<compile_context>
chip_gen: v5e
topology: v5e:2x2
jax: 0.10.0
libtpu: 0.0.40
codegen_flags: <defaults>
</compile_context>

<pallas_src>
import numpy as np

import jax
import jax.numpy as jnp
from jax.experimental import pallas as pl
from jax.experimental.pallas import tpu as pltpu


_SB = 4  # samples lane-packed per grid step


# ------------------------------ fused kernel --------------------------------

def _disc_fused_kernel(p1_ref, w1_ref, b1_ref,
                       sel2_ref, w2_ref, b2_ref, bn2s_ref, bn2t_ref,
                       sel3_ref, w3_ref, b3_ref, bn3s_ref, bn3t_ref,
                       w4_ref, b4_ref,
                       out_ref):
    """One grid step = _SB samples lane-packed; all activations stay on-chip."""
    f32 = jnp.float32
    bf16 = jnp.bfloat16
    sb = b1_ref.shape[1] // 32          # samples packed along lanes

    def leaky(v):                       # f32 VPU
        return jnp.where(v >= 0.0, v, 0.2 * v)

    # ---- layer 1: Conv(1->32, k4 s2 p1) as im2col matmul (block-diag W1) ------
    # p1_ref: (256, sb*16) rows = output position (oy*16+ox), cols = (sample, tap).
    p1 = p1_ref[...].astype(bf16)
    a1 = jnp.dot(p1, w1_ref[...], preferred_element_type=f32)       # (256, sb*32)
    a1 = leaky(a1 + b1_ref[...])
    a1_bf = a1.astype(bf16)

    # ---- layer 2: Conv(32->64, k4 s2 p1) + LeakyReLU + BN(eval) ---------------
    # One big spatial gather for all 16 taps and all packed samples (full MXU
    # width); rows of g2 are (tap, out_pos), cols (sample, cin). 0/1 selectors in
    # bf16 are exact, so g2 == a1_bf entries (or 0) bit-for-bit.
    g2 = jnp.dot(sel2_ref[...], a1_bf, preferred_element_type=f32)  # (1024, sb*32)
    g2 = g2.astype(bf16)
    acc2 = jnp.zeros((64, sb * 64), f32)
    for t in range(16):                 # chained MXU accumulation, no VPU between
        acc2 += jnp.dot(g2[t * 64:(t + 1) * 64, :], w2_ref[t],
                        preferred_element_type=f32)
    y2 = leaky(acc2 + b2_ref[...]) * bn2s_ref[...] + bn2t_ref[...]  # (64, sb*64)
    y2_bf = y2.astype(bf16)

    # ---- layer 3: Conv(64->128, k3 s2 p1) + LeakyReLU + BN(eval) --------------
    g3 = jnp.dot(sel3_ref[...], y2_bf, preferred_element_type=f32)  # (144, sb*64)
    g3 = g3.astype(bf16)
    acc3 = jnp.zeros((16, sb * 128), f32)
    for t in range(9):
        acc3 += jnp.dot(g3[t * 16:(t + 1) * 16, :], w3_ref[t],
                        preferred_element_type=f32)
    y3 = leaky(acc3 + b3_ref[...]) * bn3s_ref[...] + bn3t_ref[...]  # (16, sb*128)

    # ---- layer 4: Conv(128->1, k4 s1 p0) == full reduction (VPU/XLU) + Sigmoid -
    mult = y3 * w4_ref[...]                                         # (16, sb*128) f32
    rows = []
    for s in range(sb):                 # static, 128-aligned lane slices
        ms = mult[:, s * 128:(s + 1) * 128]                          # (16, 128)
        zs = jnp.sum(jnp.sum(ms, axis=1, keepdims=True),
                     axis=0, keepdims=True) + b4_ref[...]            # (1, 1)
        sig = 1.0 / (1.0 + jnp.exp(-zs))
        rows.append(jnp.broadcast_to(sig, (1, 128)))
    out_ref[0] = jnp.concatenate(rows, axis=0).astype(out_ref.dtype)  # (sb, 128)


# --------------------------- host-side preparation --------------------------

def _conv1_im2col(x):
    """x: (B, 1, 32, 32) -> (B, 256, 16) patches; rows (oy*16+ox), cols ki*4+kj."""
    B = x.shape[0]
    xp = jnp.pad(x[:, 0], ((0, 0), (1, 1), (1, 1)))                  # (B, 34, 34)
    cols = [xp[:, ki:ki + 32:2, kj:kj + 32:2]
            for ki in range(4) for kj in range(4)]                   # each (B,16,16)
    return jnp.stack(cols, axis=-1).reshape(B, 256, 16)


def _make_select_matrix(h_in, w_in, k, stride, pad):
    """Constant 0/1 gather matrix: (k*k*oh*ow, h_in*w_in); zero rows = zero padding."""
    oh = (h_in + 2 * pad - k) // stride + 1
    ow = (w_in + 2 * pad - k) // stride + 1
    s = np.zeros((k * k * oh * ow, h_in * w_in), np.float32)
    for ki in range(k):
        for kj in range(k):
            t = ki * k + kj
            for oy in range(oh):
                for ox in range(ow):
                    iy = stride * oy + ki - pad
                    ix = stride * ox + kj - pad
                    if 0 <= iy < h_in and 0 <= ix < w_in:
                        s[t * oh * ow + oy * ow + ox, iy * w_in + ix] = 1.0
    return jnp.asarray(s)


def _bn_fold(gamma, beta, mean, var, eps=1e-5):
    """Eval-mode BatchNorm2d -> per-channel scale / shift."""
    scale = gamma * jax.lax.rsqrt(var + eps)
    shift = beta - mean * scale
    return scale.reshape(1, -1), shift.reshape(1, -1)


def discriminator_forward(params, x):
    """x: (B, 1, 32, 32) NCHW -> (B, 1, 1, 1), matching the PyTorch module in eval mode."""
    B = x.shape[0]
    assert x.shape[1:] == (1, 32, 32), x.shape
    f32, bf16 = jnp.float32, jnp.bfloat16

    G = (B + _SB - 1) // _SB
    Bp = G * _SB
    if Bp != B:                                   # pad batch to a multiple of _SB
        x = jnp.pad(x, ((0, Bp - B), (0, 0), (0, 0), (0, 0)))

    # --- conv1 im2col, lane-packed (sample, tap) columns ---
    patches = _conv1_im2col(x).astype(f32)                            # (Bp, 256, 16)
    p1 = (patches.reshape(G, _SB, 256, 16)
                 .transpose(0, 2, 1, 3)
                 .reshape(G * 256, _SB * 16))                         # (G*256, 64)

    eye = jnp.eye(_SB, dtype=f32)

    # Block-diagonal (per packed sample) weights, bf16 MXU operands.
    w1m = params["w1"].reshape(32, 16).T                              # (16, 32)
    W1 = jnp.einsum("ab,ij->aibj", eye, w1m).reshape(_SB * 16, _SB * 32).astype(bf16)
    b1p = jnp.tile(params["b1"].reshape(1, 32), (1, _SB)).astype(f32)

    w2m = params["w2"].transpose(2, 3, 1, 0).reshape(16, 32, 64)      # (taps, Cin, Cout)
    W2 = jnp.einsum("ab,tij->taibj", eye, w2m).reshape(16, _SB * 32, _SB * 64).astype(bf16)
    b2p = jnp.tile(params["b2"].reshape(1, 64), (1, _SB)).astype(f32)

    w3m = params["w3"].transpose(2, 3, 1, 0).reshape(9, 64, 128)
    W3 = jnp.einsum("ab,tij->taibj", eye, w3m).reshape(9, _SB * 64, _SB * 128).astype(bf16)
    b3p = jnp.tile(params["b3"].reshape(1, 128), (1, _SB)).astype(f32)

    w4m = params["w4"][0].transpose(1, 2, 0).reshape(16, 128)         # (ki*4+kj, C)
    w4t = jnp.tile(w4m, (1, _SB)).astype(f32)
    b4m = params["b4"].reshape(1, 1).astype(f32)

    bn2_s, bn2_t = _bn_fold(params["bn2_gamma"], params["bn2_beta"],
                            params["bn2_mean"], params["bn2_var"])
    bn3_s, bn3_t = _bn_fold(params["bn3_gamma"], params["bn3_beta"],
                            params["bn3_mean"], params["bn3_var"])
    bn2_s = jnp.tile(bn2_s, (1, _SB)).astype(f32)
    bn2_t = jnp.tile(bn2_t, (1, _SB)).astype(f32)
    bn3_s = jnp.tile(bn3_s, (1, _SB)).astype(f32)
    bn3_t = jnp.tile(bn3_t, (1, _SB)).astype(f32)

    sel2 = _make_select_matrix(16, 16, 4, 2, 1).astype(bf16)          # (1024, 256)
    sel3 = _make_select_matrix(8, 8, 3, 2, 1).astype(bf16)            # (144, 64)

    out = pl.pallas_call(
        _disc_fused_kernel,
        out_shape=jax.ShapeDtypeStruct((G, _SB, 128), jnp.float32),
        grid=(G,),
        in_specs=[
            pl.BlockSpec((256, _SB * 16), lambda g: (g, 0)),              # p1 (per step)
            pl.BlockSpec((_SB * 16, _SB * 32), lambda g: (0, 0)),         # W1 blkdiag
            pl.BlockSpec((1, _SB * 32), lambda g: (0, 0)),                # b1
            pl.BlockSpec((1024, 256), lambda g: (0, 0)),                  # sel2
            pl.BlockSpec((16, _SB * 32, _SB * 64), lambda g: (0, 0, 0)),  # W2 blkdiag
            pl.BlockSpec((1, _SB * 64), lambda g: (0, 0)),                # b2
            pl.BlockSpec((1, _SB * 64), lambda g: (0, 0)),                # bn2 scale
            pl.BlockSpec((1, _SB * 64), lambda g: (0, 0)),                # bn2 shift
            pl.BlockSpec((144, 64), lambda g: (0, 0)),                    # sel3
            pl.BlockSpec((9, _SB * 64, _SB * 128), lambda g: (0, 0, 0)),  # W3 blkdiag
            pl.BlockSpec((1, _SB * 128), lambda g: (0, 0)),               # b3
            pl.BlockSpec((1, _SB * 128), lambda g: (0, 0)),               # bn3 scale
            pl.BlockSpec((1, _SB * 128), lambda g: (0, 0)),               # bn3 shift
            pl.BlockSpec((16, _SB * 128), lambda g: (0, 0)),              # w4 tiled
            pl.BlockSpec((1, 1), lambda g: (0, 0)),                       # b4
        ],
        out_specs=pl.BlockSpec((1, _SB, 128), lambda g: (g, 0, 0)),
        compiler_params=pltpu.CompilerParams(
            dimension_semantics=("parallel",),
            vmem_limit_bytes=32 * 1024 * 1024,
        ),
    )(p1, W1, b1p, sel2, W2, b2p, bn2_s, bn2_t,
      sel3, W3, b3p, bn3_s, bn3_t, w4t, b4m)

    return out[:, :, 0].reshape(Bp, 1, 1, 1)[:B]


# -------------------------- parameters & reference --------------------------

def init_discriminator_params(key):
    """Deterministic synthetic parameters matching the PyTorch module's shapes."""
    ks = jax.random.split(key, 16)

    def conv_init(kw_, kb_, shape):
        fan_in = shape[1] * shape[2] * shape[3]
        bound = 1.0 / jnp.sqrt(fan_in)
        w = jax.random.uniform(kw_, shape, jnp.float32, -bound, bound)
        b = jax.random.uniform(kb_, (shape[0],), jnp.float32, -bound, bound)
        return w, b

    p = {}
    p["w1"], p["b1"] = conv_init(ks[0], ks[1], (32, 1, 4, 4))
    p["w2"], p["b2"] = conv_init(ks[2], ks[3], (64, 32, 4, 4))
    p["w3"], p["b3"] = conv_init(ks[4], ks[5], (128, 64, 3, 3))
    p["w4"], p["b4"] = conv_init(ks[6], ks[7], (1, 128, 4, 4))
    # Eval-mode BatchNorm2d params ("as if trained"): affine + running statistics.
    p["bn2_gamma"] = 1.0 + 0.1 * jax.random.normal(ks[8], (64,), jnp.float32)
    p["bn2_beta"] = 0.1 * jax.random.normal(ks[9], (64,), jnp.float32)
    p["bn2_mean"] = 0.1 * jax.random.normal(ks[10], (64,), jnp.float32)
    p["bn2_var"] = 1.0 + 0.1 * jax.random.uniform(ks[11], (64,), jnp.float32)
    p["bn3_gamma"] = 1.0 + 0.1 * jax.random.normal(ks[12], (128,), jnp.float32)
    p["bn3_beta"] = 0.1 * jax.random.normal(ks[13], (128,), jnp.float32)
    p["bn3_mean"] = 0.1 * jax.random.normal(ks[14], (128,), jnp.float32)
    p["bn3_var"] = 1.0 + 0.1 * jax.random.uniform(ks[15], (128,), jnp.float32)
    return p


def _reference_forward(params, x):
    """Pure-JAX (XLA conv, f32) eval-mode reference, used as the correctness check."""
    def conv(h, w, b, stride, pad):
        y = jax.lax.conv_general_dilated(
            h, w, window_strides=(stride, stride),
            padding=[(pad, pad), (pad, pad)],
            dimension_numbers=("NCHW", "OIHW", "NCHW"))
        return y + b.reshape(1, -1, 1, 1)

    def leaky(v):
        return jnp.where(v >= 0, v, 0.2 * v)

    def bn(v, g, bta, m, var, eps=1e-5):
        g, bta, m, var = (t.reshape(1, -1, 1, 1) for t in (g, bta, m, var))
        return (v - m) * jax.lax.rsqrt(var + eps) * g + bta

    h = leaky(conv(x, params["w1"], params["b1"], 2, 1))
    h = bn(leaky(conv(h, params["w2"], params["b2"], 2, 1)),
           params["bn2_gamma"], params["bn2_beta"], params["bn2_mean"], params["bn2_var"])
    h = bn(leaky(conv(h, params["w3"], params["b3"], 2, 1)),
           params["bn3_gamma"], params["bn3_beta"], params["bn3_mean"], params["bn3_var"])
    h = conv(h, params["w4"], params["b4"], 1, 0)
    return jax.nn.sigmoid(h)


if __name__ == "__main__":
    key = jax.random.PRNGKey(0)
    k_param, k_x = jax.random.split(key)
    params = init_discriminator_params(k_param)

    # NCHW input, 1 channel, 32x32 (architecture's natural size: 32->16->8->4->1).
    x = jax.random.normal(k_x, (2, 1, 32, 32), dtype=jnp.float32)

    fwd = jax.jit(discriminator_forward)
    out = jax.block_until_ready(fwd(params, x))

    assert out.shape == (2, 1, 1, 1), out.shape
    assert bool(jnp.all(jnp.isfinite(out)))
    assert bool(jnp.all((out >= 0.0) & (out <= 1.0)))

    # bf16 matmul operands (f32 accumulate) -> relaxed parity vs. f32 XLA reference.
    ref = _reference_forward(params, x)
    assert bool(jnp.allclose(out, ref, rtol=5e-2, atol=3e-2)), (out, ref)

    print("KERNEL_OK")
</pallas_src>

<mosaic_0001>
module attributes {stable_mosaic.version = 11 : i64} {
  func.func @_disc_fused_kernel(%arg0: i32, %arg1: memref<256x64xf32, #tpu.memory_space<vmem>>, %arg2: memref<64x128xbf16, #tpu.memory_space<vmem>>, %arg3: memref<1x128xf32, #tpu.memory_space<vmem>>, %arg4: memref<1024x256xbf16, #tpu.memory_space<vmem>>, %arg5: memref<16x128x256xbf16, #tpu.memory_space<vmem>>, %arg6: memref<1x256xf32, #tpu.memory_space<vmem>>, %arg7: memref<1x256xf32, #tpu.memory_space<vmem>>, %arg8: memref<1x256xf32, #tpu.memory_space<vmem>>, %arg9: memref<144x64xbf16, #tpu.memory_space<vmem>>, %arg10: memref<9x256x512xbf16, #tpu.memory_space<vmem>>, %arg11: memref<1x512xf32, #tpu.memory_space<vmem>>, %arg12: memref<1x512xf32, #tpu.memory_space<vmem>>, %arg13: memref<1x512xf32, #tpu.memory_space<vmem>>, %arg14: memref<16x512xf32, #tpu.memory_space<vmem>>, %arg15: memref<1x1xf32, #tpu.memory_space<vmem>>, %arg16: memref<1x4x128xf32, #tpu.memory_space<vmem>>) attributes {dimension_semantics = [#tpu.dimension_semantics<parallel>], iteration_bounds = array<i64: 1>, scalar_prefetch = 0 : i64, scratch_operands = 0 : i64, tpu.core_type = #tpu.core_type<tc>, window_params = [{transform_indices = @transform_0, window_bounds = array<i64: 256, 64>}, {pipeline_mode = #tpu.pipeline_mode<synchronous>, transform_indices = @transform_1, window_bounds = array<i64: 64, 128>}, {pipeline_mode = #tpu.pipeline_mode<synchronous>, transform_indices = @transform_2, window_bounds = array<i64: 1, 128>}, {pipeline_mode = #tpu.pipeline_mode<synchronous>, transform_indices = @transform_3, window_bounds = array<i64: 1024, 256>}, {pipeline_mode = #tpu.pipeline_mode<synchronous>, transform_indices = @transform_4, window_bounds = array<i64: 16, 128, 256>}, {pipeline_mode = #tpu.pipeline_mode<synchronous>, transform_indices = @transform_5, window_bounds = array<i64: 1, 256>}, {pipeline_mode = #tpu.pipeline_mode<synchronous>, transform_indices = @transform_6, window_bounds = array<i64: 1, 256>}, {pipeline_mode = #tpu.pipeline_mode<synchronous>, transform_indices = @transform_7, window_bounds = array<i64: 1, 256>}, {pipeline_mode = #tpu.pipeline_mode<synchronous>, transform_indices = @transform_8, window_bounds = array<i64: 144, 64>}, {pipeline_mode = #tpu.pipeline_mode<synchronous>, transform_indices = @transform_9, window_bounds = array<i64: 9, 256, 512>}, {pipeline_mode = #tpu.pipeline_mode<synchronous>, transform_indices = @transform_10, window_bounds = array<i64: 1, 512>}, {pipeline_mode = #tpu.pipeline_mode<synchronous>, transform_indices = @transform_11, window_bounds = array<i64: 1, 512>}, {pipeline_mode = #tpu.pipeline_mode<synchronous>, transform_indices = @transform_12, window_bounds = array<i64: 1, 512>}, {pipeline_mode = #tpu.pipeline_mode<synchronous>, transform_indices = @transform_13, window_bounds = array<i64: 16, 512>}, {pipeline_mode = #tpu.pipeline_mode<synchronous>, transform_indices = @transform_14, window_bounds = array<i64: 1, 1>}, {transform_indices = @transform_15, window_bounds = array<i64: 1, 4, 128>}]} {
    %c0 = arith.constant 0 : index
    %c0_0 = arith.constant 0 : index
    %0 = vector.load %arg1[%c0, %c0_0] : memref<256x64xf32, #tpu.memory_space<vmem>>, vector<256x64xf32>
    %1 = arith.truncf %0 : vector<256x64xf32> to vector<256x64xbf16>
    %c0_1 = arith.constant 0 : index
    %c0_2 = arith.constant 0 : index
    %2 = vector.load %arg2[%c0_1, %c0_2] : memref<64x128xbf16, #tpu.memory_space<vmem>>, vector<64x128xbf16>
    %cst = arith.constant dense<0.000000e+00> : vector<256x128xf32>
    %3 = tpu.matmul %1, %2, %cst {dimension_numbers = #tpu.dot_dimension_numbers<[1], [0], [0], [1], [0, 0, 1, 1], [], []>} : vector<256x64xbf16>, vector<64x128xbf16>, vector<256x128xf32> -> vector<256x128xf32>
    %c0_3 = arith.constant 0 : index
    %c0_4 = arith.constant 0 : index
    %4 = vector.load %arg3[%c0_3, %c0_4] : memref<1x128xf32, #tpu.memory_space<vmem>>, vector<1x128xf32>
    %5 = vector.broadcast %4 : vector<1x128xf32> to vector<256x128xf32>
    %6 = arith.addf %3, %5 : vector<256x128xf32>
    %cst_5 = arith.constant 0.000000e+00 : f32
    %7 = vector.broadcast %cst_5 : f32 to vector<256x128xf32>
    %8 = arith.cmpf oge, %6, %7 : vector<256x128xf32>
    %cst_6 = arith.constant 2.000000e-01 : f32
    %9 = vector.broadcast %cst_6 : f32 to vector<256x128xf32>
    %10 = arith.mulf %9, %6 : vector<256x128xf32>
    %11 = arith.select %8, %6, %10 : vector<256x128xi1>, vector<256x128xf32>
    %12 = arith.truncf %11 : vector<256x128xf32> to vector<256x128xbf16>
    %c0_7 = arith.constant 0 : index
    %c0_8 = arith.constant 0 : index
    %13 = vector.load %arg4[%c0_7, %c0_8] : memref<1024x256xbf16, #tpu.memory_space<vmem>>, vector<1024x256xbf16>
    %cst_9 = arith.constant dense<0.000000e+00> : vector<1024x128xf32>
    %14 = tpu.matmul %13, %12, %cst_9 {dimension_numbers = #tpu.dot_dimension_numbers<[1], [0], [0], [1], [0, 0, 1, 1], [], []>} : vector<1024x256xbf16>, vector<256x128xbf16>, vector<1024x128xf32> -> vector<1024x128xf32>
    %15 = arith.truncf %14 : vector<1024x128xf32> to vector<1024x128xbf16>
    %cst_10 = arith.constant 0.000000e+00 : f32
    %16 = vector.broadcast %cst_10 : f32 to vector<64x256xf32>
    %17 = vector.extract_strided_slice %15 {offsets = [0, 0], sizes = [64, 128], strides = [1, 1]} : vector<1024x128xbf16> to vector<64x128xbf16>
    %c0_11 = arith.constant 0 : index
    %c0_12 = arith.constant 0 : index
    %c0_13 = arith.constant 0 : index
    %18 = vector.load %arg5[%c0_11, %c0_12, %c0_13] : memref<16x128x256xbf16, #tpu.memory_space<vmem>>, vector<1x128x256xbf16>
    %19 = vector.shape_cast %18 : vector<1x128x256xbf16> to vector<128x256xbf16>
    %cst_14 = arith.constant dense<0.000000e+00> : vector<64x256xf32>
    %20 = tpu.matmul %17, %19, %cst_14 {dimension_numbers = #tpu.dot_dimension_numbers<[1], [0], [0], [1], [0, 0, 1, 1], [], []>} : vector<64x128xbf16>, vector<128x256xbf16>, vector<64x256xf32> -> vector<64x256xf32>
    %21 = arith.addf %16, %20 : vector<64x256xf32>
    %22 = vector.extract_strided_slice %15 {offsets = [64, 0], sizes = [64, 128], strides = [1, 1]} : vector<1024x128xbf16> to vector<64x128xbf16>
    %c1 = arith.constant 1 : index
    %c0_15 = arith.constant 0 : index
    %c0_16 = arith.constant 0 : index
    %23 = vector.load %arg5[%c1, %c0_15, %c0_16] : memref<16x128x256xbf16, #tpu.memory_space<vmem>>, vector<1x128x256xbf16>
    %24 = vector.shape_cast %23 : vector<1x128x256xbf16> to vector<128x256xbf16>
    %cst_17 = arith.constant dense<0.000000e+00> : vector<64x256xf32>
    %25 = tpu.matmul %22, %24, %cst_17 {dimension_numbers = #tpu.dot_dimension_numbers<[1], [0], [0], [1], [0, 0, 1, 1], [], []>} : vector<64x128xbf16>, vector<128x256xbf16>, vector<64x256xf32> -> vector<64x256xf32>
    %26 = arith.addf %21, %25 : vector<64x256xf32>
    %27 = vector.extract_strided_slice %15 {offsets = [128, 0], sizes = [64, 128], strides = [1, 1]} : vector<1024x128xbf16> to vector<64x128xbf16>
    %c2 = arith.constant 2 : index
    %c0_18 = arith.constant 0 : index
    %c0_19 = arith.constant 0 : index
    %28 = vector.load %arg5[%c2, %c0_18, %c0_19] : memref<16x128x256xbf16, #tpu.memory_space<vmem>>, vector<1x128x256xbf16>
    %29 = vector.shape_cast %28 : vector<1x128x256xbf16> to vector<128x256xbf16>
    %cst_20 = arith.constant dense<0.000000e+00> : vector<64x256xf32>
    %30 = tpu.matmul %27, %29, %cst_20 {dimension_numbers = #tpu.dot_dimension_numbers<[1], [0], [0], [1], [0, 0, 1, 1], [], []>} : vector<64x128xbf16>, vector<128x256xbf16>, vector<64x256xf32> -> vector<64x256xf32>
    %31 = arith.addf %26, %30 : vector<64x256xf32>
    %32 = vector.extract_strided_slice %15 {offsets = [192, 0], sizes = [64, 128], strides = [1, 1]} : vector<1024x128xbf16> to vector<64x128xbf16>
    %c3 = arith.constant 3 : index
    %c0_21 = arith.constant 0 : index
    %c0_22 = arith.constant 0 : index
    %33 = vector.load %arg5[%c3, %c0_21, %c0_22] : memref<16x128x256xbf16, #tpu.memory_space<vmem>>, vector<1x128x256xbf16>
    %34 = vector.shape_cast %33 : vector<1x128x256xbf16> to vector<128x256xbf16>
    %cst_23 = arith.constant dense<0.000000e+00> : vector<64x256xf32>
    %35 = tpu.matmul %32, %34, %cst_23 {dimension_numbers = #tpu.dot_dimension_numbers<[1], [0], [0], [1], [0, 0, 1, 1], [], []>} : vector<64x128xbf16>, vector<128x256xbf16>, vector<64x256xf32> -> vector<64x256xf32>
    %36 = arith.addf %31, %35 : vector<64x256xf32>
    %37 = vector.extract_strided_slice %15 {offsets = [256, 0], sizes = [64, 128], strides = [1, 1]} : vector<1024x128xbf16> to vector<64x128xbf16>
    %c4 = arith.constant 4 : index
    %c0_24 = arith.constant 0 : index
    %c0_25 = arith.constant 0 : index
    %38 = vector.load %arg5[%c4, %c0_24, %c0_25] : memref<16x128x256xbf16, #tpu.memory_space<vmem>>, vector<1x128x256xbf16>
    %39 = vector.shape_cast %38 : vector<1x128x256xbf16> to vector<128x256xbf16>
    %cst_26 = arith.constant dense<0.000000e+00> : vector<64x256xf32>
    %40 = tpu.matmul %37, %39, %cst_26 {dimension_numbers = #tpu.dot_dimension_numbers<[1], [0], [0], [1], [0, 0, 1, 1], [], []>} : vector<64x128xbf16>, vector<128x256xbf16>, vector<64x256xf32> -> vector<64x256xf32>
    %41 = arith.addf %36, %40 : vector<64x256xf32>
    %42 = vector.extract_strided_slice %15 {offsets = [320, 0], sizes = [64, 128], strides = [1, 1]} : vector<1024x128xbf16> to vector<64x128xbf16>
    %c5 = arith.constant 5 : index
    %c0_27 = arith.constant 0 : index
    %c0_28 = arith.constant 0 : index
    %43 = vector.load %arg5[%c5, %c0_27, %c0_28] : memref<16x128x256xbf16, #tpu.memory_space<vmem>>, vector<1x128x256xbf16>
    %44 = vector.shape_cast %43 : vector<1x128x256xbf16> to vector<128x256xbf16>
    %cst_29 = arith.constant dense<0.000000e+00> : vector<64x256xf32>
    %45 = tpu.matmul %42, %44, %cst_29 {dimension_numbers = #tpu.dot_dimension_numbers<[1], [0], [0], [1], [0, 0, 1, 1], [], []>} : vector<64x128xbf16>, vector<128x256xbf16>, vector<64x256xf32> -> vector<64x256xf32>
    %46 = arith.addf %41, %45 : vector<64x256xf32>
    %47 = vector.extract_strided_slice %15 {offsets = [384, 0], sizes = [64, 128], strides = [1, 1]} : vector<1024x128xbf16> to vector<64x128xbf16>
    %c6 = arith.constant 6 : index
    %c0_30 = arith.constant 0 : index
    %c0_31 = arith.constant 0 : index
    %48 = vector.load %arg5[%c6, %c0_30, %c0_31] : memref<16x128x256xbf16, #tpu.memory_space<vmem>>, vector<1x128x256xbf16>
    %49 = vector.shape_cast %48 : vector<1x128x256xbf16> to vector<128x256xbf16>
    %cst_32 = arith.constant dense<0.000000e+00> : vector<64x256xf32>
    %50 = tpu.matmul %47, %49, %cst_32 {dimension_numbers = #tpu.dot_dimension_numbers<[1], [0], [0], [1], [0, 0, 1, 1], [], []>} : vector<64x128xbf16>, vector<128x256xbf16>, vector<64x256xf32> -> vector<64x256xf32>
    %51 = arith.addf %46, %50 : vector<64x256xf32>
    %52 = vector.extract_strided_slice %15 {offsets = [448, 0], sizes = [64, 128], strides = [1, 1]} : vector<1024x128xbf16> to vector<64x128xbf16>
    %c7 = arith.constant 7 : index
    %c0_33 = arith.constant 0 : index
    %c0_34 = arith.constant 0 : index
    %53 = vector.load %arg5[%c7, %c0_33, %c0_34] : memref<16x128x256xbf16, #tpu.memory_space<vmem>>, vector<1x128x256xbf16>
    %54 = vector.shape_cast %53 : vector<1x128x256xbf16> to vector<128x256xbf16>
    %cst_35 = arith.constant dense<0.000000e+00> : vector<64x256xf32>
    %55 = tpu.matmul %52, %54, %cst_35 {dimension_numbers = #tpu.dot_dimension_numbers<[1], [0], [0], [1], [0, 0, 1, 1], [], []>} : vector<64x128xbf16>, vector<128x256xbf16>, vector<64x256xf32> -> vector<64x256xf32>
    %56 = arith.addf %51, %55 : vector<64x256xf32>
    %57 = vector.extract_strided_slice %15 {offsets = [512, 0], sizes = [64, 128], strides = [1, 1]} : vector<1024x128xbf16> to vector<64x128xbf16>
    %c8 = arith.constant 8 : index
    %c0_36 = arith.constant 0 : index
    %c0_37 = arith.constant 0 : index
    %58 = vector.load %arg5[%c8, %c0_36, %c0_37] : memref<16x128x256xbf16, #tpu.memory_space<vmem>>, vector<1x128x256xbf16>
    %59 = vector.shape_cast %58 : vector<1x128x256xbf16> to vector<128x256xbf16>
    %cst_38 = arith.constant dense<0.000000e+00> : vector<64x256xf32>
    %60 = tpu.matmul %57, %59, %cst_38 {dimension_numbers = #tpu.dot_dimension_numbers<[1], [0], [0], [1], [0, 0, 1, 1], [], []>} : vector<64x128xbf16>, vector<128x256xbf16>, vector<64x256xf32> -> vector<64x256xf32>
    %61 = arith.addf %56, %60 : vector<64x256xf32>
    %62 = vector.extract_strided_slice %15 {offsets = [576, 0], sizes = [64, 128], strides = [1, 1]} : vector<1024x128xbf16> to vector<64x128xbf16>
    %c9 = arith.constant 9 : index
    %c0_39 = arith.constant 0 : index
    %c0_40 = arith.constant 0 : index
    %63 = vector.load %arg5[%c9, %c0_39, %c0_40] : memref<16x128x256xbf16, #tpu.memory_space<vmem>>, vector<1x128x256xbf16>
    %64 = vector.shape_cast %63 : vector<1x128x256xbf16> to vector<128x256xbf16>
    %cst_41 = arith.constant dense<0.000000e+00> : vector<64x256xf32>
    %65 = tpu.matmul %62, %64, %cst_41 {dimension_numbers = #tpu.dot_dimension_numbers<[1], [0], [0], [1], [0, 0, 1, 1], [], []>} : vector<64x128xbf16>, vector<128x256xbf16>, vector<64x256xf32> -> vector<64x256xf32>
    %66 = arith.addf %61, %65 : vector<64x256xf32>
    %67 = vector.extract_strided_slice %15 {offsets = [640, 0], sizes = [64, 128], strides = [1, 1]} : vector<1024x128xbf16> to vector<64x128xbf16>
    %c10 = arith.constant 10 : index
    %c0_42 = arith.constant 0 : index
    %c0_43 = arith.constant 0 : index
    %68 = vector.load %arg5[%c10, %c0_42, %c0_43] : memref<16x128x256xbf16, #tpu.memory_space<vmem>>, vector<1x128x256xbf16>
    %69 = vector.shape_cast %68 : vector<1x128x256xbf16> to vector<128x256xbf16>
    %cst_44 = arith.constant dense<0.000000e+00> : vector<64x256xf32>
    %70 = tpu.matmul %67, %69, %cst_44 {dimension_numbers = #tpu.dot_dimension_numbers<[1], [0], [0], [1], [0, 0, 1, 1], [], []>} : vector<64x128xbf16>, vector<128x256xbf16>, vector<64x256xf32> -> vector<64x256xf32>
    %71 = arith.addf %66, %70 : vector<64x256xf32>
    %72 = vector.extract_strided_slice %15 {offsets = [704, 0], sizes = [64, 128], strides = [1, 1]} : vector<1024x128xbf16> to vector<64x128xbf16>
    %c11 = arith.constant 11 : index
    %c0_45 = arith.constant 0 : index
    %c0_46 = arith.constant 0 : index
    %73 = vector.load %arg5[%c11, %c0_45, %c0_46] : memref<16x128x256xbf16, #tpu.memory_space<vmem>>, vector<1x128x256xbf16>
    %74 = vector.shape_cast %73 : vector<1x128x256xbf16> to vector<128x256xbf16>
    %cst_47 = arith.constant dense<0.000000e+00> : vector<64x256xf32>
    %75 = tpu.matmul %72, %74, %cst_47 {dimension_numbers = #tpu.dot_dimension_numbers<[1], [0], [0], [1], [0, 0, 1, 1], [], []>} : vector<64x128xbf16>, vector<128x256xbf16>, vector<64x256xf32> -> vector<64x256xf32>
    %76 = arith.addf %71, %75 : vector<64x256xf32>
    %77 = vector.extract_strided_slice %15 {offsets = [768, 0], sizes = [64, 128], strides = [1, 1]} : vector<1024x128xbf16> to vector<64x128xbf16>
    %c12 = arith.constant 12 : index
    %c0_48 = arith.constant 0 : index
    %c0_49 = arith.constant 0 : index
    %78 = vector.load %arg5[%c12, %c0_48, %c0_49] : memref<16x128x256xbf16, #tpu.memory_space<vmem>>, vector<1x128x256xbf16>
    %79 = vector.shape_cast %78 : vector<1x128x256xbf16> to vector<128x256xbf16>
    %cst_50 = arith.constant dense<0.000000e+00> : vector<64x256xf32>
    %80 = tpu.matmul %77, %79, %cst_50 {dimension_numbers = #tpu.dot_dimension_numbers<[1], [0], [0], [1], [0, 0, 1, 1], [], []>} : vector<64x128xbf16>, vector<128x256xbf16>, vector<64x256xf32> -> vector<64x256xf32>
    %81 = arith.addf %76, %80 : vector<64x256xf32>
    %82 = vector.extract_strided_slice %15 {offsets = [832, 0], sizes = [64, 128], strides = [1, 1]} : vector<1024x128xbf16> to vector<64x128xbf16>
    %c13 = arith.constant 13 : index
    %c0_51 = arith.constant 0 : index
    %c0_52 = arith.constant 0 : index
    %83 = vector.load %arg5[%c13, %c0_51, %c0_52] : memref<16x128x256xbf16, #tpu.memory_space<vmem>>, vector<1x128x256xbf16>
    %84 = vector.shape_cast %83 : vector<1x128x256xbf16> to vector<128x256xbf16>
    %cst_53 = arith.constant dense<0.000000e+00> : vector<64x256xf32>
    %85 = tpu.matmul %82, %84, %cst_53 {dimension_numbers = #tpu.dot_dimension_numbers<[1], [0], [0], [1], [0, 0, 1, 1], [], []>} : vector<64x128xbf16>, vector<128x256xbf16>, vector<64x256xf32> -> vector<64x256xf32>
    %86 = arith.addf %81, %85 : vector<64x256xf32>
    %87 = vector.extract_strided_slice %15 {offsets = [896, 0], sizes = [64, 128], strides = [1, 1]} : vector<1024x128xbf16> to vector<64x128xbf16>
    %c14 = arith.constant 14 : index
    %c0_54 = arith.constant 0 : index
    %c0_55 = arith.constant 0 : index
    %88 = vector.load %arg5[%c14, %c0_54, %c0_55] : memref<16x128x256xbf16, #tpu.memory_space<vmem>>, vector<1x128x256xbf16>
    %89 = vector.shape_cast %88 : vector<1x128x256xbf16> to vector<128x256xbf16>
    %cst_56 = arith.constant dense<0.000000e+00> : vector<64x256xf32>
    %90 = tpu.matmul %87, %89, %cst_56 {dimension_numbers = #tpu.dot_dimension_numbers<[1], [0], [0], [1], [0, 0, 1, 1], [], []>} : vector<64x128xbf16>, vector<128x256xbf16>, vector<64x256xf32> -> vector<64x256xf32>
    %91 = arith.addf %86, %90 : vector<64x256xf32>
    %92 = vector.extract_strided_slice %15 {offsets = [960, 0], sizes = [64, 128], strides = [1, 1]} : vector<1024x128xbf16> to vector<64x128xbf16>
    %c15 = arith.constant 15 : index
    %c0_57 = arith.constant 0 : index
    %c0_58 = arith.constant 0 : index
    %93 = vector.load %arg5[%c15, %c0_57, %c0_58] : memref<16x128x256xbf16, #tpu.memory_space<vmem>>, vector<1x128x256xbf16>
    %94 = vector.shape_cast %93 : vector<1x128x256xbf16> to vector<128x256xbf16>
    %cst_59 = arith.constant dense<0.000000e+00> : vector<64x256xf32>
    %95 = tpu.matmul %92, %94, %cst_59 {dimension_numbers = #tpu.dot_dimension_numbers<[1], [0], [0], [1], [0, 0, 1, 1], [], []>} : vector<64x128xbf16>, vector<128x256xbf16>, vector<64x256xf32> -> vector<64x256xf32>
    %96 = arith.addf %91, %95 : vector<64x256xf32>
    %c0_60 = arith.constant 0 : index
    %c0_61 = arith.constant 0 : index
    %97 = vector.load %arg6[%c0_60, %c0_61] : memref<1x256xf32, #tpu.memory_space<vmem>>, vector<1x256xf32>
    %98 = vector.broadcast %97 : vector<1x256xf32> to vector<64x256xf32>
    %99 = arith.addf %96, %98 : vector<64x256xf32>
    %cst_62 = arith.constant 0.000000e+00 : f32
    %100 = vector.broadcast %cst_62 : f32 to vector<64x256xf32>
    %101 = arith.cmpf oge, %99, %100 : vector<64x256xf32>
    %cst_63 = arith.constant 2.000000e-01 : f32
    %102 = vector.broadcast %cst_63 : f32 to vector<64x256xf32>
    %103 = arith.mulf %102, %99 : vector<64x256xf32>
    %104 = arith.select %101, %99, %103 : vector<64x256xi1>, vector<64x256xf32>
    %c0_64 = arith.constant 0 : index
    %c0_65 = arith.constant 0 : index
    %105 = vector.load %arg7[%c0_64, %c0_65] : memref<1x256xf32, #tpu.memory_space<vmem>>, vector<1x256xf32>
    %106 = vector.broadcast %105 : vector<1x256xf32> to vector<64x256xf32>
    %107 = arith.mulf %104, %106 : vector<64x256xf32>
    %c0_66 = arith.constant 0 : index
    %c0_67 = arith.constant 0 : index
    %108 = vector.load %arg8[%c0_66, %c0_67] : memref<1x256xf32, #tpu.memory_space<vmem>>, vector<1x256xf32>
    %109 = vector.broadcast %108 : vector<1x256xf32> to vector<64x256xf32>
    %110 = arith.addf %107, %109 : vector<64x256xf32>
    %111 = arith.truncf %110 : vector<64x256xf32> to vector<64x256xbf16>
    %c0_68 = arith.constant 0 : index
    %c0_69 = arith.constant 0 : index
    %112 = vector.load %arg9[%c0_68, %c0_69] : memref<144x64xbf16, #tpu.memory_space<vmem>>, vector<144x64xbf16>
    %cst_70 = arith.constant dense<0.000000e+00> : vector<144x256xf32>
    %113 = tpu.matmul %112, %111, %cst_70 {dimension_numbers = #tpu.dot_dimension_numbers<[1], [0], [0], [1], [0, 0, 1, 1], [], []>} : vector<144x64xbf16>, vector<64x256xbf16>, vector<144x256xf32> -> vector<144x256xf32>
    %114 = arith.truncf %113 : vector<144x256xf32> to vector<144x256xbf16>
    %cst_71 = arith.constant 0.000000e+00 : f32
    %115 = vector.broadcast %cst_71 : f32 to vector<16x512xf32>
    %116 = vector.extract_strided_slice %114 {offsets = [0, 0], sizes = [16, 256], strides = [1, 1]} : vector<144x256xbf16> to vector<16x256xbf16>
    %c0_72 = arith.constant 0 : index
    %c0_73 = arith.constant 0 : index
    %c0_74 = arith.constant 0 : index
    %117 = vector.load %arg10[%c0_72, %c0_73, %c0_74] : memref<9x256x512xbf16, #tpu.memory_space<vmem>>, vector<1x256x512xbf16>
    %118 = vector.shape_cast %117 : vector<1x256x512xbf16> to vector<256x512xbf16>
    %cst_75 = arith.constant dense<0.000000e+00> : vector<16x512xf32>
    %119 = tpu.matmul %116, %118, %cst_75 {dimension_numbers = #tpu.dot_dimension_numbers<[1], [0], [0], [1], [0, 0, 1, 1], [], []>} : vector<16x256xbf16>, vector<256x512xbf16>, vector<16x512xf32> -> vector<16x512xf32>
    %120 = arith.addf %115, %119 : vector<16x512xf32>
    %121 = vector.extract_strided_slice %114 {offsets = [16, 0], sizes = [16, 256], strides = [1, 1]} : vector<144x256xbf16> to vector<16x256xbf16>
    %c1_76 = arith.constant 1 : index
    %c0_77 = arith.constant 0 : index
    %c0_78 = arith.constant 0 : index
    %122 = vector.load %arg10[%c1_76, %c0_77, %c0_78] : memref<9x256x512xbf16, #tpu.memory_space<vmem>>, vector<1x256x512xbf16>
    %123 = vector.shape_cast %122 : vector<1x256x512xbf16> to vector<256x512xbf16>
    %cst_79 = arith.constant dense<0.000000e+00> : vector<16x512xf32>
    %124 = tpu.matmul %121, %123, %cst_79 {dimension_numbers = #tpu.dot_dimension_numbers<[1], [0], [0], [1], [0, 0, 1, 1], [], []>} : vector<16x256xbf16>, vector<256x512xbf16>, vector<16x512xf32> -> vector<16x512xf32>
    %125 = arith.addf %120, %124 : vector<16x512xf32>
    %126 = vector.extract_strided_slice %114 {offsets = [32, 0], sizes = [16, 256], strides = [1, 1]} : vector<144x256xbf16> to vector<16x256xbf16>
    %c2_80 = arith.constant 2 : index
    %c0_81 = arith.constant 0 : index
    %c0_82 = arith.constant 0 : index
    %127 = vector.load %arg10[%c2_80, %c0_81, %c0_82] : memref<9x256x512xbf16, #tpu.memory_space<vmem>>, vector<1x256x512xbf16>
    %128 = vector.shape_cast %127 : vector<1x256x512xbf16> to vector<256x512xbf16>
    %cst_83 = arith.constant dense<0.000000e+00> : vector<16x512xf32>
    %129 = tpu.matmul %126, %128, %cst_83 {dimension_numbers = #tpu.dot_dimension_numbers<[1], [0], [0], [1], [0, 0, 1, 1], [], []>} : vector<16x256xbf16>, vector<256x512xbf16>, vector<16x512xf32> -> vector<16x512xf32>
    %130 = arith.addf %125, %129 : vector<16x512xf32>
    %131 = vector.extract_strided_slice %114 {offsets = [48, 0], sizes = [16, 256], strides = [1, 1]} : vector<144x256xbf16> to vector<16x256xbf16>
    %c3_84 = arith.constant 3 : index
    %c0_85 = arith.constant 0 : index
    %c0_86 = arith.constant 0 : index
    %132 = vector.load %arg10[%c3_84, %c0_85, %c0_86] : memref<9x256x512xbf16, #tpu.memory_space<vmem>>, vector<1x256x512xbf16>
    %133 = vector.shape_cast %132 : vector<1x256x512xbf16> to vector<256x512xbf16>
    %cst_87 = arith.constant dense<0.000000e+00> : vector<16x512xf32>
    %134 = tpu.matmul %131, %133, %cst_87 {dimension_numbers = #tpu.dot_dimension_numbers<[1], [0], [0], [1], [0, 0, 1, 1], [], []>} : vector<16x256xbf16>, vector<256x512xbf16>, vector<16x512xf32> -> vector<16x512xf32>
    %135 = arith.addf %130, %134 : vector<16x512xf32>
    %136 = vector.extract_strided_slice %114 {offsets = [64, 0], sizes = [16, 256], strides = [1, 1]} : vector<144x256xbf16> to vector<16x256xbf16>
    %c4_88 = arith.constant 4 : index
    %c0_89 = arith.constant 0 : index
    %c0_90 = arith.constant 0 : index
    %137 = vector.load %arg10[%c4_88, %c0_89, %c0_90] : memref<9x256x512xbf16, #tpu.memory_space<vmem>>, vector<1x256x512xbf16>
    %138 = vector.shape_cast %137 : vector<1x256x512xbf16> to vector<256x512xbf16>
    %cst_91 = arith.constant dense<0.000000e+00> : vector<16x512xf32>
    %139 = tpu.matmul %136, %138, %cst_91 {dimension_numbers = #tpu.dot_dimension_numbers<[1], [0], [0], [1], [0, 0, 1, 1], [], []>} : vector<16x256xbf16>, vector<256x512xbf16>, vector<16x512xf32> -> vector<16x512xf32>
    %140 = arith.addf %135, %139 : vector<16x512xf32>
    %141 = vector.extract_strided_slice %114 {offsets = [80, 0], sizes = [16, 256], strides = [1, 1]} : vector<144x256xbf16> to vector<16x256xbf16>
    %c5_92 = arith.constant 5 : index
    %c0_93 = arith.constant 0 : index
    %c0_94 = arith.constant 0 : index
    %142 = vector.load %arg10[%c5_92, %c0_93, %c0_94] : memref<9x256x512xbf16, #tpu.memory_space<vmem>>, vector<1x256x512xbf16>
    %143 = vector.shape_cast %142 : vector<1x256x512xbf16> to vector<256x512xbf16>
    %cst_95 = arith.constant dense<0.000000e+00> : vector<16x512xf32>
    %144 = tpu.matmul %141, %143, %cst_95 {dimension_numbers = #tpu.dot_dimension_numbers<[1], [0], [0], [1], [0, 0, 1, 1], [], []>} : vector<16x256xbf16>, vector<256x512xbf16>, vector<16x512xf32> -> vector<16x512xf32>
    %145 = arith.addf %140, %144 : vector<16x512xf32>
    %146 = vector.extract_strided_slice %114 {offsets = [96, 0], sizes = [16, 256], strides = [1, 1]} : vector<144x256xbf16> to vector<16x256xbf16>
    %c6_96 = arith.constant 6 : index
    %c0_97 = arith.constant 0 : index
    %c0_98 = arith.constant 0 : index
    %147 = vector.load %arg10[%c6_96, %c0_97, %c0_98] : memref<9x256x512xbf16, #tpu.memory_space<vmem>>, vector<1x256x512xbf16>
    %148 = vector.shape_cast %147 : vector<1x256x512xbf16> to vector<256x512xbf16>
    %cst_99 = arith.constant dense<0.000000e+00> : vector<16x512xf32>
    %149 = tpu.matmul %146, %148, %cst_99 {dimension_numbers = #tpu.dot_dimension_numbers<[1], [0], [0], [1], [0, 0, 1, 1], [], []>} : vector<16x256xbf16>, vector<256x512xbf16>, vector<16x512xf32> -> vector<16x512xf32>
    %150 = arith.addf %145, %149 : vector<16x512xf32>
    %151 = vector.extract_strided_slice %114 {offsets = [112, 0], sizes = [16, 256], strides = [1, 1]} : vector<144x256xbf16> to vector<16x256xbf16>
    %c7_100 = arith.constant 7 : index
    %c0_101 = arith.constant 0 : index
    %c0_102 = arith.constant 0 : index
    %152 = vector.load %arg10[%c7_100, %c0_101, %c0_102] : memref<9x256x512xbf16, #tpu.memory_space<vmem>>, vector<1x256x512xbf16>
    %153 = vector.shape_cast %152 : vector<1x256x512xbf16> to vector<256x512xbf16>
    %cst_103 = arith.constant dense<0.000000e+00> : vector<16x512xf32>
    %154 = tpu.matmul %151, %153, %cst_103 {dimension_numbers = #tpu.dot_dimension_numbers<[1], [0], [0], [1], [0, 0, 1, 1], [], []>} : vector<16x256xbf16>, vector<256x512xbf16>, vector<16x512xf32> -> vector<16x512xf32>
    %155 = arith.addf %150, %154 : vector<16x512xf32>
    %156 = vector.extract_strided_slice %114 {offsets = [128, 0], sizes = [16, 256], strides = [1, 1]} : vector<144x256xbf16> to vector<16x256xbf16>
    %c8_104 = arith.constant 8 : index
    %c0_105 = arith.constant 0 : index
    %c0_106 = arith.constant 0 : index
    %157 = vector.load %arg10[%c8_104, %c0_105, %c0_106] : memref<9x256x512xbf16, #tpu.memory_space<vmem>>, vector<1x256x512xbf16>
    %158 = vector.shape_cast %157 : vector<1x256x512xbf16> to vector<256x512xbf16>
    %cst_107 = arith.constant dense<0.000000e+00> : vector<16x512xf32>
    %159 = tpu.matmul %156, %158, %cst_107 {dimension_numbers = #tpu.dot_dimension_numbers<[1], [0], [0], [1], [0, 0, 1, 1], [], []>} : vector<16x256xbf16>, vector<256x512xbf16>, vector<16x512xf32> -> vector<16x512xf32>
    %160 = arith.addf %155, %159 : vector<16x512xf32>
    %c0_108 = arith.constant 0 : index
    %c0_109 = arith.constant 0 : index
    %161 = vector.load %arg11[%c0_108, %c0_109] : memref<1x512xf32, #tpu.memory_space<vmem>>, vector<1x512xf32>
    %162 = vector.broadcast %161 : vector<1x512xf32> to vector<16x512xf32>
    %163 = arith.addf %160, %162 : vector<16x512xf32>
    %cst_110 = arith.constant 0.000000e+00 : f32
    %164 = vector.broadcast %cst_110 : f32 to vector<16x512xf32>
    %165 = arith.cmpf oge, %163, %164 : vector<16x512xf32>
    %cst_111 = arith.constant 2.000000e-01 : f32
    %166 = vector.broadcast %cst_111 : f32 to vector<16x512xf32>
    %167 = arith.mulf %166, %163 : vector<16x512xf32>
    %168 = arith.select %165, %163, %167 : vector<16x512xi1>, vector<16x512xf32>
    %c0_112 = arith.constant 0 : index
    %c0_113 = arith.constant 0 : index
    %169 = vector.load %arg12[%c0_112, %c0_113] : memref<1x512xf32, #tpu.memory_space<vmem>>, vector<1x512xf32>
    %170 = vector.broadcast %169 : vector<1x512xf32> to vector<16x512xf32>
    %171 = arith.mulf %168, %170 : vector<16x512xf32>
    %c0_114 = arith.constant 0 : index
    %c0_115 = arith.constant 0 : index
    %172 = vector.load %arg13[%c0_114, %c0_115] : memref<1x512xf32, #tpu.memory_space<vmem>>, vector<1x512xf32>
    %173 = vector.broadcast %172 : vector<1x512xf32> to vector<16x512xf32>
    %174 = arith.addf %171, %173 : vector<16x512xf32>
    %c0_116 = arith.constant 0 : index
    %c0_117 = arith.constant 0 : index
    %175 = vector.load %arg14[%c0_116, %c0_117] : memref<16x512xf32, #tpu.memory_space<vmem>>, vector<16x512xf32>
    %176 = arith.mulf %174, %175 : vector<16x512xf32>
    %177 = vector.extract_strided_slice %176 {offsets = [0, 0], sizes = [16, 128], strides = [1, 1]} : vector<16x512xf32> to vector<16x128xf32>
    %cst_118 = arith.constant dense<0.000000e+00> : vector<16xf32>
    %178 = vector.multi_reduction <add>, %177, %cst_118 [1] : vector<16x128xf32> to vector<16xf32>
    %179 = vector.shape_cast %178 : vector<16xf32> to vector<16x1xf32>
    %cst_119 = arith.constant dense<0.000000e+00> : vector<1xf32>
    %180 = vector.multi_reduction <add>, %179, %cst_119 [0] : vector<16x1xf32> to vector<1xf32>
    %181 = vector.shape_cast %180 : vector<1xf32> to vector<1x1xf32>
    %c0_120 = arith.constant 0 : index
    %c0_121 = arith.constant 0 : index
    %182 = vector.load %arg15[%c0_120, %c0_121] : memref<1x1xf32, #tpu.memory_space<vmem>>, vector<1x1xf32>
    %183 = arith.addf %181, %182 : vector<1x1xf32>
    %cst_122 = arith.constant 0.000000e+00 : f32
    %184 = vector.broadcast %cst_122 : f32 to vector<1x1xf32>
    %185 = arith.subf %184, %183 : vector<1x1xf32>
    %186 = math.exp %185 : vector<1x1xf32>
    %cst_123 = arith.constant 1.000000e+00 : f32
    %187 = vector.broadcast %cst_123 : f32 to vector<1x1xf32>
    %188 = arith.addf %187, %186 : vector<1x1xf32>
    %cst_124 = arith.constant 1.000000e+00 : f32
    %189 = vector.broadcast %cst_124 : f32 to vector<1x1xf32>
    %190 = arith.divf %189, %188 : vector<1x1xf32>
    %191 = vector.shape_cast %190 : vector<1x1xf32> to vector<1x1xf32>
    %192 = vector.broadcast %191 : vector<1x1xf32> to vector<1x128xf32>
    %193 = vector.extract_strided_slice %176 {offsets = [0, 128], sizes = [16, 128], strides = [1, 1]} : vector<16x512xf32> to vector<16x128xf32>
    %cst_125 = arith.constant dense<0.000000e+00> : vector<16xf32>
    %194 = vector.multi_reduction <add>, %193, %cst_125 [1] : vector<16x128xf32> to vector<16xf32>
    %195 = vector.shape_cast %194 : vector<16xf32> to vector<16x1xf32>
    %cst_126 = arith.constant dense<0.000000e+00> : vector<1xf32>
    %196 = vector.multi_reduction <add>, %195, %cst_126 [0] : vector<16x1xf32> to vector<1xf32>
    %197 = vector.shape_cast %196 : vector<1xf32> to vector<1x1xf32>
    %c0_127 = arith.constant 0 : index
    %c0_128 = arith.constant 0 : index
    %198 = vector.load %arg15[%c0_127, %c0_128] : memref<1x1xf32, #tpu.memory_space<vmem>>, vector<1x1xf32>
    %199 = arith.addf %197, %198 : vector<1x1xf32>
    %cst_129 = arith.constant 0.000000e+00 : f32
    %200 = vector.broadcast %cst_129 : f32 to vector<1x1xf32>
    %201 = arith.subf %200, %199 : vector<1x1xf32>
    %202 = math.exp %201 : vector<1x1xf32>
    %cst_130 = arith.constant 1.000000e+00 : f32
    %203 = vector.broadcast %cst_130 : f32 to vector<1x1xf32>
    %204 = arith.addf %203, %202 : vector<1x1xf32>
    %cst_131 = arith.constant 1.000000e+00 : f32
    %205 = vector.broadcast %cst_131 : f32 to vector<1x1xf32>
    %206 = arith.divf %205, %204 : vector<1x1xf32>
    %207 = vector.shape_cast %206 : vector<1x1xf32> to vector<1x1xf32>
    %208 = vector.broadcast %207 : vector<1x1xf32> to vector<1x128xf32>
    %209 = vector.extract_strided_slice %176 {offsets = [0, 256], sizes = [16, 128], strides = [1, 1]} : vector<16x512xf32> to vector<16x128xf32>
    %cst_132 = arith.constant dense<0.000000e+00> : vector<16xf32>
    %210 = vector.multi_reduction <add>, %209, %cst_132 [1] : vector<16x128xf32> to vector<16xf32>
    %211 = vector.shape_cast %210 : vector<16xf32> to vector<16x1xf32>
    %cst_133 = arith.constant dense<0.000000e+00> : vector<1xf32>
    %212 = vector.multi_reduction <add>, %211, %cst_133 [0] : vector<16x1xf32> to vector<1xf32>
    %213 = vector.shape_cast %212 : vector<1xf32> to vector<1x1xf32>
    %c0_134 = arith.constant 0 : index
    %c0_135 = arith.constant 0 : index
    %214 = vector.load %arg15[%c0_134, %c0_135] : memref<1x1xf32, #tpu.memory_space<vmem>>, vector<1x1xf32>
    %215 = arith.addf %213, %214 : vector<1x1xf32>
    %cst_136 = arith.constant 0.000000e+00 : f32
    %216 = vector.broadcast %cst_136 : f32 to vector<1x1xf32>
    %217 = arith.subf %216, %215 : vector<1x1xf32>
    %218 = math.exp %217 : vector<1x1xf32>
    %cst_137 = arith.constant 1.000000e+00 : f32
    %219 = vector.broadcast %cst_137 : f32 to vector<1x1xf32>
    %220 = arith.addf %219, %218 : vector<1x1xf32>
    %cst_138 = arith.constant 1.000000e+00 : f32
    %221 = vector.broadcast %cst_138 : f32 to vector<1x1xf32>
    %222 = arith.divf %221, %220 : vector<1x1xf32>
    %223 = vector.shape_cast %222 : vector<1x1xf32> to vector<1x1xf32>
    %224 = vector.broadcast %223 : vector<1x1xf32> to vector<1x128xf32>
    %225 = vector.extract_strided_slice %176 {offsets = [0, 384], sizes = [16, 128], strides = [1, 1]} : vector<16x512xf32> to vector<16x128xf32>
    %cst_139 = arith.constant dense<0.000000e+00> : vector<16xf32>
    %226 = vector.multi_reduction <add>, %225, %cst_139 [1] : vector<16x128xf32> to vector<16xf32>
    %227 = vector.shape_cast %226 : vector<16xf32> to vector<16x1xf32>
    %cst_140 = arith.constant dense<0.000000e+00> : vector<1xf32>
    %228 = vector.multi_reduction <add>, %227, %cst_140 [0] : vector<16x1xf32> to vector<1xf32>
    %229 = vector.shape_cast %228 : vector<1xf32> to vector<1x1xf32>
    %c0_141 = arith.constant 0 : index
    %c0_142 = arith.constant 0 : index
    %230 = vector.load %arg15[%c0_141, %c0_142] : memref<1x1xf32, #tpu.memory_space<vmem>>, vector<1x1xf32>
    %231 = arith.addf %229, %230 : vector<1x1xf32>
    %cst_143 = arith.constant 0.000000e+00 : f32
    %232 = vector.broadcast %cst_143 : f32 to vector<1x1xf32>
    %233 = arith.subf %232, %231 : vector<1x1xf32>
    %234 = math.exp %233 : vector<1x1xf32>
    %cst_144 = arith.constant 1.000000e+00 : f32
    %235 = vector.broadcast %cst_144 : f32 to vector<1x1xf32>
    %236 = arith.addf %235, %234 : vector<1x1xf32>
    %cst_145 = arith.constant 1.000000e+00 : f32
    %237 = vector.broadcast %cst_145 : f32 to vector<1x1xf32>
    %238 = arith.divf %237, %236 : vector<1x1xf32>
    %239 = vector.shape_cast %238 : vector<1x1xf32> to vector<1x1xf32>
    %240 = vector.broadcast %239 : vector<1x1xf32> to vector<1x128xf32>
    %241 = tpu.concatenate %192, %208, %224, %240 in 0 : vector<1x128xf32>, vector<1x128xf32>, vector<1x128xf32>, vector<1x128xf32> -> vector<4x128xf32>
    %c0_146 = arith.constant 0 : index
    %c0_147 = arith.constant 0 : index
    %c0_148 = arith.constant 0 : index
    %242 = vector.load %arg16[%c0_146, %c0_147, %c0_148] : memref<1x4x128xf32, #tpu.memory_space<vmem>>, vector<1x4x128xf32>
    %243 = vector.shape_cast %242 : vector<1x4x128xf32> to vector<4x128xf32>
    %244 = vector.shape_cast %241 : vector<4x128xf32> to vector<1x4x128xf32>
    tpu.vector_store %arg16[%c0_146, %c0_147, %c0_148], %244 {strides = array<i32>} : memref<1x4x128xf32, #tpu.memory_space<vmem>>, vector<1x4x128xf32>,
    return
  }
  func.func @transform_0(%arg0: i32) -> (i32, i32) {
    %c0_i32 = arith.constant 0 : i32
    %c0_i32_0 = arith.constant 0 : i32
    return %arg0, %c0_i32 : i32, i32
  }
  func.func @transform_1(%arg0: i32) -> (i32, i32) {
    %c0_i32 = arith.constant 0 : i32
    %c0_i32_0 = arith.constant 0 : i32
    %c0_i32_1 = arith.constant 0 : i32
    return %c0_i32, %c0_i32_0 : i32, i32
  }
  func.func @transform_2(%arg0: i32) -> (i32, i32) {
    %c0_i32 = arith.constant 0 : i32
    %c0_i32_0 = arith.constant 0 : i32
    %c0_i32_1 = arith.constant 0 : i32
    return %c0_i32, %c0_i32_0 : i32, i32
  }
  func.func @transform_3(%arg0: i32) -> (i32, i32) {
    %c0_i32 = arith.constant 0 : i32
    %c0_i32_0 = arith.constant 0 : i32
    %c0_i32_1 = arith.constant 0 : i32
    return %c0_i32, %c0_i32_0 : i32, i32
  }
  func.func @transform_4(%arg0: i32) -> (i32, i32, i32) {
    %c0_i32 = arith.constant 0 : i32
    %c0_i32_0 = arith.constant 0 : i32
    %c0_i32_1 = arith.constant 0 : i32
    %c0_i32_2 = arith.constant 0 : i32
    return %c0_i32, %c0_i32_0, %c0_i32_1 : i32, i32, i32
  }
  func.func @transform_5(%arg0: i32) -> (i32, i32) {
    %c0_i32 = arith.constant 0 : i32
    %c0_i32_0 = arith.constant 0 : i32
    %c0_i32_1 = arith.constant 0 : i32
    return %c0_i32, %c0_i32_0 : i32, i32
  }
  func.func @transform_6(%arg0: i32) -> (i32, i32) {
    %c0_i32 = arith.constant 0 : i32
    %c0_i32_0 = arith.constant 0 : i32
    %c0_i32_1 = arith.constant 0 : i32
    return %c0_i32, %c0_i32_0 : i32, i32
  }
  func.func @transform_7(%arg0: i32) -> (i32, i32) {
    %c0_i32 = arith.constant 0 : i32
    %c0_i32_0 = arith.constant 0 : i32
    %c0_i32_1 = arith.constant 0 : i32
    return %c0_i32, %c0_i32_0 : i32, i32
  }
  func.func @transform_8(%arg0: i32) -> (i32, i32) {
    %c0_i32 = arith.constant 0 : i32
    %c0_i32_0 = arith.constant 0 : i32
    %c0_i32_1 = arith.constant 0 : i32
    return %c0_i32, %c0_i32_0 : i32, i32
  }
  func.func @transform_9(%arg0: i32) -> (i32, i32, i32) {
    %c0_i32 = arith.constant 0 : i32
    %c0_i32_0 = arith.constant 0 : i32
    %c0_i32_1 = arith.constant 0 : i32
    %c0_i32_2 = arith.constant 0 : i32
    return %c0_i32, %c0_i32_0, %c0_i32_1 : i32, i32, i32
  }
  func.func @transform_10(%arg0: i32) -> (i32, i32) {
    %c0_i32 = arith.constant 0 : i32
    %c0_i32_0 = arith.constant 0 : i32
    %c0_i32_1 = arith.constant 0 : i32
    return %c0_i32, %c0_i32_0 : i32, i32
  }
  func.func @transform_11(%arg0: i32) -> (i32, i32) {
    %c0_i32 = arith.constant 0 : i32
    %c0_i32_0 = arith.constant 0 : i32
    %c0_i32_1 = arith.constant 0 : i32
    return %c0_i32, %c0_i32_0 : i32, i32
  }
  func.func @transform_12(%arg0: i32) -> (i32, i32) {
    %c0_i32 = arith.constant 0 : i32
    %c0_i32_0 = arith.constant 0 : i32
    %c0_i32_1 = arith.constant 0 : i32
    return %c0_i32, %c0_i32_0 : i32, i32
  }
  func.func @transform_13(%arg0: i32) -> (i32, i32) {
    %c0_i32 = arith.constant 0 : i32
    %c0_i32_0 = arith.constant 0 : i32
    %c0_i32_1 = arith.constant 0 : i32
    return %c0_i32, %c0_i32_0 : i32, i32
  }
  func.func @transform_14(%arg0: i32) -> (i32, i32) {
    %c0_i32 = arith.constant 0 : i32
    %c0_i32_0 = arith.constant 0 : i32
    %c0_i32_1 = arith.constant 0 : i32
    return %c0_i32, %c0_i32_0 : i32, i32
  }
  func.func @transform_15(%arg0: i32) -> (i32, i32, i32) {
    %c0_i32 = arith.constant 0 : i32
    %c0_i32_0 = arith.constant 0 : i32
    %c0_i32_1 = arith.constant 0 : i32
    return %arg0, %c0_i32, %c0_i32_0 : i32, i32, i32
  }
}

</mosaic_0001>

<llo_original>
// kernel: discriminator_forward.1
$region0: #{discriminator_forward.1}
  #allocation0 [shape = 'u32[]', space=smem, size = 0x4, offset = 0x4, fixed_abs, tag = 'smem constant byte address 0x4 - core index']
  #allocation1 [shape = 'u32[72,128]{1,0:T(1,128)}', space=vmem, size = 0x9000, scoped, tag = 'internal scratch']
  #allocation2 [shape = 'f32[1,1]{1,0:T(1,128)S(1)}', space=vmem, size = 0x200, scoped, tag = 'scoped memory for discriminator_forward.1']
  %s0 = inlined_call_operand.vmem [shape: f32[256,64], index: 0, kind: input, shape index: {}]
  %s1 = inlined_call_operand.vmem [shape: bf16[64,128], index: 1, kind: input, shape index: {}]
  %s2 = inlined_call_operand.vmem [shape: f32[1,128], index: 2, kind: input, shape index: {}]
  %s3 = inlined_call_operand.vmem [shape: bf16[1024,256], index: 3, kind: input, shape index: {}]
  %s4 = inlined_call_operand.vmem [shape: bf16[16,128,256], index: 4, kind: input, shape index: {}]
  %s5 = inlined_call_operand.vmem [shape: f32[1,256], index: 5, kind: input, shape index: {}]
  %s6 = inlined_call_operand.vmem [shape: f32[1,256], index: 6, kind: input, shape index: {}]
  %s7 = inlined_call_operand.vmem [shape: f32[1,256], index: 7, kind: input, shape index: {}]
  %s8 = inlined_call_operand.vmem [shape: bf16[144,64], index: 8, kind: input, shape index: {}]
  %s9 = inlined_call_operand.vmem [shape: bf16[9,256,512], index: 9, kind: input, shape index: {}]
  %s10 = inlined_call_operand.vmem [shape: f32[1,512], index: 10, kind: input, shape index: {}]
  %s11 = inlined_call_operand.vmem [shape: f32[1,512], index: 11, kind: input, shape index: {}]
  %s12 = inlined_call_operand.vmem [shape: f32[1,512], index: 12, kind: input, shape index: {}]
  %s13 = inlined_call_operand.vmem [shape: f32[16,512], index: 13, kind: input, shape index: {}]
  %s14 = inlined_call_operand.<no memory space> [shape: f32[1,1], index: 14, kind: input, shape index: {}]
  %s15 = inlined_call_operand.vmem [shape: f32[1,4,128], index: 15, kind: output, shape index: {}]
  %s16 = sld [smem:[#allocation0]]
  $region70: #{discriminator_forward.1} parent=0
    _
  %s18 = ssub.s32 1, %s16
  %s19 = scalar_select 0, %s18, %s16
  %v20 = vstv %s14
  %21 = vst [vmem:[#allocation2] sm:$0x1] %v20
  // Predicated region
  $region2: #{discriminator_forward.1} parent=0 // pred_check
    _
  $region3: #{discriminator_forward.1} parent=0 // pred_check_branch
    %23 = sbr.rel (0) target = $region5
  $region4: #{discriminator_forward.1} parent=0 // pred_region
    _
  $region5: #{discriminator_forward.1} parent=0 // pred_fallthru
    _
  // Predicated region
  $region6: #{discriminator_forward.1} parent=0 // pred_check
    _
  $region7: #{discriminator_forward.1} parent=0 // pred_check_branch
    %25 = sbr.rel (0) target = $region9
  $region8: #{discriminator_forward.1} parent=0 // pred_region
    _
  $region9: #{discriminator_forward.1} parent=0 // pred_fallthru
    _
  // Predicated region
  $region10: #{discriminator_forward.1} parent=0 // pred_check
    _
  $region11: #{discriminator_forward.1} parent=0 // pred_check_branch
    %27 = sbr.rel (0) target = $region13
  $region12: #{discriminator_forward.1} parent=0 // pred_region
    _
  $region13: #{discriminator_forward.1} parent=0 // pred_fallthru
    _
  // Predicated region
  $region14: #{discriminator_forward.1} parent=0 // pred_check
    _
  $region15: #{discriminator_forward.1} parent=0 // pred_check_branch
    %29 = sbr.rel (0) target = $region17
  $region16: #{discriminator_forward.1} parent=0 // pred_region
    _
  $region17: #{discriminator_forward.1} parent=0 // pred_fallthru
    _
  // Predicated region
  $region18: #{discriminator_forward.1} parent=0 // pred_check
    _
  $region19: #{discriminator_forward.1} parent=0 // pred_check_branch
    %31 = sbr.rel (0) target = $region21
  $region20: #{discriminator_forward.1} parent=0 // pred_region
    _
  $region21: #{discriminator_forward.1} parent=0 // pred_fallthru
    _
  // Predicated region
  $region22: #{discriminator_forward.1} parent=0 // pred_check
    _
  $region23: #{discriminator_forward.1} parent=0 // pred_check_branch
    %33 = sbr.rel (0) target = $region25
  $region24: #{discriminator_forward.1} parent=0 // pred_region
    _
  $region25: #{discriminator_forward.1} parent=0 // pred_fallthru
    _
  // Predicated region
  $region26: #{discriminator_forward.1} parent=0 // pred_check
    _
  $region27: #{discriminator_forward.1} parent=0 // pred_check_branch
    %35 = sbr.rel (0) target = $region29
  $region28: #{discriminator_forward.1} parent=0 // pred_region
    _
  $region29: #{discriminator_forward.1} parent=0 // pred_fallthru
    _
  // Predicated region
  $region30: #{discriminator_forward.1} parent=0 // pred_check
    _
  $region31: #{discriminator_forward.1} parent=0 // pred_check_branch
    %37 = sbr.rel (0) target = $region33
  $region32: #{discriminator_forward.1} parent=0 // pred_region
    _
  $region33: #{discriminator_forward.1} parent=0 // pred_fallthru
    _
  // Predicated region
  $region34: #{discriminator_forward.1} parent=0 // pred_check
    _
  $region35: #{discriminator_forward.1} parent=0 // pred_check_branch
    %39 = sbr.rel (0) target = $region37
  $region36: #{discriminator_forward.1} parent=0 // pred_region
    _
  $region37: #{discriminator_forward.1} parent=0 // pred_fallthru
    _
  // Predicated region
  $region38: #{discriminator_forward.1} parent=0 // pred_check
    _
  $region39: #{discriminator_forward.1} parent=0 // pred_check_branch
    %41 = sbr.rel (0) target = $region41
  $region40: #{discriminator_forward.1} parent=0 // pred_region
    _
  $region41: #{discriminator_forward.1} parent=0 // pred_fallthru
    _
  // Predicated region
  $region42: #{discriminator_forward.1} parent=0 // pred_check
    _
  $region43: #{discriminator_forward.1} parent=0 // pred_check_branch
    %43 = sbr.rel (0) target = $region45
  $region44: #{discriminator_forward.1} parent=0 // pred_region
    _
  $region45: #{discriminator_forward.1} parent=0 // pred_fallthru
    _
  // Predicated region
  $region46: #{discriminator_forward.1} parent=0 // pred_check
    _
  $region47: #{discriminator_forward.1} parent=0 // pred_check_branch
    %45 = sbr.rel (0) target = $region49
  $region48: #{discriminator_forward.1} parent=0 // pred_region
    _
  $region49: #{discriminator_forward.1} parent=0 // pred_fallthru
    _
  // Predicated region
  $region50: #{discriminator_forward.1} parent=0 // pred_check
    _
  $region51: #{discriminator_forward.1} parent=0 // pred_check_branch
    %47 = sbr.rel (0) target = $region53
  $region52: #{discriminator_forward.1} parent=0 // pred_region
    _
  $region53: #{discriminator_forward.1} parent=0 // pred_fallthru
    _
  // Predicated region
  $region54: #{discriminator_forward.1} parent=0 // pred_check
    _
  $region55: #{discriminator_forward.1} parent=0 // pred_check_branch
    %49 = sbr.rel (0) target = $region57
  $region56: #{discriminator_forward.1} parent=0 // pred_region
    _
  $region57: #{discriminator_forward.1} parent=0 // pred_fallthru
    _
  // Predicated region
  $region58: #{discriminator_forward.1} parent=0 // pred_check
    _
  $region59: #{discriminator_forward.1} parent=0 // pred_check_branch
    %51 = sbr.rel (0) target = $region61
  $region60: #{discriminator_forward.1} parent=0 // pred_region
    _
  $region61: #{discriminator_forward.1} parent=0 // pred_fallthru
    _
  %v53 = vld [vmem:[%s0] sm:$0xff]
  %v54 = vld [vmem:[%s0 + $0x8] sm:$0xff]
  %v55 = vld [vmem:[%s0 + $0x10] sm:$0xff]
  %v56 = vld [vmem:[%s0 + $0x18] sm:$0xff]
  %v57 = vld [vmem:[%s0 + $0x20] sm:$0xff]
  %v58 = vld [vmem:[%s0 + $0x28] sm:$0xff]
  %v59 = vld [vmem:[%s0 + $0x30] sm:$0xff]
  %v60 = vld [vmem:[%s0 + $0x38] sm:$0xff]
  %v61 = vld [vmem:[%s0 + $0x40] sm:$0xff]
  %v62 = vld [vmem:[%s0 + $0x48] sm:$0xff]
  %v63 = vld [vmem:[%s0 + $0x50] sm:$0xff]
  %v64 = vld [vmem:[%s0 + $0x58] sm:$0xff]
  %v65 = vld [vmem:[%s0 + $0x60] sm:$0xff]
  %v66 = vld [vmem:[%s0 + $0x68] sm:$0xff]
  %v67 = vld [vmem:[%s0 + $0x70] sm:$0xff]
  %v68 = vld [vmem:[%s0 + $0x78] sm:$0xff]
  %v69 = vld [vmem:[%s0 + $0x80] sm:$0xff]
  %v70 = vld [vmem:[%s0 + $0x88] sm:$0xff]
  %v71 = vld [vmem:[%s0 + $0x90] sm:$0xff]
  %v72 = vld [vmem:[%s0 + $0x98] sm:$0xff]
  %v73 = vld [vmem:[%s0 + $0xa0] sm:$0xff]
  %v74 = vld [vmem:[%s0 + $0xa8] sm:$0xff]
  %v75 = vld [vmem:[%s0 + $0xb0] sm:$0xff]
  %v76 = vld [vmem:[%s0 + $0xb8] sm:$0xff]
  %v77 = vld [vmem:[%s0 + $0xc0] sm:$0xff]
  %v78 = vld [vmem:[%s0 + $0xc8] sm:$0xff]
  %v79 = vld [vmem:[%s0 + $0xd0] sm:$0xff]
  %v80 = vld [vmem:[%s0 + $0xd8] sm:$0xff]
  %v81 = vld [vmem:[%s0 + $0xe0] sm:$0xff]
  %v82 = vld [vmem:[%s0 + $0xe8] sm:$0xff]
  %v83 = vld [vmem:[%s0 + $0xf0] sm:$0xff]
  %v84 = vld [vmem:[%s0 + $0xf8] sm:$0xff]
  %v85 = vpack.c.bf16 %v54, %v53
  %v86 = vpack.c.bf16 %v56, %v55
  %v87 = vpack.c.bf16 %v58, %v57
  %v88 = vpack.c.bf16 %v60, %v59
  %v89 = vpack.c.bf16 %v62, %v61
  %v90 = vpack.c.bf16 %v64, %v63
  %v91 = vpack.c.bf16 %v66, %v65
  %v92 = vpack.c.bf16 %v68, %v67
  %v93 = vpack.c.bf16 %v70, %v69
  %v94 = vpack.c.bf16 %v72, %v71
  %v95 = vpack.c.bf16 %v74, %v73
  %v96 = vpack.c.bf16 %v76, %v75
  %v97 = vpack.c.bf16 %v78, %v77
  %v98 = vpack.c.bf16 %v80, %v79
  %v99 = vpack.c.bf16 %v82, %v81
  %v100 = vpack.c.bf16 %v84, %v83
  %v101 = vld [vmem:[%s1] sm:$0xf]
  %v102 = vld [vmem:[%s1 + $0x4] sm:$0xf]
  %v103 = vld [vmem:[%s1 + $0x8] sm:$0xf]
  %v104 = vld [vmem:[%s1 + $0xc] sm:$0xf]
  %v105 = vld [vmem:[%s1 + $0x10] sm:$0xf]
  %v106 = vld [vmem:[%s1 + $0x14] sm:$0xf]
  %v107 = vld [vmem:[%s1 + $0x18] sm:$0xf]
  %v108 = vld [vmem:[%s1 + $0x1c] sm:$0xf]
  %v109 = vld [vmem:[%s2] sm:$0x1]
  %v111 = vperm.slane %v109, 0
  %v121 = vunpack.c.l.b16 %v101
  %v122 = vunpack.c.l.b16 %v102
  %v123 = vunpack.c.l.b16 %v103
  %v124 = vunpack.c.l.b16 %v104
  %v125 = vunpack.c.l.b16 %v105
  %v126 = vunpack.c.l.b16 %v106
  %v127 = vunpack.c.l.b16 %v107
  %v128 = vunpack.c.l.b16 %v108
  %v129 = vpack.c.b16 %v122, %v121
  %v130 = vpack.c.b16 %v124, %v123
  %v131 = vpack.c.b16 %v126, %v125
  %v132 = vpack.c.b16 %v128, %v127
  %vm137 = vcmask 523264
  %v139 = vsel %vm137, %v85, 0
  %v142 = vsel %vm137, %v86, 0
  %v145 = vsel %vm137, %v87, 0
  %v148 = vsel %vm137, %v88, 0
  %v151 = vsel %vm137, %v89, 0
  %v154 = vsel %vm137, %v90, 0
  %v157 = vsel %vm137, %v91, 0
  %v160 = vsel %vm137, %v92, 0
  %v163 = vsel %vm137, %v93, 0
  %v166 = vsel %vm137, %v94, 0
  %v169 = vsel %vm137, %v95, 0
  %v172 = vsel %vm137, %v96, 0
  %v175 = vsel %vm137, %v97, 0
  %v178 = vsel %vm137, %v98, 0
  %v181 = vsel %vm137, %v99, 0
  %v184 = vsel %vm137, %v100, 0
  %186 = vmatpush.bf16.msra.mxu0 0
  %187 = vmatpush.bf16.msra.mxu0 0
  %188 = vmatpush.bf16.msra.mxu0 0
  %189 = vmatpush.bf16.msra.mxu0 0
  %190 = vmatpush.bf16.msra.mxu0 %v132
  %191 = vmatpush.bf16.msra.mxu0 %v131
  %192 = vmatpush.bf16.msra.mxu0 %v130
  %193 = vmatpush.bf16.msra.mxu0 %v129
  %194 = vmatmul.bf16.gmra.mxu0 %v139
  %v195 = vpop.f32.mrf.mxu0
  %v196 = vadd.f32 %v111, %v195
  %v197 = vpop.f32.mrf.mxu0
  %v198 = vadd.f32 %v111, %v197
  %199 = vmatmul.bf16.gmra.mxu0 %v142
  %v200 = vpop.f32.mrf.mxu0
  %v201 = vadd.f32 %v111, %v200
  %v202 = vpop.f32.mrf.mxu0
  %v203 = vadd.f32 %v111, %v202
  %204 = vmatmul.bf16.gmra.mxu0 %v145
  %v205 = vpop.f32.mrf.mxu0
  %v206 = vadd.f32 %v111, %v205
  %v207 = vpop.f32.mrf.mxu0
  %v208 = vadd.f32 %v111, %v207
  %209 = vmatmul.bf16.gmra.mxu0 %v148
  %v210 = vpop.f32.mrf.mxu0
  %v211 = vadd.f32 %v111, %v210
  %v212 = vpop.f32.mrf.mxu0
  %v213 = vadd.f32 %v111, %v212
  %214 = vmatmul.bf16.gmra.mxu0 %v151
  %v215 = vpop.f32.mrf.mxu0
  %v216 = vadd.f32 %v111, %v215
  %v217 = vpop.f32.mrf.mxu0
  %v218 = vadd.f32 %v111, %v217
  %219 = vmatmul.bf16.gmra.mxu0 %v154
  %v220 = vpop.f32.mrf.mxu0
  %v221 = vadd.f32 %v111, %v220
  %v222 = vpop.f32.mrf.mxu0
  %v223 = vadd.f32 %v111, %v222
  %224 = vmatmul.bf16.gmra.mxu0 %v157
  %v225 = vpop.f32.mrf.mxu0
  %v226 = vadd.f32 %v111, %v225
  %v227 = vpop.f32.mrf.mxu0
  %v228 = vadd.f32 %v111, %v227
  %229 = vmatmul.bf16.gmra.mxu0 %v160
  %v230 = vpop.f32.mrf.mxu0
  %v231 = vadd.f32 %v111, %v230
  %v232 = vpop.f32.mrf.mxu0
  %v233 = vadd.f32 %v111, %v232
  %234 = vmatmul.bf16.gmra.mxu0 %v163
  %v235 = vpop.f32.mrf.mxu0
  %v236 = vadd.f32 %v111, %v235
  %v237 = vpop.f32.mrf.mxu0
  %v238 = vadd.f32 %v111, %v237
  %239 = vmatmul.bf16.gmra.mxu0 %v166
  %v240 = vpop.f32.mrf.mxu0
  %v241 = vadd.f32 %v111, %v240
  %v242 = vpop.f32.mrf.mxu0
  %v243 = vadd.f32 %v111, %v242
  %244 = vmatmul.bf16.gmra.mxu0 %v169
  %v245 = vpop.f32.mrf.mxu0
  %v246 = vadd.f32 %v111, %v245
  %v247 = vpop.f32.mrf.mxu0
  %v248 = vadd.f32 %v111, %v247
  %249 = vmatmul.bf16.gmra.mxu0 %v172
  %v250 = vpop.f32.mrf.mxu0
  %v251 = vadd.f32 %v111, %v250
  %v252 = vpop.f32.mrf.mxu0
  %v253 = vadd.f32 %v111, %v252
  %254 = vmatmul.bf16.gmra.mxu0 %v175
  %v255 = vpop.f32.mrf.mxu0
  %v256 = vadd.f32 %v111, %v255
  %v257 = vpop.f32.mrf.mxu0
  %v258 = vadd.f32 %v111, %v257
  %259 = vmatmul.bf16.gmra.mxu0 %v178
  %v260 = vpop.f32.mrf.mxu0
  %v261 = vadd.f32 %v111, %v260
  %v262 = vpop.f32.mrf.mxu0
  %v263 = vadd.f32 %v111, %v262
  %264 = vmatmul.bf16.gmra.mxu0 %v181
  %v265 = vpop.f32.mrf.mxu0
  %v266 = vadd.f32 %v111, %v265
  %v267 = vpop.f32.mrf.mxu0
  %v268 = vadd.f32 %v111, %v267
  %269 = vmatmul.bf16.gmra.mxu0 %v184
  %v270 = vpop.f32.mrf.mxu0
  %v271 = vadd.f32 %v111, %v270
  %v272 = vpop.f32.mrf.mxu0
  %v273 = vadd.f32 %v111, %v272
  %274 = vdwg.mxu0
  %vm275 = vcmp.ge.f32.partialorder %v196, 0.0
  %vm276 = vcmp.ge.f32.partialorder %v198, 0.0
  %vm277 = vcmp.ge.f32.partialorder %v201, 0.0
  %vm278 = vcmp.ge.f32.partialorder %v203, 0.0
  %vm279 = vcmp.ge.f32.partialorder %v206, 0.0
  %vm280 = vcmp.ge.f32.partialorder %v208, 0.0
  %vm281 = vcmp.ge.f32.partialorder %v211, 0.0
  %vm282 = vcmp.ge.f32.partialorder %v213, 0.0
  %vm283 = vcmp.ge.f32.partialorder %v216, 0.0
  %vm284 = vcmp.ge.f32.partialorder %v218, 0.0
  %vm285 = vcmp.ge.f32.partialorder %v221, 0.0
  %vm286 = vcmp.ge.f32.partialorder %v223, 0.0
  %vm287 = vcmp.ge.f32.partialorder %v226, 0.0
  %vm288 = vcmp.ge.f32.partialorder %v228, 0.0
  %vm289 = vcmp.ge.f32.partialorder %v231, 0.0
  %vm290 = vcmp.ge.f32.partialorder %v233, 0.0
  %vm291 = vcmp.ge.f32.partialorder %v236, 0.0
  %vm292 = vcmp.ge.f32.partialorder %v238, 0.0
  %vm293 = vcmp.ge.f32.partialorder %v241, 0.0
  %vm294 = vcmp.ge.f32.partialorder %v243, 0.0
  %vm295 = vcmp.ge.f32.partialorder %v246, 0.0
  %vm296 = vcmp.ge.f32.partialorder %v248, 0.0
  %vm297 = vcmp.ge.f32.partialorder %v251, 0.0
  %vm298 = vcmp.ge.f32.partialorder %v253, 0.0
  %vm299 = vcmp.ge.f32.partialorder %v256, 0.0
  %vm300 = vcmp.ge.f32.partialorder %v258, 0.0
  %vm301 = vcmp.ge.f32.partialorder %v261, 0.0
  %vm302 = vcmp.ge.f32.partialorder %v263, 0.0
  %vm303 = vcmp.ge.f32.partialorder %v266, 0.0
  %vm304 = vcmp.ge.f32.partialorder %v268, 0.0
  %vm305 = vcmp.ge.f32.partialorder %v271, 0.0
  %vm306 = vcmp.ge.f32.partialorder %v273, 0.0
  %v307 = vmul.f32 %v196, 0.2
  %v308 = vmul.f32 %v198, 0.2
  %v309 = vmul.f32 %v201, 0.2
  %v310 = vmul.f32 %v203, 0.2
  %v311 = vmul.f32 %v206, 0.2
  %v312 = vmul.f32 %v208, 0.2
  %v313 = vmul.f32 %v211, 0.2
  %v314 = vmul.f32 %v213, 0.2
  %v315 = vmul.f32 %v216, 0.2
  %v316 = vmul.f32 %v218, 0.2
  %v317 = vmul.f32 %v221, 0.2
  %v318 = vmul.f32 %v223, 0.2
  %v319 = vmul.f32 %v226, 0.2
  %v320 = vmul.f32 %v228, 0.2
  %v321 = vmul.f32 %v231, 0.2
  %v322 = vmul.f32 %v233, 0.2
  %v323 = vmul.f32 %v236, 0.2
  %v324 = vmul.f32 %v238, 0.2
  %v325 = vmul.f32 %v241, 0.2
  %v326 = vmul.f32 %v243, 0.2
  %v327 = vmul.f32 %v246, 0.2
  %v328 = vmul.f32 %v248, 0.2
  %v329 = vmul.f32 %v251, 0.2
  %v330 = vmul.f32 %v253, 0.2
  %v331 = vmul.f32 %v256, 0.2
  %v332 = vmul.f32 %v258, 0.2
  %v333 = vmul.f32 %v261, 0.2
  %v334 = vmul.f32 %v263, 0.2
  %v335 = vmul.f32 %v266, 0.2
  %v336 = vmul.f32 %v268, 0.2
  %v337 = vmul.f32 %v271, 0.2
  %v338 = vmul.f32 %v273, 0.2
  %v339 = vsel %vm275, %v196, %v307
  %v340 = vsel %vm276, %v198, %v308
  %v341 = vsel %vm277, %v201, %v309
  %v342 = vsel %vm278, %v203, %v310
  %v343 = vsel %vm279, %v206, %v311
  %v344 = vsel %vm280, %v208, %v312
  %v345 = vsel %vm281, %v211, %v313
  %v346 = vsel %vm282, %v213, %v314
  %v347 = vsel %vm283, %v216, %v315
  %v348 = vsel %vm284, %v218, %v316
  %v349 = vsel %vm285, %v221, %v317
  %v350 = vsel %vm286, %v223, %v318
  %v351 = vsel %vm287, %v226, %v319
  %v352 = vsel %vm288, %v228, %v320
  %v353 = vsel %vm289, %v231, %v321
  %v354 = vsel %vm290, %v233, %v322
  %v355 = vsel %vm291, %v236, %v323
  %v356 = vsel %vm292, %v238, %v324
  %v357 = vsel %vm293, %v241, %v325
  %v358 = vsel %vm294, %v243, %v326
  %v359 = vsel %vm295, %v246, %v327
  %v360 = vsel %vm296, %v248, %v328
  %v361 = vsel %vm297, %v251, %v329
  %v362 = vsel %vm298, %v253, %v330
  %v363 = vsel %vm299, %v256, %v331
  %v364 = vsel %vm300, %v258, %v332
  %v365 = vsel %vm301, %v261, %v333
  %v366 = vsel %vm302, %v263, %v334
  %v367 = vsel %vm303, %v266, %v335
  %v368 = vsel %vm304, %v268, %v336
  %v369 = vsel %vm305, %v271, %v337
  %v370 = vsel %vm306, %v273, %v338
  %v371 = vpack.c.bf16 %v340, %v339
  %v372 = vpack.c.bf16 %v342, %v341
  %v373 = vpack.c.bf16 %v344, %v343
  %v374 = vpack.c.bf16 %v346, %v345
  %v375 = vpack.c.bf16 %v348, %v347
  %v376 = vpack.c.bf16 %v350, %v349
  %v377 = vpack.c.bf16 %v352, %v351
  %v378 = vpack.c.bf16 %v354, %v353
  %v379 = vpack.c.bf16 %v356, %v355
  %v380 = vpack.c.bf16 %v358, %v357
  %v381 = vpack.c.bf16 %v360, %v359
  %v382 = vpack.c.bf16 %v362, %v361
  %v383 = vpack.c.bf16 %v364, %v363
  %v384 = vpack.c.bf16 %v366, %v365
  %v385 = vpack.c.bf16 %v368, %v367
  %v386 = vpack.c.bf16 %v370, %v369
  %v387 = vld [vmem:[%s3] sm:$0xff]
  %v388 = vld [vmem:[%s3 + $0x8] sm:$0xff]
  %v389 = vld [vmem:[%s3 + $0x10] sm:$0xff]
  %v390 = vld [vmem:[%s3 + $0x18] sm:$0xff]
  %v391 = vld [vmem:[%s3 + $0x20] sm:$0xff]
  %v392 = vld [vmem:[%s3 + $0x28] sm:$0xff]
  %v393 = vld [vmem:[%s3 + $0x30] sm:$0xff]
  %v394 = vld [vmem:[%s3 + $0x38] sm:$0xff]
  %v395 = vld [vmem:[%s3 + $0x40] sm:$0xff]
  %v396 = vld [vmem:[%s3 + $0x48] sm:$0xff]
  %v397 = vld [vmem:[%s3 + $0x50] sm:$0xff]
  %v398 = vld [vmem:[%s3 + $0x58] sm:$0xff]
  %v399 = vld [vmem:[%s3 + $0x60] sm:$0xff]
  %v400 = vld [vmem:[%s3 + $0x68] sm:$0xff]
  %v401 = vld [vmem:[%s3 + $0x70] sm:$0xff]
  %v402 = vld [vmem:[%s3 + $0x78] sm:$0xff]
  %v403 = vld [vmem:[%s3 + $0x80] sm:$0xff]
  %v404 = vld [vmem:[%s3 + $0x88] sm:$0xff]
  %v405 = vld [vmem:[%s3 + $0x90] sm:$0xff]
  %v406 = vld [vmem:[%s3 + $0x98] sm:$0xff]
  %v407 = vld [vmem:[%s3 + $0xa0] sm:$0xff]
  %v408 = vld [vmem:[%s3 + $0xa8] sm:$0xff]
  %v409 = vld [vmem:[%s3 + $0xb0] sm:$0xff]
  %v410 = vld [vmem:[%s3 + $0xb8] sm:$0xff]
  %v411 = vld [vmem:[%s3 + $0xc0] sm:$0xff]
  %v412 = vld [vmem:[%s3 + $0xc8] sm:$0xff]
  %v413 = vld [vmem:[%s3 + $0xd0] sm:$0xff]
  %v414 = vld [vmem:[%s3 + $0xd8] sm:$0xff]
  %v415 = vld [vmem:[%s3 + $0xe0] sm:$0xff]
  %v416 = vld [vmem:[%s3 + $0xe8] sm:$0xff]
  %v417 = vld [vmem:[%s3 + $0xf0] sm:$0xff]
  %v418 = vld [vmem:[%s3 + $0xf8] sm:$0xff]
  %v419 = vld [vmem:[%s3 + $0x100] sm:$0xff]
  %v420 = vld [vmem:[%s3 + $0x108] sm:$0xff]
  %v421 = vld [vmem:[%s3 + $0x110] sm:$0xff]
  %v422 = vld [vmem:[%s3 + $0x118] sm:$0xff]
  %v423 = vld [vmem:[%s3 + $0x120] sm:$0xff]
  %v424 = vld [vmem:[%s3 + $0x128] sm:$0xff]
  %v425 = vld [vmem:[%s3 + $0x130] sm:$0xff]
  %v426 = vld [vmem:[%s3 + $0x138] sm:$0xff]
  %v427 = vld [vmem:[%s3 + $0x140] sm:$0xff]
  %v428 = vld [vmem:[%s3 + $0x148] sm:$0xff]
  %v429 = vld [vmem:[%s3 + $0x150] sm:$0xff]
  %v430 = vld [vmem:[%s3 + $0x158] sm:$0xff]
  %v431 = vld [vmem:[%s3 + $0x160] sm:$0xff]
  %v432 = vld [vmem:[%s3 + $0x168] sm:$0xff]
  %v433 = vld [vmem:[%s3 + $0x170] sm:$0xff]
  %v434 = vld [vmem:[%s3 + $0x178] sm:$0xff]
  %v435 = vld [vmem:[%s3 + $0x180] sm:$0xff]
  %v436 = vld [vmem:[%s3 + $0x188] sm:$0xff]
  %v437 = vld [vmem:[%s3 + $0x190] sm:$0xff]
  %v438 = vld [vmem:[%s3 + $0x198] sm:$0xff]
  %v439 = vld [vmem:[%s3 + $0x1a0] sm:$0xff]
  %v440 = vld [vmem:[%s3 + $0x1a8] sm:$0xff]
  %v441 = vld [vmem:[%s3 + $0x1b0] sm:$0xff]
  %v442 = vld [vmem:[%s3 + $0x1b8] sm:$0xff]
  %v443 = vld [vmem:[%s3 + $0x1c0] sm:$0xff]
  %v444 = vld [vmem:[%s3 + $0x1c8] sm:$0xff]
  %v445 = vld [vmem:[%s3 + $0x1d0] sm:$0xff]
  %v446 = vld [vmem:[%s3 + $0x1d8] sm:$0xff]
  %v447 = vld [vmem:[%s3 + $0x1e0] sm:$0xff]
  %v448 = vld [vmem:[%s3 + $0x1e8] sm:$0xff]
  %v449 = vld [vmem:[%s3 + $0x1f0] sm:$0xff]
  %v450 = vld [vmem:[%s3 + $0x1f8] sm:$0xff]
  %v451 = vld [vmem:[%s3 + $0x200] sm:$0xff]
  %v452 = vld [vmem:[%s3 + $0x208] sm:$0xff]
  %v453 = vld [vmem:[%s3 + $0x210] sm:$0xff]
  %v454 = vld [vmem:[%s3 + $0x218] sm:$0xff]
  %v455 = vld [vmem:[%s3 + $0x220] sm:$0xff]
  %v456 = vld [vmem:[%s3 + $0x228] sm:$0xff]
  %v457 = vld [vmem:[%s3 + $0x230] sm:$0xff]
  %v458 = vld [vmem:[%s3 + $0x238] sm:$0xff]
  %v459 = vld [vmem:[%s3 + $0x240] sm:$0xff]
  %v460 = vld [vmem:[%s3 + $0x248] sm:$0xff]
  %v461 = vld [vmem:[%s3 + $0x250] sm:$0xff]
  %v462 = vld [vmem:[%s3 + $0x258] sm:$0xff]
  %v463 = vld [vmem:[%s3 + $0x260] sm:$0xff]
  %v464 = vld [vmem:[%s3 + $0x268] sm:$0xff]
  %v465 = vld [vmem:[%s3 + $0x270] sm:$0xff]
  %v466 = vld [vmem:[%s3 + $0x278] sm:$0xff]
  %v467 = vld [vmem:[%s3 + $0x280] sm:$0xff]
  %v468 = vld [vmem:[%s3 + $0x288] sm:$0xff]
  %v469 = vld [vmem:[%s3 + $0x290] sm:$0xff]
  %v470 = vld [vmem:[%s3 + $0x298] sm:$0xff]
  %v471 = vld [vmem:[%s3 + $0x2a0] sm:$0xff]
  %v472 = vld [vmem:[%s3 + $0x2a8] sm:$0xff]
  %v473 = vld [vmem:[%s3 + $0x2b0] sm:$0xff]
  %v474 = vld [vmem:[%s3 + $0x2b8] sm:$0xff]
  %v475 = vld [vmem:[%s3 + $0x2c0] sm:$0xff]
  %v476 = vld [vmem:[%s3 + $0x2c8] sm:$0xff]
  %v477 = vld [vmem:[%s3 + $0x2d0] sm:$0xff]
  %v478 = vld [vmem:[%s3 + $0x2d8] sm:$0xff]
  %v479 = vld [vmem:[%s3 + $0x2e0] sm:$0xff]
  %v480 = vld [vmem:[%s3 + $0x2e8] sm:$0xff]
  %v481 = vld [vmem:[%s3 + $0x2f0] sm:$0xff]
  %v482 = vld [vmem:[%s3 + $0x2f8] sm:$0xff]
  %v483 = vld [vmem:[%s3 + $0x300] sm:$0xff]
  %v484 = vld [vmem:[%s3 + $0x308] sm:$0xff]
  %v485 = vld [vmem:[%s3 + $0x310] sm:$0xff]
  %v486 = vld [vmem:[%s3 + $0x318] sm:$0xff]
  %v487 = vld [vmem:[%s3 + $0x320] sm:$0xff]
  %v488 = vld [vmem:[%s3 + $0x328] sm:$0xff]
  %v489 = vld [vmem:[%s3 + $0x330] sm:$0xff]
  %v490 = vld [vmem:[%s3 + $0x338] sm:$0xff]
  %v491 = vld [vmem:[%s3 + $0x340] sm:$0xff]
  %v492 = vld [vmem:[%s3 + $0x348] sm:$0xff]
  %v493 = vld [vmem:[%s3 + $0x350] sm:$0xff]
  %v494 = vld [vmem:[%s3 + $0x358] sm:$0xff]
  %v495 = vld [vmem:[%s3 + $0x360] sm:$0xff]
  %v496 = vld [vmem:[%s3 + $0x368] sm:$0xff]
  %v497 = vld [vmem:[%s3 + $0x370] sm:$0xff]
  %v498 = vld [vmem:[%s3 + $0x378] sm:$0xff]
  %v499 = vld [vmem:[%s3 + $0x380] sm:$0xff]
  %v500 = vld [vmem:[%s3 + $0x388] sm:$0xff]
  %v501 = vld [vmem:[%s3 + $0x390] sm:$0xff]
  %v502 = vld [vmem:[%s3 + $0x398] sm:$0xff]
  %v503 = vld [vmem:[%s3 + $0x3a0] sm:$0xff]
  %v504 = vld [vmem:[%s3 + $0x3a8] sm:$0xff]
  %v505 = vld [vmem:[%s3 + $0x3b0] sm:$0xff]
  %v506 = vld [vmem:[%s3 + $0x3b8] sm:$0xff]
  %v507 = vld [vmem:[%s3 + $0x3c0] sm:$0xff]
  %v508 = vld [vmem:[%s3 + $0x3c8] sm:$0xff]
  %v509 = vld [vmem:[%s3 + $0x3d0] sm:$0xff]
  %v510 = vld [vmem:[%s3 + $0x3d8] sm:$0xff]
  %v511 = vld [vmem:[%s3 + $0x3e0] sm:$0xff]
  %v512 = vld [vmem:[%s3 + $0x3e8] sm:$0xff]
  %v513 = vld [vmem:[%s3 + $0x3f0] sm:$0xff]
  %v514 = vld [vmem:[%s3 + $0x3f8] sm:$0xff]
  %v643 = vunpack.c.l.b16 %v387
  %v644 = vunpack.c.h.b16 %v387
  %v645 = vunpack.c.l.b16 %v388
  %v646 = vunpack.c.h.b16 %v388
  %v647 = vunpack.c.l.b16 %v389
  %v648 = vunpack.c.h.b16 %v389
  %v649 = vunpack.c.l.b16 %v390
  %v650 = vunpack.c.h.b16 %v390
  %v651 = vunpack.c.l.b16 %v391
  %v652 = vunpack.c.h.b16 %v391
  %v653 = vunpack.c.l.b16 %v392
  %v654 = vunpack.c.h.b16 %v392
  %v655 = vunpack.c.l.b16 %v393
  %v656 = vunpack.c.h.b16 %v393
  %v657 = vunpack.c.l.b16 %v394
  %v658 = vunpack.c.h.b16 %v394
  %v659 = vunpack.c.l.b16 %v395
  %v660 = vunpack.c.h.b16 %v395
  %v661 = vunpack.c.l.b16 %v396
  %v662 = vunpack.c.h.b16 %v396
  %v663 = vunpack.c.l.b16 %v397
  %v664 = vunpack.c.h.b16 %v397
  %v665 = vunpack.c.l.b16 %v398
  %v666 = vunpack.c.h.b16 %v398
  %v667 = vunpack.c.l.b16 %v399
  %v668 = vunpack.c.h.b16 %v399
  %v669 = vunpack.c.l.b16 %v400
  %v670 = vunpack.c.h.b16 %v400
  %v671 = vunpack.c.l.b16 %v401
  %v672 = vunpack.c.h.b16 %v401
  %v673 = vunpack.c.l.b16 %v402
  %v674 = vunpack.c.h.b16 %v402
  %v675 = vunpack.c.l.b16 %v403
  %v676 = vunpack.c.h.b16 %v403
  %v677 = vunpack.c.l.b16 %v404
  %v678 = vunpack.c.h.b16 %v404
  %v679 = vunpack.c.l.b16 %v405
  %v680 = vunpack.c.h.b16 %v405
  %v681 = vunpack.c.l.b16 %v406
  %v682 = vunpack.c.h.b16 %v406
  %v683 = vunpack.c.l.b16 %v407
  %v684 = vunpack.c.h.b16 %v407
  %v685 = vunpack.c.l.b16 %v408
  %v686 = vunpack.c.h.b16 %v408
  %v687 = vunpack.c.l.b16 %v409
  %v688 = vunpack.c.h.b16 %v409
  %v689 = vunpack.c.l.b16 %v410
  %v690 = vunpack.c.h.b16 %v410
  %v691 = vunpack.c.l.b16 %v411
  %v692 = vunpack.c.h.b16 %v411
  %v693 = vunpack.c.l.b16 %v412
  %v694 = vunpack.c.h.b16 %v412
  %v695 = vunpack.c.l.b16 %v413
  %v696 = vunpack.c.h.b16 %v413
  %v697 = vunpack.c.l.b16 %v414
  %v698 = vunpack.c.h.b16 %v414
  %v699 = vunpack.c.l.b16 %v415
  %v700 = vunpack.c.h.b16 %v415
  %v701 = vunpack.c.l.b16 %v416
  %v702 = vunpack.c.h.b16 %v416
  %v703 = vunpack.c.l.b16 %v417
  %v704 = vunpack.c.h.b16 %v417
  %v705 = vunpack.c.l.b16 %v418
  %v706 = vunpack.c.h.b16 %v418
  %v707 = vunpack.c.l.b16 %v419
  %v708 = vunpack.c.h.b16 %v419
  %v709 = vunpack.c.l.b16 %v420
  %v710 = vunpack.c.h.b16 %v420
  %v711 = vunpack.c.l.b16 %v421
  %v712 = vunpack.c.h.b16 %v421
  %v713 = vunpack.c.l.b16 %v422
  %v714 = vunpack.c.h.b16 %v422
  %v715 = vunpack.c.l.b16 %v423
  %v716 = vunpack.c.h.b16 %v423
  %v717 = vunpack.c.l.b16 %v424
  %v718 = vunpack.c.h.b16 %v424
  %v719 = vunpack.c.l.b16 %v425
  %v720 = vunpack.c.h.b16 %v425
  %v721 = vunpack.c.l.b16 %v426
  %v722 = vunpack.c.h.b16 %v426
  %v723 = vunpack.c.l.b16 %v427
  %v724 = vunpack.c.h.b16 %v427
  %v725 = vunpack.c.l.b16 %v428
  %v726 = vunpack.c.h.b16 %v428
  %v727 = vunpack.c.l.b16 %v429
  %v728 = vunpack.c.h.b16 %v429
  %v729 = vunpack.c.l.b16 %v430
  %v730 = vunpack.c.h.b16 %v430
  %v731 = vunpack.c.l.b16 %v431
  %v732 = vunpack.c.h.b16 %v431
  %v733 = vunpack.c.l.b16 %v432
  %v734 = vunpack.c.h.b16 %v432
  %v735 = vunpack.c.l.b16 %v433
  %v736 = vunpack.c.h.b16 %v433
  %v737 = vunpack.c.l.b16 %v434
  %v738 = vunpack.c.h.b16 %v434
  %v739 = vunpack.c.l.b16 %v435
  %v740 = vunpack.c.h.b16 %v435
  %v741 = vunpack.c.l.b16 %v436
  %v742 = vunpack.c.h.b16 %v436
  %v743 = vunpack.c.l.b16 %v437
  %v744 = vunpack.c.h.b16 %v437
  %v745 = vunpack.c.l.b16 %v438
  %v746 = vunpack.c.h.b16 %v438
  %v747 = vunpack.c.l.b16 %v439
  %v748 = vunpack.c.h.b16 %v439
  %v749 = vunpack.c.l.b16 %v440
  %v750 = vunpack.c.h.b16 %v440
  %v751 = vunpack.c.l.b16 %v441
  %v752 = vunpack.c.h.b16 %v441
  %v753 = vunpack.c.l.b16 %v442
  %v754 = vunpack.c.h.b16 %v442
  %v755 = vunpack.c.l.b16 %v443
  %v756 = vunpack.c.h.b16 %v443
  %v757 = vunpack.c.l.b16 %v444
  %v758 = vunpack.c.h.b16 %v444
  %v759 = vunpack.c.l.b16 %v445
  %v760 = vunpack.c.h.b16 %v445
  %v761 = vunpack.c.l.b16 %v446
  %v762 = vunpack.c.h.b16 %v446
  %v763 = vunpack.c.l.b16 %v447
  %v764 = vunpack.c.h.b16 %v447
  %v765 = vunpack.c.l.b16 %v448
  %v766 = vunpack.c.h.b16 %v448
  %v767 = vunpack.c.l.b16 %v449
  %v768 = vunpack.c.h.b16 %v449
  %v769 = vunpack.c.l.b16 %v450
  %v770 = vunpack.c.h.b16 %v450
  %v771 = vunpack.c.l.b16 %v451
  %v772 = vunpack.c.h.b16 %v451
  %v773 = vunpack.c.l.b16 %v452
  %v774 = vunpack.c.h.b16 %v452
  %v775 = vunpack.c.l.b16 %v453
  %v776 = vunpack.c.h.b16 %v453
  %v777 = vunpack.c.l.b16 %v454
  %v778 = vunpack.c.h.b16 %v454
  %v779 = vunpack.c.l.b16 %v455
  %v780 = vunpack.c.h.b16 %v455
  %v781 = vunpack.c.l.b16 %v456
  %v782 = vunpack.c.h.b16 %v456
  %v783 = vunpack.c.l.b16 %v457
  %v784 = vunpack.c.h.b16 %v457
  %v785 = vunpack.c.l.b16 %v458
  %v786 = vunpack.c.h.b16 %v458
  %v787 = vunpack.c.l.b16 %v459
  %v788 = vunpack.c.h.b16 %v459
  %v789 = vunpack.c.l.b16 %v460
  %v790 = vunpack.c.h.b16 %v460
  %v791 = vunpack.c.l.b16 %v461
  %v792 = vunpack.c.h.b16 %v461
  %v793 = vunpack.c.l.b16 %v462
  %v794 = vunpack.c.h.b16 %v462
  %v795 = vunpack.c.l.b16 %v463
  %v796 = vunpack.c.h.b16 %v463
  %v797 = vunpack.c.l.b16 %v464
  %v798 = vunpack.c.h.b16 %v464
  %v799 = vunpack.c.l.b16 %v465
  %v800 = vunpack.c.h.b16 %v465
  %v801 = vunpack.c.l.b16 %v466
  %v802 = vunpack.c.h.b16 %v466
  %v803 = vunpack.c.l.b16 %v467
  %v804 = vunpack.c.h.b16 %v467
  %v805 = vunpack.c.l.b16 %v468
  %v806 = vunpack.c.h.b16 %v468
  %v807 = vunpack.c.l.b16 %v469
  %v808 = vunpack.c.h.b16 %v469
  %v809 = vunpack.c.l.b16 %v470
  %v810 = vunpack.c.h.b16 %v470
  %v811 = vunpack.c.l.b16 %v471
  %v812 = vunpack.c.h.b16 %v471
  %v813 = vunpack.c.l.b16 %v472
  %v814 = vunpack.c.h.b16 %v472
  %v815 = vunpack.c.l.b16 %v473
  %v816 = vunpack.c.h.b16 %v473
  %v817 = vunpack.c.l.b16 %v474
  %v818 = vunpack.c.h.b16 %v474
  %v819 = vunpack.c.l.b16 %v475
  %v820 = vunpack.c.h.b16 %v475
  %v821 = vunpack.c.l.b16 %v476
  %v822 = vunpack.c.h.b16 %v476
  %v823 = vunpack.c.l.b16 %v477
  %v824 = vunpack.c.h.b16 %v477
  %v825 = vunpack.c.l.b16 %v478
  %v826 = vunpack.c.h.b16 %v478
  %v827 = vunpack.c.l.b16 %v479
  %v828 = vunpack.c.h.b16 %v479
  %v829 = vunpack.c.l.b16 %v480
  %v830 = vunpack.c.h.b16 %v480
  %v831 = vunpack.c.l.b16 %v481
  %v832 = vunpack.c.h.b16 %v481
  %v833 = vunpack.c.l.b16 %v482
  %v834 = vunpack.c.h.b16 %v482
  %v835 = vunpack.c.l.b16 %v483
  %v836 = vunpack.c.h.b16 %v483
  %v837 = vunpack.c.l.b16 %v484
  %v838 = vunpack.c.h.b16 %v484
  %v839 = vunpack.c.l.b16 %v485
  %v840 = vunpack.c.h.b16 %v485
  %v841 = vunpack.c.l.b16 %v486
  %v842 = vunpack.c.h.b16 %v486
  %v843 = vunpack.c.l.b16 %v487
  %v844 = vunpack.c.h.b16 %v487
  %v845 = vunpack.c.l.b16 %v488
  %v846 = vunpack.c.h.b16 %v488
  %v847 = vunpack.c.l.b16 %v489
  %v848 = vunpack.c.h.b16 %v489
  %v849 = vunpack.c.l.b16 %v490
  %v850 = vunpack.c.h.b16 %v490
  %v851 = vunpack.c.l.b16 %v491
  %v852 = vunpack.c.h.b16 %v491
  %v853 = vunpack.c.l.b16 %v492
  %v854 = vunpack.c.h.b16 %v492
  %v855 = vunpack.c.l.b16 %v493
  %v856 = vunpack.c.h.b16 %v493
  %v857 = vunpack.c.l.b16 %v494
  %v858 = vunpack.c.h.b16 %v494
  %v859 = vunpack.c.l.b16 %v495
  %v860 = vunpack.c.h.b16 %v495
  %v861 = vunpack.c.l.b16 %v496
  %v862 = vunpack.c.h.b16 %v496
  %v863 = vunpack.c.l.b16 %v497
  %v864 = vunpack.c.h.b16 %v497
  %v865 = vunpack.c.l.b16 %v498
  %v866 = vunpack.c.h.b16 %v498
  %v867 = vunpack.c.l.b16 %v499
  %v868 = vunpack.c.h.b16 %v499
  %v869 = vunpack.c.l.b16 %v500
  %v870 = vunpack.c.h.b16 %v500
  %v871 = vunpack.c.l.b16 %v501
  %v872 = vunpack.c.h.b16 %v501
  %v873 = vunpack.c.l.b16 %v502
  %v874 = vunpack.c.h.b16 %v502
  %v875 = vunpack.c.l.b16 %v503
  %v876 = vunpack.c.h.b16 %v503
  %v877 = vunpack.c.l.b16 %v504
  %v878 = vunpack.c.h.b16 %v504
  %v879 = vunpack.c.l.b16 %v505
  %v880 = vunpack.c.h.b16 %v505
  %v881 = vunpack.c.l.b16 %v506
  %v882 = vunpack.c.h.b16 %v506
  %v883 = vunpack.c.l.b16 %v507
  %v884 = vunpack.c.h.b16 %v507
  %v885 = vunpack.c.l.b16 %v508
  %v886 = vunpack.c.h.b16 %v508
  %v887 = vunpack.c.l.b16 %v509
  %v888 = vunpack.c.h.b16 %v509
  %v889 = vunpack.c.l.b16 %v510
  %v890 = vunpack.c.h.b16 %v510
  %v891 = vunpack.c.l.b16 %v511
  %v892 = vunpack.c.h.b16 %v511
  %v893 = vunpack.c.l.b16 %v512
  %v894 = vunpack.c.h.b16 %v512
  %v895 = vunpack.c.l.b16 %v513
  %v896 = vunpack.c.h.b16 %v513
  %v897 = vunpack.c.l.b16 %v514
  %v898 = vunpack.c.h.b16 %v514
  %v899 = vpack.c.b16 %v645, %v643
  %v900 = vpack.c.b16 %v646, %v644
  %v901 = vpack.c.b16 %v649, %v647
  %v902 = vpack.c.b16 %v650, %v648
  %v903 = vpack.c.b16 %v653, %v651
  %v904 = vpack.c.b16 %v654, %v652
  %v905 = vpack.c.b16 %v657, %v655
  %v906 = vpack.c.b16 %v658, %v656
  %v907 = vpack.c.b16 %v661, %v659
  %v908 = vpack.c.b16 %v662, %v660
  %v909 = vpack.c.b16 %v665, %v663
  %v910 = vpack.c.b16 %v666, %v664
  %v911 = vpack.c.b16 %v669, %v667
  %v912 = vpack.c.b16 %v670, %v668
  %v913 = vpack.c.b16 %v673, %v671
  %v914 = vpack.c.b16 %v674, %v672
  %v915 = vpack.c.b16 %v677, %v675
  %v916 = vpack.c.b16 %v678, %v676
  %v917 = vpack.c.b16 %v681, %v679
  %v918 = vpack.c.b16 %v682, %v680
  %v919 = vpack.c.b16 %v685, %v683
  %v920 = vpack.c.b16 %v686, %v684
  %v921 = vpack.c.b16 %v689, %v687
  %v922 = vpack.c.b16 %v690, %v688
  %v923 = vpack.c.b16 %v693, %v691
  %v924 = vpack.c.b16 %v694, %v692
  %v925 = vpack.c.b16 %v697, %v695
  %v926 = vpack.c.b16 %v698, %v696
  %v927 = vpack.c.b16 %v701, %v699
  %v928 = vpack.c.b16 %v702, %v700
  %v929 = vpack.c.b16 %v705, %v703
  %v930 = vpack.c.b16 %v706, %v704
  %v931 = vpack.c.b16 %v709, %v707
  %v932 = vpack.c.b16 %v710, %v708
  %v933 = vpack.c.b16 %v713, %v711
  %v934 = vpack.c.b16 %v714, %v712
  %v935 = vpack.c.b16 %v717, %v715
  %v936 = vpack.c.b16 %v718, %v716
  %v937 = vpack.c.b16 %v721, %v719
  %v938 = vpack.c.b16 %v722, %v720
  %v939 = vpack.c.b16 %v725, %v723
  %v940 = vpack.c.b16 %v726, %v724
  %v941 = vpack.c.b16 %v729, %v727
  %v942 = vpack.c.b16 %v730, %v728
  %v943 = vpack.c.b16 %v733, %v731
  %v944 = vpack.c.b16 %v734, %v732
  %v945 = vpack.c.b16 %v737, %v735
  %v946 = vpack.c.b16 %v738, %v736
  %v947 = vpack.c.b16 %v741, %v739
  %v948 = vpack.c.b16 %v742, %v740
  %v949 = vpack.c.b16 %v745, %v743
  %v950 = vpack.c.b16 %v746, %v744
  %v951 = vpack.c.b16 %v749, %v747
  %v952 = vpack.c.b16 %v750, %v748
  %v953 = vpack.c.b16 %v753, %v751
  %v954 = vpack.c.b16 %v754, %v752
  %v955 = vpack.c.b16 %v757, %v755
  %v956 = vpack.c.b16 %v758, %v756
  %v957 = vpack.c.b16 %v761, %v759
  %v958 = vpack.c.b16 %v762, %v760
  %v959 = vpack.c.b16 %v765, %v763
  %v960 = vpack.c.b16 %v766, %v764
  %v961 = vpack.c.b16 %v769, %v767
  %v962 = vpack.c.b16 %v770, %v768
  %v963 = vpack.c.b16 %v773, %v771
  %v964 = vpack.c.b16 %v774, %v772
  %v965 = vpack.c.b16 %v777, %v775
  %v966 = vpack.c.b16 %v778, %v776
  %v967 = vpack.c.b16 %v781, %v779
  %v968 = vpack.c.b16 %v782, %v780
  %v969 = vpack.c.b16 %v785, %v783
  %v970 = vpack.c.b16 %v786, %v784
  %v971 = vpack.c.b16 %v789, %v787
  %v972 = vpack.c.b16 %v790, %v788
  %v973 = vpack.c.b16 %v793, %v791
  %v974 = vpack.c.b16 %v794, %v792
  %v975 = vpack.c.b16 %v797, %v795
  %v976 = vpack.c.b16 %v798, %v796
  %v977 = vpack.c.b16 %v801, %v799
  %v978 = vpack.c.b16 %v802, %v800
  %v979 = vpack.c.b16 %v805, %v803
  %v980 = vpack.c.b16 %v806, %v804
  %v981 = vpack.c.b16 %v809, %v807
  %v982 = vpack.c.b16 %v810, %v808
  %v983 = vpack.c.b16 %v813, %v811
  %v984 = vpack.c.b16 %v814, %v812
  %v985 = vpack.c.b16 %v817, %v815
  %v986 = vpack.c.b16 %v818, %v816
  %v987 = vpack.c.b16 %v821, %v819
  %v988 = vpack.c.b16 %v822, %v820
  %v989 = vpack.c.b16 %v825, %v823
  %v990 = vpack.c.b16 %v826, %v824
  %v991 = vpack.c.b16 %v829, %v827
  %v992 = vpack.c.b16 %v830, %v828
  %v993 = vpack.c.b16 %v833, %v831
  %v994 = vpack.c.b16 %v834, %v832
  %v995 = vpack.c.b16 %v837, %v835
  %v996 = vpack.c.b16 %v838, %v836
  %v997 = vpack.c.b16 %v841, %v839
  %v998 = vpack.c.b16 %v842, %v840
  %v999 = vpack.c.b16 %v845, %v843
  %v1000 = vpack.c.b16 %v846, %v844
  %v1001 = vpack.c.b16 %v849, %v847
  %v1002 = vpack.c.b16 %v850, %v848
  %v1003 = vpack.c.b16 %v853, %v851
  %v1004 = vpack.c.b16 %v854, %v852
  %v1005 = vpack.c.b16 %v857, %v855
  %v1006 = vpack.c.b16 %v858, %v856
  %v1007 = vpack.c.b16 %v861, %v859
  %v1008 = vpack.c.b16 %v862, %v860
  %v1009 = vpack.c.b16 %v865, %v863
  %v1010 = vpack.c.b16 %v866, %v864
  %v1011 = vpack.c.b16 %v869, %v867
  %v1012 = vpack.c.b16 %v870, %v868
  %v1013 = vpack.c.b16 %v873, %v871
  %v1014 = vpack.c.b16 %v874, %v872
  %v1015 = vpack.c.b16 %v877, %v875
  %v1016 = vpack.c.b16 %v878, %v876
  %v1017 = vpack.c.b16 %v881, %v879
  %v1018 = vpack.c.b16 %v882, %v880
  %v1019 = vpack.c.b16 %v885, %v883
  %v1020 = vpack.c.b16 %v886, %v884
  %v1021 = vpack.c.b16 %v889, %v887
  %v1022 = vpack.c.b16 %v890, %v888
  %v1023 = vpack.c.b16 %v893, %v891
  %v1024 = vpack.c.b16 %v894, %v892
  %v1025 = vpack.c.b16 %v897, %v895
  %v1026 = vpack.c.b16 %v898, %v896
  %1155 = vmatpush.bf16.msra.mxu0 %v378
  %1156 = vmatpush.bf16.msra.mxu0 %v377
  %1157 = vmatpush.bf16.msra.mxu0 %v376
  %1158 = vmatpush.bf16.msra.mxu0 %v375
  %1159 = vmatpush.bf16.msra.mxu0 %v374
  %1160 = vmatpush.bf16.msra.mxu0 %v373
  %1161 = vmatpush.bf16.msra.mxu0 %v372
  %1162 = vmatpush.bf16.msra.mxu0 %v371
  %1163 = vmatmul.bf16.gmra.mxu0 %v899
  %v1164 = vpop.f32.mrf.mxu0
  %v1165 = vadd.f32 0.0, %v1164
  %v1166 = vpop.f32.mrf.mxu0
  %v1167 = vadd.f32 0.0, %v1166
  %1168 = vmatmul.bf16.gmra.mxu0 %v901
  %v1169 = vpop.f32.mrf.mxu0
  %v1170 = vadd.f32 0.0, %v1169
  %v1171 = vpop.f32.mrf.mxu0
  %v1172 = vadd.f32 0.0, %v1171
  %1173 = vmatmul.bf16.gmra.mxu0 %v903
  %v1174 = vpop.f32.mrf.mxu0
  %v1175 = vadd.f32 0.0, %v1174
  %v1176 = vpop.f32.mrf.mxu0
  %v1177 = vadd.f32 0.0, %v1176
  %1178 = vmatmul.bf16.gmra.mxu0 %v905
  %v1179 = vpop.f32.mrf.mxu0
  %v1180 = vadd.f32 0.0, %v1179
  %v1181 = vpop.f32.mrf.mxu0
  %v1182 = vadd.f32 0.0, %v1181
  %1183 = vmatmul.bf16.gmra.mxu0 %v907
  %v1184 = vpop.f32.mrf.mxu0
  %v1185 = vadd.f32 0.0, %v1184
  %v1186 = vpop.f32.mrf.mxu0
  %v1187 = vadd.f32 0.0, %v1186
  %1188 = vmatmul.bf16.gmra.mxu0 %v909
  %v1189 = vpop.f32.mrf.mxu0
  %v1190 = vadd.f32 0.0, %v1189
  %v1191 = vpop.f32.mrf.mxu0
  %v1192 = vadd.f32 0.0, %v1191
  %1193 = vmatmul.bf16.gmra.mxu0 %v911
  %v1194 = vpop.f32.mrf.mxu0
  %v1195 = vadd.f32 0.0, %v1194
  %v1196 = vpop.f32.mrf.mxu0
  %v1197 = vadd.f32 0.0, %v1196
  %1198 = vmatmul.bf16.gmra.mxu0 %v913
  %v1199 = vpop.f32.mrf.mxu0
  %v1200 = vadd.f32 0.0, %v1199
  %v1201 = vpop.f32.mrf.mxu0
  %v1202 = vadd.f32 0.0, %v1201
  %1203 = vmatmul.bf16.gmra.mxu0 %v915
  %v1204 = vpop.f32.mrf.mxu0
  %v1205 = vadd.f32 0.0, %v1204
  %v1206 = vpop.f32.mrf.mxu0
  %v1207 = vadd.f32 0.0, %v1206
  %1208 = vmatmul.bf16.gmra.mxu0 %v917
  %v1209 = vpop.f32.mrf.mxu0
  %v1210 = vadd.f32 0.0, %v1209
  %v1211 = vpop.f32.mrf.mxu0
  %v1212 = vadd.f32 0.0, %v1211
  %1213 = vmatmul.bf16.gmra.mxu0 %v919
  %v1214 = vpop.f32.mrf.mxu0
  %v1215 = vadd.f32 0.0, %v1214
  %v1216 = vpop.f32.mrf.mxu0
  %v1217 = vadd.f32 0.0, %v1216
  %1218 = vmatmul.bf16.gmra.mxu0 %v921
  %v1219 = vpop.f32.mrf.mxu0
  %v1220 = vadd.f32 0.0, %v1219
  %v1221 = vpop.f32.mrf.mxu0
  %v1222 = vadd.f32 0.0, %v1221
  %1223 = vmatmul.bf16.gmra.mxu0 %v923
  %v1224 = vpop.f32.mrf.mxu0
  %v1225 = vadd.f32 0.0, %v1224
  %v1226 = vpop.f32.mrf.mxu0
  %v1227 = vadd.f32 0.0, %v1226
  %1228 = vmatmul.bf16.gmra.mxu0 %v925
  %v1229 = vpop.f32.mrf.mxu0
  %v1230 = vadd.f32 0.0, %v1229
  %v1231 = vpop.f32.mrf.mxu0
  %v1232 = vadd.f32 0.0, %v1231
  %1233 = vmatmul.bf16.gmra.mxu0 %v927
  %v1234 = vpop.f32.mrf.mxu0
  %v1235 = vadd.f32 0.0, %v1234
  %v1236 = vpop.f32.mrf.mxu0
  %v1237 = vadd.f32 0.0, %v1236
  %1238 = vmatmul.bf16.gmra.mxu0 %v929
  %v1239 = vpop.f32.mrf.mxu0
  %v1240 = vadd.f32 0.0, %v1239
  %v1241 = vpop.f32.mrf.mxu0
  %v1242 = vadd.f32 0.0, %v1241
  %1243 = vmatmul.bf16.gmra.mxu0 %v931
  %v1244 = vpop.f32.mrf.mxu0
  %v1245 = vadd.f32 0.0, %v1244
  %v1246 = vpop.f32.mrf.mxu0
  %v1247 = vadd.f32 0.0, %v1246
  %1248 = vmatmul.bf16.gmra.mxu0 %v933
  %v1249 = vpop.f32.mrf.mxu0
  %v1250 = vadd.f32 0.0, %v1249
  %v1251 = vpop.f32.mrf.mxu0
  %v1252 = vadd.f32 0.0, %v1251
  %1253 = vmatmul.bf16.gmra.mxu0 %v935
  %v1254 = vpop.f32.mrf.mxu0
  %v1255 = vadd.f32 0.0, %v1254
  %v1256 = vpop.f32.mrf.mxu0
  %v1257 = vadd.f32 0.0, %v1256
  %1258 = vmatmul.bf16.gmra.mxu0 %v937
  %v1259 = vpop.f32.mrf.mxu0
  %v1260 = vadd.f32 0.0, %v1259
  %v1261 = vpop.f32.mrf.mxu0
  %v1262 = vadd.f32 0.0, %v1261
  %1263 = vmatmul.bf16.gmra.mxu0 %v939
  %v1264 = vpop.f32.mrf.mxu0
  %v1265 = vadd.f32 0.0, %v1264
  %v1266 = vpop.f32.mrf.mxu0
  %v1267 = vadd.f32 0.0, %v1266
  %1268 = vmatmul.bf16.gmra.mxu0 %v941
  %v1269 = vpop.f32.mrf.mxu0
  %v1270 = vadd.f32 0.0, %v1269
  %v1271 = vpop.f32.mrf.mxu0
  %v1272 = vadd.f32 0.0, %v1271
  %1273 = vmatmul.bf16.gmra.mxu0 %v943
  %v1274 = vpop.f32.mrf.mxu0
  %v1275 = vadd.f32 0.0, %v1274
  %v1276 = vpop.f32.mrf.mxu0
  %v1277 = vadd.f32 0.0, %v1276
  %1278 = vmatmul.bf16.gmra.mxu0 %v945
  %v1279 = vpop.f32.mrf.mxu0
  %v1280 = vadd.f32 0.0, %v1279
  %v1281 = vpop.f32.mrf.mxu0
  %v1282 = vadd.f32 0.0, %v1281
  %1283 = vmatmul.bf16.gmra.mxu0 %v947
  %v1284 = vpop.f32.mrf.mxu0
  %v1285 = vadd.f32 0.0, %v1284
  %v1286 = vpop.f32.mrf.mxu0
  %v1287 = vadd.f32 0.0, %v1286
  %1288 = vmatmul.bf16.gmra.mxu0 %v949
  %v1289 = vpop.f32.mrf.mxu0
  %v1290 = vadd.f32 0.0, %v1289
  %v1291 = vpop.f32.mrf.mxu0
  %v1292 = vadd.f32 0.0, %v1291
  %1293 = vmatmul.bf16.gmra.mxu0 %v951
  %v1294 = vpop.f32.mrf.mxu0
  %v1295 = vadd.f32 0.0, %v1294
  %v1296 = vpop.f32.mrf.mxu0
  %v1297 = vadd.f32 0.0, %v1296
  %1298 = vmatmul.bf16.gmra.mxu0 %v953
  %v1299 = vpop.f32.mrf.mxu0
  %v1300 = vadd.f32 0.0, %v1299
  %v1301 = vpop.f32.mrf.mxu0
  %v1302 = vadd.f32 0.0, %v1301
  %1303 = vmatmul.bf16.gmra.mxu0 %v955
  %v1304 = vpop.f32.mrf.mxu0
  %v1305 = vadd.f32 0.0, %v1304
  %v1306 = vpop.f32.mrf.mxu0
  %v1307 = vadd.f32 0.0, %v1306
  %1308 = vmatmul.bf16.gmra.mxu0 %v957
  %v1309 = vpop.f32.mrf.mxu0
  %v1310 = vadd.f32 0.0, %v1309
  %v1311 = vpop.f32.mrf.mxu0
  %v1312 = vadd.f32 0.0, %v1311
  %1313 = vmatmul.bf16.gmra.mxu0 %v959
  %v1314 = vpop.f32.mrf.mxu0
  %v1315 = vadd.f32 0.0, %v1314
  %v1316 = vpop.f32.mrf.mxu0
  %v1317 = vadd.f32 0.0, %v1316
  %1318 = vmatmul.bf16.gmra.mxu0 %v961
  %v1319 = vpop.f32.mrf.mxu0
  %v1320 = vadd.f32 0.0, %v1319
  %v1321 = vpop.f32.mrf.mxu0
  %v1322 = vadd.f32 0.0, %v1321
  %1323 = vmatmul.bf16.gmra.mxu0 %v963
  %v1324 = vpop.f32.mrf.mxu0
  %v1325 = vadd.f32 0.0, %v1324
  %v1326 = vpop.f32.mrf.mxu0
  %v1327 = vadd.f32 0.0, %v1326
  %1328 = vmatmul.bf16.gmra.mxu0 %v965
  %v1329 = vpop.f32.mrf.mxu0
  %v1330 = vadd.f32 0.0, %v1329
  %v1331 = vpop.f32.mrf.mxu0
  %v1332 = vadd.f32 0.0, %v1331
  %1333 = vmatmul.bf16.gmra.mxu0 %v967
  %v1334 = vpop.f32.mrf.mxu0
  %v1335 = vadd.f32 0.0, %v1334
  %v1336 = vpop.f32.mrf.mxu0
  %v1337 = vadd.f32 0.0, %v1336
  %1338 = vmatmul.bf16.gmra.mxu0 %v969
  %v1339 = vpop.f32.mrf.mxu0
  %v1340 = vadd.f32 0.0, %v1339
  %v1341 = vpop.f32.mrf.mxu0
  %v1342 = vadd.f32 0.0, %v1341
  %1343 = vmatmul.bf16.gmra.mxu0 %v971
  %v1344 = vpop.f32.mrf.mxu0
  %v1345 = vadd.f32 0.0, %v1344
  %v1346 = vpop.f32.mrf.mxu0
  %v1347 = vadd.f32 0.0, %v1346
  %1348 = vmatmul.bf16.gmra.mxu0 %v973
  %v1349 = vpop.f32.mrf.mxu0
  %v1350 = vadd.f32 0.0, %v1349
  %v1351 = vpop.f32.mrf.mxu0
  %v1352 = vadd.f32 0.0, %v1351
  %1353 = vmatmul.bf16.gmra.mxu0 %v975
  %v1354 = vpop.f32.mrf.mxu0
  %v1355 = vadd.f32 0.0, %v1354
  %v1356 = vpop.f32.mrf.mxu0
  %v1357 = vadd.f32 0.0, %v1356
  %1358 = vmatmul.bf16.gmra.mxu0 %v977
  %v1359 = vpop.f32.mrf.mxu0
  %v1360 = vadd.f32 0.0, %v1359
  %v1361 = vpop.f32.mrf.mxu0
  %v1362 = vadd.f32 0.0, %v1361
  %1363 = vmatmul.bf16.gmra.mxu0 %v979
  %v1364 = vpop.f32.mrf.mxu0
  %v1365 = vadd.f32 0.0, %v1364
  %v1366 = vpop.f32.mrf.mxu0
  %v1367 = vadd.f32 0.0, %v1366
  %1368 = vmatmul.bf16.gmra.mxu0 %v981
  %v1369 = vpop.f32.mrf.mxu0
  %v1370 = vadd.f32 0.0, %v1369
  %v1371 = vpop.f32.mrf.mxu0
  %v1372 = vadd.f32 0.0, %v1371
  %1373 = vmatmul.bf16.gmra.mxu0 %v983
  %v1374 = vpop.f32.mrf.mxu0
  %v1375 = vadd.f32 0.0, %v1374
  %v1376 = vpop.f32.mrf.mxu0
  %v1377 = vadd.f32 0.0, %v1376
  %1378 = vmatmul.bf16.gmra.mxu0 %v985
  %v1379 = vpop.f32.mrf.mxu0
  %v1380 = vadd.f32 0.0, %v1379
  %v1381 = vpop.f32.mrf.mxu0
  %v1382 = vadd.f32 0.0, %v1381
  %1383 = vmatmul.bf16.gmra.mxu0 %v987
  %v1384 = vpop.f32.mrf.mxu0
  %v1385 = vadd.f32 0.0, %v1384
  %v1386 = vpop.f32.mrf.mxu0
  %v1387 = vadd.f32 0.0, %v1386
  %1388 = vmatmul.bf16.gmra.mxu0 %v989
  %v1389 = vpop.f32.mrf.mxu0
  %v1390 = vadd.f32 0.0, %v1389
  %v1391 = vpop.f32.mrf.mxu0
  %v1392 = vadd.f32 0.0, %v1391
  %1393 = vmatmul.bf16.gmra.mxu0 %v991
  %v1394 = vpop.f32.mrf.mxu0
  %v1395 = vadd.f32 0.0, %v1394
  %v1396 = vpop.f32.mrf.mxu0
  %v1397 = vadd.f32 0.0, %v1396
  %1398 = vmatmul.bf16.gmra.mxu0 %v993
  %v1399 = vpop.f32.mrf.mxu0
  %v1400 = vadd.f32 0.0, %v1399
  %v1401 = vpop.f32.mrf.mxu0
  %v1402 = vadd.f32 0.0, %v1401
  %1403 = vmatmul.bf16.gmra.mxu0 %v995
  %v1404 = vpop.f32.mrf.mxu0
  %v1405 = vadd.f32 0.0, %v1404
  %v1406 = vpop.f32.mrf.mxu0
  %v1407 = vadd.f32 0.0, %v1406
  %1408 = vmatmul.bf16.gmra.mxu0 %v997
  %v1409 = vpop.f32.mrf.mxu0
  %v1410 = vadd.f32 0.0, %v1409
  %v1411 = vpop.f32.mrf.mxu0
  %v1412 = vadd.f32 0.0, %v1411
  %1413 = vmatmul.bf16.gmra.mxu0 %v999
  %v1414 = vpop.f32.mrf.mxu0
  %v1415 = vadd.f32 0.0, %v1414
  %v1416 = vpop.f32.mrf.mxu0
  %v1417 = vadd.f32 0.0, %v1416
  %1418 = vmatmul.bf16.gmra.mxu0 %v1001
  %v1419 = vpop.f32.mrf.mxu0
  %v1420 = vadd.f32 0.0, %v1419
  %v1421 = vpop.f32.mrf.mxu0
  %v1422 = vadd.f32 0.0, %v1421
  %1423 = vmatmul.bf16.gmra.mxu0 %v1003
  %v1424 = vpop.f32.mrf.mxu0
  %v1425 = vadd.f32 0.0, %v1424
  %v1426 = vpop.f32.mrf.mxu0
  %v1427 = vadd.f32 0.0, %v1426
  %1428 = vmatmul.bf16.gmra.mxu0 %v1005
  %v1429 = vpop.f32.mrf.mxu0
  %v1430 = vadd.f32 0.0, %v1429
  %v1431 = vpop.f32.mrf.mxu0
  %v1432 = vadd.f32 0.0, %v1431
  %1433 = vmatmul.bf16.gmra.mxu0 %v1007
  %v1434 = vpop.f32.mrf.mxu0
  %v1435 = vadd.f32 0.0, %v1434
  %v1436 = vpop.f32.mrf.mxu0
  %v1437 = vadd.f32 0.0, %v1436
  %1438 = vmatmul.bf16.gmra.mxu0 %v1009
  %v1439 = vpop.f32.mrf.mxu0
  %v1440 = vadd.f32 0.0, %v1439
  %v1441 = vpop.f32.mrf.mxu0
  %v1442 = vadd.f32 0.0, %v1441
  %1443 = vmatmul.bf16.gmra.mxu0 %v1011
  %v1444 = vpop.f32.mrf.mxu0
  %v1445 = vadd.f32 0.0, %v1444
  %v1446 = vpop.f32.mrf.mxu0
  %v1447 = vadd.f32 0.0, %v1446
  %1448 = vmatmul.bf16.gmra.mxu0 %v1013
  %v1449 = vpop.f32.mrf.mxu0
  %v1450 = vadd.f32 0.0, %v1449
  %v1451 = vpop.f32.mrf.mxu0
  %v1452 = vadd.f32 0.0, %v1451
  %1453 = vmatmul.bf16.gmra.mxu0 %v1015
  %v1454 = vpop.f32.mrf.mxu0
  %v1455 = vadd.f32 0.0, %v1454
  %v1456 = vpop.f32.mrf.mxu0
  %v1457 = vadd.f32 0.0, %v1456
  %1458 = vmatmul.bf16.gmra.mxu0 %v1017
  %v1459 = vpop.f32.mrf.mxu0
  %v1460 = vadd.f32 0.0, %v1459
  %v1461 = vpop.f32.mrf.mxu0
  %v1462 = vadd.f32 0.0, %v1461
  %1463 = vmatmul.bf16.gmra.mxu0 %v1019
  %v1464 = vpop.f32.mrf.mxu0
  %v1465 = vadd.f32 0.0, %v1464
  %v1466 = vpop.f32.mrf.mxu0
  %v1467 = vadd.f32 0.0, %v1466
  %1468 = vmatmul.bf16.gmra.mxu0 %v1021
  %v1469 = vpop.f32.mrf.mxu0
  %v1470 = vadd.f32 0.0, %v1469
  %v1471 = vpop.f32.mrf.mxu0
  %v1472 = vadd.f32 0.0, %v1471
  %1473 = vmatmul.bf16.gmra.mxu0 %v1023
  %v1474 = vpop.f32.mrf.mxu0
  %v1475 = vadd.f32 0.0, %v1474
  %v1476 = vpop.f32.mrf.mxu0
  %v1477 = vadd.f32 0.0, %v1476
  %1478 = vmatmul.bf16.gmra.mxu0 %v1025
  %v1479 = vpop.f32.mrf.mxu0
  %v1480 = vadd.f32 0.0, %v1479
  %v1481 = vpop.f32.mrf.mxu0
  %v1482 = vadd.f32 0.0, %v1481
  %1483 = vdwg.mxu0
  %1484 = vmatpush.bf16.msra.mxu0 %v386
  %1485 = vmatpush.bf16.msra.mxu0 %v385
  %1486 = vmatpush.bf16.msra.mxu0 %v384
  %1487 = vmatpush.bf16.msra.mxu0 %v383
  %1488 = vmatpush.bf16.msra.mxu0 %v382
  %1489 = vmatpush.bf16.msra.mxu0 %v381
  %1490 = vmatpush.bf16.msra.mxu0 %v380
  %1491 = vmatpush.bf16.msra.mxu0 %v379
  %1492 = vmatmul.bf16.gmra.mxu0 %v900
  %v1493 = vpop.f32.mrf.mxu0
  %v1494 = vadd.f32 %v1165, %v1493
  %v1495 = vpop.f32.mrf.mxu0
  %v1496 = vadd.f32 %v1167, %v1495
  %1497 = vmatmul.bf16.gmra.mxu0 %v902
  %v1498 = vpop.f32.mrf.mxu0
  %v1499 = vadd.f32 %v1170, %v1498
  %v1500 = vpop.f32.mrf.mxu0
  %v1501 = vadd.f32 %v1172, %v1500
  %1502 = vmatmul.bf16.gmra.mxu0 %v904
  %v1503 = vpop.f32.mrf.mxu0
  %v1504 = vadd.f32 %v1175, %v1503
  %v1505 = vpop.f32.mrf.mxu0
  %v1506 = vadd.f32 %v1177, %v1505
  %1507 = vmatmul.bf16.gmra.mxu0 %v906
  %v1508 = vpop.f32.mrf.mxu0
  %v1509 = vadd.f32 %v1180, %v1508
  %v1510 = vpop.f32.mrf.mxu0
  %v1511 = vadd.f32 %v1182, %v1510
  %1512 = vmatmul.bf16.gmra.mxu0 %v908
  %v1513 = vpop.f32.mrf.mxu0
  %v1514 = vadd.f32 %v1185, %v1513
  %v1515 = vpop.f32.mrf.mxu0
  %v1516 = vadd.f32 %v1187, %v1515
  %1517 = vmatmul.bf16.gmra.mxu0 %v910
  %v1518 = vpop.f32.mrf.mxu0
  %v1519 = vadd.f32 %v1190, %v1518
  %v1520 = vpop.f32.mrf.mxu0
  %v1521 = vadd.f32 %v1192, %v1520
  %1522 = vmatmul.bf16.gmra.mxu0 %v912
  %v1523 = vpop.f32.mrf.mxu0
  %v1524 = vadd.f32 %v1195, %v1523
  %v1525 = vpop.f32.mrf.mxu0
  %v1526 = vadd.f32 %v1197, %v1525
  %1527 = vmatmul.bf16.gmra.mxu0 %v914
  %v1528 = vpop.f32.mrf.mxu0
  %v1529 = vadd.f32 %v1200, %v1528
  %v1530 = vpop.f32.mrf.mxu0
  %v1531 = vadd.f32 %v1202, %v1530
  %1532 = vmatmul.bf16.gmra.mxu0 %v916
  %v1533 = vpop.f32.mrf.mxu0
  %v1534 = vadd.f32 %v1205, %v1533
  %v1535 = vpop.f32.mrf.mxu0
  %v1536 = vadd.f32 %v1207, %v1535
  %1537 = vmatmul.bf16.gmra.mxu0 %v918
  %v1538 = vpop.f32.mrf.mxu0
  %v1539 = vadd.f32 %v1210, %v1538
  %v1540 = vpop.f32.mrf.mxu0
  %v1541 = vadd.f32 %v1212, %v1540
  %1542 = vmatmul.bf16.gmra.mxu0 %v920
  %v1543 = vpop.f32.mrf.mxu0
  %v1544 = vadd.f32 %v1215, %v1543
  %v1545 = vpop.f32.mrf.mxu0
  %v1546 = vadd.f32 %v1217, %v1545
  %1547 = vmatmul.bf16.gmra.mxu0 %v922
  %v1548 = vpop.f32.mrf.mxu0
  %v1549 = vadd.f32 %v1220, %v1548
  %v1550 = vpop.f32.mrf.mxu0
  %v1551 = vadd.f32 %v1222, %v1550
  %1552 = vmatmul.bf16.gmra.mxu0 %v924
  %v1553 = vpop.f32.mrf.mxu0
  %v1554 = vadd.f32 %v1225, %v1553
  %v1555 = vpop.f32.mrf.mxu0
  %v1556 = vadd.f32 %v1227, %v1555
  %1557 = vmatmul.bf16.gmra.mxu0 %v926
  %v1558 = vpop.f32.mrf.mxu0
  %v1559 = vadd.f32 %v1230, %v1558
  %v1560 = vpop.f32.mrf.mxu0
  %v1561 = vadd.f32 %v1232, %v1560
  %1562 = vmatmul.bf16.gmra.mxu0 %v928
  %v1563 = vpop.f32.mrf.mxu0
  %v1564 = vadd.f32 %v1235, %v1563
  %v1565 = vpop.f32.mrf.mxu0
  %v1566 = vadd.f32 %v1237, %v1565
  %1567 = vmatmul.bf16.gmra.mxu0 %v930
  %v1568 = vpop.f32.mrf.mxu0
  %v1569 = vadd.f32 %v1240, %v1568
  %v1570 = vpop.f32.mrf.mxu0
  %v1571 = vadd.f32 %v1242, %v1570
  %1572 = vmatmul.bf16.gmra.mxu0 %v932
  %v1573 = vpop.f32.mrf.mxu0
  %v1574 = vadd.f32 %v1245, %v1573
  %v1575 = vpop.f32.mrf.mxu0
  %v1576 = vadd.f32 %v1247, %v1575
  %1577 = vmatmul.bf16.gmra.mxu0 %v934
  %v1578 = vpop.f32.mrf.mxu0
  %v1579 = vadd.f32 %v1250, %v1578
  %v1580 = vpop.f32.mrf.mxu0
  %v1581 = vadd.f32 %v1252, %v1580
  %1582 = vmatmul.bf16.gmra.mxu0 %v936
  %v1583 = vpop.f32.mrf.mxu0
  %v1584 = vadd.f32 %v1255, %v1583
  %v1585 = vpop.f32.mrf.mxu0
  %v1586 = vadd.f32 %v1257, %v1585
  %1587 = vmatmul.bf16.gmra.mxu0 %v938
  %v1588 = vpop.f32.mrf.mxu0
  %v1589 = vadd.f32 %v1260, %v1588
  %v1590 = vpop.f32.mrf.mxu0
  %v1591 = vadd.f32 %v1262, %v1590
  %1592 = vmatmul.bf16.gmra.mxu0 %v940
  %v1593 = vpop.f32.mrf.mxu0
  %v1594 = vadd.f32 %v1265, %v1593
  %v1595 = vpop.f32.mrf.mxu0
  %v1596 = vadd.f32 %v1267, %v1595
  %1597 = vmatmul.bf16.gmra.mxu0 %v942
  %v1598 = vpop.f32.mrf.mxu0
  %v1599 = vadd.f32 %v1270, %v1598
  %v1600 = vpop.f32.mrf.mxu0
  %v1601 = vadd.f32 %v1272, %v1600
  %1602 = vmatmul.bf16.gmra.mxu0 %v944
  %v1603 = vpop.f32.mrf.mxu0
  %v1604 = vadd.f32 %v1275, %v1603
  %v1605 = vpop.f32.mrf.mxu0
  %v1606 = vadd.f32 %v1277, %v1605
  %1607 = vmatmul.bf16.gmra.mxu0 %v946
  %v1608 = vpop.f32.mrf.mxu0
  %v1609 = vadd.f32 %v1280, %v1608
  %v1610 = vpop.f32.mrf.mxu0
  %v1611 = vadd.f32 %v1282, %v1610
  %1612 = vmatmul.bf16.gmra.mxu0 %v948
  %v1613 = vpop.f32.mrf.mxu0
  %v1614 = vadd.f32 %v1285, %v1613
  %v1615 = vpop.f32.mrf.mxu0
  %v1616 = vadd.f32 %v1287, %v1615
  %1617 = vmatmul.bf16.gmra.mxu0 %v950
  %v1618 = vpop.f32.mrf.mxu0
  %v1619 = vadd.f32 %v1290, %v1618
  %v1620 = vpop.f32.mrf.mxu0
  %v1621 = vadd.f32 %v1292, %v1620
  %1622 = vmatmul.bf16.gmra.mxu0 %v952
  %v1623 = vpop.f32.mrf.mxu0
  %v1624 = vadd.f32 %v1295, %v1623
  %v1625 = vpop.f32.mrf.mxu0
  %v1626 = vadd.f32 %v1297, %v1625
  %1627 = vmatmul.bf16.gmra.mxu0 %v954
  %v1628 = vpop.f32.mrf.mxu0
  %v1629 = vadd.f32 %v1300, %v1628
  %v1630 = vpop.f32.mrf.mxu0
  %v1631 = vadd.f32 %v1302, %v1630
  %1632 = vmatmul.bf16.gmra.mxu0 %v956
  %v1633 = vpop.f32.mrf.mxu0
  %v1634 = vadd.f32 %v1305, %v1633
  %v1635 = vpop.f32.mrf.mxu0
  %v1636 = vadd.f32 %v1307, %v1635
  %1637 = vmatmul.bf16.gmra.mxu0 %v958
  %v1638 = vpop.f32.mrf.mxu0
  %v1639 = vadd.f32 %v1310, %v1638
  %v1640 = vpop.f32.mrf.mxu0
  %v1641 = vadd.f32 %v1312, %v1640
  %1642 = vmatmul.bf16.gmra.mxu0 %v960
  %v1643 = vpop.f32.mrf.mxu0
  %v1644 = vadd.f32 %v1315, %v1643
  %v1645 = vpop.f32.mrf.mxu0
  %v1646 = vadd.f32 %v1317, %v1645
  %1647 = vmatmul.bf16.gmra.mxu0 %v962
  %v1648 = vpop.f32.mrf.mxu0
  %v1649 = vadd.f32 %v1320, %v1648
  %v1650 = vpop.f32.mrf.mxu0
  %v1651 = vadd.f32 %v1322, %v1650
  %1652 = vmatmul.bf16.gmra.mxu0 %v964
  %v1653 = vpop.f32.mrf.mxu0
  %v1654 = vadd.f32 %v1325, %v1653
  %v1655 = vpop.f32.mrf.mxu0
  %v1656 = vadd.f32 %v1327, %v1655
  %1657 = vmatmul.bf16.gmra.mxu0 %v966
  %v1658 = vpop.f32.mrf.mxu0
  %v1659 = vadd.f32 %v1330, %v1658
  %v1660 = vpop.f32.mrf.mxu0
  %v1661 = vadd.f32 %v1332, %v1660
  %1662 = vmatmul.bf16.gmra.mxu0 %v968
  %v1663 = vpop.f32.mrf.mxu0
  %v1664 = vadd.f32 %v1335, %v1663
  %v1665 = vpop.f32.mrf.mxu0
  %v1666 = vadd.f32 %v1337, %v1665
  %1667 = vmatmul.bf16.gmra.mxu0 %v970
  %v1668 = vpop.f32.mrf.mxu0
  %v1669 = vadd.f32 %v1340, %v1668
  %v1670 = vpop.f32.mrf.mxu0
  %v1671 = vadd.f32 %v1342, %v1670
  %1672 = vmatmul.bf16.gmra.mxu0 %v972
  %v1673 = vpop.f32.mrf.mxu0
  %v1674 = vadd.f32 %v1345, %v1673
  %v1675 = vpop.f32.mrf.mxu0
  %v1676 = vadd.f32 %v1347, %v1675
  %1677 = vmatmul.bf16.gmra.mxu0 %v974
  %v1678 = vpop.f32.mrf.mxu0
  %v1679 = vadd.f32 %v1350, %v1678
  %v1680 = vpop.f32.mrf.mxu0
  %v1681 = vadd.f32 %v1352, %v1680
  %1682 = vmatmul.bf16.gmra.mxu0 %v976
  %v1683 = vpop.f32.mrf.mxu0
  %v1684 = vadd.f32 %v1355, %v1683
  %v1685 = vpop.f32.mrf.mxu0
  %v1686 = vadd.f32 %v1357, %v1685
  %1687 = vmatmul.bf16.gmra.mxu0 %v978
  %v1688 = vpop.f32.mrf.mxu0
  %v1689 = vadd.f32 %v1360, %v1688
  %v1690 = vpop.f32.mrf.mxu0
  %v1691 = vadd.f32 %v1362, %v1690
  %1692 = vmatmul.bf16.gmra.mxu0 %v980
  %v1693 = vpop.f32.mrf.mxu0
  %v1694 = vadd.f32 %v1365, %v1693
  %v1695 = vpop.f32.mrf.mxu0
  %v1696 = vadd.f32 %v1367, %v1695
  %1697 = vmatmul.bf16.gmra.mxu0 %v982
  %v1698 = vpop.f32.mrf.mxu0
  %v1699 = vadd.f32 %v1370, %v1698
  %v1700 = vpop.f32.mrf.mxu0
  %v1701 = vadd.f32 %v1372, %v1700
  %1702 = vmatmul.bf16.gmra.mxu0 %v984
  %v1703 = vpop.f32.mrf.mxu0
  %v1704 = vadd.f32 %v1375, %v1703
  %v1705 = vpop.f32.mrf.mxu0
  %v1706 = vadd.f32 %v1377, %v1705
  %1707 = vmatmul.bf16.gmra.mxu0 %v986
  %v1708 = vpop.f32.mrf.mxu0
  %v1709 = vadd.f32 %v1380, %v1708
  %v1710 = vpop.f32.mrf.mxu0
  %v1711 = vadd.f32 %v1382, %v1710
  %1712 = vmatmul.bf16.gmra.mxu0 %v988
  %v1713 = vpop.f32.mrf.mxu0
  %v1714 = vadd.f32 %v1385, %v1713
  %v1715 = vpop.f32.mrf.mxu0
  %v1716 = vadd.f32 %v1387, %v1715
  %1717 = vmatmul.bf16.gmra.mxu0 %v990
  %v1718 = vpop.f32.mrf.mxu0
  %v1719 = vadd.f32 %v1390, %v1718
  %v1720 = vpop.f32.mrf.mxu0
  %v1721 = vadd.f32 %v1392, %v1720
  %1722 = vmatmul.bf16.gmra.mxu0 %v992
  %v1723 = vpop.f32.mrf.mxu0
  %v1724 = vadd.f32 %v1395, %v1723
  %v1725 = vpop.f32.mrf.mxu0
  %v1726 = vadd.f32 %v1397, %v1725
  %1727 = vmatmul.bf16.gmra.mxu0 %v994
  %v1728 = vpop.f32.mrf.mxu0
  %v1729 = vadd.f32 %v1400, %v1728
  %v1730 = vpop.f32.mrf.mxu0
  %v1731 = vadd.f32 %v1402, %v1730
  %1732 = vmatmul.bf16.gmra.mxu0 %v996
  %v1733 = vpop.f32.mrf.mxu0
  %v1734 = vadd.f32 %v1405, %v1733
  %v1735 = vpop.f32.mrf.mxu0
  %v1736 = vadd.f32 %v1407, %v1735
  %1737 = vmatmul.bf16.gmra.mxu0 %v998
  %v1738 = vpop.f32.mrf.mxu0
  %v1739 = vadd.f32 %v1410, %v1738
  %v1740 = vpop.f32.mrf.mxu0
  %v1741 = vadd.f32 %v1412, %v1740
  %1742 = vmatmul.bf16.gmra.mxu0 %v1000
  %v1743 = vpop.f32.mrf.mxu0
  %v1744 = vadd.f32 %v1415, %v1743
  %v1745 = vpop.f32.mrf.mxu0
  %v1746 = vadd.f32 %v1417, %v1745
  %1747 = vmatmul.bf16.gmra.mxu0 %v1002
  %v1748 = vpop.f32.mrf.mxu0
  %v1749 = vadd.f32 %v1420, %v1748
  %v1750 = vpop.f32.mrf.mxu0
  %v1751 = vadd.f32 %v1422, %v1750
  %1752 = vmatmul.bf16.gmra.mxu0 %v1004
  %v1753 = vpop.f32.mrf.mxu0
  %v1754 = vadd.f32 %v1425, %v1753
  %v1755 = vpop.f32.mrf.mxu0
  %v1756 = vadd.f32 %v1427, %v1755
  %1757 = vmatmul.bf16.gmra.mxu0 %v1006
  %v1758 = vpop.f32.mrf.mxu0
  %v1759 = vadd.f32 %v1430, %v1758
  %v1760 = vpop.f32.mrf.mxu0
  %v1761 = vadd.f32 %v1432, %v1760
  %1762 = vmatmul.bf16.gmra.mxu0 %v1008
  %v1763 = vpop.f32.mrf.mxu0
  %v1764 = vadd.f32 %v1435, %v1763
  %v1765 = vpop.f32.mrf.mxu0
  %v1766 = vadd.f32 %v1437, %v1765
  %1767 = vmatmul.bf16.gmra.mxu0 %v1010
  %v1768 = vpop.f32.mrf.mxu0
  %v1769 = vadd.f32 %v1440, %v1768
  %v1770 = vpop.f32.mrf.mxu0
  %v1771 = vadd.f32 %v1442, %v1770
  %1772 = vmatmul.bf16.gmra.mxu0 %v1012
  %v1773 = vpop.f32.mrf.mxu0
  %v1774 = vadd.f32 %v1445, %v1773
  %v1775 = vpop.f32.mrf.mxu0
  %v1776 = vadd.f32 %v1447, %v1775
  %1777 = vmatmul.bf16.gmra.mxu0 %v1014
  %v1778 = vpop.f32.mrf.mxu0
  %v1779 = vadd.f32 %v1450, %v1778
  %v1780 = vpop.f32.mrf.mxu0
  %v1781 = vadd.f32 %v1452, %v1780
  %1782 = vmatmul.bf16.gmra.mxu0 %v1016
  %v1783 = vpop.f32.mrf.mxu0
  %v1784 = vadd.f32 %v1455, %v1783
  %v1785 = vpop.f32.mrf.mxu0
  %v1786 = vadd.f32 %v1457, %v1785
  %1787 = vmatmul.bf16.gmra.mxu0 %v1018
  %v1788 = vpop.f32.mrf.mxu0
  %v1789 = vadd.f32 %v1460, %v1788
  %v1790 = vpop.f32.mrf.mxu0
  %v1791 = vadd.f32 %v1462, %v1790
  %1792 = vmatmul.bf16.gmra.mxu0 %v1020
  %v1793 = vpop.f32.mrf.mxu0
  %v1794 = vadd.f32 %v1465, %v1793
  %v1795 = vpop.f32.mrf.mxu0
  %v1796 = vadd.f32 %v1467, %v1795
  %1797 = vmatmul.bf16.gmra.mxu0 %v1022
  %v1798 = vpop.f32.mrf.mxu0
  %v1799 = vadd.f32 %v1470, %v1798
  %v1800 = vpop.f32.mrf.mxu0
  %v1801 = vadd.f32 %v1472, %v1800
  %1802 = vmatmul.bf16.gmra.mxu0 %v1024
  %v1803 = vpop.f32.mrf.mxu0
  %v1804 = vadd.f32 %v1475, %v1803
  %v1805 = vpop.f32.mrf.mxu0
  %v1806 = vadd.f32 %v1477, %v1805
  %1807 = vmatmul.bf16.gmra.mxu0 %v1026
  %v1808 = vpop.f32.mrf.mxu0
  %v1809 = vadd.f32 %v1480, %v1808
  %v1810 = vpop.f32.mrf.mxu0
  %v1811 = vadd.f32 %v1482, %v1810
  %1812 = vdwg.mxu0
  %v1813 = vpack.c.bf16 %v1494, %v1494
  %v1814 = vpack.c.bf16 %v1496, %v1496
  %v1815 = vpack.c.bf16 %v1499, %v1499
  %v1816 = vpack.c.bf16 %v1501, %v1501
  %v1817 = vpack.c.bf16 %v1504, %v1504
  %v1818 = vpack.c.bf16 %v1506, %v1506
  %v1819 = vpack.c.bf16 %v1509, %v1509
  %v1820 = vpack.c.bf16 %v1511, %v1511
  %v1821 = vpack.c.bf16 %v1514, %v1514
  %v1822 = vpack.c.bf16 %v1516, %v1516
  %v1823 = vpack.c.bf16 %v1519, %v1519
  %v1824 = vpack.c.bf16 %v1521, %v1521
  %v1825 = vpack.c.bf16 %v1524, %v1524
  %v1826 = vpack.c.bf16 %v1526, %v1526
  %v1827 = vpack.c.bf16 %v1529, %v1529
  %v1828 = vpack.c.bf16 %v1531, %v1531
  %v1829 = vpack.c.bf16 %v1534, %v1534
  %v1830 = vpack.c.bf16 %v1536, %v1536
  %v1831 = vpack.c.bf16 %v1539, %v1539
  %v1832 = vpack.c.bf16 %v1541, %v1541
  %v1833 = vpack.c.bf16 %v1544, %v1544
  %v1834 = vpack.c.bf16 %v1546, %v1546
  %v1835 = vpack.c.bf16 %v1549, %v1549
  %v1836 = vpack.c.bf16 %v1551, %v1551
  %v1837 = vpack.c.bf16 %v1554, %v1554
  %v1838 = vpack.c.bf16 %v1556, %v1556
  %v1839 = vpack.c.bf16 %v1559, %v1559
  %v1840 = vpack.c.bf16 %v1561, %v1561
  %v1841 = vpack.c.bf16 %v1564, %v1564
  %v1842 = vpack.c.bf16 %v1566, %v1566
  %v1843 = vpack.c.bf16 %v1569, %v1569
  %v1844 = vpack.c.bf16 %v1571, %v1571
  %v1845 = vpack.c.bf16 %v1574, %v1574
  %v1846 = vpack.c.bf16 %v1576, %v1576
  %v1847 = vpack.c.bf16 %v1579, %v1579
  %v1848 = vpack.c.bf16 %v1581, %v1581
  %v1849 = vpack.c.bf16 %v1584, %v1584
  %v1850 = vpack.c.bf16 %v1586, %v1586
  %v1851 = vpack.c.bf16 %v1589, %v1589
  %v1852 = vpack.c.bf16 %v1591, %v1591
  %v1853 = vpack.c.bf16 %v1594, %v1594
  %v1854 = vpack.c.bf16 %v1596, %v1596
  %v1855 = vpack.c.bf16 %v1599, %v1599
  %v1856 = vpack.c.bf16 %v1601, %v1601
  %v1857 = vpack.c.bf16 %v1604, %v1604
  %v1858 = vpack.c.bf16 %v1606, %v1606
  %v1859 = vpack.c.bf16 %v1609, %v1609
  %v1860 = vpack.c.bf16 %v1611, %v1611
  %v1861 = vpack.c.bf16 %v1614, %v1614
  %v1862 = vpack.c.bf16 %v1616, %v1616
  %v1863 = vpack.c.bf16 %v1619, %v1619
  %v1864 = vpack.c.bf16 %v1621, %v1621
  %v1865 = vpack.c.bf16 %v1624, %v1624
  %v1866 = vpack.c.bf16 %v1626, %v1626
  %v1867 = vpack.c.bf16 %v1629, %v1629
  %v1868 = vpack.c.bf16 %v1631, %v1631
  %v1869 = vpack.c.bf16 %v1634, %v1634
  %v1870 = vpack.c.bf16 %v1636, %v1636
  %v1871 = vpack.c.bf16 %v1639, %v1639
  %v1872 = vpack.c.bf16 %v1641, %v1641
  %v1873 = vpack.c.bf16 %v1644, %v1644
  %v1874 = vpack.c.bf16 %v1646, %v1646
  %v1875 = vpack.c.bf16 %v1649, %v1649
  %v1876 = vpack.c.bf16 %v1651, %v1651
  %v1877 = vpack.c.bf16 %v1654, %v1654
  %v1878 = vpack.c.bf16 %v1656, %v1656
  %v1879 = vpack.c.bf16 %v1659, %v1659
  %v1880 = vpack.c.bf16 %v1661, %v1661
  %v1881 = vpack.c.bf16 %v1664, %v1664
  %v1882 = vpack.c.bf16 %v1666, %v1666
  %v1883 = vpack.c.bf16 %v1669, %v1669
  %v1884 = vpack.c.bf16 %v1671, %v1671
  %v1885 = vpack.c.bf16 %v1674, %v1674
  %v1886 = vpack.c.bf16 %v1676, %v1676
  %v1887 = vpack.c.bf16 %v1679, %v1679
  %v1888 = vpack.c.bf16 %v1681, %v1681
  %v1889 = vpack.c.bf16 %v1684, %v1684
  %v1890 = vpack.c.bf16 %v1686, %v1686
  %v1891 = vpack.c.bf16 %v1689, %v1689
  %v1892 = vpack.c.bf16 %v1691, %v1691
  %v1893 = vpack.c.bf16 %v1694, %v1694
  %v1894 = vpack.c.bf16 %v1696, %v1696
  %v1895 = vpack.c.bf16 %v1699, %v1699
  %v1896 = vpack.c.bf16 %v1701, %v1701
  %v1897 = vpack.c.bf16 %v1704, %v1704
  %v1898 = vpack.c.bf16 %v1706, %v1706
  %v1899 = vpack.c.bf16 %v1709, %v1709
  %v1900 = vpack.c.bf16 %v1711, %v1711
  %v1901 = vpack.c.bf16 %v1714, %v1714
  %v1902 = vpack.c.bf16 %v1716, %v1716
  %v1903 = vpack.c.bf16 %v1719, %v1719
  %v1904 = vpack.c.bf16 %v1721, %v1721
  %v1905 = vpack.c.bf16 %v1724, %v1724
  %v1906 = vpack.c.bf16 %v1726, %v1726
  %v1907 = vpack.c.bf16 %v1729, %v1729
  %v1908 = vpack.c.bf16 %v1731, %v1731
  %v1909 = vpack.c.bf16 %v1734, %v1734
  %v1910 = vpack.c.bf16 %v1736, %v1736
  %v1911 = vpack.c.bf16 %v1739, %v1739
  %v1912 = vpack.c.bf16 %v1741, %v1741
  %v1913 = vpack.c.bf16 %v1744, %v1744
  %v1914 = vpack.c.bf16 %v1746, %v1746
  %v1915 = vpack.c.bf16 %v1749, %v1749
  %v1916 = vpack.c.bf16 %v1751, %v1751
  %v1917 = vpack.c.bf16 %v1754, %v1754
  %v1918 = vpack.c.bf16 %v1756, %v1756
  %v1919 = vpack.c.bf16 %v1759, %v1759
  %v1920 = vpack.c.bf16 %v1761, %v1761
  %v1921 = vpack.c.bf16 %v1764, %v1764
  %v1922 = vpack.c.bf16 %v1766, %v1766
  %v1923 = vpack.c.bf16 %v1769, %v1769
  %v1924 = vpack.c.bf16 %v1771, %v1771
  %v1925 = vpack.c.bf16 %v1774, %v1774
  %v1926 = vpack.c.bf16 %v1776, %v1776
  %v1927 = vpack.c.bf16 %v1779, %v1779
  %v1928 = vpack.c.bf16 %v1781, %v1781
  %v1929 = vpack.c.bf16 %v1784, %v1784
  %v1930 = vpack.c.bf16 %v1786, %v1786
  %v1931 = vpack.c.bf16 %v1789, %v1789
  %v1932 = vpack.c.bf16 %v1791, %v1791
  %v1933 = vpack.c.bf16 %v1794, %v1794
  %v1934 = vpack.c.bf16 %v1796, %v1796
  %v1935 = vpack.c.bf16 %v1799, %v1799
  %v1936 = vpack.c.bf16 %v1801, %v1801
  %v1937 = vpack.c.bf16 %v1804, %v1804
  %v1938 = vpack.c.bf16 %v1806, %v1806
  %v1939 = vpack.c.bf16 %v1809, %v1809
  %v1940 = vpack.c.bf16 %v1811, %v1811
  %v1941 = vld [vmem:[%s4] sm:$0xff]
  %v1942 = vld [vmem:[%s4 + $0x8] sm:$0xff]
  %v1943 = vld [vmem:[%s4 + $0x10] sm:$0xff]
  %v1944 = vld [vmem:[%s4 + $0x18] sm:$0xff]
  %v1945 = vld [vmem:[%s4 + $0x20] sm:$0xff]
  %v1946 = vld [vmem:[%s4 + $0x28] sm:$0xff]
  %v1947 = vld [vmem:[%s4 + $0x30] sm:$0xff]
  %v1948 = vld [vmem:[%s4 + $0x38] sm:$0xff]
  %v1949 = vld [vmem:[%s4 + $0x40] sm:$0xff]
  %v1950 = vld [vmem:[%s4 + $0x48] sm:$0xff]
  %v1951 = vld [vmem:[%s4 + $0x50] sm:$0xff]
  %v1952 = vld [vmem:[%s4 + $0x58] sm:$0xff]
  %v1953 = vld [vmem:[%s4 + $0x60] sm:$0xff]
  %v1954 = vld [vmem:[%s4 + $0x68] sm:$0xff]
  %v1955 = vld [vmem:[%s4 + $0x70] sm:$0xff]
  %v1956 = vld [vmem:[%s4 + $0x78] sm:$0xff]
  %s1957 = scalar_lea.vmem %s4, 128
  %v1958 = vld [vmem:[%s1957] sm:$0xff]
  %v1959 = vld [vmem:[%s1957 + $0x8] sm:$0xff]
  %v1960 = vld [vmem:[%s1957 + $0x10] sm:$0xff]
  %v1961 = vld [vmem:[%s1957 + $0x18] sm:$0xff]
  %v1962 = vld [vmem:[%s1957 + $0x20] sm:$0xff]
  %v1963 = vld [vmem:[%s1957 + $0x28] sm:$0xff]
  %v1964 = vld [vmem:[%s1957 + $0x30] sm:$0xff]
  %v1965 = vld [vmem:[%s1957 + $0x38] sm:$0xff]
  %v1966 = vld [vmem:[%s1957 + $0x40] sm:$0xff]
  %v1967 = vld [vmem:[%s1957 + $0x48] sm:$0xff]
  %v1968 = vld [vmem:[%s1957 + $0x50] sm:$0xff]
  %v1969 = vld [vmem:[%s1957 + $0x58] sm:$0xff]
  %v1970 = vld [vmem:[%s1957 + $0x60] sm:$0xff]
  %v1971 = vld [vmem:[%s1957 + $0x68] sm:$0xff]
  %v1972 = vld [vmem:[%s1957 + $0x70] sm:$0xff]
  %v1973 = vld [vmem:[%s1957 + $0x78] sm:$0xff]
  %v1982 = vunpack.c.l.b16 %v1821
  %v1983 = vunpack.c.l.b16 %v1822
  %v1984 = vunpack.c.l.b16 %v1823
  %v1985 = vunpack.c.l.b16 %v1824
  %v1986 = vunpack.c.l.b16 %v1825
  %v1987 = vunpack.c.l.b16 %v1826
  %v1988 = vunpack.c.l.b16 %v1827
  %v1989 = vunpack.c.l.b16 %v1828
  %v1990 = vpack.c.b16 %v1983, %v1982
  %v1991 = vpack.c.b16 %v1985, %v1984
  %v1992 = vpack.c.b16 %v1987, %v1986
  %v1993 = vpack.c.b16 %v1989, %v1988
  %v2014 = vunpack.c.l.b16 %v1958
  %v2015 = vunpack.c.h.b16 %v1958
  %v2016 = vunpack.c.l.b16 %v1959
  %v2017 = vunpack.c.h.b16 %v1959
  %v2018 = vunpack.c.l.b16 %v1960
  %v2019 = vunpack.c.h.b16 %v1960
  %v2020 = vunpack.c.l.b16 %v1961
  %v2021 = vunpack.c.h.b16 %v1961
  %v2022 = vunpack.c.l.b16 %v1962
  %v2023 = vunpack.c.h.b16 %v1962
  %v2024 = vunpack.c.l.b16 %v1963
  %v2025 = vunpack.c.h.b16 %v1963
  %v2026 = vunpack.c.l.b16 %v1964
  %v2027 = vunpack.c.h.b16 %v1964
  %v2028 = vunpack.c.l.b16 %v1965
  %v2029 = vunpack.c.h.b16 %v1965
  %v2030 = vunpack.c.l.b16 %v1966
  %v2031 = vunpack.c.h.b16 %v1966
  %v2032 = vunpack.c.l.b16 %v1967
  %v2033 = vunpack.c.h.b16 %v1967
  %v2034 = vunpack.c.l.b16 %v1968
  %v2035 = vunpack.c.h.b16 %v1968
  %v2036 = vunpack.c.l.b16 %v1969
  %v2037 = vunpack.c.h.b16 %v1969
  %v2038 = vunpack.c.l.b16 %v1970
  %v2039 = vunpack.c.h.b16 %v1970
  %v2040 = vunpack.c.l.b16 %v1971
  %v2041 = vunpack.c.h.b16 %v1971
  %v2042 = vunpack.c.l.b16 %v1972
  %v2043 = vunpack.c.h.b16 %v1972
  %v2044 = vunpack.c.l.b16 %v1973
  %v2045 = vunpack.c.h.b16 %v1973
  %v2046 = vpack.c.b16 %v2016, %v2014
  %v2047 = vpack.c.b16 %v2017, %v2015
  %v2048 = vpack.c.b16 %v2020, %v2018
  %v2049 = vpack.c.b16 %v2021, %v2019
  %v2050 = vpack.c.b16 %v2024, %v2022
  %v2051 = vpack.c.b16 %v2025, %v2023
  %v2052 = vpack.c.b16 %v2028, %v2026
  %v2053 = vpack.c.b16 %v2029, %v2027
  %v2054 = vpack.c.b16 %v2032, %v2030
  %v2055 = vpack.c.b16 %v2033, %v2031
  %v2056 = vpack.c.b16 %v2036, %v2034
  %v2057 = vpack.c.b16 %v2037, %v2035
  %v2058 = vpack.c.b16 %v2040, %v2038
  %v2059 = vpack.c.b16 %v2041, %v2039
  %v2060 = vpack.c.b16 %v2044, %v2042
  %v2061 = vpack.c.b16 %v2045, %v2043
  %2078 = vmatpush.bf16.msra.mxu0 %v2060
  %2079 = vmatpush.bf16.msra.mxu0 %v2058
  %2080 = vmatpush.bf16.msra.mxu0 %v2056
  %2081 = vmatpush.bf16.msra.mxu0 %v2054
  %2082 = vmatpush.bf16.msra.mxu0 %v2052
  %2083 = vmatpush.bf16.msra.mxu0 %v2050
  %2084 = vmatpush.bf16.msra.mxu0 %v2048
  %2085 = vmatpush.bf16.msra.mxu0 %v2046
  %2086 = vmatmul.bf16.gmra.mxu0 %v1990
  %v2087 = vpop.f32.mrf.mxu0
  %v2088 = vadd.f32 0.0, %v2087
  %v2089 = vpop.f32.mrf.mxu0
  %v2090 = vadd.f32 0.0, %v2089
  %2091 = vmatmul.bf16.gmra.mxu0 %v1991
  %v2092 = vpop.f32.mrf.mxu0
  %v2093 = vadd.f32 0.0, %v2092
  %v2094 = vpop.f32.mrf.mxu0
  %v2095 = vadd.f32 0.0, %v2094
  %2096 = vmatmul.bf16.gmra.mxu0 %v1992
  %v2097 = vpop.f32.mrf.mxu0
  %v2098 = vadd.f32 0.0, %v2097
  %v2099 = vpop.f32.mrf.mxu0
  %v2100 = vadd.f32 0.0, %v2099
  %2101 = vmatmul.bf16.gmra.mxu0 %v1993
  %v2102 = vpop.f32.mrf.mxu0
  %v2103 = vadd.f32 0.0, %v2102
  %v2104 = vpop.f32.mrf.mxu0
  %v2105 = vadd.f32 0.0, %v2104
  %2106 = vdwg.mxu0
  %2107 = vmatpush.bf16.msra.mxu0 %v2061
  %2108 = vmatpush.bf16.msra.mxu0 %v2059
  %2109 = vmatpush.bf16.msra.mxu0 %v2057
  %2110 = vmatpush.bf16.msra.mxu0 %v2055
  %2111 = vmatpush.bf16.msra.mxu0 %v2053
  %2112 = vmatpush.bf16.msra.mxu0 %v2051
  %2113 = vmatpush.bf16.msra.mxu0 %v2049
  %2114 = vmatpush.bf16.msra.mxu0 %v2047
  %2115 = vmatmul.bf16.gmra.mxu0 %v1990
  %v2116 = vpop.f32.mrf.mxu0
  %v2117 = vadd.f32 0.0, %v2116
  %v2118 = vpop.f32.mrf.mxu0
  %v2119 = vadd.f32 0.0, %v2118
  %2120 = vmatmul.bf16.gmra.mxu0 %v1991
  %v2121 = vpop.f32.mrf.mxu0
  %v2122 = vadd.f32 0.0, %v2121
  %v2123 = vpop.f32.mrf.mxu0
  %v2124 = vadd.f32 0.0, %v2123
  %2125 = vmatmul.bf16.gmra.mxu0 %v1992
  %v2126 = vpop.f32.mrf.mxu0
  %v2127 = vadd.f32 0.0, %v2126
  %v2128 = vpop.f32.mrf.mxu0
  %v2129 = vadd.f32 0.0, %v2128
  %2130 = vmatmul.bf16.gmra.mxu0 %v1993
  %v2131 = vpop.f32.mrf.mxu0
  %v2132 = vadd.f32 0.0, %v2131
  %v2133 = vpop.f32.mrf.mxu0
  %v2134 = vadd.f32 0.0, %v2133
  %2135 = vdwg.mxu0
  %v2144 = vunpack.c.l.b16 %v1813
  %v2145 = vunpack.c.l.b16 %v1814
  %v2146 = vunpack.c.l.b16 %v1815
  %v2147 = vunpack.c.l.b16 %v1816
  %v2148 = vunpack.c.l.b16 %v1817
  %v2149 = vunpack.c.l.b16 %v1818
  %v2150 = vunpack.c.l.b16 %v1819
  %v2151 = vunpack.c.l.b16 %v1820
  %v2152 = vpack.c.b16 %v2145, %v2144
  %v2153 = vpack.c.b16 %v2147, %v2146
  %v2154 = vpack.c.b16 %v2149, %v2148
  %v2155 = vpack.c.b16 %v2151, %v2150
  %v2176 = vunpack.c.l.b16 %v1941
  %v2177 = vunpack.c.h.b16 %v1941
  %v2178 = vunpack.c.l.b16 %v1942
  %v2179 = vunpack.c.h.b16 %v1942
  %v2180 = vunpack.c.l.b16 %v1943
  %v2181 = vunpack.c.h.b16 %v1943
  %v2182 = vunpack.c.l.b16 %v1944
  %v2183 = vunpack.c.h.b16 %v1944
  %v2184 = vunpack.c.l.b16 %v1945
  %v2185 = vunpack.c.h.b16 %v1945
  %v2186 = vunpack.c.l.b16 %v1946
  %v2187 = vunpack.c.h.b16 %v1946
  %v2188 = vunpack.c.l.b16 %v1947
  %v2189 = vunpack.c.h.b16 %v1947
  %v2190 = vunpack.c.l.b16 %v1948
  %v2191 = vunpack.c.h.b16 %v1948
  %v2192 = vunpack.c.l.b16 %v1949
  %v2193 = vunpack.c.h.b16 %v1949
  %v2194 = vunpack.c.l.b16 %v1950
  %v2195 = vunpack.c.h.b16 %v1950
  %v2196 = vunpack.c.l.b16 %v1951
  %v2197 = vunpack.c.h.b16 %v1951
  %v2198 = vunpack.c.l.b16 %v1952
  %v2199 = vunpack.c.h.b16 %v1952
  %v2200 = vunpack.c.l.b16 %v1953
  %v2201 = vunpack.c.h.b16 %v1953
  %v2202 = vunpack.c.l.b16 %v1954
  %v2203 = vunpack.c.h.b16 %v1954
  %v2204 = vunpack.c.l.b16 %v1955
  %v2205 = vunpack.c.h.b16 %v1955
  %v2206 = vunpack.c.l.b16 %v1956
  %v2207 = vunpack.c.h.b16 %v1956
  %v2208 = vpack.c.b16 %v2178, %v2176
  %v2209 = vpack.c.b16 %v2179, %v2177
  %v2210 = vpack.c.b16 %v2182, %v2180
  %v2211 = vpack.c.b16 %v2183, %v2181
  %v2212 = vpack.c.b16 %v2186, %v2184
  %v2213 = vpack.c.b16 %v2187, %v2185
  %v2214 = vpack.c.b16 %v2190, %v2188
  %v2215 = vpack.c.b16 %v2191, %v2189
  %v2216 = vpack.c.b16 %v2194, %v2192
  %v2217 = vpack.c.b16 %v2195, %v2193
  %v2218 = vpack.c.b16 %v2198, %v2196
  %v2219 = vpack.c.b16 %v2199, %v2197
  %v2220 = vpack.c.b16 %v2202, %v2200
  %v2221 = vpack.c.b16 %v2203, %v2201
  %v2222 = vpack.c.b16 %v2206, %v2204
  %v2223 = vpack.c.b16 %v2207, %v2205
  %2240 = vmatpush.bf16.msra.mxu0 %v2222
  %2241 = vmatpush.bf16.msra.mxu0 %v2220
  %2242 = vmatpush.bf16.msra.mxu0 %v2218
  %2243 = vmatpush.bf16.msra.mxu0 %v2216
  %2244 = vmatpush.bf16.msra.mxu0 %v2214
  %2245 = vmatpush.bf16.msra.mxu0 %v2212
  %2246 = vmatpush.bf16.msra.mxu0 %v2210
  %2247 = vmatpush.bf16.msra.mxu0 %v2208
  %2248 = vmatmul.bf16.gmra.mxu0 %v2152
  %v2249 = vpop.f32.mrf.mxu0
  %v2250 = vadd.f32 %v2088, %v2249
  %v2251 = vpop.f32.mrf.mxu0
  %v2252 = vadd.f32 %v2090, %v2251
  %2253 = vmatmul.bf16.gmra.mxu0 %v2153
  %v2254 = vpop.f32.mrf.mxu0
  %v2255 = vadd.f32 %v2093, %v2254
  %v2256 = vpop.f32.mrf.mxu0
  %v2257 = vadd.f32 %v2095, %v2256
  %2258 = vmatmul.bf16.gmra.mxu0 %v2154
  %v2259 = vpop.f32.mrf.mxu0
  %v2260 = vadd.f32 %v2098, %v2259
  %v2261 = vpop.f32.mrf.mxu0
  %v2262 = vadd.f32 %v2100, %v2261
  %2263 = vmatmul.bf16.gmra.mxu0 %v2155
  %v2264 = vpop.f32.mrf.mxu0
  %v2265 = vadd.f32 %v2103, %v2264
  %v2266 = vpop.f32.mrf.mxu0
  %v2267 = vadd.f32 %v2105, %v2266
  %2268 = vdwg.mxu0
  %2269 = vmatpush.bf16.msra.mxu0 %v2223
  %2270 = vmatpush.bf16.msra.mxu0 %v2221
  %2271 = vmatpush.bf16.msra.mxu0 %v2219
  %2272 = vmatpush.bf16.msra.mxu0 %v2217
  %2273 = vmatpush.bf16.msra.mxu0 %v2215
  %2274 = vmatpush.bf16.msra.mxu0 %v2213
  %2275 = vmatpush.bf16.msra.mxu0 %v2211
  %2276 = vmatpush.bf16.msra.mxu0 %v2209
  %2277 = vmatmul.bf16.gmra.mxu0 %v2152
  %v2278 = vpop.f32.mrf.mxu0
  %v2279 = vadd.f32 %v2117, %v2278
  %v2280 = vpop.f32.mrf.mxu0
  %v2281 = vadd.f32 %v2119, %v2280
  %2282 = vmatmul.bf16.gmra.mxu0 %v2153
  %v2283 = vpop.f32.mrf.mxu0
  %v2284 = vadd.f32 %v2122, %v2283
  %v2285 = vpop.f32.mrf.mxu0
  %v2286 = vadd.f32 %v2124, %v2285
  %2287 = vmatmul.bf16.gmra.mxu0 %v2154
  %v2288 = vpop.f32.mrf.mxu0
  %v2289 = vadd.f32 %v2127, %v2288
  %v2290 = vpop.f32.mrf.mxu0
  %v2291 = vadd.f32 %v2129, %v2290
  %2292 = vmatmul.bf16.gmra.mxu0 %v2155
  %v2293 = vpop.f32.mrf.mxu0
  %v2294 = vadd.f32 %v2132, %v2293
  %v2295 = vpop.f32.mrf.mxu0
  %v2296 = vadd.f32 %v2134, %v2295
  %2297 = vdwg.mxu0
  %s2298 = scalar_lea.vmem %s4, 256
  %v2299 = vld [vmem:[%s2298] sm:$0xff]
  %v2300 = vld [vmem:[%s2298 + $0x8] sm:$0xff]
  %v2301 = vld [vmem:[%s2298 + $0x10] sm:$0xff]
  %v2302 = vld [vmem:[%s2298 + $0x18] sm:$0xff]
  %v2303 = vld [vmem:[%s2298 + $0x20] sm:$0xff]
  %v2304 = vld [vmem:[%s2298 + $0x28] sm:$0xff]
  %v2305 = vld [vmem:[%s2298 + $0x30] sm:$0xff]
  %v2306 = vld [vmem:[%s2298 + $0x38] sm:$0xff]
  %v2307 = vld [vmem:[%s2298 + $0x40] sm:$0xff]
  %v2308 = vld [vmem:[%s2298 + $0x48] sm:$0xff]
  %v2309 = vld [vmem:[%s2298 + $0x50] sm:$0xff]
  %v2310 = vld [vmem:[%s2298 + $0x58] sm:$0xff]
  %v2311 = vld [vmem:[%s2298 + $0x60] sm:$0xff]
  %v2312 = vld [vmem:[%s2298 + $0x68] sm:$0xff]
  %v2313 = vld [vmem:[%s2298 + $0x70] sm:$0xff]
  %v2314 = vld [vmem:[%s2298 + $0x78] sm:$0xff]
  %v2323 = vunpack.c.l.b16 %v1829
  %v2324 = vunpack.c.l.b16 %v1830
  %v2325 = vunpack.c.l.b16 %v1831
  %v2326 = vunpack.c.l.b16 %v1832
  %v2327 = vunpack.c.l.b16 %v1833
  %v2328 = vunpack.c.l.b16 %v1834
  %v2329 = vunpack.c.l.b16 %v1835
  %v2330 = vunpack.c.l.b16 %v1836
  %v2331 = vpack.c.b16 %v2324, %v2323
  %v2332 = vpack.c.b16 %v2326, %v2325
  %v2333 = vpack.c.b16 %v2328, %v2327
  %v2334 = vpack.c.b16 %v2330, %v2329
  %v2355 = vunpack.c.l.b16 %v2299
  %v2356 = vunpack.c.h.b16 %v2299
  %v2357 = vunpack.c.l.b16 %v2300
  %v2358 = vunpack.c.h.b16 %v2300
  %v2359 = vunpack.c.l.b16 %v2301
  %v2360 = vunpack.c.h.b16 %v2301
  %v2361 = vunpack.c.l.b16 %v2302
  %v2362 = vunpack.c.h.b16 %v2302
  %v2363 = vunpack.c.l.b16 %v2303
  %v2364 = vunpack.c.h.b16 %v2303
  %v2365 = vunpack.c.l.b16 %v2304
  %v2366 = vunpack.c.h.b16 %v2304
  %v2367 = vunpack.c.l.b16 %v2305
  %v2368 = vunpack.c.h.b16 %v2305
  %v2369 = vunpack.c.l.b16 %v2306
  %v2370 = vunpack.c.h.b16 %v2306
  %v2371 = vunpack.c.l.b16 %v2307
  %v2372 = vunpack.c.h.b16 %v2307
  %v2373 = vunpack.c.l.b16 %v2308
  %v2374 = vunpack.c.h.b16 %v2308
  %v2375 = vunpack.c.l.b16 %v2309
  %v2376 = vunpack.c.h.b16 %v2309
  %v2377 = vunpack.c.l.b16 %v2310
  %v2378 = vunpack.c.h.b16 %v2310
  %v2379 = vunpack.c.l.b16 %v2311
  %v2380 = vunpack.c.h.b16 %v2311
  %v2381 = vunpack.c.l.b16 %v2312
  %v2382 = vunpack.c.h.b16 %v2312
  %v2383 = vunpack.c.l.b16 %v2313
  %v2384 = vunpack.c.h.b16 %v2313
  %v2385 = vunpack.c.l.b16 %v2314
  %v2386 = vunpack.c.h.b16 %v2314
  %v2387 = vpack.c.b16 %v2357, %v2355
  %v2388 = vpack.c.b16 %v2358, %v2356
  %v2389 = vpack.c.b16 %v2361, %v2359
  %v2390 = vpack.c.b16 %v2362, %v2360
  %v2391 = vpack.c.b16 %v2365, %v2363
  %v2392 = vpack.c.b16 %v2366, %v2364
  %v2393 = vpack.c.b16 %v2369, %v2367
  %v2394 = vpack.c.b16 %v2370, %v2368
  %v2395 = vpack.c.b16 %v2373, %v2371
  %v2396 = vpack.c.b16 %v2374, %v2372
  %v2397 = vpack.c.b16 %v2377, %v2375
  %v2398 = vpack.c.b16 %v2378, %v2376
  %v2399 = vpack.c.b16 %v2381, %v2379
  %v2400 = vpack.c.b16 %v2382, %v2380
  %v2401 = vpack.c.b16 %v2385, %v2383
  %v2402 = vpack.c.b16 %v2386, %v2384
  %2419 = vmatpush.bf16.msra.mxu0 %v2401
  %2420 = vmatpush.bf16.msra.mxu0 %v2399
  %2421 = vmatpush.bf16.msra.mxu0 %v2397
  %2422 = vmatpush.bf16.msra.mxu0 %v2395
  %2423 = vmatpush.bf16.msra.mxu0 %v2393
  %2424 = vmatpush.bf16.msra.mxu0 %v2391
  %2425 = vmatpush.bf16.msra.mxu0 %v2389
  %2426 = vmatpush.bf16.msra.mxu0 %v2387
  %2427 = vmatmul.bf16.gmra.mxu0 %v2331
  %v2428 = vpop.f32.mrf.mxu0
  %v2429 = vadd.f32 0.0, %v2428
  %v2430 = vpop.f32.mrf.mxu0
  %v2431 = vadd.f32 0.0, %v2430
  %2432 = vmatmul.bf16.gmra.mxu0 %v2332
  %v2433 = vpop.f32.mrf.mxu0
  %v2434 = vadd.f32 0.0, %v2433
  %v2435 = vpop.f32.mrf.mxu0
  %v2436 = vadd.f32 0.0, %v2435
  %2437 = vmatmul.bf16.gmra.mxu0 %v2333
  %v2438 = vpop.f32.mrf.mxu0
  %v2439 = vadd.f32 0.0, %v2438
  %v2440 = vpop.f32.mrf.mxu0
  %v2441 = vadd.f32 0.0, %v2440
  %2442 = vmatmul.bf16.gmra.mxu0 %v2334
  %v2443 = vpop.f32.mrf.mxu0
  %v2444 = vadd.f32 0.0, %v2443
  %v2445 = vpop.f32.mrf.mxu0
  %v2446 = vadd.f32 0.0, %v2445
  %2447 = vdwg.mxu0
  %2448 = vmatpush.bf16.msra.mxu0 %v2402
  %2449 = vmatpush.bf16.msra.mxu0 %v2400
  %2450 = vmatpush.bf16.msra.mxu0 %v2398
  %2451 = vmatpush.bf16.msra.mxu0 %v2396
  %2452 = vmatpush.bf16.msra.mxu0 %v2394
  %2453 = vmatpush.bf16.msra.mxu0 %v2392
  %2454 = vmatpush.bf16.msra.mxu0 %v2390
  %2455 = vmatpush.bf16.msra.mxu0 %v2388
  %2456 = vmatmul.bf16.gmra.mxu0 %v2331
  %v2457 = vpop.f32.mrf.mxu0
  %v2458 = vadd.f32 0.0, %v2457
  %v2459 = vpop.f32.mrf.mxu0
  %v2460 = vadd.f32 0.0, %v2459
  %2461 = vmatmul.bf16.gmra.mxu0 %v2332
  %v2462 = vpop.f32.mrf.mxu0
  %v2463 = vadd.f32 0.0, %v2462
  %v2464 = vpop.f32.mrf.mxu0
  %v2465 = vadd.f32 0.0, %v2464
  %2466 = vmatmul.bf16.gmra.mxu0 %v2333
  %v2467 = vpop.f32.mrf.mxu0
  %v2468 = vadd.f32 0.0, %v2467
  %v2469 = vpop.f32.mrf.mxu0
  %v2470 = vadd.f32 0.0, %v2469
  %2471 = vmatmul.bf16.gmra.mxu0 %v2334
  %v2472 = vpop.f32.mrf.mxu0
  %v2473 = vadd.f32 0.0, %v2472
  %v2474 = vpop.f32.mrf.mxu0
  %v2475 = vadd.f32 0.0, %v2474
  %2476 = vdwg.mxu0
  %v2477 = vadd.f32 %v2250, %v2429
  %v2478 = vadd.f32 %v2279, %v2458
  %v2479 = vadd.f32 %v2252, %v2431
  %v2480 = vadd.f32 %v2281, %v2460
  %v2481 = vadd.f32 %v2255, %v2434
  %v2482 = vadd.f32 %v2284, %v2463
  %v2483 = vadd.f32 %v2257, %v2436
  %v2484 = vadd.f32 %v2286, %v2465
  %v2485 = vadd.f32 %v2260, %v2439
  %v2486 = vadd.f32 %v2289, %v2468
  %v2487 = vadd.f32 %v2262, %v2441
  %v2488 = vadd.f32 %v2291, %v2470
  %v2489 = vadd.f32 %v2265, %v2444
  %v2490 = vadd.f32 %v2294, %v2473
  %v2491 = vadd.f32 %v2267, %v2446
  %v2492 = vadd.f32 %v2296, %v2475
  %s2493 = scalar_lea.vmem %s4, 384
  %v2494 = vld [vmem:[%s2493] sm:$0xff]
  %v2495 = vld [vmem:[%s2493 + $0x8] sm:$0xff]
  %v2496 = vld [vmem:[%s2493 + $0x10] sm:$0xff]
  %v2497 = vld [vmem:[%s2493 + $0x18] sm:$0xff]
  %v2498 = vld [vmem:[%s2493 + $0x20] sm:$0xff]
  %v2499 = vld [vmem:[%s2493 + $0x28] sm:$0xff]
  %v2500 = vld [vmem:[%s2493 + $0x30] sm:$0xff]
  %v2501 = vld [vmem:[%s2493 + $0x38] sm:$0xff]
  %v2502 = vld [vmem:[%s2493 + $0x40] sm:$0xff]
  %v2503 = vld [vmem:[%s2493 + $0x48] sm:$0xff]
  %v2504 = vld [vmem:[%s2493 + $0x50] sm:$0xff]
  %v2505 = vld [vmem:[%s2493 + $0x58] sm:$0xff]
  %v2506 = vld [vmem:[%s2493 + $0x60] sm:$0xff]
  %v2507 = vld [vmem:[%s2493 + $0x68] sm:$0xff]
  %v2508 = vld [vmem:[%s2493 + $0x70] sm:$0xff]
  %v2509 = vld [vmem:[%s2493 + $0x78] sm:$0xff]
  %v2518 = vunpack.c.l.b16 %v1837
  %v2519 = vunpack.c.l.b16 %v1838
  %v2520 = vunpack.c.l.b16 %v1839
  %v2521 = vunpack.c.l.b16 %v1840
  %v2522 = vunpack.c.l.b16 %v1841
  %v2523 = vunpack.c.l.b16 %v1842
  %v2524 = vunpack.c.l.b16 %v1843
  %v2525 = vunpack.c.l.b16 %v1844
  %v2526 = vpack.c.b16 %v2519, %v2518
  %v2527 = vpack.c.b16 %v2521, %v2520
  %v2528 = vpack.c.b16 %v2523, %v2522
  %v2529 = vpack.c.b16 %v2525, %v2524
  %v2550 = vunpack.c.l.b16 %v2494
  %v2551 = vunpack.c.h.b16 %v2494
  %v2552 = vunpack.c.l.b16 %v2495
  %v2553 = vunpack.c.h.b16 %v2495
  %v2554 = vunpack.c.l.b16 %v2496
  %v2555 = vunpack.c.h.b16 %v2496
  %v2556 = vunpack.c.l.b16 %v2497
  %v2557 = vunpack.c.h.b16 %v2497
  %v2558 = vunpack.c.l.b16 %v2498
  %v2559 = vunpack.c.h.b16 %v2498
  %v2560 = vunpack.c.l.b16 %v2499
  %v2561 = vunpack.c.h.b16 %v2499
  %v2562 = vunpack.c.l.b16 %v2500
  %v2563 = vunpack.c.h.b16 %v2500
  %v2564 = vunpack.c.l.b16 %v2501
  %v2565 = vunpack.c.h.b16 %v2501
  %v2566 = vunpack.c.l.b16 %v2502
  %v2567 = vunpack.c.h.b16 %v2502
  %v2568 = vunpack.c.l.b16 %v2503
  %v2569 = vunpack.c.h.b16 %v2503
  %v2570 = vunpack.c.l.b16 %v2504
  %v2571 = vunpack.c.h.b16 %v2504
  %v2572 = vunpack.c.l.b16 %v2505
  %v2573 = vunpack.c.h.b16 %v2505
  %v2574 = vunpack.c.l.b16 %v2506
  %v2575 = vunpack.c.h.b16 %v2506
  %v2576 = vunpack.c.l.b16 %v2507
  %v2577 = vunpack.c.h.b16 %v2507
  %v2578 = vunpack.c.l.b16 %v2508
  %v2579 = vunpack.c.h.b16 %v2508
  %v2580 = vunpack.c.l.b16 %v2509
  %v2581 = vunpack.c.h.b16 %v2509
  %v2582 = vpack.c.b16 %v2552, %v2550
  %v2583 = vpack.c.b16 %v2553, %v2551
  %v2584 = vpack.c.b16 %v2556, %v2554
  %v2585 = vpack.c.b16 %v2557, %v2555
  %v2586 = vpack.c.b16 %v2560, %v2558
  %v2587 = vpack.c.b16 %v2561, %v2559
  %v2588 = vpack.c.b16 %v2564, %v2562
  %v2589 = vpack.c.b16 %v2565, %v2563
  %v2590 = vpack.c.b16 %v2568, %v2566
  %v2591 = vpack.c.b16 %v2569, %v2567
  %v2592 = vpack.c.b16 %v2572, %v2570
  %v2593 = vpack.c.b16 %v2573, %v2571
  %v2594 = vpack.c.b16 %v2576, %v2574
  %v2595 = vpack.c.b16 %v2577, %v2575
  %v2596 = vpack.c.b16 %v2580, %v2578
  %v2597 = vpack.c.b16 %v2581, %v2579
  %2614 = vmatpush.bf16.msra.mxu0 %v2596
  %2615 = vmatpush.bf16.msra.mxu0 %v2594
  %2616 = vmatpush.bf16.msra.mxu0 %v2592
  %2617 = vmatpush.bf16.msra.mxu0 %v2590
  %2618 = vmatpush.bf16.msra.mxu0 %v2588
  %2619 = vmatpush.bf16.msra.mxu0 %v2586
  %2620 = vmatpush.bf16.msra.mxu0 %v2584
  %2621 = vmatpush.bf16.msra.mxu0 %v2582
  %2622 = vmatmul.bf16.gmra.mxu0 %v2526
  %v2623 = vpop.f32.mrf.mxu0
  %v2624 = vadd.f32 0.0, %v2623
  %v2625 = vpop.f32.mrf.mxu0
  %v2626 = vadd.f32 0.0, %v2625
  %2627 = vmatmul.bf16.gmra.mxu0 %v2527
  %v2628 = vpop.f32.mrf.mxu0
  %v2629 = vadd.f32 0.0, %v2628
  %v2630 = vpop.f32.mrf.mxu0
  %v2631 = vadd.f32 0.0, %v2630
  %2632 = vmatmul.bf16.gmra.mxu0 %v2528
  %v2633 = vpop.f32.mrf.mxu0
  %v2634 = vadd.f32 0.0, %v2633
  %v2635 = vpop.f32.mrf.mxu0
  %v2636 = vadd.f32 0.0, %v2635
  %2637 = vmatmul.bf16.gmra.mxu0 %v2529
  %v2638 = vpop.f32.mrf.mxu0
  %v2639 = vadd.f32 0.0, %v2638
  %v2640 = vpop.f32.mrf.mxu0
  %v2641 = vadd.f32 0.0, %v2640
  %2642 = vdwg.mxu0
  %2643 = vmatpush.bf16.msra.mxu0 %v2597
  %2644 = vmatpush.bf16.msra.mxu0 %v2595
  %2645 = vmatpush.bf16.msra.mxu0 %v2593
  %2646 = vmatpush.bf16.msra.mxu0 %v2591
  %2647 = vmatpush.bf16.msra.mxu0 %v2589
  %2648 = vmatpush.bf16.msra.mxu0 %v2587
  %2649 = vmatpush.bf16.msra.mxu0 %v2585
  %2650 = vmatpush.bf16.msra.mxu0 %v2583
  %2651 = vmatmul.bf16.gmra.mxu0 %v2526
  %v2652 = vpop.f32.mrf.mxu0
  %v2653 = vadd.f32 0.0, %v2652
  %v2654 = vpop.f32.mrf.mxu0
  %v2655 = vadd.f32 0.0, %v2654
  %2656 = vmatmul.bf16.gmra.mxu0 %v2527
  %v2657 = vpop.f32.mrf.mxu0
  %v2658 = vadd.f32 0.0, %v2657
  %v2659 = vpop.f32.mrf.mxu0
  %v2660 = vadd.f32 0.0, %v2659
  %2661 = vmatmul.bf16.gmra.mxu0 %v2528
  %v2662 = vpop.f32.mrf.mxu0
  %v2663 = vadd.f32 0.0, %v2662
  %v2664 = vpop.f32.mrf.mxu0
  %v2665 = vadd.f32 0.0, %v2664
  %2666 = vmatmul.bf16.gmra.mxu0 %v2529
  %v2667 = vpop.f32.mrf.mxu0
  %v2668 = vadd.f32 0.0, %v2667
  %v2669 = vpop.f32.mrf.mxu0
  %v2670 = vadd.f32 0.0, %v2669
  %2671 = vdwg.mxu0
  %v2672 = vadd.f32 %v2477, %v2624
  %v2673 = vadd.f32 %v2478, %v2653
  %v2674 = vadd.f32 %v2479, %v2626
  %v2675 = vadd.f32 %v2480, %v2655
  %v2676 = vadd.f32 %v2481, %v2629
  %v2677 = vadd.f32 %v2482, %v2658
  %v2678 = vadd.f32 %v2483, %v2631
  %v2679 = vadd.f32 %v2484, %v2660
  %v2680 = vadd.f32 %v2485, %v2634
  %v2681 = vadd.f32 %v2486, %v2663
  %v2682 = vadd.f32 %v2487, %v2636
  %v2683 = vadd.f32 %v2488, %v2665
  %v2684 = vadd.f32 %v2489, %v2639
  %v2685 = vadd.f32 %v2490, %v2668
  %v2686 = vadd.f32 %v2491, %v2641
  %v2687 = vadd.f32 %v2492, %v2670
  %s2688 = scalar_lea.vmem %s4, 512
  %v2689 = vld [vmem:[%s2688] sm:$0xff]
  %v2690 = vld [vmem:[%s2688 + $0x8] sm:$0xff]
  %v2691 = vld [vmem:[%s2688 + $0x10] sm:$0xff]
  %v2692 = vld [vmem:[%s2688 + $0x18] sm:$0xff]
  %v2693 = vld [vmem:[%s2688 + $0x20] sm:$0xff]
  %v2694 = vld [vmem:[%s2688 + $0x28] sm:$0xff]
  %v2695 = vld [vmem:[%s2688 + $0x30] sm:$0xff]
  %v2696 = vld [vmem:[%s2688 + $0x38] sm:$0xff]
  %v2697 = vld [vmem:[%s2688 + $0x40] sm:$0xff]
  %v2698 = vld [vmem:[%s2688 + $0x48] sm:$0xff]
  %v2699 = vld [vmem:[%s2688 + $0x50] sm:$0xff]
  %v2700 = vld [vmem:[%s2688 + $0x58] sm:$0xff]
  %v2701 = vld [vmem:[%s2688 + $0x60] sm:$0xff]
  %v2702 = vld [vmem:[%s2688 + $0x68] sm:$0xff]
  %v2703 = vld [vmem:[%s2688 + $0x70] sm:$0xff]
  %v2704 = vld [vmem:[%s2688 + $0x78] sm:$0xff]
  %v2713 = vunpack.c.l.b16 %v1845
  %v2714 = vunpack.c.l.b16 %v1846
  %v2715 = vunpack.c.l.b16 %v1847
  %v2716 = vunpack.c.l.b16 %v1848
  %v2717 = vunpack.c.l.b16 %v1849
  %v2718 = vunpack.c.l.b16 %v1850
  %v2719 = vunpack.c.l.b16 %v1851
  %v2720 = vunpack.c.l.b16 %v1852
  %v2721 = vpack.c.b16 %v2714, %v2713
  %v2722 = vpack.c.b16 %v2716, %v2715
  %v2723 = vpack.c.b16 %v2718, %v2717
  %v2724 = vpack.c.b16 %v2720, %v2719
  %v2745 = vunpack.c.l.b16 %v2689
  %v2746 = vunpack.c.h.b16 %v2689
  %v2747 = vunpack.c.l.b16 %v2690
  %v2748 = vunpack.c.h.b16 %v2690
  %v2749 = vunpack.c.l.b16 %v2691
  %v2750 = vunpack.c.h.b16 %v2691
  %v2751 = vunpack.c.l.b16 %v2692
  %v2752 = vunpack.c.h.b16 %v2692
  %v2753 = vunpack.c.l.b16 %v2693
  %v2754 = vunpack.c.h.b16 %v2693
  %v2755 = vunpack.c.l.b16 %v2694
  %v2756 = vunpack.c.h.b16 %v2694
  %v2757 = vunpack.c.l.b16 %v2695
  %v2758 = vunpack.c.h.b16 %v2695
  %v2759 = vunpack.c.l.b16 %v2696
  %v2760 = vunpack.c.h.b16 %v2696
  %v2761 = vunpack.c.l.b16 %v2697
  %v2762 = vunpack.c.h.b16 %v2697
  %v2763 = vunpack.c.l.b16 %v2698
  %v2764 = vunpack.c.h.b16 %v2698
  %v2765 = vunpack.c.l.b16 %v2699
  %v2766 = vunpack.c.h.b16 %v2699
  %v2767 = vunpack.c.l.b16 %v2700
  %v2768 = vunpack.c.h.b16 %v2700
  %v2769 = vunpack.c.l.b16 %v2701
  %v2770 = vunpack.c.h.b16 %v2701
  %v2771 = vunpack.c.l.b16 %v2702
  %v2772 = vunpack.c.h.b16 %v2702
  %v2773 = vunpack.c.l.b16 %v2703
  %v2774 = vunpack.c.h.b16 %v2703
  %v2775 = vunpack.c.l.b16 %v2704
  %v2776 = vunpack.c.h.b16 %v2704
  %v2777 = vpack.c.b16 %v2747, %v2745
  %v2778 = vpack.c.b16 %v2748, %v2746
  %v2779 = vpack.c.b16 %v2751, %v2749
  %v2780 = vpack.c.b16 %v2752, %v2750
  %v2781 = vpack.c.b16 %v2755, %v2753
  %v2782 = vpack.c.b16 %v2756, %v2754
  %v2783 = vpack.c.b16 %v2759, %v2757
  %v2784 = vpack.c.b16 %v2760, %v2758
  %v2785 = vpack.c.b16 %v2763, %v2761
  %v2786 = vpack.c.b16 %v2764, %v2762
  %v2787 = vpack.c.b16 %v2767, %v2765
  %v2788 = vpack.c.b16 %v2768, %v2766
  %v2789 = vpack.c.b16 %v2771, %v2769
  %v2790 = vpack.c.b16 %v2772, %v2770
  %v2791 = vpack.c.b16 %v2775, %v2773
  %v2792 = vpack.c.b16 %v2776, %v2774
  %2809 = vmatpush.bf16.msra.mxu0 %v2791
  %2810 = vmatpush.bf16.msra.mxu0 %v2789
  %2811 = vmatpush.bf16.msra.mxu0 %v2787
  %2812 = vmatpush.bf16.msra.mxu0 %v2785
  %2813 = vmatpush.bf16.msra.mxu0 %v2783
  %2814 = vmatpush.bf16.msra.mxu0 %v2781
  %2815 = vmatpush.bf16.msra.mxu0 %v2779
  %2816 = vmatpush.bf16.msra.mxu0 %v2777
  %2817 = vmatmul.bf16.gmra.mxu0 %v2721
  %v2818 = vpop.f32.mrf.mxu0
  %v2819 = vadd.f32 0.0, %v2818
  %v2820 = vpop.f32.mrf.mxu0
  %v2821 = vadd.f32 0.0, %v2820
  %2822 = vmatmul.bf16.gmra.mxu0 %v2722
  %v2823 = vpop.f32.mrf.mxu0
  %v2824 = vadd.f32 0.0, %v2823
  %v2825 = vpop.f32.mrf.mxu0
  %v2826 = vadd.f32 0.0, %v2825
  %2827 = vmatmul.bf16.gmra.mxu0 %v2723
  %v2828 = vpop.f32.mrf.mxu0
  %v2829 = vadd.f32 0.0, %v2828
  %v2830 = vpop.f32.mrf.mxu0
  %v2831 = vadd.f32 0.0, %v2830
  %2832 = vmatmul.bf16.gmra.mxu0 %v2724
  %v2833 = vpop.f32.mrf.mxu0
  %v2834 = vadd.f32 0.0, %v2833
  %v2835 = vpop.f32.mrf.mxu0
  %v2836 = vadd.f32 0.0, %v2835
  %2837 = vdwg.mxu0
  %2838 = vmatpush.bf16.msra.mxu0 %v2792
  %2839 = vmatpush.bf16.msra.mxu0 %v2790
  %2840 = vmatpush.bf16.msra.mxu0 %v2788
  %2841 = vmatpush.bf16.msra.mxu0 %v2786
  %2842 = vmatpush.bf16.msra.mxu0 %v2784
  %2843 = vmatpush.bf16.msra.mxu0 %v2782
  %2844 = vmatpush.bf16.msra.mxu0 %v2780
  %2845 = vmatpush.bf16.msra.mxu0 %v2778
  %2846 = vmatmul.bf16.gmra.mxu0 %v2721
  %v2847 = vpop.f32.mrf.mxu0
  %v2848 = vadd.f32 0.0, %v2847
  %v2849 = vpop.f32.mrf.mxu0
  %v2850 = vadd.f32 0.0, %v2849
  %2851 = vmatmul.bf16.gmra.mxu0 %v2722
  %v2852 = vpop.f32.mrf.mxu0
  %v2853 = vadd.f32 0.0, %v2852
  %v2854 = vpop.f32.mrf.mxu0
  %v2855 = vadd.f32 0.0, %v2854
  %2856 = vmatmul.bf16.gmra.mxu0 %v2723
  %v2857 = vpop.f32.mrf.mxu0
  %v2858 = vadd.f32 0.0, %v2857
  %v2859 = vpop.f32.mrf.mxu0
  %v2860 = vadd.f32 0.0, %v2859
  %2861 = vmatmul.bf16.gmra.mxu0 %v2724
  %v2862 = vpop.f32.mrf.mxu0
  %v2863 = vadd.f32 0.0, %v2862
  %v2864 = vpop.f32.mrf.mxu0
  %v2865 = vadd.f32 0.0, %v2864
  %2866 = vdwg.mxu0
  %v2867 = vadd.f32 %v2672, %v2819
  %v2868 = vadd.f32 %v2673, %v2848
  %v2869 = vadd.f32 %v2674, %v2821
  %v2870 = vadd.f32 %v2675, %v2850
  %v2871 = vadd.f32 %v2676, %v2824
  %v2872 = vadd.f32 %v2677, %v2853
  %v2873 = vadd.f32 %v2678, %v2826
  %v2874 = vadd.f32 %v2679, %v2855
  %v2875 = vadd.f32 %v2680, %v2829
  %v2876 = vadd.f32 %v2681, %v2858
  %v2877 = vadd.f32 %v2682, %v2831
  %v2878 = vadd.f32 %v2683, %v2860
  %v2879 = vadd.f32 %v2684, %v2834
  %v2880 = vadd.f32 %v2685, %v2863
  %v2881 = vadd.f32 %v2686, %v2836
  %v2882 = vadd.f32 %v2687, %v2865
  %s2883 = scalar_lea.vmem %s4, 640
  %v2884 = vld [vmem:[%s2883] sm:$0xff]
  %v2885 = vld [vmem:[%s2883 + $0x8] sm:$0xff]
  %v2886 = vld [vmem:[%s2883 + $0x10] sm:$0xff]
  %v2887 = vld [vmem:[%s2883 + $0x18] sm:$0xff]
  %v2888 = vld [vmem:[%s2883 + $0x20] sm:$0xff]
  %v2889 = vld [vmem:[%s2883 + $0x28] sm:$0xff]
  %v2890 = vld [vmem:[%s2883 + $0x30] sm:$0xff]
  %v2891 = vld [vmem:[%s2883 + $0x38] sm:$0xff]
  %v2892 = vld [vmem:[%s2883 + $0x40] sm:$0xff]
  %v2893 = vld [vmem:[%s2883 + $0x48] sm:$0xff]
  %v2894 = vld [vmem:[%s2883 + $0x50] sm:$0xff]
  %v2895 = vld [vmem:[%s2883 + $0x58] sm:$0xff]
  %v2896 = vld [vmem:[%s2883 + $0x60] sm:$0xff]
  %v2897 = vld [vmem:[%s2883 + $0x68] sm:$0xff]
  %v2898 = vld [vmem:[%s2883 + $0x70] sm:$0xff]
  %v2899 = vld [vmem:[%s2883 + $0x78] sm:$0xff]
  %v2908 = vunpack.c.l.b16 %v1853
  %v2909 = vunpack.c.l.b16 %v1854
  %v2910 = vunpack.c.l.b16 %v1855
  %v2911 = vunpack.c.l.b16 %v1856
  %v2912 = vunpack.c.l.b16 %v1857
  %v2913 = vunpack.c.l.b16 %v1858
  %v2914 = vunpack.c.l.b16 %v1859
  %v2915 = vunpack.c.l.b16 %v1860
  %v2916 = vpack.c.b16 %v2909, %v2908
  %v2917 = vpack.c.b16 %v2911, %v2910
  %v2918 = vpack.c.b16 %v2913, %v2912
  %v2919 = vpack.c.b16 %v2915, %v2914
  %v2940 = vunpack.c.l.b16 %v2884
  %v2941 = vunpack.c.h.b16 %v2884
  %v2942 = vunpack.c.l.b16 %v2885
  %v2943 = vunpack.c.h.b16 %v2885
  %v2944 = vunpack.c.l.b16 %v2886
  %v2945 = vunpack.c.h.b16 %v2886
  %v2946 = vunpack.c.l.b16 %v2887
  %v2947 = vunpack.c.h.b16 %v2887
  %v2948 = vunpack.c.l.b16 %v2888
  %v2949 = vunpack.c.h.b16 %v2888
  %v2950 = vunpack.c.l.b16 %v2889
  %v2951 = vunpack.c.h.b16 %v2889
  %v2952 = vunpack.c.l.b16 %v2890
  %v2953 = vunpack.c.h.b16 %v2890
  %v2954 = vunpack.c.l.b16 %v2891
  %v2955 = vunpack.c.h.b16 %v2891
  %v2956 = vunpack.c.l.b16 %v2892
  %v2957 = vunpack.c.h.b16 %v2892
  %v2958 = vunpack.c.l.b16 %v2893
  %v2959 = vunpack.c.h.b16 %v2893
  %v2960 = vunpack.c.l.b16 %v2894
  %v2961 = vunpack.c.h.b16 %v2894
  %v2962 = vunpack.c.l.b16 %v2895
  %v2963 = vunpack.c.h.b16 %v2895
  %v2964 = vunpack.c.l.b16 %v2896
  %v2965 = vunpack.c.h.b16 %v2896
  %v2966 = vunpack.c.l.b16 %v2897
  %v2967 = vunpack.c.h.b16 %v2897
  %v2968 = vunpack.c.l.b16 %v2898
  %v2969 = vunpack.c.h.b16 %v2898
  %v2970 = vunpack.c.l.b16 %v2899
  %v2971 = vunpack.c.h.b16 %v2899
  %v2972 = vpack.c.b16 %v2942, %v2940
  %v2973 = vpack.c.b16 %v2943, %v2941
  %v2974 = vpack.c.b16 %v2946, %v2944
  %v2975 = vpack.c.b16 %v2947, %v2945
  %v2976 = vpack.c.b16 %v2950, %v2948
  %v2977 = vpack.c.b16 %v2951, %v2949
  %v2978 = vpack.c.b16 %v2954, %v2952
  %v2979 = vpack.c.b16 %v2955, %v2953
  %v2980 = vpack.c.b16 %v2958, %v2956
  %v2981 = vpack.c.b16 %v2959, %v2957
  %v2982 = vpack.c.b16 %v2962, %v2960
  %v2983 = vpack.c.b16 %v2963, %v2961
  %v2984 = vpack.c.b16 %v2966, %v2964
  %v2985 = vpack.c.b16 %v2967, %v2965
  %v2986 = vpack.c.b16 %v2970, %v2968
  %v2987 = vpack.c.b16 %v2971, %v2969
  %3004 = vmatpush.bf16.msra.mxu0 %v2986
  %3005 = vmatpush.bf16.msra.mxu0 %v2984
  %3006 = vmatpush.bf16.msra.mxu0 %v2982
  %3007 = vmatpush.bf16.msra.mxu0 %v2980
  %3008 = vmatpush.bf16.msra.mxu0 %v2978
  %3009 = vmatpush.bf16.msra.mxu0 %v2976
  %3010 = vmatpush.bf16.msra.mxu0 %v2974
  %3011 = vmatpush.bf16.msra.mxu0 %v2972
  %3012 = vmatmul.bf16.gmra.mxu0 %v2916
  %v3013 = vpop.f32.mrf.mxu0
  %v3014 = vadd.f32 0.0, %v3013
  %v3015 = vpop.f32.mrf.mxu0
  %v3016 = vadd.f32 0.0, %v3015
  %3017 = vmatmul.bf16.gmra.mxu0 %v2917
  %v3018 = vpop.f32.mrf.mxu0
  %v3019 = vadd.f32 0.0, %v3018
  %v3020 = vpop.f32.mrf.mxu0
  %v3021 = vadd.f32 0.0, %v3020
  %3022 = vmatmul.bf16.gmra.mxu0 %v2918
  %v3023 = vpop.f32.mrf.mxu0
  %v3024 = vadd.f32 0.0, %v3023
  %v3025 = vpop.f32.mrf.mxu0
  %v3026 = vadd.f32 0.0, %v3025
  %3027 = vmatmul.bf16.gmra.mxu0 %v2919
  %v3028 = vpop.f32.mrf.mxu0
  %v3029 = vadd.f32 0.0, %v3028
  %v3030 = vpop.f32.mrf.mxu0
  %v3031 = vadd.f32 0.0, %v3030
  %3032 = vdwg.mxu0
  %3033 = vmatpush.bf16.msra.mxu0 %v2987
  %3034 = vmatpush.bf16.msra.mxu0 %v2985
  %3035 = vmatpush.bf16.msra.mxu0 %v2983
  %3036 = vmatpush.bf16.msra.mxu0 %v2981
  %3037 = vmatpush.bf16.msra.mxu0 %v2979
  %3038 = vmatpush.bf16.msra.mxu0 %v2977
  %3039 = vmatpush.bf16.msra.mxu0 %v2975
  %3040 = vmatpush.bf16.msra.mxu0 %v2973
  %3041 = vmatmul.bf16.gmra.mxu0 %v2916
  %v3042 = vpop.f32.mrf.mxu0
  %v3043 = vadd.f32 0.0, %v3042
  %v3044 = vpop.f32.mrf.mxu0
  %v3045 = vadd.f32 0.0, %v3044
  %3046 = vmatmul.bf16.gmra.mxu0 %v2917
  %v3047 = vpop.f32.mrf.mxu0
  %v3048 = vadd.f32 0.0, %v3047
  %v3049 = vpop.f32.mrf.mxu0
  %v3050 = vadd.f32 0.0, %v3049
  %3051 = vmatmul.bf16.gmra.mxu0 %v2918
  %v3052 = vpop.f32.mrf.mxu0
  %v3053 = vadd.f32 0.0, %v3052
  %v3054 = vpop.f32.mrf.mxu0
  %v3055 = vadd.f32 0.0, %v3054
  %3056 = vmatmul.bf16.gmra.mxu0 %v2919
  %v3057 = vpop.f32.mrf.mxu0
  %v3058 = vadd.f32 0.0, %v3057
  %v3059 = vpop.f32.mrf.mxu0
  %v3060 = vadd.f32 0.0, %v3059
  %3061 = vdwg.mxu0
  %v3062 = vadd.f32 %v2867, %v3014
  %v3063 = vadd.f32 %v2868, %v3043
  %v3064 = vadd.f32 %v2869, %v3016
  %v3065 = vadd.f32 %v2870, %v3045
  %v3066 = vadd.f32 %v2871, %v3019
  %v3067 = vadd.f32 %v2872, %v3048
  %v3068 = vadd.f32 %v2873, %v3021
  %v3069 = vadd.f32 %v2874, %v3050
  %v3070 = vadd.f32 %v2875, %v3024
  %v3071 = vadd.f32 %v2876, %v3053
  %v3072 = vadd.f32 %v2877, %v3026
  %v3073 = vadd.f32 %v2878, %v3055
  %v3074 = vadd.f32 %v2879, %v3029
  %v3075 = vadd.f32 %v2880, %v3058
  %v3076 = vadd.f32 %v2881, %v3031
  %v3077 = vadd.f32 %v2882, %v3060
  %s3078 = scalar_lea.vmem %s4, 768
  %v3079 = vld [vmem:[%s3078] sm:$0xff]
  %v3080 = vld [vmem:[%s3078 + $0x8] sm:$0xff]
  %v3081 = vld [vmem:[%s3078 + $0x10] sm:$0xff]
  %v3082 = vld [vmem:[%s3078 + $0x18] sm:$0xff]
  %v3083 = vld [vmem:[%s3078 + $0x20] sm:$0xff]
  %v3084 = vld [vmem:[%s3078 + $0x28] sm:$0xff]
  %v3085 = vld [vmem:[%s3078 + $0x30] sm:$0xff]
  %v3086 = vld [vmem:[%s3078 + $0x38] sm:$0xff]
  %v3087 = vld [vmem:[%s3078 + $0x40] sm:$0xff]
  %v3088 = vld [vmem:[%s3078 + $0x48] sm:$0xff]
  %v3089 = vld [vmem:[%s3078 + $0x50] sm:$0xff]
  %v3090 = vld [vmem:[%s3078 + $0x58] sm:$0xff]
  %v3091 = vld [vmem:[%s3078 + $0x60] sm:$0xff]
  %v3092 = vld [vmem:[%s3078 + $0x68] sm:$0xff]
  %v3093 = vld [vmem:[%s3078 + $0x70] sm:$0xff]
  %v3094 = vld [vmem:[%s3078 + $0x78] sm:$0xff]
  %v3103 = vunpack.c.l.b16 %v1861
  %v3104 = vunpack.c.l.b16 %v1862
  %v3105 = vunpack.c.l.b16 %v1863
  %v3106 = vunpack.c.l.b16 %v1864
  %v3107 = vunpack.c.l.b16 %v1865
  %v3108 = vunpack.c.l.b16 %v1866
  %v3109 = vunpack.c.l.b16 %v1867
  %v3110 = vunpack.c.l.b16 %v1868
  %v3111 = vpack.c.b16 %v3104, %v3103
  %v3112 = vpack.c.b16 %v3106, %v3105
  %v3113 = vpack.c.b16 %v3108, %v3107
  %v3114 = vpack.c.b16 %v3110, %v3109
  %v3135 = vunpack.c.l.b16 %v3079
  %v3136 = vunpack.c.h.b16 %v3079
  %v3137 = vunpack.c.l.b16 %v3080
  %v3138 = vunpack.c.h.b16 %v3080
  %v3139 = vunpack.c.l.b16 %v3081
  %v3140 = vunpack.c.h.b16 %v3081
  %v3141 = vunpack.c.l.b16 %v3082
  %v3142 = vunpack.c.h.b16 %v3082
  %v3143 = vunpack.c.l.b16 %v3083
  %v3144 = vunpack.c.h.b16 %v3083
  %v3145 = vunpack.c.l.b16 %v3084
  %v3146 = vunpack.c.h.b16 %v3084
  %v3147 = vunpack.c.l.b16 %v3085
  %v3148 = vunpack.c.h.b16 %v3085
  %v3149 = vunpack.c.l.b16 %v3086
  %v3150 = vunpack.c.h.b16 %v3086
  %v3151 = vunpack.c.l.b16 %v3087
  %v3152 = vunpack.c.h.b16 %v3087
  %v3153 = vunpack.c.l.b16 %v3088
  %v3154 = vunpack.c.h.b16 %v3088
  %v3155 = vunpack.c.l.b16 %v3089
  %v3156 = vunpack.c.h.b16 %v3089
  %v3157 = vunpack.c.l.b16 %v3090
  %v3158 = vunpack.c.h.b16 %v3090
  %v3159 = vunpack.c.l.b16 %v3091
  %v3160 = vunpack.c.h.b16 %v3091
  %v3161 = vunpack.c.l.b16 %v3092
  %v3162 = vunpack.c.h.b16 %v3092
  %v3163 = vunpack.c.l.b16 %v3093
  %v3164 = vunpack.c.h.b16 %v3093
  %v3165 = vunpack.c.l.b16 %v3094
  %v3166 = vunpack.c.h.b16 %v3094
  %v3167 = vpack.c.b16 %v3137, %v3135
  %v3168 = vpack.c.b16 %v3138, %v3136
  %v3169 = vpack.c.b16 %v3141, %v3139
  %v3170 = vpack.c.b16 %v3142, %v3140
  %v3171 = vpack.c.b16 %v3145, %v3143
  %v3172 = vpack.c.b16 %v3146, %v3144
  %v3173 = vpack.c.b16 %v3149, %v3147
  %v3174 = vpack.c.b16 %v3150, %v3148
  %v3175 = vpack.c.b16 %v3153, %v3151
  %v3176 = vpack.c.b16 %v3154, %v3152
  %v3177 = vpack.c.b16 %v3157, %v3155
  %v3178 = vpack.c.b16 %v3158, %v3156
  %v3179 = vpack.c.b16 %v3161, %v3159
  %v3180 = vpack.c.b16 %v3162, %v3160
  %v3181 = vpack.c.b16 %v3165, %v3163
  %v3182 = vpack.c.b16 %v3166, %v3164
  %3199 = vmatpush.bf16.msra.mxu0 %v3181
  %3200 = vmatpush.bf16.msra.mxu0 %v3179
  %3201 = vmatpush.bf16.msra.mxu0 %v3177
  %3202 = vmatpush.bf16.msra.mxu0 %v3175
  %3203 = vmatpush.bf16.msra.mxu0 %v3173
  %3204 = vmatpush.bf16.msra.mxu0 %v3171
  %3205 = vmatpush.bf16.msra.mxu0 %v3169
  %3206 = vmatpush.bf16.msra.mxu0 %v3167
  %3207 = vmatmul.bf16.gmra.mxu0 %v3111
  %v3208 = vpop.f32.mrf.mxu0
  %v3209 = vadd.f32 0.0, %v3208
  %v3210 = vpop.f32.mrf.mxu0
  %v3211 = vadd.f32 0.0, %v3210
  %3212 = vmatmul.bf16.gmra.mxu0 %v3112
  %v3213 = vpop.f32.mrf.mxu0
  %v3214 = vadd.f32 0.0, %v3213
  %v3215 = vpop.f32.mrf.mxu0
  %v3216 = vadd.f32 0.0, %v3215
  %3217 = vmatmul.bf16.gmra.mxu0 %v3113
  %v3218 = vpop.f32.mrf.mxu0
  %v3219 = vadd.f32 0.0, %v3218
  %v3220 = vpop.f32.mrf.mxu0
  %v3221 = vadd.f32 0.0, %v3220
  %3222 = vmatmul.bf16.gmra.mxu0 %v3114
  %v3223 = vpop.f32.mrf.mxu0
  %v3224 = vadd.f32 0.0, %v3223
  %v3225 = vpop.f32.mrf.mxu0
  %v3226 = vadd.f32 0.0, %v3225
  %3227 = vdwg.mxu0
  %3228 = vmatpush.bf16.msra.mxu0 %v3182
  %3229 = vmatpush.bf16.msra.mxu0 %v3180
  %3230 = vmatpush.bf16.msra.mxu0 %v3178
  %3231 = vmatpush.bf16.msra.mxu0 %v3176
  %3232 = vmatpush.bf16.msra.mxu0 %v3174
  %3233 = vmatpush.bf16.msra.mxu0 %v3172
  %3234 = vmatpush.bf16.msra.mxu0 %v3170
  %3235 = vmatpush.bf16.msra.mxu0 %v3168
  %3236 = vmatmul.bf16.gmra.mxu0 %v3111
  %v3237 = vpop.f32.mrf.mxu0
  %v3238 = vadd.f32 0.0, %v3237
  %v3239 = vpop.f32.mrf.mxu0
  %v3240 = vadd.f32 0.0, %v3239
  %3241 = vmatmul.bf16.gmra.mxu0 %v3112
  %v3242 = vpop.f32.mrf.mxu0
  %v3243 = vadd.f32 0.0, %v3242
  %v3244 = vpop.f32.mrf.mxu0
  %v3245 = vadd.f32 0.0, %v3244
  %3246 = vmatmul.bf16.gmra.mxu0 %v3113
  %v3247 = vpop.f32.mrf.mxu0
  %v3248 = vadd.f32 0.0, %v3247
  %v3249 = vpop.f32.mrf.mxu0
  %v3250 = vadd.f32 0.0, %v3249
  %3251 = vmatmul.bf16.gmra.mxu0 %v3114
  %v3252 = vpop.f32.mrf.mxu0
  %v3253 = vadd.f32 0.0, %v3252
  %v3254 = vpop.f32.mrf.mxu0
  %v3255 = vadd.f32 0.0, %v3254
  %3256 = vdwg.mxu0
  %v3257 = vadd.f32 %v3062, %v3209
  %v3258 = vadd.f32 %v3063, %v3238
  %v3259 = vadd.f32 %v3064, %v3211
  %v3260 = vadd.f32 %v3065, %v3240
  %v3261 = vadd.f32 %v3066, %v3214
  %v3262 = vadd.f32 %v3067, %v3243
  %v3263 = vadd.f32 %v3068, %v3216
  %v3264 = vadd.f32 %v3069, %v3245
  %v3265 = vadd.f32 %v3070, %v3219
  %v3266 = vadd.f32 %v3071, %v3248
  %v3267 = vadd.f32 %v3072, %v3221
  %v3268 = vadd.f32 %v3073, %v3250
  %v3269 = vadd.f32 %v3074, %v3224
  %v3270 = vadd.f32 %v3075, %v3253
  %v3271 = vadd.f32 %v3076, %v3226
  %v3272 = vadd.f32 %v3077, %v3255
  %s3273 = scalar_lea.vmem %s4, 896
  %v3274 = vld [vmem:[%s3273] sm:$0xff]
  %v3275 = vld [vmem:[%s3273 + $0x8] sm:$0xff]
  %v3276 = vld [vmem:[%s3273 + $0x10] sm:$0xff]
  %v3277 = vld [vmem:[%s3273 + $0x18] sm:$0xff]
  %v3278 = vld [vmem:[%s3273 + $0x20] sm:$0xff]
  %v3279 = vld [vmem:[%s3273 + $0x28] sm:$0xff]
  %v3280 = vld [vmem:[%s3273 + $0x30] sm:$0xff]
  %v3281 = vld [vmem:[%s3273 + $0x38] sm:$0xff]
  %v3282 = vld [vmem:[%s3273 + $0x40] sm:$0xff]
  %v3283 = vld [vmem:[%s3273 + $0x48] sm:$0xff]
  %v3284 = vld [vmem:[%s3273 + $0x50] sm:$0xff]
  %v3285 = vld [vmem:[%s3273 + $0x58] sm:$0xff]
  %v3286 = vld [vmem:[%s3273 + $0x60] sm:$0xff]
  %v3287 = vld [vmem:[%s3273 + $0x68] sm:$0xff]
  %v3288 = vld [vmem:[%s3273 + $0x70] sm:$0xff]
  %v3289 = vld [vmem:[%s3273 + $0x78] sm:$0xff]
  %v3298 = vunpack.c.l.b16 %v1869
  %v3299 = vunpack.c.l.b16 %v1870
  %v3300 = vunpack.c.l.b16 %v1871
  %v3301 = vunpack.c.l.b16 %v1872
  %v3302 = vunpack.c.l.b16 %v1873
  %v3303 = vunpack.c.l.b16 %v1874
  %v3304 = vunpack.c.l.b16 %v1875
  %v3305 = vunpack.c.l.b16 %v1876
  %v3306 = vpack.c.b16 %v3299, %v3298
  %v3307 = vpack.c.b16 %v3301, %v3300
  %v3308 = vpack.c.b16 %v3303, %v3302
  %v3309 = vpack.c.b16 %v3305, %v3304
  %v3330 = vunpack.c.l.b16 %v3274
  %v3331 = vunpack.c.h.b16 %v3274
  %v3332 = vunpack.c.l.b16 %v3275
  %v3333 = vunpack.c.h.b16 %v3275
  %v3334 = vunpack.c.l.b16 %v3276
  %v3335 = vunpack.c.h.b16 %v3276
  %v3336 = vunpack.c.l.b16 %v3277
  %v3337 = vunpack.c.h.b16 %v3277
  %v3338 = vunpack.c.l.b16 %v3278
  %v3339 = vunpack.c.h.b16 %v3278
  %v3340 = vunpack.c.l.b16 %v3279
  %v3341 = vunpack.c.h.b16 %v3279
  %v3342 = vunpack.c.l.b16 %v3280
  %v3343 = vunpack.c.h.b16 %v3280
  %v3344 = vunpack.c.l.b16 %v3281
  %v3345 = vunpack.c.h.b16 %v3281
  %v3346 = vunpack.c.l.b16 %v3282
  %v3347 = vunpack.c.h.b16 %v3282
  %v3348 = vunpack.c.l.b16 %v3283
  %v3349 = vunpack.c.h.b16 %v3283
  %v3350 = vunpack.c.l.b16 %v3284
  %v3351 = vunpack.c.h.b16 %v3284
  %v3352 = vunpack.c.l.b16 %v3285
  %v3353 = vunpack.c.h.b16 %v3285
  %v3354 = vunpack.c.l.b16 %v3286
  %v3355 = vunpack.c.h.b16 %v3286
  %v3356 = vunpack.c.l.b16 %v3287
  %v3357 = vunpack.c.h.b16 %v3287
  %v3358 = vunpack.c.l.b16 %v3288
  %v3359 = vunpack.c.h.b16 %v3288
  %v3360 = vunpack.c.l.b16 %v3289
  %v3361 = vunpack.c.h.b16 %v3289
  %v3362 = vpack.c.b16 %v3332, %v3330
  %v3363 = vpack.c.b16 %v3333, %v3331
  %v3364 = vpack.c.b16 %v3336, %v3334
  %v3365 = vpack.c.b16 %v3337, %v3335
  %v3366 = vpack.c.b16 %v3340, %v3338
  %v3367 = vpack.c.b16 %v3341, %v3339
  %v3368 = vpack.c.b16 %v3344, %v3342
  %v3369 = vpack.c.b16 %v3345, %v3343
  %v3370 = vpack.c.b16 %v3348, %v3346
  %v3371 = vpack.c.b16 %v3349, %v3347
  %v3372 = vpack.c.b16 %v3352, %v3350
  %v3373 = vpack.c.b16 %v3353, %v3351
  %v3374 = vpack.c.b16 %v3356, %v3354
  %v3375 = vpack.c.b16 %v3357, %v3355
  %v3376 = vpack.c.b16 %v3360, %v3358
  %v3377 = vpack.c.b16 %v3361, %v3359
  %3394 = vmatpush.bf16.msra.mxu0 %v3376
  %3395 = vmatpush.bf16.msra.mxu0 %v3374
  %3396 = vmatpush.bf16.msra.mxu0 %v3372
  %3397 = vmatpush.bf16.msra.mxu0 %v3370
  %3398 = vmatpush.bf16.msra.mxu0 %v3368
  %3399 = vmatpush.bf16.msra.mxu0 %v3366
  %3400 = vmatpush.bf16.msra.mxu0 %v3364
  %3401 = vmatpush.bf16.msra.mxu0 %v3362
  %3402 = vmatmul.bf16.gmra.mxu0 %v3306
  %v3403 = vpop.f32.mrf.mxu0
  %v3404 = vadd.f32 0.0, %v3403
  %v3405 = vpop.f32.mrf.mxu0
  %v3406 = vadd.f32 0.0, %v3405
  %3407 = vmatmul.bf16.gmra.mxu0 %v3307
  %v3408 = vpop.f32.mrf.mxu0
  %v3409 = vadd.f32 0.0, %v3408
  %v3410 = vpop.f32.mrf.mxu0
  %v3411 = vadd.f32 0.0, %v3410
  %3412 = vmatmul.bf16.gmra.mxu0 %v3308
  %v3413 = vpop.f32.mrf.mxu0
  %v3414 = vadd.f32 0.0, %v3413
  %v3415 = vpop.f32.mrf.mxu0
  %v3416 = vadd.f32 0.0, %v3415
  %3417 = vmatmul.bf16.gmra.mxu0 %v3309
  %v3418 = vpop.f32.mrf.mxu0
  %v3419 = vadd.f32 0.0, %v3418
  %v3420 = vpop.f32.mrf.mxu0
  %v3421 = vadd.f32 0.0, %v3420
  %3422 = vdwg.mxu0
  %3423 = vmatpush.bf16.msra.mxu0 %v3377
  %3424 = vmatpush.bf16.msra.mxu0 %v3375
  %3425 = vmatpush.bf16.msra.mxu0 %v3373
  %3426 = vmatpush.bf16.msra.mxu0 %v3371
  %3427 = vmatpush.bf16.msra.mxu0 %v3369
  %3428 = vmatpush.bf16.msra.mxu0 %v3367
  %3429 = vmatpush.bf16.msra.mxu0 %v3365
  %3430 = vmatpush.bf16.msra.mxu0 %v3363
  %3431 = vmatmul.bf16.gmra.mxu0 %v3306
  %v3432 = vpop.f32.mrf.mxu0
  %v3433 = vadd.f32 0.0, %v3432
  %v3434 = vpop.f32.mrf.mxu0
  %v3435 = vadd.f32 0.0, %v3434
  %3436 = vmatmul.bf16.gmra.mxu0 %v3307
  %v3437 = vpop.f32.mrf.mxu0
  %v3438 = vadd.f32 0.0, %v3437
  %v3439 = vpop.f32.mrf.mxu0
  %v3440 = vadd.f32 0.0, %v3439
  %3441 = vmatmul.bf16.gmra.mxu0 %v3308
  %v3442 = vpop.f32.mrf.mxu0
  %v3443 = vadd.f32 0.0, %v3442
  %v3444 = vpop.f32.mrf.mxu0
  %v3445 = vadd.f32 0.0, %v3444
  %3446 = vmatmul.bf16.gmra.mxu0 %v3309
  %v3447 = vpop.f32.mrf.mxu0
  %v3448 = vadd.f32 0.0, %v3447
  %v3449 = vpop.f32.mrf.mxu0
  %v3450 = vadd.f32 0.0, %v3449
  %3451 = vdwg.mxu0
  %v3452 = vadd.f32 %v3257, %v3404
  %v3453 = vadd.f32 %v3258, %v3433
  %v3454 = vadd.f32 %v3259, %v3406
  %v3455 = vadd.f32 %v3260, %v3435
  %v3456 = vadd.f32 %v3261, %v3409
  %v3457 = vadd.f32 %v3262, %v3438
  %v3458 = vadd.f32 %v3263, %v3411
  %v3459 = vadd.f32 %v3264, %v3440
  %v3460 = vadd.f32 %v3265, %v3414
  %v3461 = vadd.f32 %v3266, %v3443
  %v3462 = vadd.f32 %v3267, %v3416
  %v3463 = vadd.f32 %v3268, %v3445
  %v3464 = vadd.f32 %v3269, %v3419
  %v3465 = vadd.f32 %v3270, %v3448
  %v3466 = vadd.f32 %v3271, %v3421
  %v3467 = vadd.f32 %v3272, %v3450
  %s3468 = scalar_lea.vmem %s4, 1024
  %v3469 = vld [vmem:[%s3468] sm:$0xff]
  %v3470 = vld [vmem:[%s3468 + $0x8] sm:$0xff]
  %v3471 = vld [vmem:[%s3468 + $0x10] sm:$0xff]
  %v3472 = vld [vmem:[%s3468 + $0x18] sm:$0xff]
  %v3473 = vld [vmem:[%s3468 + $0x20] sm:$0xff]
  %v3474 = vld [vmem:[%s3468 + $0x28] sm:$0xff]
  %v3475 = vld [vmem:[%s3468 + $0x30] sm:$0xff]
  %v3476 = vld [vmem:[%s3468 + $0x38] sm:$0xff]
  %v3477 = vld [vmem:[%s3468 + $0x40] sm:$0xff]
  %v3478 = vld [vmem:[%s3468 + $0x48] sm:$0xff]
  %v3479 = vld [vmem:[%s3468 + $0x50] sm:$0xff]
  %v3480 = vld [vmem:[%s3468 + $0x58] sm:$0xff]
  %v3481 = vld [vmem:[%s3468 + $0x60] sm:$0xff]
  %v3482 = vld [vmem:[%s3468 + $0x68] sm:$0xff]
  %v3483 = vld [vmem:[%s3468 + $0x70] sm:$0xff]
  %v3484 = vld [vmem:[%s3468 + $0x78] sm:$0xff]
  %v3493 = vunpack.c.l.b16 %v1877
  %v3494 = vunpack.c.l.b16 %v1878
  %v3495 = vunpack.c.l.b16 %v1879
  %v3496 = vunpack.c.l.b16 %v1880
  %v3497 = vunpack.c.l.b16 %v1881
  %v3498 = vunpack.c.l.b16 %v1882
  %v3499 = vunpack.c.l.b16 %v1883
  %v3500 = vunpack.c.l.b16 %v1884
  %v3501 = vpack.c.b16 %v3494, %v3493
  %v3502 = vpack.c.b16 %v3496, %v3495
  %v3503 = vpack.c.b16 %v3498, %v3497
  %v3504 = vpack.c.b16 %v3500, %v3499
  %v3525 = vunpack.c.l.b16 %v3469
  %v3526 = vunpack.c.h.b16 %v3469
  %v3527 = vunpack.c.l.b16 %v3470
  %v3528 = vunpack.c.h.b16 %v3470
  %v3529 = vunpack.c.l.b16 %v3471
  %v3530 = vunpack.c.h.b16 %v3471
  %v3531 = vunpack.c.l.b16 %v3472
  %v3532 = vunpack.c.h.b16 %v3472
  %v3533 = vunpack.c.l.b16 %v3473
  %v3534 = vunpack.c.h.b16 %v3473
  %v3535 = vunpack.c.l.b16 %v3474
  %v3536 = vunpack.c.h.b16 %v3474
  %v3537 = vunpack.c.l.b16 %v3475
  %v3538 = vunpack.c.h.b16 %v3475
  %v3539 = vunpack.c.l.b16 %v3476
  %v3540 = vunpack.c.h.b16 %v3476
  %v3541 = vunpack.c.l.b16 %v3477
  %v3542 = vunpack.c.h.b16 %v3477
  %v3543 = vunpack.c.l.b16 %v3478
  %v3544 = vunpack.c.h.b16 %v3478
  %v3545 = vunpack.c.l.b16 %v3479
  %v3546 = vunpack.c.h.b16 %v3479
  %v3547 = vunpack.c.l.b16 %v3480
  %v3548 = vunpack.c.h.b16 %v3480
  %v3549 = vunpack.c.l.b16 %v3481
  %v3550 = vunpack.c.h.b16 %v3481
  %v3551 = vunpack.c.l.b16 %v3482
  %v3552 = vunpack.c.h.b16 %v3482
  %v3553 = vunpack.c.l.b16 %v3483
  %v3554 = vunpack.c.h.b16 %v3483
  %v3555 = vunpack.c.l.b16 %v3484
  %v3556 = vunpack.c.h.b16 %v3484
  %v3557 = vpack.c.b16 %v3527, %v3525
  %v3558 = vpack.c.b16 %v3528, %v3526
  %v3559 = vpack.c.b16 %v3531, %v3529
  %v3560 = vpack.c.b16 %v3532, %v3530
  %v3561 = vpack.c.b16 %v3535, %v3533
  %v3562 = vpack.c.b16 %v3536, %v3534
  %v3563 = vpack.c.b16 %v3539, %v3537
  %v3564 = vpack.c.b16 %v3540, %v3538
  %v3565 = vpack.c.b16 %v3543, %v3541
  %v3566 = vpack.c.b16 %v3544, %v3542
  %v3567 = vpack.c.b16 %v3547, %v3545
  %v3568 = vpack.c.b16 %v3548, %v3546
  %v3569 = vpack.c.b16 %v3551, %v3549
  %v3570 = vpack.c.b16 %v3552, %v3550
  %v3571 = vpack.c.b16 %v3555, %v3553
  %v3572 = vpack.c.b16 %v3556, %v3554
  %3589 = vmatpush.bf16.msra.mxu0 %v3571
  %3590 = vmatpush.bf16.msra.mxu0 %v3569
  %3591 = vmatpush.bf16.msra.mxu0 %v3567
  %3592 = vmatpush.bf16.msra.mxu0 %v3565
  %3593 = vmatpush.bf16.msra.mxu0 %v3563
  %3594 = vmatpush.bf16.msra.mxu0 %v3561
  %3595 = vmatpush.bf16.msra.mxu0 %v3559
  %3596 = vmatpush.bf16.msra.mxu0 %v3557
  %3597 = vmatmul.bf16.gmra.mxu0 %v3501
  %v3598 = vpop.f32.mrf.mxu0
  %v3599 = vadd.f32 0.0, %v3598
  %v3600 = vpop.f32.mrf.mxu0
  %v3601 = vadd.f32 0.0, %v3600
  %3602 = vmatmul.bf16.gmra.mxu0 %v3502
  %v3603 = vpop.f32.mrf.mxu0
  %v3604 = vadd.f32 0.0, %v3603
  %v3605 = vpop.f32.mrf.mxu0
  %v3606 = vadd.f32 0.0, %v3605
  %3607 = vmatmul.bf16.gmra.mxu0 %v3503
  %v3608 = vpop.f32.mrf.mxu0
  %v3609 = vadd.f32 0.0, %v3608
  %v3610 = vpop.f32.mrf.mxu0
  %v3611 = vadd.f32 0.0, %v3610
  %3612 = vmatmul.bf16.gmra.mxu0 %v3504
  %v3613 = vpop.f32.mrf.mxu0
  %v3614 = vadd.f32 0.0, %v3613
  %v3615 = vpop.f32.mrf.mxu0
  %v3616 = vadd.f32 0.0, %v3615
  %3617 = vdwg.mxu0
  %3618 = vmatpush.bf16.msra.mxu0 %v3572
  %3619 = vmatpush.bf16.msra.mxu0 %v3570
  %3620 = vmatpush.bf16.msra.mxu0 %v3568
  %3621 = vmatpush.bf16.msra.mxu0 %v3566
  %3622 = vmatpush.bf16.msra.mxu0 %v3564
  %3623 = vmatpush.bf16.msra.mxu0 %v3562
  %3624 = vmatpush.bf16.msra.mxu0 %v3560
  %3625 = vmatpush.bf16.msra.mxu0 %v3558
  %3626 = vmatmul.bf16.gmra.mxu0 %v3501
  %v3627 = vpop.f32.mrf.mxu0
  %v3628 = vadd.f32 0.0, %v3627
  %v3629 = vpop.f32.mrf.mxu0
  %v3630 = vadd.f32 0.0, %v3629
  %3631 = vmatmul.bf16.gmra.mxu0 %v3502
  %v3632 = vpop.f32.mrf.mxu0
  %v3633 = vadd.f32 0.0, %v3632
  %v3634 = vpop.f32.mrf.mxu0
  %v3635 = vadd.f32 0.0, %v3634
  %3636 = vmatmul.bf16.gmra.mxu0 %v3503
  %v3637 = vpop.f32.mrf.mxu0
  %v3638 = vadd.f32 0.0, %v3637
  %v3639 = vpop.f32.mrf.mxu0
  %v3640 = vadd.f32 0.0, %v3639
  %3641 = vmatmul.bf16.gmra.mxu0 %v3504
  %v3642 = vpop.f32.mrf.mxu0
  %v3643 = vadd.f32 0.0, %v3642
  %v3644 = vpop.f32.mrf.mxu0
  %v3645 = vadd.f32 0.0, %v3644
  %3646 = vdwg.mxu0
  %v3647 = vadd.f32 %v3452, %v3599
  %v3648 = vadd.f32 %v3453, %v3628
  %v3649 = vadd.f32 %v3454, %v3601
  %v3650 = vadd.f32 %v3455, %v3630
  %v3651 = vadd.f32 %v3456, %v3604
  %v3652 = vadd.f32 %v3457, %v3633
  %v3653 = vadd.f32 %v3458, %v3606
  %v3654 = vadd.f32 %v3459, %v3635
  %v3655 = vadd.f32 %v3460, %v3609
  %v3656 = vadd.f32 %v3461, %v3638
  %v3657 = vadd.f32 %v3462, %v3611
  %v3658 = vadd.f32 %v3463, %v3640
  %v3659 = vadd.f32 %v3464, %v3614
  %v3660 = vadd.f32 %v3465, %v3643
  %v3661 = vadd.f32 %v3466, %v3616
  %v3662 = vadd.f32 %v3467, %v3645
  %s3663 = scalar_lea.vmem %s4, 1152
  %v3664 = vld [vmem:[%s3663] sm:$0xff]
  %v3665 = vld [vmem:[%s3663 + $0x8] sm:$0xff]
  %v3666 = vld [vmem:[%s3663 + $0x10] sm:$0xff]
  %v3667 = vld [vmem:[%s3663 + $0x18] sm:$0xff]
  %v3668 = vld [vmem:[%s3663 + $0x20] sm:$0xff]
  %v3669 = vld [vmem:[%s3663 + $0x28] sm:$0xff]
  %v3670 = vld [vmem:[%s3663 + $0x30] sm:$0xff]
  %v3671 = vld [vmem:[%s3663 + $0x38] sm:$0xff]
  %v3672 = vld [vmem:[%s3663 + $0x40] sm:$0xff]
  %v3673 = vld [vmem:[%s3663 + $0x48] sm:$0xff]
  %v3674 = vld [vmem:[%s3663 + $0x50] sm:$0xff]
  %v3675 = vld [vmem:[%s3663 + $0x58] sm:$0xff]
  %v3676 = vld [vmem:[%s3663 + $0x60] sm:$0xff]
  %v3677 = vld [vmem:[%s3663 + $0x68] sm:$0xff]
  %v3678 = vld [vmem:[%s3663 + $0x70] sm:$0xff]
  %v3679 = vld [vmem:[%s3663 + $0x78] sm:$0xff]
  %v3688 = vunpack.c.l.b16 %v1885
  %v3689 = vunpack.c.l.b16 %v1886
  %v3690 = vunpack.c.l.b16 %v1887
  %v3691 = vunpack.c.l.b16 %v1888
  %v3692 = vunpack.c.l.b16 %v1889
  %v3693 = vunpack.c.l.b16 %v1890
  %v3694 = vunpack.c.l.b16 %v1891
  %v3695 = vunpack.c.l.b16 %v1892
  %v3696 = vpack.c.b16 %v3689, %v3688
  %v3697 = vpack.c.b16 %v3691, %v3690
  %v3698 = vpack.c.b16 %v3693, %v3692
  %v3699 = vpack.c.b16 %v3695, %v3694
  %v3720 = vunpack.c.l.b16 %v3664
  %v3721 = vunpack.c.h.b16 %v3664
  %v3722 = vunpack.c.l.b16 %v3665
  %v3723 = vunpack.c.h.b16 %v3665
  %v3724 = vunpack.c.l.b16 %v3666
  %v3725 = vunpack.c.h.b16 %v3666
  %v3726 = vunpack.c.l.b16 %v3667
  %v3727 = vunpack.c.h.b16 %v3667
  %v3728 = vunpack.c.l.b16 %v3668
  %v3729 = vunpack.c.h.b16 %v3668
  %v3730 = vunpack.c.l.b16 %v3669
  %v3731 = vunpack.c.h.b16 %v3669
  %v3732 = vunpack.c.l.b16 %v3670
  %v3733 = vunpack.c.h.b16 %v3670
  %v3734 = vunpack.c.l.b16 %v3671
  %v3735 = vunpack.c.h.b16 %v3671
  %v3736 = vunpack.c.l.b16 %v3672
  %v3737 = vunpack.c.h.b16 %v3672
  %v3738 = vunpack.c.l.b16 %v3673
  %v3739 = vunpack.c.h.b16 %v3673
  %v3740 = vunpack.c.l.b16 %v3674
  %v3741 = vunpack.c.h.b16 %v3674
  %v3742 = vunpack.c.l.b16 %v3675
  %v3743 = vunpack.c.h.b16 %v3675
  %v3744 = vunpack.c.l.b16 %v3676
  %v3745 = vunpack.c.h.b16 %v3676
  %v3746 = vunpack.c.l.b16 %v3677
  %v3747 = vunpack.c.h.b16 %v3677
  %v3748 = vunpack.c.l.b16 %v3678
  %v3749 = vunpack.c.h.b16 %v3678
  %v3750 = vunpack.c.l.b16 %v3679
  %v3751 = vunpack.c.h.b16 %v3679
  %v3752 = vpack.c.b16 %v3722, %v3720
  %v3753 = vpack.c.b16 %v3723, %v3721
  %v3754 = vpack.c.b16 %v3726, %v3724
  %v3755 = vpack.c.b16 %v3727, %v3725
  %v3756 = vpack.c.b16 %v3730, %v3728
  %v3757 = vpack.c.b16 %v3731, %v3729
  %v3758 = vpack.c.b16 %v3734, %v3732
  %v3759 = vpack.c.b16 %v3735, %v3733
  %v3760 = vpack.c.b16 %v3738, %v3736
  %v3761 = vpack.c.b16 %v3739, %v3737
  %v3762 = vpack.c.b16 %v3742, %v3740
  %v3763 = vpack.c.b16 %v3743, %v3741
  %v3764 = vpack.c.b16 %v3746, %v3744
  %v3765 = vpack.c.b16 %v3747, %v3745
  %v3766 = vpack.c.b16 %v3750, %v3748
  %v3767 = vpack.c.b16 %v3751, %v3749
  %3784 = vmatpush.bf16.msra.mxu0 %v3766
  %3785 = vmatpush.bf16.msra.mxu0 %v3764
  %3786 = vmatpush.bf16.msra.mxu0 %v3762
  %3787 = vmatpush.bf16.msra.mxu0 %v3760
  %3788 = vmatpush.bf16.msra.mxu0 %v3758
  %3789 = vmatpush.bf16.msra.mxu0 %v3756
  %3790 = vmatpush.bf16.msra.mxu0 %v3754
  %3791 = vmatpush.bf16.msra.mxu0 %v3752
  %3792 = vmatmul.bf16.gmra.mxu0 %v3696
  %v3793 = vpop.f32.mrf.mxu0
  %v3794 = vadd.f32 0.0, %v3793
  %v3795 = vpop.f32.mrf.mxu0
  %v3796 = vadd.f32 0.0, %v3795
  %3797 = vmatmul.bf16.gmra.mxu0 %v3697
  %v3798 = vpop.f32.mrf.mxu0
  %v3799 = vadd.f32 0.0, %v3798
  %v3800 = vpop.f32.mrf.mxu0
  %v3801 = vadd.f32 0.0, %v3800
  %3802 = vmatmul.bf16.gmra.mxu0 %v3698
  %v3803 = vpop.f32.mrf.mxu0
  %v3804 = vadd.f32 0.0, %v3803
  %v3805 = vpop.f32.mrf.mxu0
  %v3806 = vadd.f32 0.0, %v3805
  %3807 = vmatmul.bf16.gmra.mxu0 %v3699
  %v3808 = vpop.f32.mrf.mxu0
  %v3809 = vadd.f32 0.0, %v3808
  %v3810 = vpop.f32.mrf.mxu0
  %v3811 = vadd.f32 0.0, %v3810
  %3812 = vdwg.mxu0
  %3813 = vmatpush.bf16.msra.mxu0 %v3767
  %3814 = vmatpush.bf16.msra.mxu0 %v3765
  %3815 = vmatpush.bf16.msra.mxu0 %v3763
  %3816 = vmatpush.bf16.msra.mxu0 %v3761
  %3817 = vmatpush.bf16.msra.mxu0 %v3759
  %3818 = vmatpush.bf16.msra.mxu0 %v3757
  %3819 = vmatpush.bf16.msra.mxu0 %v3755
  %3820 = vmatpush.bf16.msra.mxu0 %v3753
  %3821 = vmatmul.bf16.gmra.mxu0 %v3696
  %v3822 = vpop.f32.mrf.mxu0
  %v3823 = vadd.f32 0.0, %v3822
  %v3824 = vpop.f32.mrf.mxu0
  %v3825 = vadd.f32 0.0, %v3824
  %3826 = vmatmul.bf16.gmra.mxu0 %v3697
  %v3827 = vpop.f32.mrf.mxu0
  %v3828 = vadd.f32 0.0, %v3827
  %v3829 = vpop.f32.mrf.mxu0
  %v3830 = vadd.f32 0.0, %v3829
  %3831 = vmatmul.bf16.gmra.mxu0 %v3698
  %v3832 = vpop.f32.mrf.mxu0
  %v3833 = vadd.f32 0.0, %v3832
  %v3834 = vpop.f32.mrf.mxu0
  %v3835 = vadd.f32 0.0, %v3834
  %3836 = vmatmul.bf16.gmra.mxu0 %v3699
  %v3837 = vpop.f32.mrf.mxu0
  %v3838 = vadd.f32 0.0, %v3837
  %v3839 = vpop.f32.mrf.mxu0
  %v3840 = vadd.f32 0.0, %v3839
  %3841 = vdwg.mxu0
  %v3842 = vadd.f32 %v3647, %v3794
  %v3843 = vadd.f32 %v3648, %v3823
  %v3844 = vadd.f32 %v3649, %v3796
  %v3845 = vadd.f32 %v3650, %v3825
  %v3846 = vadd.f32 %v3651, %v3799
  %v3847 = vadd.f32 %v3652, %v3828
  %v3848 = vadd.f32 %v3653, %v3801
  %v3849 = vadd.f32 %v3654, %v3830
  %v3850 = vadd.f32 %v3655, %v3804
  %v3851 = vadd.f32 %v3656, %v3833
  %v3852 = vadd.f32 %v3657, %v3806
  %v3853 = vadd.f32 %v3658, %v3835
  %v3854 = vadd.f32 %v3659, %v3809
  %v3855 = vadd.f32 %v3660, %v3838
  %v3856 = vadd.f32 %v3661, %v3811
  %v3857 = vadd.f32 %v3662, %v3840
  %s3858 = scalar_lea.vmem %s4, 1280
  %v3859 = vld [vmem:[%s3858] sm:$0xff]
  %v3860 = vld [vmem:[%s3858 + $0x8] sm:$0xff]
  %v3861 = vld [vmem:[%s3858 + $0x10] sm:$0xff]
  %v3862 = vld [vmem:[%s3858 + $0x18] sm:$0xff]
  %v3863 = vld [vmem:[%s3858 + $0x20] sm:$0xff]
  %v3864 = vld [vmem:[%s3858 + $0x28] sm:$0xff]
  %v3865 = vld [vmem:[%s3858 + $0x30] sm:$0xff]
  %v3866 = vld [vmem:[%s3858 + $0x38] sm:$0xff]
  %v3867 = vld [vmem:[%s3858 + $0x40] sm:$0xff]
  %v3868 = vld [vmem:[%s3858 + $0x48] sm:$0xff]
  %v3869 = vld [vmem:[%s3858 + $0x50] sm:$0xff]
  %v3870 = vld [vmem:[%s3858 + $0x58] sm:$0xff]
  %v3871 = vld [vmem:[%s3858 + $0x60] sm:$0xff]
  %v3872 = vld [vmem:[%s3858 + $0x68] sm:$0xff]
  %v3873 = vld [vmem:[%s3858 + $0x70] sm:$0xff]
  %v3874 = vld [vmem:[%s3858 + $0x78] sm:$0xff]
  %v3883 = vunpack.c.l.b16 %v1893
  %v3884 = vunpack.c.l.b16 %v1894
  %v3885 = vunpack.c.l.b16 %v1895
  %v3886 = vunpack.c.l.b16 %v1896
  %v3887 = vunpack.c.l.b16 %v1897
  %v3888 = vunpack.c.l.b16 %v1898
  %v3889 = vunpack.c.l.b16 %v1899
  %v3890 = vunpack.c.l.b16 %v1900
  %v3891 = vpack.c.b16 %v3884, %v3883
  %v3892 = vpack.c.b16 %v3886, %v3885
  %v3893 = vpack.c.b16 %v3888, %v3887
  %v3894 = vpack.c.b16 %v3890, %v3889
  %v3915 = vunpack.c.l.b16 %v3859
  %v3916 = vunpack.c.h.b16 %v3859
  %v3917 = vunpack.c.l.b16 %v3860
  %v3918 = vunpack.c.h.b16 %v3860
  %v3919 = vunpack.c.l.b16 %v3861
  %v3920 = vunpack.c.h.b16 %v3861
  %v3921 = vunpack.c.l.b16 %v3862
  %v3922 = vunpack.c.h.b16 %v3862
  %v3923 = vunpack.c.l.b16 %v3863
  %v3924 = vunpack.c.h.b16 %v3863
  %v3925 = vunpack.c.l.b16 %v3864
  %v3926 = vunpack.c.h.b16 %v3864
  %v3927 = vunpack.c.l.b16 %v3865
  %v3928 = vunpack.c.h.b16 %v3865
  %v3929 = vunpack.c.l.b16 %v3866
  %v3930 = vunpack.c.h.b16 %v3866
  %v3931 = vunpack.c.l.b16 %v3867
  %v3932 = vunpack.c.h.b16 %v3867
  %v3933 = vunpack.c.l.b16 %v3868
  %v3934 = vunpack.c.h.b16 %v3868
  %v3935 = vunpack.c.l.b16 %v3869
  %v3936 = vunpack.c.h.b16 %v3869
  %v3937 = vunpack.c.l.b16 %v3870
  %v3938 = vunpack.c.h.b16 %v3870
  %v3939 = vunpack.c.l.b16 %v3871
  %v3940 = vunpack.c.h.b16 %v3871
  %v3941 = vunpack.c.l.b16 %v3872
  %v3942 = vunpack.c.h.b16 %v3872
  %v3943 = vunpack.c.l.b16 %v3873
  %v3944 = vunpack.c.h.b16 %v3873
  %v3945 = vunpack.c.l.b16 %v3874
  %v3946 = vunpack.c.h.b16 %v3874
  %v3947 = vpack.c.b16 %v3917, %v3915
  %v3948 = vpack.c.b16 %v3918, %v3916
  %v3949 = vpack.c.b16 %v3921, %v3919
  %v3950 = vpack.c.b16 %v3922, %v3920
  %v3951 = vpack.c.b16 %v3925, %v3923
  %v3952 = vpack.c.b16 %v3926, %v3924
  %v3953 = vpack.c.b16 %v3929, %v3927
  %v3954 = vpack.c.b16 %v3930, %v3928
  %v3955 = vpack.c.b16 %v3933, %v3931
  %v3956 = vpack.c.b16 %v3934, %v3932
  %v3957 = vpack.c.b16 %v3937, %v3935
  %v3958 = vpack.c.b16 %v3938, %v3936
  %v3959 = vpack.c.b16 %v3941, %v3939
  %v3960 = vpack.c.b16 %v3942, %v3940
  %v3961 = vpack.c.b16 %v3945, %v3943
  %v3962 = vpack.c.b16 %v3946, %v3944
  %3979 = vmatpush.bf16.msra.mxu0 %v3961
  %3980 = vmatpush.bf16.msra.mxu0 %v3959
  %3981 = vmatpush.bf16.msra.mxu0 %v3957
  %3982 = vmatpush.bf16.msra.mxu0 %v3955
  %3983 = vmatpush.bf16.msra.mxu0 %v3953
  %3984 = vmatpush.bf16.msra.mxu0 %v3951
  %3985 = vmatpush.bf16.msra.mxu0 %v3949
  %3986 = vmatpush.bf16.msra.mxu0 %v3947
  %3987 = vmatmul.bf16.gmra.mxu0 %v3891
  %v3988 = vpop.f32.mrf.mxu0
  %v3989 = vadd.f32 0.0, %v3988
  %v3990 = vpop.f32.mrf.mxu0
  %v3991 = vadd.f32 0.0, %v3990
  %3992 = vmatmul.bf16.gmra.mxu0 %v3892
  %v3993 = vpop.f32.mrf.mxu0
  %v3994 = vadd.f32 0.0, %v3993
  %v3995 = vpop.f32.mrf.mxu0
  %v3996 = vadd.f32 0.0, %v3995
  %3997 = vmatmul.bf16.gmra.mxu0 %v3893
  %v3998 = vpop.f32.mrf.mxu0
  %v3999 = vadd.f32 0.0, %v3998
  %v4000 = vpop.f32.mrf.mxu0
  %v4001 = vadd.f32 0.0, %v4000
  %4002 = vmatmul.bf16.gmra.mxu0 %v3894
  %v4003 = vpop.f32.mrf.mxu0
  %v4004 = vadd.f32 0.0, %v4003
  %v4005 = vpop.f32.mrf.mxu0
  %v4006 = vadd.f32 0.0, %v4005
  %4007 = vdwg.mxu0
  %4008 = vmatpush.bf16.msra.mxu0 %v3962
  %4009 = vmatpush.bf16.msra.mxu0 %v3960
  %4010 = vmatpush.bf16.msra.mxu0 %v3958
  %4011 = vmatpush.bf16.msra.mxu0 %v3956
  %4012 = vmatpush.bf16.msra.mxu0 %v3954
  %4013 = vmatpush.bf16.msra.mxu0 %v3952
  %4014 = vmatpush.bf16.msra.mxu0 %v3950
  %4015 = vmatpush.bf16.msra.mxu0 %v3948
  %4016 = vmatmul.bf16.gmra.mxu0 %v3891
  %v4017 = vpop.f32.mrf.mxu0
  %v4018 = vadd.f32 0.0, %v4017
  %v4019 = vpop.f32.mrf.mxu0
  %v4020 = vadd.f32 0.0, %v4019
  %4021 = vmatmul.bf16.gmra.mxu0 %v3892
  %v4022 = vpop.f32.mrf.mxu0
  %v4023 = vadd.f32 0.0, %v4022
  %v4024 = vpop.f32.mrf.mxu0
  %v4025 = vadd.f32 0.0, %v4024
  %4026 = vmatmul.bf16.gmra.mxu0 %v3893
  %v4027 = vpop.f32.mrf.mxu0
  %v4028 = vadd.f32 0.0, %v4027
  %v4029 = vpop.f32.mrf.mxu0
  %v4030 = vadd.f32 0.0, %v4029
  %4031 = vmatmul.bf16.gmra.mxu0 %v3894
  %v4032 = vpop.f32.mrf.mxu0
  %v4033 = vadd.f32 0.0, %v4032
  %v4034 = vpop.f32.mrf.mxu0
  %v4035 = vadd.f32 0.0, %v4034
  %4036 = vdwg.mxu0
  %v4037 = vadd.f32 %v3842, %v3989
  %v4038 = vadd.f32 %v3843, %v4018
  %v4039 = vadd.f32 %v3844, %v3991
  %v4040 = vadd.f32 %v3845, %v4020
  %v4041 = vadd.f32 %v3846, %v3994
  %v4042 = vadd.f32 %v3847, %v4023
  %v4043 = vadd.f32 %v3848, %v3996
  %v4044 = vadd.f32 %v3849, %v4025
  %v4045 = vadd.f32 %v3850, %v3999
  %v4046 = vadd.f32 %v3851, %v4028
  %v4047 = vadd.f32 %v3852, %v4001
  %v4048 = vadd.f32 %v3853, %v4030
  %v4049 = vadd.f32 %v3854, %v4004
  %v4050 = vadd.f32 %v3855, %v4033
  %v4051 = vadd.f32 %v3856, %v4006
  %v4052 = vadd.f32 %v3857, %v4035
  %s4053 = scalar_lea.vmem %s4, 1408
  %v4054 = vld [vmem:[%s4053] sm:$0xff]
  %v4055 = vld [vmem:[%s4053 + $0x8] sm:$0xff]
  %v4056 = vld [vmem:[%s4053 + $0x10] sm:$0xff]
  %v4057 = vld [vmem:[%s4053 + $0x18] sm:$0xff]
  %v4058 = vld [vmem:[%s4053 + $0x20] sm:$0xff]
  %v4059 = vld [vmem:[%s4053 + $0x28] sm:$0xff]
  %v4060 = vld [vmem:[%s4053 + $0x30] sm:$0xff]
  %v4061 = vld [vmem:[%s4053 + $0x38] sm:$0xff]
  %v4062 = vld [vmem:[%s4053 + $0x40] sm:$0xff]
  %v4063 = vld [vmem:[%s4053 + $0x48] sm:$0xff]
  %v4064 = vld [vmem:[%s4053 + $0x50] sm:$0xff]
  %v4065 = vld [vmem:[%s4053 + $0x58] sm:$0xff]
  %v4066 = vld [vmem:[%s4053 + $0x60] sm:$0xff]
  %v4067 = vld [vmem:[%s4053 + $0x68] sm:$0xff]
  %v4068 = vld [vmem:[%s4053 + $0x70] sm:$0xff]
  %v4069 = vld [vmem:[%s4053 + $0x78] sm:$0xff]
  %v4078 = vunpack.c.l.b16 %v1901
  %v4079 = vunpack.c.l.b16 %v1902
  %v4080 = vunpack.c.l.b16 %v1903
  %v4081 = vunpack.c.l.b16 %v1904
  %v4082 = vunpack.c.l.b16 %v1905
  %v4083 = vunpack.c.l.b16 %v1906
  %v4084 = vunpack.c.l.b16 %v1907
  %v4085 = vunpack.c.l.b16 %v1908
  %v4086 = vpack.c.b16 %v4079, %v4078
  %v4087 = vpack.c.b16 %v4081, %v4080
  %v4088 = vpack.c.b16 %v4083, %v4082
  %v4089 = vpack.c.b16 %v4085, %v4084
  %v4110 = vunpack.c.l.b16 %v4054
  %v4111 = vunpack.c.h.b16 %v4054
  %v4112 = vunpack.c.l.b16 %v4055
  %v4113 = vunpack.c.h.b16 %v4055
  %v4114 = vunpack.c.l.b16 %v4056
  %v4115 = vunpack.c.h.b16 %v4056
  %v4116 = vunpack.c.l.b16 %v4057
  %v4117 = vunpack.c.h.b16 %v4057
  %v4118 = vunpack.c.l.b16 %v4058
  %v4119 = vunpack.c.h.b16 %v4058
  %v4120 = vunpack.c.l.b16 %v4059
  %v4121 = vunpack.c.h.b16 %v4059
  %v4122 = vunpack.c.l.b16 %v4060
  %v4123 = vunpack.c.h.b16 %v4060
  %v4124 = vunpack.c.l.b16 %v4061
  %v4125 = vunpack.c.h.b16 %v4061
  %v4126 = vunpack.c.l.b16 %v4062
  %v4127 = vunpack.c.h.b16 %v4062
  %v4128 = vunpack.c.l.b16 %v4063
  %v4129 = vunpack.c.h.b16 %v4063
  %v4130 = vunpack.c.l.b16 %v4064
  %v4131 = vunpack.c.h.b16 %v4064
  %v4132 = vunpack.c.l.b16 %v4065
  %v4133 = vunpack.c.h.b16 %v4065
  %v4134 = vunpack.c.l.b16 %v4066
  %v4135 = vunpack.c.h.b16 %v4066
  %v4136 = vunpack.c.l.b16 %v4067
  %v4137 = vunpack.c.h.b16 %v4067
  %v4138 = vunpack.c.l.b16 %v4068
  %v4139 = vunpack.c.h.b16 %v4068
  %v4140 = vunpack.c.l.b16 %v4069
  %v4141 = vunpack.c.h.b16 %v4069
  %v4142 = vpack.c.b16 %v4112, %v4110
  %v4143 = vpack.c.b16 %v4113, %v4111
  %v4144 = vpack.c.b16 %v4116, %v4114
  %v4145 = vpack.c.b16 %v4117, %v4115
  %v4146 = vpack.c.b16 %v4120, %v4118
  %v4147 = vpack.c.b16 %v4121, %v4119
  %v4148 = vpack.c.b16 %v4124, %v4122
  %v4149 = vpack.c.b16 %v4125, %v4123
  %v4150 = vpack.c.b16 %v4128, %v4126
  %v4151 = vpack.c.b16 %v4129, %v4127
  %v4152 = vpack.c.b16 %v4132, %v4130
  %v4153 = vpack.c.b16 %v4133, %v4131
  %v4154 = vpack.c.b16 %v4136, %v4134
  %v4155 = vpack.c.b16 %v4137, %v4135
  %v4156 = vpack.c.b16 %v4140, %v4138
  %v4157 = vpack.c.b16 %v4141, %v4139
  %4174 = vmatpush.bf16.msra.mxu0 %v4156
  %4175 = vmatpush.bf16.msra.mxu0 %v4154
  %4176 = vmatpush.bf16.msra.mxu0 %v4152
  %4177 = vmatpush.bf16.msra.mxu0 %v4150
  %4178 = vmatpush.bf16.msra.mxu0 %v4148
  %4179 = vmatpush.bf16.msra.mxu0 %v4146
  %4180 = vmatpush.bf16.msra.mxu0 %v4144
  %4181 = vmatpush.bf16.msra.mxu0 %v4142
  %4182 = vmatmul.bf16.gmra.mxu0 %v4086
  %v4183 = vpop.f32.mrf.mxu0
  %v4184 = vadd.f32 0.0, %v4183
  %v4185 = vpop.f32.mrf.mxu0
  %v4186 = vadd.f32 0.0, %v4185
  %4187 = vmatmul.bf16.gmra.mxu0 %v4087
  %v4188 = vpop.f32.mrf.mxu0
  %v4189 = vadd.f32 0.0, %v4188
  %v4190 = vpop.f32.mrf.mxu0
  %v4191 = vadd.f32 0.0, %v4190
  %4192 = vmatmul.bf16.gmra.mxu0 %v4088
  %v4193 = vpop.f32.mrf.mxu0
  %v4194 = vadd.f32 0.0, %v4193
  %v4195 = vpop.f32.mrf.mxu0
  %v4196 = vadd.f32 0.0, %v4195
  %4197 = vmatmul.bf16.gmra.mxu0 %v4089
  %v4198 = vpop.f32.mrf.mxu0
  %v4199 = vadd.f32 0.0, %v4198
  %v4200 = vpop.f32.mrf.mxu0
  %v4201 = vadd.f32 0.0, %v4200
  %4202 = vdwg.mxu0
  %4203 = vmatpush.bf16.msra.mxu0 %v4157
  %4204 = vmatpush.bf16.msra.mxu0 %v4155
  %4205 = vmatpush.bf16.msra.mxu0 %v4153
  %4206 = vmatpush.bf16.msra.mxu0 %v4151
  %4207 = vmatpush.bf16.msra.mxu0 %v4149
  %4208 = vmatpush.bf16.msra.mxu0 %v4147
  %4209 = vmatpush.bf16.msra.mxu0 %v4145
  %4210 = vmatpush.bf16.msra.mxu0 %v4143
  %4211 = vmatmul.bf16.gmra.mxu0 %v4086
  %v4212 = vpop.f32.mrf.mxu0
  %v4213 = vadd.f32 0.0, %v4212
  %v4214 = vpop.f32.mrf.mxu0
  %v4215 = vadd.f32 0.0, %v4214
  %4216 = vmatmul.bf16.gmra.mxu0 %v4087
  %v4217 = vpop.f32.mrf.mxu0
  %v4218 = vadd.f32 0.0, %v4217
  %v4219 = vpop.f32.mrf.mxu0
  %v4220 = vadd.f32 0.0, %v4219
  %4221 = vmatmul.bf16.gmra.mxu0 %v4088
  %v4222 = vpop.f32.mrf.mxu0
  %v4223 = vadd.f32 0.0, %v4222
  %v4224 = vpop.f32.mrf.mxu0
  %v4225 = vadd.f32 0.0, %v4224
  %4226 = vmatmul.bf16.gmra.mxu0 %v4089
  %v4227 = vpop.f32.mrf.mxu0
  %v4228 = vadd.f32 0.0, %v4227
  %v4229 = vpop.f32.mrf.mxu0
  %v4230 = vadd.f32 0.0, %v4229
  %4231 = vdwg.mxu0
  %v4232 = vadd.f32 %v4037, %v4184
  %v4233 = vadd.f32 %v4038, %v4213
  %v4234 = vadd.f32 %v4039, %v4186
  %v4235 = vadd.f32 %v4040, %v4215
  %v4236 = vadd.f32 %v4041, %v4189
  %v4237 = vadd.f32 %v4042, %v4218
  %v4238 = vadd.f32 %v4043, %v4191
  %v4239 = vadd.f32 %v4044, %v4220
  %v4240 = vadd.f32 %v4045, %v4194
  %v4241 = vadd.f32 %v4046, %v4223
  %v4242 = vadd.f32 %v4047, %v4196
  %v4243 = vadd.f32 %v4048, %v4225
  %v4244 = vadd.f32 %v4049, %v4199
  %v4245 = vadd.f32 %v4050, %v4228
  %v4246 = vadd.f32 %v4051, %v4201
  %v4247 = vadd.f32 %v4052, %v4230
  %s4248 = scalar_lea.vmem %s4, 1536
  %v4249 = vld [vmem:[%s4248] sm:$0xff]
  %v4250 = vld [vmem:[%s4248 + $0x8] sm:$0xff]
  %v4251 = vld [vmem:[%s4248 + $0x10] sm:$0xff]
  %v4252 = vld [vmem:[%s4248 + $0x18] sm:$0xff]
  %v4253 = vld [vmem:[%s4248 + $0x20] sm:$0xff]
  %v4254 = vld [vmem:[%s4248 + $0x28] sm:$0xff]
  %v4255 = vld [vmem:[%s4248 + $0x30] sm:$0xff]
  %v4256 = vld [vmem:[%s4248 + $0x38] sm:$0xff]
  %v4257 = vld [vmem:[%s4248 + $0x40] sm:$0xff]
  %v4258 = vld [vmem:[%s4248 + $0x48] sm:$0xff]
  %v4259 = vld [vmem:[%s4248 + $0x50] sm:$0xff]
  %v4260 = vld [vmem:[%s4248 + $0x58] sm:$0xff]
  %v4261 = vld [vmem:[%s4248 + $0x60] sm:$0xff]
  %v4262 = vld [vmem:[%s4248 + $0x68] sm:$0xff]
  %v4263 = vld [vmem:[%s4248 + $0x70] sm:$0xff]
  %v4264 = vld [vmem:[%s4248 + $0x78] sm:$0xff]
  %v4273 = vunpack.c.l.b16 %v1909
  %v4274 = vunpack.c.l.b16 %v1910
  %v4275 = vunpack.c.l.b16 %v1911
  %v4276 = vunpack.c.l.b16 %v1912
  %v4277 = vunpack.c.l.b16 %v1913
  %v4278 = vunpack.c.l.b16 %v1914
  %v4279 = vunpack.c.l.b16 %v1915
  %v4280 = vunpack.c.l.b16 %v1916
  %v4281 = vpack.c.b16 %v4274, %v4273
  %v4282 = vpack.c.b16 %v4276, %v4275
  %v4283 = vpack.c.b16 %v4278, %v4277
  %v4284 = vpack.c.b16 %v4280, %v4279
  %v4305 = vunpack.c.l.b16 %v4249
  %v4306 = vunpack.c.h.b16 %v4249
  %v4307 = vunpack.c.l.b16 %v4250
  %v4308 = vunpack.c.h.b16 %v4250
  %v4309 = vunpack.c.l.b16 %v4251
  %v4310 = vunpack.c.h.b16 %v4251
  %v4311 = vunpack.c.l.b16 %v4252
  %v4312 = vunpack.c.h.b16 %v4252
  %v4313 = vunpack.c.l.b16 %v4253
  %v4314 = vunpack.c.h.b16 %v4253
  %v4315 = vunpack.c.l.b16 %v4254
  %v4316 = vunpack.c.h.b16 %v4254
  %v4317 = vunpack.c.l.b16 %v4255
  %v4318 = vunpack.c.h.b16 %v4255
  %v4319 = vunpack.c.l.b16 %v4256
  %v4320 = vunpack.c.h.b16 %v4256
  %v4321 = vunpack.c.l.b16 %v4257
  %v4322 = vunpack.c.h.b16 %v4257
  %v4323 = vunpack.c.l.b16 %v4258
  %v4324 = vunpack.c.h.b16 %v4258
  %v4325 = vunpack.c.l.b16 %v4259
  %v4326 = vunpack.c.h.b16 %v4259
  %v4327 = vunpack.c.l.b16 %v4260
  %v4328 = vunpack.c.h.b16 %v4260
  %v4329 = vunpack.c.l.b16 %v4261
  %v4330 = vunpack.c.h.b16 %v4261
  %v4331 = vunpack.c.l.b16 %v4262
  %v4332 = vunpack.c.h.b16 %v4262
  %v4333 = vunpack.c.l.b16 %v4263
  %v4334 = vunpack.c.h.b16 %v4263
  %v4335 = vunpack.c.l.b16 %v4264
  %v4336 = vunpack.c.h.b16 %v4264
  %v4337 = vpack.c.b16 %v4307, %v4305
  %v4338 = vpack.c.b16 %v4308, %v4306
  %v4339 = vpack.c.b16 %v4311, %v4309
  %v4340 = vpack.c.b16 %v4312, %v4310
  %v4341 = vpack.c.b16 %v4315, %v4313
  %v4342 = vpack.c.b16 %v4316, %v4314
  %v4343 = vpack.c.b16 %v4319, %v4317
  %v4344 = vpack.c.b16 %v4320, %v4318
  %v4345 = vpack.c.b16 %v4323, %v4321
  %v4346 = vpack.c.b16 %v4324, %v4322
  %v4347 = vpack.c.b16 %v4327, %v4325
  %v4348 = vpack.c.b16 %v4328, %v4326
  %v4349 = vpack.c.b16 %v4331, %v4329
  %v4350 = vpack.c.b16 %v4332, %v4330
  %v4351 = vpack.c.b16 %v4335, %v4333
  %v4352 = vpack.c.b16 %v4336, %v4334
  %4369 = vmatpush.bf16.msra.mxu0 %v4351
  %4370 = vmatpush.bf16.msra.mxu0 %v4349
  %4371 = vmatpush.bf16.msra.mxu0 %v4347
  %4372 = vmatpush.bf16.msra.mxu0 %v4345
  %4373 = vmatpush.bf16.msra.mxu0 %v4343
  %4374 = vmatpush.bf16.msra.mxu0 %v4341
  %4375 = vmatpush.bf16.msra.mxu0 %v4339
  %4376 = vmatpush.bf16.msra.mxu0 %v4337
  %4377 = vmatmul.bf16.gmra.mxu0 %v4281
  %v4378 = vpop.f32.mrf.mxu0
  %v4379 = vadd.f32 0.0, %v4378
  %v4380 = vpop.f32.mrf.mxu0
  %v4381 = vadd.f32 0.0, %v4380
  %4382 = vmatmul.bf16.gmra.mxu0 %v4282
  %v4383 = vpop.f32.mrf.mxu0
  %v4384 = vadd.f32 0.0, %v4383
  %v4385 = vpop.f32.mrf.mxu0
  %v4386 = vadd.f32 0.0, %v4385
  %4387 = vmatmul.bf16.gmra.mxu0 %v4283
  %v4388 = vpop.f32.mrf.mxu0
  %v4389 = vadd.f32 0.0, %v4388
  %v4390 = vpop.f32.mrf.mxu0
  %v4391 = vadd.f32 0.0, %v4390
  %4392 = vmatmul.bf16.gmra.mxu0 %v4284
  %v4393 = vpop.f32.mrf.mxu0
  %v4394 = vadd.f32 0.0, %v4393
  %v4395 = vpop.f32.mrf.mxu0
  %v4396 = vadd.f32 0.0, %v4395
  %4397 = vdwg.mxu0
  %4398 = vmatpush.bf16.msra.mxu0 %v4352
  %4399 = vmatpush.bf16.msra.mxu0 %v4350
  %4400 = vmatpush.bf16.msra.mxu0 %v4348
  %4401 = vmatpush.bf16.msra.mxu0 %v4346
  %4402 = vmatpush.bf16.msra.mxu0 %v4344
  %4403 = vmatpush.bf16.msra.mxu0 %v4342
  %4404 = vmatpush.bf16.msra.mxu0 %v4340
  %4405 = vmatpush.bf16.msra.mxu0 %v4338
  %4406 = vmatmul.bf16.gmra.mxu0 %v4281
  %v4407 = vpop.f32.mrf.mxu0
  %v4408 = vadd.f32 0.0, %v4407
  %v4409 = vpop.f32.mrf.mxu0
  %v4410 = vadd.f32 0.0, %v4409
  %4411 = vmatmul.bf16.gmra.mxu0 %v4282
  %v4412 = vpop.f32.mrf.mxu0
  %v4413 = vadd.f32 0.0, %v4412
  %v4414 = vpop.f32.mrf.mxu0
  %v4415 = vadd.f32 0.0, %v4414
  %4416 = vmatmul.bf16.gmra.mxu0 %v4283
  %v4417 = vpop.f32.mrf.mxu0
  %v4418 = vadd.f32 0.0, %v4417
  %v4419 = vpop.f32.mrf.mxu0
  %v4420 = vadd.f32 0.0, %v4419
  %4421 = vmatmul.bf16.gmra.mxu0 %v4284
  %v4422 = vpop.f32.mrf.mxu0
  %v4423 = vadd.f32 0.0, %v4422
  %v4424 = vpop.f32.mrf.mxu0
  %v4425 = vadd.f32 0.0, %v4424
  %4426 = vdwg.mxu0
  %v4427 = vadd.f32 %v4232, %v4379
  %v4428 = vadd.f32 %v4233, %v4408
  %v4429 = vadd.f32 %v4234, %v4381
  %v4430 = vadd.f32 %v4235, %v4410
  %v4431 = vadd.f32 %v4236, %v4384
  %v4432 = vadd.f32 %v4237, %v4413
  %v4433 = vadd.f32 %v4238, %v4386
  %v4434 = vadd.f32 %v4239, %v4415
  %v4435 = vadd.f32 %v4240, %v4389
  %v4436 = vadd.f32 %v4241, %v4418
  %v4437 = vadd.f32 %v4242, %v4391
  %v4438 = vadd.f32 %v4243, %v4420
  %v4439 = vadd.f32 %v4244, %v4394
  %v4440 = vadd.f32 %v4245, %v4423
  %v4441 = vadd.f32 %v4246, %v4396
  %v4442 = vadd.f32 %v4247, %v4425
  %s4443 = scalar_lea.vmem %s4, 1664
  %v4444 = vld [vmem:[%s4443] sm:$0xff]
  %v4445 = vld [vmem:[%s4443 + $0x8] sm:$0xff]
  %v4446 = vld [vmem:[%s4443 + $0x10] sm:$0xff]
  %v4447 = vld [vmem:[%s4443 + $0x18] sm:$0xff]
  %v4448 = vld [vmem:[%s4443 + $0x20] sm:$0xff]
  %v4449 = vld [vmem:[%s4443 + $0x28] sm:$0xff]
  %v4450 = vld [vmem:[%s4443 + $0x30] sm:$0xff]
  %v4451 = vld [vmem:[%s4443 + $0x38] sm:$0xff]
  %v4452 = vld [vmem:[%s4443 + $0x40] sm:$0xff]
  %v4453 = vld [vmem:[%s4443 + $0x48] sm:$0xff]
  %v4454 = vld [vmem:[%s4443 + $0x50] sm:$0xff]
  %v4455 = vld [vmem:[%s4443 + $0x58] sm:$0xff]
  %v4456 = vld [vmem:[%s4443 + $0x60] sm:$0xff]
  %v4457 = vld [vmem:[%s4443 + $0x68] sm:$0xff]
  %v4458 = vld [vmem:[%s4443 + $0x70] sm:$0xff]
  %v4459 = vld [vmem:[%s4443 + $0x78] sm:$0xff]
  %v4468 = vunpack.c.l.b16 %v1917
  %v4469 = vunpack.c.l.b16 %v1918
  %v4470 = vunpack.c.l.b16 %v1919
  %v4471 = vunpack.c.l.b16 %v1920
  %v4472 = vunpack.c.l.b16 %v1921
  %v4473 = vunpack.c.l.b16 %v1922
  %v4474 = vunpack.c.l.b16 %v1923
  %v4475 = vunpack.c.l.b16 %v1924
  %v4476 = vpack.c.b16 %v4469, %v4468
  %v4477 = vpack.c.b16 %v4471, %v4470
  %v4478 = vpack.c.b16 %v4473, %v4472
  %v4479 = vpack.c.b16 %v4475, %v4474
  %v4500 = vunpack.c.l.b16 %v4444
  %v4501 = vunpack.c.h.b16 %v4444
  %v4502 = vunpack.c.l.b16 %v4445
  %v4503 = vunpack.c.h.b16 %v4445
  %v4504 = vunpack.c.l.b16 %v4446
  %v4505 = vunpack.c.h.b16 %v4446
  %v4506 = vunpack.c.l.b16 %v4447
  %v4507 = vunpack.c.h.b16 %v4447
  %v4508 = vunpack.c.l.b16 %v4448
  %v4509 = vunpack.c.h.b16 %v4448
  %v4510 = vunpack.c.l.b16 %v4449
  %v4511 = vunpack.c.h.b16 %v4449
  %v4512 = vunpack.c.l.b16 %v4450
  %v4513 = vunpack.c.h.b16 %v4450
  %v4514 = vunpack.c.l.b16 %v4451
  %v4515 = vunpack.c.h.b16 %v4451
  %v4516 = vunpack.c.l.b16 %v4452
  %v4517 = vunpack.c.h.b16 %v4452
  %v4518 = vunpack.c.l.b16 %v4453
  %v4519 = vunpack.c.h.b16 %v4453
  %v4520 = vunpack.c.l.b16 %v4454
  %v4521 = vunpack.c.h.b16 %v4454
  %v4522 = vunpack.c.l.b16 %v4455
  %v4523 = vunpack.c.h.b16 %v4455
  %v4524 = vunpack.c.l.b16 %v4456
  %v4525 = vunpack.c.h.b16 %v4456
  %v4526 = vunpack.c.l.b16 %v4457
  %v4527 = vunpack.c.h.b16 %v4457
  %v4528 = vunpack.c.l.b16 %v4458
  %v4529 = vunpack.c.h.b16 %v4458
  %v4530 = vunpack.c.l.b16 %v4459
  %v4531 = vunpack.c.h.b16 %v4459
  %v4532 = vpack.c.b16 %v4502, %v4500
  %v4533 = vpack.c.b16 %v4503, %v4501
  %v4534 = vpack.c.b16 %v4506, %v4504
  %v4535 = vpack.c.b16 %v4507, %v4505
  %v4536 = vpack.c.b16 %v4510, %v4508
  %v4537 = vpack.c.b16 %v4511, %v4509
  %v4538 = vpack.c.b16 %v4514, %v4512
  %v4539 = vpack.c.b16 %v4515, %v4513
  %v4540 = vpack.c.b16 %v4518, %v4516
  %v4541 = vpack.c.b16 %v4519, %v4517
  %v4542 = vpack.c.b16 %v4522, %v4520
  %v4543 = vpack.c.b16 %v4523, %v4521
  %v4544 = vpack.c.b16 %v4526, %v4524
  %v4545 = vpack.c.b16 %v4527, %v4525
  %v4546 = vpack.c.b16 %v4530, %v4528
  %v4547 = vpack.c.b16 %v4531, %v4529
  %4564 = vmatpush.bf16.msra.mxu0 %v4546
  %4565 = vmatpush.bf16.msra.mxu0 %v4544
  %4566 = vmatpush.bf16.msra.mxu0 %v4542
  %4567 = vmatpush.bf16.msra.mxu0 %v4540
  %4568 = vmatpush.bf16.msra.mxu0 %v4538
  %4569 = vmatpush.bf16.msra.mxu0 %v4536
  %4570 = vmatpush.bf16.msra.mxu0 %v4534
  %4571 = vmatpush.bf16.msra.mxu0 %v4532
  %4572 = vmatmul.bf16.gmra.mxu0 %v4476
  %v4573 = vpop.f32.mrf.mxu0
  %v4574 = vadd.f32 0.0, %v4573
  %v4575 = vpop.f32.mrf.mxu0
  %v4576 = vadd.f32 0.0, %v4575
  %4577 = vmatmul.bf16.gmra.mxu0 %v4477
  %v4578 = vpop.f32.mrf.mxu0
  %v4579 = vadd.f32 0.0, %v4578
  %v4580 = vpop.f32.mrf.mxu0
  %v4581 = vadd.f32 0.0, %v4580
  %4582 = vmatmul.bf16.gmra.mxu0 %v4478
  %v4583 = vpop.f32.mrf.mxu0
  %v4584 = vadd.f32 0.0, %v4583
  %v4585 = vpop.f32.mrf.mxu0
  %v4586 = vadd.f32 0.0, %v4585
  %4587 = vmatmul.bf16.gmra.mxu0 %v4479
  %v4588 = vpop.f32.mrf.mxu0
  %v4589 = vadd.f32 0.0, %v4588
  %v4590 = vpop.f32.mrf.mxu0
  %v4591 = vadd.f32 0.0, %v4590
  %4592 = vdwg.mxu0
  %4593 = vmatpush.bf16.msra.mxu0 %v4547
  %4594 = vmatpush.bf16.msra.mxu0 %v4545
  %4595 = vmatpush.bf16.msra.mxu0 %v4543
  %4596 = vmatpush.bf16.msra.mxu0 %v4541
  %4597 = vmatpush.bf16.msra.mxu0 %v4539
  %4598 = vmatpush.bf16.msra.mxu0 %v4537
  %4599 = vmatpush.bf16.msra.mxu0 %v4535
  %4600 = vmatpush.bf16.msra.mxu0 %v4533
  %4601 = vmatmul.bf16.gmra.mxu0 %v4476
  %v4602 = vpop.f32.mrf.mxu0
  %v4603 = vadd.f32 0.0, %v4602
  %v4604 = vpop.f32.mrf.mxu0
  %v4605 = vadd.f32 0.0, %v4604
  %4606 = vmatmul.bf16.gmra.mxu0 %v4477
  %v4607 = vpop.f32.mrf.mxu0
  %v4608 = vadd.f32 0.0, %v4607
  %v4609 = vpop.f32.mrf.mxu0
  %v4610 = vadd.f32 0.0, %v4609
  %4611 = vmatmul.bf16.gmra.mxu0 %v4478
  %v4612 = vpop.f32.mrf.mxu0
  %v4613 = vadd.f32 0.0, %v4612
  %v4614 = vpop.f32.mrf.mxu0
  %v4615 = vadd.f32 0.0, %v4614
  %4616 = vmatmul.bf16.gmra.mxu0 %v4479
  %v4617 = vpop.f32.mrf.mxu0
  %v4618 = vadd.f32 0.0, %v4617
  %v4619 = vpop.f32.mrf.mxu0
  %v4620 = vadd.f32 0.0, %v4619
  %4621 = vdwg.mxu0
  %v4622 = vadd.f32 %v4427, %v4574
  %v4623 = vadd.f32 %v4428, %v4603
  %v4624 = vadd.f32 %v4429, %v4576
  %v4625 = vadd.f32 %v4430, %v4605
  %v4626 = vadd.f32 %v4431, %v4579
  %v4627 = vadd.f32 %v4432, %v4608
  %v4628 = vadd.f32 %v4433, %v4581
  %v4629 = vadd.f32 %v4434, %v4610
  %v4630 = vadd.f32 %v4435, %v4584
  %v4631 = vadd.f32 %v4436, %v4613
  %v4632 = vadd.f32 %v4437, %v4586
  %v4633 = vadd.f32 %v4438, %v4615
  %v4634 = vadd.f32 %v4439, %v4589
  %v4635 = vadd.f32 %v4440, %v4618
  %v4636 = vadd.f32 %v4441, %v4591
  %v4637 = vadd.f32 %v4442, %v4620
  %s4638 = scalar_lea.vmem %s4, 1792
  %v4639 = vld [vmem:[%s4638] sm:$0xff]
  %v4640 = vld [vmem:[%s4638 + $0x8] sm:$0xff]
  %v4641 = vld [vmem:[%s4638 + $0x10] sm:$0xff]
  %v4642 = vld [vmem:[%s4638 + $0x18] sm:$0xff]
  %v4643 = vld [vmem:[%s4638 + $0x20] sm:$0xff]
  %v4644 = vld [vmem:[%s4638 + $0x28] sm:$0xff]
  %v4645 = vld [vmem:[%s4638 + $0x30] sm:$0xff]
  %v4646 = vld [vmem:[%s4638 + $0x38] sm:$0xff]
  %v4647 = vld [vmem:[%s4638 + $0x40] sm:$0xff]
  %v4648 = vld [vmem:[%s4638 + $0x48] sm:$0xff]
  %v4649 = vld [vmem:[%s4638 + $0x50] sm:$0xff]
  %v4650 = vld [vmem:[%s4638 + $0x58] sm:$0xff]
  %v4651 = vld [vmem:[%s4638 + $0x60] sm:$0xff]
  %v4652 = vld [vmem:[%s4638 + $0x68] sm:$0xff]
  %v4653 = vld [vmem:[%s4638 + $0x70] sm:$0xff]
  %v4654 = vld [vmem:[%s4638 + $0x78] sm:$0xff]
  %v4663 = vunpack.c.l.b16 %v1925
  %v4664 = vunpack.c.l.b16 %v1926
  %v4665 = vunpack.c.l.b16 %v1927
  %v4666 = vunpack.c.l.b16 %v1928
  %v4667 = vunpack.c.l.b16 %v1929
  %v4668 = vunpack.c.l.b16 %v1930
  %v4669 = vunpack.c.l.b16 %v1931
  %v4670 = vunpack.c.l.b16 %v1932
  %v4671 = vpack.c.b16 %v4664, %v4663
  %v4672 = vpack.c.b16 %v4666, %v4665
  %v4673 = vpack.c.b16 %v4668, %v4667
  %v4674 = vpack.c.b16 %v4670, %v4669
  %v4695 = vunpack.c.l.b16 %v4639
  %v4696 = vunpack.c.h.b16 %v4639
  %v4697 = vunpack.c.l.b16 %v4640
  %v4698 = vunpack.c.h.b16 %v4640
  %v4699 = vunpack.c.l.b16 %v4641
  %v4700 = vunpack.c.h.b16 %v4641
  %v4701 = vunpack.c.l.b16 %v4642
  %v4702 = vunpack.c.h.b16 %v4642
  %v4703 = vunpack.c.l.b16 %v4643
  %v4704 = vunpack.c.h.b16 %v4643
  %v4705 = vunpack.c.l.b16 %v4644
  %v4706 = vunpack.c.h.b16 %v4644
  %v4707 = vunpack.c.l.b16 %v4645
  %v4708 = vunpack.c.h.b16 %v4645
  %v4709 = vunpack.c.l.b16 %v4646
  %v4710 = vunpack.c.h.b16 %v4646
  %v4711 = vunpack.c.l.b16 %v4647
  %v4712 = vunpack.c.h.b16 %v4647
  %v4713 = vunpack.c.l.b16 %v4648
  %v4714 = vunpack.c.h.b16 %v4648
  %v4715 = vunpack.c.l.b16 %v4649
  %v4716 = vunpack.c.h.b16 %v4649
  %v4717 = vunpack.c.l.b16 %v4650
  %v4718 = vunpack.c.h.b16 %v4650
  %v4719 = vunpack.c.l.b16 %v4651
  %v4720 = vunpack.c.h.b16 %v4651
  %v4721 = vunpack.c.l.b16 %v4652
  %v4722 = vunpack.c.h.b16 %v4652
  %v4723 = vunpack.c.l.b16 %v4653
  %v4724 = vunpack.c.h.b16 %v4653
  %v4725 = vunpack.c.l.b16 %v4654
  %v4726 = vunpack.c.h.b16 %v4654
  %v4727 = vpack.c.b16 %v4697, %v4695
  %v4728 = vpack.c.b16 %v4698, %v4696
  %v4729 = vpack.c.b16 %v4701, %v4699
  %v4730 = vpack.c.b16 %v4702, %v4700
  %v4731 = vpack.c.b16 %v4705, %v4703
  %v4732 = vpack.c.b16 %v4706, %v4704
  %v4733 = vpack.c.b16 %v4709, %v4707
  %v4734 = vpack.c.b16 %v4710, %v4708
  %v4735 = vpack.c.b16 %v4713, %v4711
  %v4736 = vpack.c.b16 %v4714, %v4712
  %v4737 = vpack.c.b16 %v4717, %v4715
  %v4738 = vpack.c.b16 %v4718, %v4716
  %v4739 = vpack.c.b16 %v4721, %v4719
  %v4740 = vpack.c.b16 %v4722, %v4720
  %v4741 = vpack.c.b16 %v4725, %v4723
  %v4742 = vpack.c.b16 %v4726, %v4724
  %4759 = vmatpush.bf16.msra.mxu0 %v4741
  %4760 = vmatpush.bf16.msra.mxu0 %v4739
  %4761 = vmatpush.bf16.msra.mxu0 %v4737
  %4762 = vmatpush.bf16.msra.mxu0 %v4735
  %4763 = vmatpush.bf16.msra.mxu0 %v4733
  %4764 = vmatpush.bf16.msra.mxu0 %v4731
  %4765 = vmatpush.bf16.msra.mxu0 %v4729
  %4766 = vmatpush.bf16.msra.mxu0 %v4727
  %4767 = vmatmul.bf16.gmra.mxu0 %v4671
  %v4768 = vpop.f32.mrf.mxu0
  %v4769 = vadd.f32 0.0, %v4768
  %v4770 = vpop.f32.mrf.mxu0
  %v4771 = vadd.f32 0.0, %v4770
  %4772 = vmatmul.bf16.gmra.mxu0 %v4672
  %v4773 = vpop.f32.mrf.mxu0
  %v4774 = vadd.f32 0.0, %v4773
  %v4775 = vpop.f32.mrf.mxu0
  %v4776 = vadd.f32 0.0, %v4775
  %4777 = vmatmul.bf16.gmra.mxu0 %v4673
  %v4778 = vpop.f32.mrf.mxu0
  %v4779 = vadd.f32 0.0, %v4778
  %v4780 = vpop.f32.mrf.mxu0
  %v4781 = vadd.f32 0.0, %v4780
  %4782 = vmatmul.bf16.gmra.mxu0 %v4674
  %v4783 = vpop.f32.mrf.mxu0
  %v4784 = vadd.f32 0.0, %v4783
  %v4785 = vpop.f32.mrf.mxu0
  %v4786 = vadd.f32 0.0, %v4785
  %4787 = vdwg.mxu0
  %4788 = vmatpush.bf16.msra.mxu0 %v4742
  %4789 = vmatpush.bf16.msra.mxu0 %v4740
  %4790 = vmatpush.bf16.msra.mxu0 %v4738
  %4791 = vmatpush.bf16.msra.mxu0 %v4736
  %4792 = vmatpush.bf16.msra.mxu0 %v4734
  %4793 = vmatpush.bf16.msra.mxu0 %v4732
  %4794 = vmatpush.bf16.msra.mxu0 %v4730
  %4795 = vmatpush.bf16.msra.mxu0 %v4728
  %4796 = vmatmul.bf16.gmra.mxu0 %v4671
  %v4797 = vpop.f32.mrf.mxu0
  %v4798 = vadd.f32 0.0, %v4797
  %v4799 = vpop.f32.mrf.mxu0
  %v4800 = vadd.f32 0.0, %v4799
  %4801 = vmatmul.bf16.gmra.mxu0 %v4672
  %v4802 = vpop.f32.mrf.mxu0
  %v4803 = vadd.f32 0.0, %v4802
  %v4804 = vpop.f32.mrf.mxu0
  %v4805 = vadd.f32 0.0, %v4804
  %4806 = vmatmul.bf16.gmra.mxu0 %v4673
  %v4807 = vpop.f32.mrf.mxu0
  %v4808 = vadd.f32 0.0, %v4807
  %v4809 = vpop.f32.mrf.mxu0
  %v4810 = vadd.f32 0.0, %v4809
  %4811 = vmatmul.bf16.gmra.mxu0 %v4674
  %v4812 = vpop.f32.mrf.mxu0
  %v4813 = vadd.f32 0.0, %v4812
  %v4814 = vpop.f32.mrf.mxu0
  %v4815 = vadd.f32 0.0, %v4814
  %4816 = vdwg.mxu0
  %v4817 = vadd.f32 %v4622, %v4769
  %v4818 = vadd.f32 %v4623, %v4798
  %v4819 = vadd.f32 %v4624, %v4771
  %v4820 = vadd.f32 %v4625, %v4800
  %v4821 = vadd.f32 %v4626, %v4774
  %v4822 = vadd.f32 %v4627, %v4803
  %v4823 = vadd.f32 %v4628, %v4776
  %v4824 = vadd.f32 %v4629, %v4805
  %v4825 = vadd.f32 %v4630, %v4779
  %v4826 = vadd.f32 %v4631, %v4808
  %v4827 = vadd.f32 %v4632, %v4781
  %v4828 = vadd.f32 %v4633, %v4810
  %v4829 = vadd.f32 %v4634, %v4784
  %v4830 = vadd.f32 %v4635, %v4813
  %v4831 = vadd.f32 %v4636, %v4786
  %v4832 = vadd.f32 %v4637, %v4815
  %s4833 = scalar_lea.vmem %s4, 1920
  %v4834 = vld [vmem:[%s4833] sm:$0xff]
  %v4835 = vld [vmem:[%s4833 + $0x8] sm:$0xff]
  %v4836 = vld [vmem:[%s4833 + $0x10] sm:$0xff]
  %v4837 = vld [vmem:[%s4833 + $0x18] sm:$0xff]
  %v4838 = vld [vmem:[%s4833 + $0x20] sm:$0xff]
  %v4839 = vld [vmem:[%s4833 + $0x28] sm:$0xff]
  %v4840 = vld [vmem:[%s4833 + $0x30] sm:$0xff]
  %v4841 = vld [vmem:[%s4833 + $0x38] sm:$0xff]
  %v4842 = vld [vmem:[%s4833 + $0x40] sm:$0xff]
  %v4843 = vld [vmem:[%s4833 + $0x48] sm:$0xff]
  %v4844 = vld [vmem:[%s4833 + $0x50] sm:$0xff]
  %v4845 = vld [vmem:[%s4833 + $0x58] sm:$0xff]
  %v4846 = vld [vmem:[%s4833 + $0x60] sm:$0xff]
  %v4847 = vld [vmem:[%s4833 + $0x68] sm:$0xff]
  %v4848 = vld [vmem:[%s4833 + $0x70] sm:$0xff]
  %v4849 = vld [vmem:[%s4833 + $0x78] sm:$0xff]
  %v4858 = vunpack.c.l.b16 %v1933
  %v4859 = vunpack.c.l.b16 %v1934
  %v4860 = vunpack.c.l.b16 %v1935
  %v4861 = vunpack.c.l.b16 %v1936
  %v4862 = vunpack.c.l.b16 %v1937
  %v4863 = vunpack.c.l.b16 %v1938
  %v4864 = vunpack.c.l.b16 %v1939
  %v4865 = vunpack.c.l.b16 %v1940
  %v4866 = vpack.c.b16 %v4859, %v4858
  %v4867 = vpack.c.b16 %v4861, %v4860
  %v4868 = vpack.c.b16 %v4863, %v4862
  %v4869 = vpack.c.b16 %v4865, %v4864
  %v4890 = vunpack.c.l.b16 %v4834
  %v4891 = vunpack.c.h.b16 %v4834
  %v4892 = vunpack.c.l.b16 %v4835
  %v4893 = vunpack.c.h.b16 %v4835
  %v4894 = vunpack.c.l.b16 %v4836
  %v4895 = vunpack.c.h.b16 %v4836
  %v4896 = vunpack.c.l.b16 %v4837
  %v4897 = vunpack.c.h.b16 %v4837
  %v4898 = vunpack.c.l.b16 %v4838
  %v4899 = vunpack.c.h.b16 %v4838
  %v4900 = vunpack.c.l.b16 %v4839
  %v4901 = vunpack.c.h.b16 %v4839
  %v4902 = vunpack.c.l.b16 %v4840
  %v4903 = vunpack.c.h.b16 %v4840
  %v4904 = vunpack.c.l.b16 %v4841
  %v4905 = vunpack.c.h.b16 %v4841
  %v4906 = vunpack.c.l.b16 %v4842
  %v4907 = vunpack.c.h.b16 %v4842
  %v4908 = vunpack.c.l.b16 %v4843
  %v4909 = vunpack.c.h.b16 %v4843
  %v4910 = vunpack.c.l.b16 %v4844
  %v4911 = vunpack.c.h.b16 %v4844
  %v4912 = vunpack.c.l.b16 %v4845
  %v4913 = vunpack.c.h.b16 %v4845
  %v4914 = vunpack.c.l.b16 %v4846
  %v4915 = vunpack.c.h.b16 %v4846
  %v4916 = vunpack.c.l.b16 %v4847
  %v4917 = vunpack.c.h.b16 %v4847
  %v4918 = vunpack.c.l.b16 %v4848
  %v4919 = vunpack.c.h.b16 %v4848
  %v4920 = vunpack.c.l.b16 %v4849
  %v4921 = vunpack.c.h.b16 %v4849
  %v4922 = vpack.c.b16 %v4892, %v4890
  %v4923 = vpack.c.b16 %v4893, %v4891
  %v4924 = vpack.c.b16 %v4896, %v4894
  %v4925 = vpack.c.b16 %v4897, %v4895
  %v4926 = vpack.c.b16 %v4900, %v4898
  %v4927 = vpack.c.b16 %v4901, %v4899
  %v4928 = vpack.c.b16 %v4904, %v4902
  %v4929 = vpack.c.b16 %v4905, %v4903
  %v4930 = vpack.c.b16 %v4908, %v4906
  %v4931 = vpack.c.b16 %v4909, %v4907
  %v4932 = vpack.c.b16 %v4912, %v4910
  %v4933 = vpack.c.b16 %v4913, %v4911
  %v4934 = vpack.c.b16 %v4916, %v4914
  %v4935 = vpack.c.b16 %v4917, %v4915
  %v4936 = vpack.c.b16 %v4920, %v4918
  %v4937 = vpack.c.b16 %v4921, %v4919
  %4954 = vmatpush.bf16.msra.mxu0 %v4936
  %4955 = vmatpush.bf16.msra.mxu0 %v4934
  %4956 = vmatpush.bf16.msra.mxu0 %v4932
  %4957 = vmatpush.bf16.msra.mxu0 %v4930
  %4958 = vmatpush.bf16.msra.mxu0 %v4928
  %4959 = vmatpush.bf16.msra.mxu0 %v4926
  %4960 = vmatpush.bf16.msra.mxu0 %v4924
  %4961 = vmatpush.bf16.msra.mxu0 %v4922
  %4962 = vmatmul.bf16.gmra.mxu0 %v4866
  %v4963 = vpop.f32.mrf.mxu0
  %v4964 = vadd.f32 0.0, %v4963
  %v4965 = vpop.f32.mrf.mxu0
  %v4966 = vadd.f32 0.0, %v4965
  %4967 = vmatmul.bf16.gmra.mxu0 %v4867
  %v4968 = vpop.f32.mrf.mxu0
  %v4969 = vadd.f32 0.0, %v4968
  %v4970 = vpop.f32.mrf.mxu0
  %v4971 = vadd.f32 0.0, %v4970
  %4972 = vmatmul.bf16.gmra.mxu0 %v4868
  %v4973 = vpop.f32.mrf.mxu0
  %v4974 = vadd.f32 0.0, %v4973
  %v4975 = vpop.f32.mrf.mxu0
  %v4976 = vadd.f32 0.0, %v4975
  %4977 = vmatmul.bf16.gmra.mxu0 %v4869
  %v4978 = vpop.f32.mrf.mxu0
  %v4979 = vadd.f32 0.0, %v4978
  %v4980 = vpop.f32.mrf.mxu0
  %v4981 = vadd.f32 0.0, %v4980
  %4982 = vdwg.mxu0
  %4983 = vmatpush.bf16.msra.mxu0 %v4937
  %4984 = vmatpush.bf16.msra.mxu0 %v4935
  %4985 = vmatpush.bf16.msra.mxu0 %v4933
  %4986 = vmatpush.bf16.msra.mxu0 %v4931
  %4987 = vmatpush.bf16.msra.mxu0 %v4929
  %4988 = vmatpush.bf16.msra.mxu0 %v4927
  %4989 = vmatpush.bf16.msra.mxu0 %v4925
  %4990 = vmatpush.bf16.msra.mxu0 %v4923
  %4991 = vmatmul.bf16.gmra.mxu0 %v4866
  %v4992 = vpop.f32.mrf.mxu0
  %v4993 = vadd.f32 0.0, %v4992
  %v4994 = vpop.f32.mrf.mxu0
  %v4995 = vadd.f32 0.0, %v4994
  %4996 = vmatmul.bf16.gmra.mxu0 %v4867
  %v4997 = vpop.f32.mrf.mxu0
  %v4998 = vadd.f32 0.0, %v4997
  %v4999 = vpop.f32.mrf.mxu0
  %v5000 = vadd.f32 0.0, %v4999
  %5001 = vmatmul.bf16.gmra.mxu0 %v4868
  %v5002 = vpop.f32.mrf.mxu0
  %v5003 = vadd.f32 0.0, %v5002
  %v5004 = vpop.f32.mrf.mxu0
  %v5005 = vadd.f32 0.0, %v5004
  %5006 = vmatmul.bf16.gmra.mxu0 %v4869
  %v5007 = vpop.f32.mrf.mxu0
  %v5008 = vadd.f32 0.0, %v5007
  %v5009 = vpop.f32.mrf.mxu0
  %v5010 = vadd.f32 0.0, %v5009
  %5011 = vdwg.mxu0
  %v5012 = vadd.f32 %v4817, %v4964
  %v5013 = vadd.f32 %v4818, %v4993
  %v5014 = vadd.f32 %v4819, %v4966
  %v5015 = vadd.f32 %v4820, %v4995
  %v5016 = vadd.f32 %v4821, %v4969
  %v5017 = vadd.f32 %v4822, %v4998
  %v5018 = vadd.f32 %v4823, %v4971
  %v5019 = vadd.f32 %v4824, %v5000
  %v5020 = vadd.f32 %v4825, %v4974
  %v5021 = vadd.f32 %v4826, %v5003
  %v5022 = vadd.f32 %v4827, %v4976
  %v5023 = vadd.f32 %v4828, %v5005
  %v5024 = vadd.f32 %v4829, %v4979
  %v5025 = vadd.f32 %v4830, %v5008
  %v5026 = vadd.f32 %v4831, %v4981
  %v5027 = vadd.f32 %v4832, %v5010
  %v5028 = vld [vmem:[%s5] sm:$0x3]
  %v5030 = vperm.slane %v5028, 0
  %v5031 = vperm.slane %v5028, 1
  %v5034 = vadd.f32 %v5012, %v5030
  %v5035 = vadd.f32 %v5013, %v5031
  %v5036 = vadd.f32 %v5014, %v5030
  %v5037 = vadd.f32 %v5015, %v5031
  %v5038 = vadd.f32 %v5016, %v5030
  %v5039 = vadd.f32 %v5017, %v5031
  %v5040 = vadd.f32 %v5018, %v5030
  %v5041 = vadd.f32 %v5019, %v5031
  %v5042 = vadd.f32 %v5020, %v5030
  %v5043 = vadd.f32 %v5021, %v5031
  %v5044 = vadd.f32 %v5022, %v5030
  %v5045 = vadd.f32 %v5023, %v5031
  %v5046 = vadd.f32 %v5024, %v5030
  %v5047 = vadd.f32 %v5025, %v5031
  %v5048 = vadd.f32 %v5026, %v5030
  %v5049 = vadd.f32 %v5027, %v5031
  %vm5050 = vcmp.ge.f32.partialorder %v5034, 0.0
  %vm5051 = vcmp.ge.f32.partialorder %v5035, 0.0
  %vm5052 = vcmp.ge.f32.partialorder %v5036, 0.0
  %vm5053 = vcmp.ge.f32.partialorder %v5037, 0.0
  %vm5054 = vcmp.ge.f32.partialorder %v5038, 0.0
  %vm5055 = vcmp.ge.f32.partialorder %v5039, 0.0
  %vm5056 = vcmp.ge.f32.partialorder %v5040, 0.0
  %vm5057 = vcmp.ge.f32.partialorder %v5041, 0.0
  %vm5058 = vcmp.ge.f32.partialorder %v5042, 0.0
  %vm5059 = vcmp.ge.f32.partialorder %v5043, 0.0
  %vm5060 = vcmp.ge.f32.partialorder %v5044, 0.0
  %vm5061 = vcmp.ge.f32.partialorder %v5045, 0.0
  %vm5062 = vcmp.ge.f32.partialorder %v5046, 0.0
  %vm5063 = vcmp.ge.f32.partialorder %v5047, 0.0
  %vm5064 = vcmp.ge.f32.partialorder %v5048, 0.0
  %vm5065 = vcmp.ge.f32.partialorder %v5049, 0.0
  %v5066 = vmul.f32 %v5034, 0.2
  %v5067 = vmul.f32 %v5035, 0.2
  %v5068 = vmul.f32 %v5036, 0.2
  %v5069 = vmul.f32 %v5037, 0.2
  %v5070 = vmul.f32 %v5038, 0.2
  %v5071 = vmul.f32 %v5039, 0.2
  %v5072 = vmul.f32 %v5040, 0.2
  %v5073 = vmul.f32 %v5041, 0.2
  %v5074 = vmul.f32 %v5042, 0.2
  %v5075 = vmul.f32 %v5043, 0.2
  %v5076 = vmul.f32 %v5044, 0.2
  %v5077 = vmul.f32 %v5045, 0.2
  %v5078 = vmul.f32 %v5046, 0.2
  %v5079 = vmul.f32 %v5047, 0.2
  %v5080 = vmul.f32 %v5048, 0.2
  %v5081 = vmul.f32 %v5049, 0.2
  %v5082 = vsel %vm5050, %v5034, %v5066
  %v5083 = vsel %vm5051, %v5035, %v5067
  %v5084 = vsel %vm5052, %v5036, %v5068
  %v5085 = vsel %vm5053, %v5037, %v5069
  %v5086 = vsel %vm5054, %v5038, %v5070
  %v5087 = vsel %vm5055, %v5039, %v5071
  %v5088 = vsel %vm5056, %v5040, %v5072
  %v5089 = vsel %vm5057, %v5041, %v5073
  %v5090 = vsel %vm5058, %v5042, %v5074
  %v5091 = vsel %vm5059, %v5043, %v5075
  %v5092 = vsel %vm5060, %v5044, %v5076
  %v5093 = vsel %vm5061, %v5045, %v5077
  %v5094 = vsel %vm5062, %v5046, %v5078
  %v5095 = vsel %vm5063, %v5047, %v5079
  %v5096 = vsel %vm5064, %v5048, %v5080
  %v5097 = vsel %vm5065, %v5049, %v5081
  %v5098 = vld [vmem:[%s6] sm:$0x3]
  %v5100 = vperm.slane %v5098, 0
  %v5101 = vperm.slane %v5098, 1
  %v5104 = vmul.f32 %v5082, %v5100
  %v5105 = vmul.f32 %v5083, %v5101
  %v5106 = vmul.f32 %v5084, %v5100
  %v5107 = vmul.f32 %v5085, %v5101
  %v5108 = vmul.f32 %v5086, %v5100
  %v5109 = vmul.f32 %v5087, %v5101
  %v5110 = vmul.f32 %v5088, %v5100
  %v5111 = vmul.f32 %v5089, %v5101
  %v5112 = vmul.f32 %v5090, %v5100
  %v5113 = vmul.f32 %v5091, %v5101
  %v5114 = vmul.f32 %v5092, %v5100
  %v5115 = vmul.f32 %v5093, %v5101
  %v5116 = vmul.f32 %v5094, %v5100
  %v5117 = vmul.f32 %v5095, %v5101
  %v5118 = vmul.f32 %v5096, %v5100
  %v5119 = vmul.f32 %v5097, %v5101
  %v5120 = vld [vmem:[%s7] sm:$0x3]
  %v5122 = vperm.slane %v5120, 0
  %v5123 = vperm.slane %v5120, 1
  %v5126 = vadd.f32 %v5104, %v5122
  %v5127 = vadd.f32 %v5105, %v5123
  %v5128 = vadd.f32 %v5106, %v5122
  %v5129 = vadd.f32 %v5107, %v5123
  %v5130 = vadd.f32 %v5108, %v5122
  %v5131 = vadd.f32 %v5109, %v5123
  %v5132 = vadd.f32 %v5110, %v5122
  %v5133 = vadd.f32 %v5111, %v5123
  %v5134 = vadd.f32 %v5112, %v5122
  %v5135 = vadd.f32 %v5113, %v5123
  %v5136 = vadd.f32 %v5114, %v5122
  %v5137 = vadd.f32 %v5115, %v5123
  %v5138 = vadd.f32 %v5116, %v5122
  %v5139 = vadd.f32 %v5117, %v5123
  %v5140 = vadd.f32 %v5118, %v5122
  %v5141 = vadd.f32 %v5119, %v5123
  %v5142 = vpack.c.bf16 %v5128, %v5126
  %v5143 = vpack.c.bf16 %v5129, %v5127
  %v5144 = vpack.c.bf16 %v5132, %v5130
  %v5145 = vpack.c.bf16 %v5133, %v5131
  %v5146 = vpack.c.bf16 %v5136, %v5134
  %v5147 = vpack.c.bf16 %v5137, %v5135
  %v5148 = vpack.c.bf16 %v5140, %v5138
  %v5149 = vpack.c.bf16 %v5141, %v5139
  %v5150 = vld [vmem:[%s8] sm:$0xf]
  %v5151 = vld [vmem:[%s8 + $0x4] sm:$0xf]
  %v5152 = vld [vmem:[%s8 + $0x8] sm:$0xf]
  %v5153 = vld [vmem:[%s8 + $0xc] sm:$0xf]
  %v5154 = vld [vmem:[%s8 + $0x10] sm:$0xf]
  %v5155 = vld [vmem:[%s8 + $0x14] sm:$0xf]
  %v5156 = vld [vmem:[%s8 + $0x18] sm:$0xf]
  %v5157 = vld [vmem:[%s8 + $0x1c] sm:$0xf]
  %v5158 = vld [vmem:[%s8 + $0x20] sm:$0xf]
  %v5159 = vld [vmem:[%s8 + $0x24] sm:$0xf]
  %v5160 = vld [vmem:[%s8 + $0x28] sm:$0xf]
  %v5161 = vld [vmem:[%s8 + $0x2c] sm:$0xf]
  %v5162 = vld [vmem:[%s8 + $0x30] sm:$0xf]
  %v5163 = vld [vmem:[%s8 + $0x34] sm:$0xf]
  %v5164 = vld [vmem:[%s8 + $0x38] sm:$0xf]
  %v5165 = vld [vmem:[%s8 + $0x3c] sm:$0xf]
  %v5166 = vld [vmem:[%s8 + $0x40] sm:$0xf]
  %v5167 = vld [vmem:[%s8 + $0x44] sm:$0xf]
  %v5186 = vunpack.c.l.b16 %v5150
  %v5187 = vunpack.c.l.b16 %v5151
  %v5188 = vunpack.c.l.b16 %v5152
  %v5189 = vunpack.c.l.b16 %v5153
  %v5190 = vunpack.c.l.b16 %v5154
  %v5191 = vunpack.c.l.b16 %v5155
  %v5192 = vunpack.c.l.b16 %v5156
  %v5193 = vunpack.c.l.b16 %v5157
  %v5194 = vunpack.c.l.b16 %v5158
  %v5195 = vunpack.c.l.b16 %v5159
  %v5196 = vunpack.c.l.b16 %v5160
  %v5197 = vunpack.c.l.b16 %v5161
  %v5198 = vunpack.c.l.b16 %v5162
  %v5199 = vunpack.c.l.b16 %v5163
  %v5200 = vunpack.c.l.b16 %v5164
  %v5201 = vunpack.c.l.b16 %v5165
  %v5202 = vunpack.c.l.b16 %v5166
  %v5203 = vunpack.c.l.b16 %v5167
  %v5204 = vpack.c.b16 %v5187, %v5186
  %v5205 = vpack.c.b16 %v5189, %v5188
  %v5206 = vpack.c.b16 %v5191, %v5190
  %v5207 = vpack.c.b16 %v5193, %v5192
  %v5208 = vpack.c.b16 %v5195, %v5194
  %v5209 = vpack.c.b16 %v5197, %v5196
  %v5210 = vpack.c.b16 %v5199, %v5198
  %v5211 = vpack.c.b16 %v5201, %v5200
  %v5212 = vpack.c.b16 %v5203, %v5202
  %v5214 = vsel %vm137, %v5204, 0
  %v5217 = vsel %vm137, %v5205, 0
  %v5220 = vsel %vm137, %v5206, 0
  %v5223 = vsel %vm137, %v5207, 0
  %v5226 = vsel %vm137, %v5208, 0
  %v5229 = vsel %vm137, %v5209, 0
  %v5232 = vsel %vm137, %v5210, 0
  %v5235 = vsel %vm137, %v5211, 0
  %v5238 = vsel %vm137, %v5212, 0
  %5240 = vmatpush.bf16.msra.mxu0 0
  %5241 = vmatpush.bf16.msra.mxu0 0
  %5242 = vmatpush.bf16.msra.mxu0 0
  %5243 = vmatpush.bf16.msra.mxu0 0
  %5244 = vmatpush.bf16.msra.mxu0 %v5148
  %5245 = vmatpush.bf16.msra.mxu0 %v5146
  %5246 = vmatpush.bf16.msra.mxu0 %v5144
  %5247 = vmatpush.bf16.msra.mxu0 %v5142
  %5248 = vmatmul.bf16.gmra.mxu0 %v5214
  %v5249 = vpop.f32.mrf.mxu0
  %v5250 = vadd.f32 0.0, %v5249
  %v5251 = vpop.f32.mrf.mxu0
  %v5252 = vadd.f32 0.0, %v5251
  %5253 = vmatmul.bf16.gmra.mxu0 %v5217
  %v5254 = vpop.f32.mrf.mxu0
  %v5255 = vadd.f32 0.0, %v5254
  %v5256 = vpop.f32.mrf.mxu0
  %v5257 = vadd.f32 0.0, %v5256
  %5258 = vmatmul.bf16.gmra.mxu0 %v5220
  %v5259 = vpop.f32.mrf.mxu0
  %v5260 = vadd.f32 0.0, %v5259
  %v5261 = vpop.f32.mrf.mxu0
  %v5262 = vadd.f32 0.0, %v5261
  %5263 = vmatmul.bf16.gmra.mxu0 %v5223
  %v5264 = vpop.f32.mrf.mxu0
  %v5265 = vadd.f32 0.0, %v5264
  %v5266 = vpop.f32.mrf.mxu0
  %v5267 = vadd.f32 0.0, %v5266
  %5268 = vmatmul.bf16.gmra.mxu0 %v5226
  %v5269 = vpop.f32.mrf.mxu0
  %v5270 = vadd.f32 0.0, %v5269
  %v5271 = vpop.f32.mrf.mxu0
  %v5272 = vadd.f32 0.0, %v5271
  %5273 = vmatmul.bf16.gmra.mxu0 %v5229
  %v5274 = vpop.f32.mrf.mxu0
  %v5275 = vadd.f32 0.0, %v5274
  %v5276 = vpop.f32.mrf.mxu0
  %v5277 = vadd.f32 0.0, %v5276
  %5278 = vmatmul.bf16.gmra.mxu0 %v5232
  %v5279 = vpop.f32.mrf.mxu0
  %v5280 = vadd.f32 0.0, %v5279
  %v5281 = vpop.f32.mrf.mxu0
  %v5282 = vadd.f32 0.0, %v5281
  %5283 = vmatmul.bf16.gmra.mxu0 %v5235
  %v5284 = vpop.f32.mrf.mxu0
  %v5285 = vadd.f32 0.0, %v5284
  %v5286 = vpop.f32.mrf.mxu0
  %v5287 = vadd.f32 0.0, %v5286
  %5288 = vmatmul.bf16.gmra.mxu0 %v5238
  %v5289 = vpop.f32.mrf.mxu0
  %v5290 = vadd.f32 0.0, %v5289
  %v5291 = vpop.f32.mrf.mxu0
  %v5292 = vadd.f32 0.0, %v5291
  %5293 = vdwg.mxu0
  %5294 = vmatpush.bf16.msra.mxu0 0
  %5295 = vmatpush.bf16.msra.mxu0 0
  %5296 = vmatpush.bf16.msra.mxu0 0
  %5297 = vmatpush.bf16.msra.mxu0 0
  %5298 = vmatpush.bf16.msra.mxu0 %v5149
  %5299 = vmatpush.bf16.msra.mxu0 %v5147
  %5300 = vmatpush.bf16.msra.mxu0 %v5145
  %5301 = vmatpush.bf16.msra.mxu0 %v5143
  %5302 = vmatmul.bf16.gmra.mxu0 %v5214
  %v5303 = vpop.f32.mrf.mxu0
  %v5304 = vadd.f32 0.0, %v5303
  %v5305 = vpop.f32.mrf.mxu0
  %v5306 = vadd.f32 0.0, %v5305
  %5307 = vmatmul.bf16.gmra.mxu0 %v5217
  %v5308 = vpop.f32.mrf.mxu0
  %v5309 = vadd.f32 0.0, %v5308
  %v5310 = vpop.f32.mrf.mxu0
  %v5311 = vadd.f32 0.0, %v5310
  %5312 = vmatmul.bf16.gmra.mxu0 %v5220
  %v5313 = vpop.f32.mrf.mxu0
  %v5314 = vadd.f32 0.0, %v5313
  %v5315 = vpop.f32.mrf.mxu0
  %v5316 = vadd.f32 0.0, %v5315
  %5317 = vmatmul.bf16.gmra.mxu0 %v5223
  %v5318 = vpop.f32.mrf.mxu0
  %v5319 = vadd.f32 0.0, %v5318
  %v5320 = vpop.f32.mrf.mxu0
  %v5321 = vadd.f32 0.0, %v5320
  %5322 = vmatmul.bf16.gmra.mxu0 %v5226
  %v5323 = vpop.f32.mrf.mxu0
  %v5324 = vadd.f32 0.0, %v5323
  %v5325 = vpop.f32.mrf.mxu0
  %v5326 = vadd.f32 0.0, %v5325
  %5327 = vmatmul.bf16.gmra.mxu0 %v5229
  %v5328 = vpop.f32.mrf.mxu0
  %v5329 = vadd.f32 0.0, %v5328
  %v5330 = vpop.f32.mrf.mxu0
  %v5331 = vadd.f32 0.0, %v5330
  %5332 = vmatmul.bf16.gmra.mxu0 %v5232
  %v5333 = vpop.f32.mrf.mxu0
  %v5334 = vadd.f32 0.0, %v5333
  %v5335 = vpop.f32.mrf.mxu0
  %v5336 = vadd.f32 0.0, %v5335
  %5337 = vmatmul.bf16.gmra.mxu0 %v5235
  %v5338 = vpop.f32.mrf.mxu0
  %v5339 = vadd.f32 0.0, %v5338
  %v5340 = vpop.f32.mrf.mxu0
  %v5341 = vadd.f32 0.0, %v5340
  %5342 = vmatmul.bf16.gmra.mxu0 %v5238
  %v5343 = vpop.f32.mrf.mxu0
  %v5344 = vadd.f32 0.0, %v5343
  %v5345 = vpop.f32.mrf.mxu0
  %v5346 = vadd.f32 0.0, %v5345
  %5347 = vdwg.mxu0
  %v5348 = vpack.c.bf16 %v5304, %v5250
  %v5349 = vpack.c.bf16 %v5306, %v5252
  %v5350 = vpack.c.bf16 %v5309, %v5255
  %v5351 = vpack.c.bf16 %v5311, %v5257
  %v5352 = vpack.c.bf16 %v5314, %v5260
  %v5353 = vpack.c.bf16 %v5316, %v5262
  %v5354 = vpack.c.bf16 %v5319, %v5265
  %v5355 = vpack.c.bf16 %v5321, %v5267
  %v5356 = vpack.c.bf16 %v5324, %v5270
  %v5357 = vpack.c.bf16 %v5326, %v5272
  %v5358 = vpack.c.bf16 %v5329, %v5275
  %v5359 = vpack.c.bf16 %v5331, %v5277
  %v5360 = vpack.c.bf16 %v5334, %v5280
  %v5361 = vpack.c.bf16 %v5336, %v5282
  %v5362 = vpack.c.bf16 %v5339, %v5285
  %v5363 = vpack.c.bf16 %v5341, %v5287
  %v5364 = vpack.c.bf16 %v5344, %v5290
  %v5365 = vpack.c.bf16 %v5346, %v5292
  %v5366 = vld [vmem:[%s9] sm:$0xff]
  %v5367 = vld [vmem:[%s9 + $0x8] sm:$0xff]
  %v5368 = vld [vmem:[%s9 + $0x10] sm:$0xff]
  %v5369 = vld [vmem:[%s9 + $0x18] sm:$0xff]
  %v5370 = vld [vmem:[%s9 + $0x20] sm:$0xff]
  %v5371 = vld [vmem:[%s9 + $0x28] sm:$0xff]
  %v5372 = vld [vmem:[%s9 + $0x30] sm:$0xff]
  %v5373 = vld [vmem:[%s9 + $0x38] sm:$0xff]
  %v5374 = vld [vmem:[%s9 + $0x40] sm:$0xff]
  %v5375 = vld [vmem:[%s9 + $0x48] sm:$0xff]
  %v5376 = vld [vmem:[%s9 + $0x50] sm:$0xff]
  %v5377 = vld [vmem:[%s9 + $0x58] sm:$0xff]
  %v5378 = vld [vmem:[%s9 + $0x60] sm:$0xff]
  %v5379 = vld [vmem:[%s9 + $0x68] sm:$0xff]
  %v5380 = vld [vmem:[%s9 + $0x70] sm:$0xff]
  %v5381 = vld [vmem:[%s9 + $0x78] sm:$0xff]
  %v5382 = vld [vmem:[%s9 + $0x80] sm:$0xff]
  %v5383 = vld [vmem:[%s9 + $0x88] sm:$0xff]
  %v5384 = vld [vmem:[%s9 + $0x90] sm:$0xff]
  %v5385 = vld [vmem:[%s9 + $0x98] sm:$0xff]
  %v5386 = vld [vmem:[%s9 + $0xa0] sm:$0xff]
  %v5387 = vld [vmem:[%s9 + $0xa8] sm:$0xff]
  %v5388 = vld [vmem:[%s9 + $0xb0] sm:$0xff]
  %v5389 = vld [vmem:[%s9 + $0xb8] sm:$0xff]
  %v5390 = vld [vmem:[%s9 + $0xc0] sm:$0xff]
  %v5391 = vld [vmem:[%s9 + $0xc8] sm:$0xff]
  %v5392 = vld [vmem:[%s9 + $0xd0] sm:$0xff]
  %v5393 = vld [vmem:[%s9 + $0xd8] sm:$0xff]
  %v5394 = vld [vmem:[%s9 + $0xe0] sm:$0xff]
  %v5395 = vld [vmem:[%s9 + $0xe8] sm:$0xff]
  %v5396 = vld [vmem:[%s9 + $0xf0] sm:$0xff]
  %v5397 = vld [vmem:[%s9 + $0xf8] sm:$0xff]
  %v5398 = vld [vmem:[%s9 + $0x100] sm:$0xff]
  %v5399 = vld [vmem:[%s9 + $0x108] sm:$0xff]
  %v5400 = vld [vmem:[%s9 + $0x110] sm:$0xff]
  %v5401 = vld [vmem:[%s9 + $0x118] sm:$0xff]
  %v5402 = vld [vmem:[%s9 + $0x120] sm:$0xff]
  %v5403 = vld [vmem:[%s9 + $0x128] sm:$0xff]
  %v5404 = vld [vmem:[%s9 + $0x130] sm:$0xff]
  %v5405 = vld [vmem:[%s9 + $0x138] sm:$0xff]
  %v5406 = vld [vmem:[%s9 + $0x140] sm:$0xff]
  %v5407 = vld [vmem:[%s9 + $0x148] sm:$0xff]
  %v5408 = vld [vmem:[%s9 + $0x150] sm:$0xff]
  %v5409 = vld [vmem:[%s9 + $0x158] sm:$0xff]
  %v5410 = vld [vmem:[%s9 + $0x160] sm:$0xff]
  %v5411 = vld [vmem:[%s9 + $0x168] sm:$0xff]
  %v5412 = vld [vmem:[%s9 + $0x170] sm:$0xff]
  %v5413 = vld [vmem:[%s9 + $0x178] sm:$0xff]
  %v5414 = vld [vmem:[%s9 + $0x180] sm:$0xff]
  %v5415 = vld [vmem:[%s9 + $0x188] sm:$0xff]
  %v5416 = vld [vmem:[%s9 + $0x190] sm:$0xff]
  %v5417 = vld [vmem:[%s9 + $0x198] sm:$0xff]
  %v5418 = vld [vmem:[%s9 + $0x1a0] sm:$0xff]
  %v5419 = vld [vmem:[%s9 + $0x1a8] sm:$0xff]
  %v5420 = vld [vmem:[%s9 + $0x1b0] sm:$0xff]
  %v5421 = vld [vmem:[%s9 + $0x1b8] sm:$0xff]
  %v5422 = vld [vmem:[%s9 + $0x1c0] sm:$0xff]
  %v5423 = vld [vmem:[%s9 + $0x1c8] sm:$0xff]
  %v5424 = vld [vmem:[%s9 + $0x1d0] sm:$0xff]
  %v5425 = vld [vmem:[%s9 + $0x1d8] sm:$0xff]
  %v5426 = vld [vmem:[%s9 + $0x1e0] sm:$0xff]
  %v5427 = vld [vmem:[%s9 + $0x1e8] sm:$0xff]
  %v5428 = vld [vmem:[%s9 + $0x1f0] sm:$0xff]
  %v5429 = vld [vmem:[%s9 + $0x1f8] sm:$0xff]
  %s5430 = scalar_lea.vmem %s9, 512
  %v5431 = vld [vmem:[%s5430] sm:$0xff]
  %v5432 = vld [vmem:[%s5430 + $0x8] sm:$0xff]
  %v5433 = vld [vmem:[%s5430 + $0x10] sm:$0xff]
  %v5434 = vld [vmem:[%s5430 + $0x18] sm:$0xff]
  %v5435 = vld [vmem:[%s5430 + $0x20] sm:$0xff]
  %v5436 = vld [vmem:[%s5430 + $0x28] sm:$0xff]
  %v5437 = vld [vmem:[%s5430 + $0x30] sm:$0xff]
  %v5438 = vld [vmem:[%s5430 + $0x38] sm:$0xff]
  %v5439 = vld [vmem:[%s5430 + $0x40] sm:$0xff]
  %v5440 = vld [vmem:[%s5430 + $0x48] sm:$0xff]
  %v5441 = vld [vmem:[%s5430 + $0x50] sm:$0xff]
  %v5442 = vld [vmem:[%s5430 + $0x58] sm:$0xff]
  %v5443 = vld [vmem:[%s5430 + $0x60] sm:$0xff]
  %v5444 = vld [vmem:[%s5430 + $0x68] sm:$0xff]
  %v5445 = vld [vmem:[%s5430 + $0x70] sm:$0xff]
  %v5446 = vld [vmem:[%s5430 + $0x78] sm:$0xff]
  %v5447 = vld [vmem:[%s5430 + $0x80] sm:$0xff]
  %v5448 = vld [vmem:[%s5430 + $0x88] sm:$0xff]
  %v5449 = vld [vmem:[%s5430 + $0x90] sm:$0xff]
  %v5450 = vld [vmem:[%s5430 + $0x98] sm:$0xff]
  %v5451 = vld [vmem:[%s5430 + $0xa0] sm:$0xff]
  %v5452 = vld [vmem:[%s5430 + $0xa8] sm:$0xff]
  %v5453 = vld [vmem:[%s5430 + $0xb0] sm:$0xff]
  %v5454 = vld [vmem:[%s5430 + $0xb8] sm:$0xff]
  %v5455 = vld [vmem:[%s5430 + $0xc0] sm:$0xff]
  %v5456 = vld [vmem:[%s5430 + $0xc8] sm:$0xff]
  %v5457 = vld [vmem:[%s5430 + $0xd0] sm:$0xff]
  %v5458 = vld [vmem:[%s5430 + $0xd8] sm:$0xff]
  %v5459 = vld [vmem:[%s5430 + $0xe0] sm:$0xff]
  %v5460 = vld [vmem:[%s5430 + $0xe8] sm:$0xff]
  %v5461 = vld [vmem:[%s5430 + $0xf0] sm:$0xff]
  %v5462 = vld [vmem:[%s5430 + $0xf8] sm:$0xff]
  %v5463 = vld [vmem:[%s5430 + $0x100] sm:$0xff]
  %v5464 = vld [vmem:[%s5430 + $0x108] sm:$0xff]
  %v5465 = vld [vmem:[%s5430 + $0x110] sm:$0xff]
  %v5466 = vld [vmem:[%s5430 + $0x118] sm:$0xff]
  %v5467 = vld [vmem:[%s5430 + $0x120] sm:$0xff]
  %v5468 = vld [vmem:[%s5430 + $0x128] sm:$0xff]
  %v5469 = vld [vmem:[%s5430 + $0x130] sm:$0xff]
  %v5470 = vld [vmem:[%s5430 + $0x138] sm:$0xff]
  %v5471 = vld [vmem:[%s5430 + $0x140] sm:$0xff]
  %v5472 = vld [vmem:[%s5430 + $0x148] sm:$0xff]
  %v5473 = vld [vmem:[%s5430 + $0x150] sm:$0xff]
  %v5474 = vld [vmem:[%s5430 + $0x158] sm:$0xff]
  %v5475 = vld [vmem:[%s5430 + $0x160] sm:$0xff]
  %v5476 = vld [vmem:[%s5430 + $0x168] sm:$0xff]
  %v5477 = vld [vmem:[%s5430 + $0x170] sm:$0xff]
  %v5478 = vld [vmem:[%s5430 + $0x178] sm:$0xff]
  %v5479 = vld [vmem:[%s5430 + $0x180] sm:$0xff]
  %v5480 = vld [vmem:[%s5430 + $0x188] sm:$0xff]
  %v5481 = vld [vmem:[%s5430 + $0x190] sm:$0xff]
  %v5482 = vld [vmem:[%s5430 + $0x198] sm:$0xff]
  %v5483 = vld [vmem:[%s5430 + $0x1a0] sm:$0xff]
  %v5484 = vld [vmem:[%s5430 + $0x1a8] sm:$0xff]
  %v5485 = vld [vmem:[%s5430 + $0x1b0] sm:$0xff]
  %v5486 = vld [vmem:[%s5430 + $0x1b8] sm:$0xff]
  %v5487 = vld [vmem:[%s5430 + $0x1c0] sm:$0xff]
  %v5488 = vld [vmem:[%s5430 + $0x1c8] sm:$0xff]
  %v5489 = vld [vmem:[%s5430 + $0x1d0] sm:$0xff]
  %v5490 = vld [vmem:[%s5430 + $0x1d8] sm:$0xff]
  %v5491 = vld [vmem:[%s5430 + $0x1e0] sm:$0xff]
  %v5492 = vld [vmem:[%s5430 + $0x1e8] sm:$0xff]
  %v5493 = vld [vmem:[%s5430 + $0x1f0] sm:$0xff]
  %v5494 = vld [vmem:[%s5430 + $0x1f8] sm:$0xff]
  %v5497 = vunpack.c.l.b16 %v5350
  %v5498 = vunpack.c.h.b16 %v5350
  %v5499 = vunpack.c.l.b16 %v5351
  %v5500 = vunpack.c.h.b16 %v5351
  %v5501 = vpack.c.b16 %v5499, %v5497
  %v5502 = vpack.c.b16 %v5500, %v5498
  %v5569 = vunpack.c.l.b16 %v5431
  %v5570 = vunpack.c.h.b16 %v5431
  %v5571 = vunpack.c.l.b16 %v5432
  %v5572 = vunpack.c.h.b16 %v5432
  %v5573 = vunpack.c.l.b16 %v5433
  %v5574 = vunpack.c.h.b16 %v5433
  %v5575 = vunpack.c.l.b16 %v5434
  %v5576 = vunpack.c.h.b16 %v5434
  %v5577 = vunpack.c.l.b16 %v5435
  %v5578 = vunpack.c.h.b16 %v5435
  %v5579 = vunpack.c.l.b16 %v5436
  %v5580 = vunpack.c.h.b16 %v5436
  %v5581 = vunpack.c.l.b16 %v5437
  %v5582 = vunpack.c.h.b16 %v5437
  %v5583 = vunpack.c.l.b16 %v5438
  %v5584 = vunpack.c.h.b16 %v5438
  %v5585 = vunpack.c.l.b16 %v5439
  %v5586 = vunpack.c.h.b16 %v5439
  %v5587 = vunpack.c.l.b16 %v5440
  %v5588 = vunpack.c.h.b16 %v5440
  %v5589 = vunpack.c.l.b16 %v5441
  %v5590 = vunpack.c.h.b16 %v5441
  %v5591 = vunpack.c.l.b16 %v5442
  %v5592 = vunpack.c.h.b16 %v5442
  %v5593 = vunpack.c.l.b16 %v5443
  %v5594 = vunpack.c.h.b16 %v5443
  %v5595 = vunpack.c.l.b16 %v5444
  %v5596 = vunpack.c.h.b16 %v5444
  %v5597 = vunpack.c.l.b16 %v5445
  %v5598 = vunpack.c.h.b16 %v5445
  %v5599 = vunpack.c.l.b16 %v5446
  %v5600 = vunpack.c.h.b16 %v5446
  %v5601 = vunpack.c.l.b16 %v5447
  %v5602 = vunpack.c.h.b16 %v5447
  %v5603 = vunpack.c.l.b16 %v5448
  %v5604 = vunpack.c.h.b16 %v5448
  %v5605 = vunpack.c.l.b16 %v5449
  %v5606 = vunpack.c.h.b16 %v5449
  %v5607 = vunpack.c.l.b16 %v5450
  %v5608 = vunpack.c.h.b16 %v5450
  %v5609 = vunpack.c.l.b16 %v5451
  %v5610 = vunpack.c.h.b16 %v5451
  %v5611 = vunpack.c.l.b16 %v5452
  %v5612 = vunpack.c.h.b16 %v5452
  %v5613 = vunpack.c.l.b16 %v5453
  %v5614 = vunpack.c.h.b16 %v5453
  %v5615 = vunpack.c.l.b16 %v5454
  %v5616 = vunpack.c.h.b16 %v5454
  %v5617 = vunpack.c.l.b16 %v5455
  %v5618 = vunpack.c.h.b16 %v5455
  %v5619 = vunpack.c.l.b16 %v5456
  %v5620 = vunpack.c.h.b16 %v5456
  %v5621 = vunpack.c.l.b16 %v5457
  %v5622 = vunpack.c.h.b16 %v5457
  %v5623 = vunpack.c.l.b16 %v5458
  %v5624 = vunpack.c.h.b16 %v5458
  %v5625 = vunpack.c.l.b16 %v5459
  %v5626 = vunpack.c.h.b16 %v5459
  %v5627 = vunpack.c.l.b16 %v5460
  %v5628 = vunpack.c.h.b16 %v5460
  %v5629 = vunpack.c.l.b16 %v5461
  %v5630 = vunpack.c.h.b16 %v5461
  %v5631 = vunpack.c.l.b16 %v5462
  %v5632 = vunpack.c.h.b16 %v5462
  %v5633 = vunpack.c.l.b16 %v5463
  %v5634 = vunpack.c.h.b16 %v5463
  %v5635 = vunpack.c.l.b16 %v5464
  %v5636 = vunpack.c.h.b16 %v5464
  %v5637 = vunpack.c.l.b16 %v5465
  %v5638 = vunpack.c.h.b16 %v5465
  %v5639 = vunpack.c.l.b16 %v5466
  %v5640 = vunpack.c.h.b16 %v5466
  %v5641 = vunpack.c.l.b16 %v5467
  %v5642 = vunpack.c.h.b16 %v5467
  %v5643 = vunpack.c.l.b16 %v5468
  %v5644 = vunpack.c.h.b16 %v5468
  %v5645 = vunpack.c.l.b16 %v5469
  %v5646 = vunpack.c.h.b16 %v5469
  %v5647 = vunpack.c.l.b16 %v5470
  %v5648 = vunpack.c.h.b16 %v5470
  %v5649 = vunpack.c.l.b16 %v5471
  %v5650 = vunpack.c.h.b16 %v5471
  %v5651 = vunpack.c.l.b16 %v5472
  %v5652 = vunpack.c.h.b16 %v5472
  %v5653 = vunpack.c.l.b16 %v5473
  %v5654 = vunpack.c.h.b16 %v5473
  %v5655 = vunpack.c.l.b16 %v5474
  %v5656 = vunpack.c.h.b16 %v5474
  %v5657 = vunpack.c.l.b16 %v5475
  %v5658 = vunpack.c.h.b16 %v5475
  %v5659 = vunpack.c.l.b16 %v5476
  %v5660 = vunpack.c.h.b16 %v5476
  %v5661 = vunpack.c.l.b16 %v5477
  %v5662 = vunpack.c.h.b16 %v5477
  %v5663 = vunpack.c.l.b16 %v5478
  %v5664 = vunpack.c.h.b16 %v5478
  %v5665 = vunpack.c.l.b16 %v5479
  %v5666 = vunpack.c.h.b16 %v5479
  %v5667 = vunpack.c.l.b16 %v5480
  %v5668 = vunpack.c.h.b16 %v5480
  %v5669 = vunpack.c.l.b16 %v5481
  %v5670 = vunpack.c.h.b16 %v5481
  %v5671 = vunpack.c.l.b16 %v5482
  %v5672 = vunpack.c.h.b16 %v5482
  %v5673 = vunpack.c.l.b16 %v5483
  %v5674 = vunpack.c.h.b16 %v5483
  %v5675 = vunpack.c.l.b16 %v5484
  %v5676 = vunpack.c.h.b16 %v5484
  %v5677 = vunpack.c.l.b16 %v5485
  %v5678 = vunpack.c.h.b16 %v5485
  %v5679 = vunpack.c.l.b16 %v5486
  %v5680 = vunpack.c.h.b16 %v5486
  %v5681 = vunpack.c.l.b16 %v5487
  %v5682 = vunpack.c.h.b16 %v5487
  %v5683 = vunpack.c.l.b16 %v5488
  %v5684 = vunpack.c.h.b16 %v5488
  %v5685 = vunpack.c.l.b16 %v5489
  %v5686 = vunpack.c.h.b16 %v5489
  %v5687 = vunpack.c.l.b16 %v5490
  %v5688 = vunpack.c.h.b16 %v5490
  %v5689 = vunpack.c.l.b16 %v5491
  %v5690 = vunpack.c.h.b16 %v5491
  %v5691 = vunpack.c.l.b16 %v5492
  %v5692 = vunpack.c.h.b16 %v5492
  %v5693 = vunpack.c.l.b16 %v5493
  %v5694 = vunpack.c.h.b16 %v5493
  %v5695 = vunpack.c.l.b16 %v5494
  %v5696 = vunpack.c.h.b16 %v5494
  %v5697 = vpack.c.b16 %v5573, %v5569
  %v5698 = vpack.c.b16 %v5574, %v5570
  %v5699 = vpack.c.b16 %v5575, %v5571
  %v5700 = vpack.c.b16 %v5576, %v5572
  %v5701 = vpack.c.b16 %v5581, %v5577
  %v5702 = vpack.c.b16 %v5582, %v5578
  %v5703 = vpack.c.b16 %v5583, %v5579
  %v5704 = vpack.c.b16 %v5584, %v5580
  %v5705 = vpack.c.b16 %v5589, %v5585
  %v5706 = vpack.c.b16 %v5590, %v5586
  %v5707 = vpack.c.b16 %v5591, %v5587
  %v5708 = vpack.c.b16 %v5592, %v5588
  %v5709 = vpack.c.b16 %v5597, %v5593
  %v5710 = vpack.c.b16 %v5598, %v5594
  %v5711 = vpack.c.b16 %v5599, %v5595
  %v5712 = vpack.c.b16 %v5600, %v5596
  %v5713 = vpack.c.b16 %v5605, %v5601
  %v5714 = vpack.c.b16 %v5606, %v5602
  %v5715 = vpack.c.b16 %v5607, %v5603
  %v5716 = vpack.c.b16 %v5608, %v5604
  %v5717 = vpack.c.b16 %v5613, %v5609
  %v5718 = vpack.c.b16 %v5614, %v5610
  %v5719 = vpack.c.b16 %v5615, %v5611
  %v5720 = vpack.c.b16 %v5616, %v5612
  %v5721 = vpack.c.b16 %v5621, %v5617
  %v5722 = vpack.c.b16 %v5622, %v5618
  %v5723 = vpack.c.b16 %v5623, %v5619
  %v5724 = vpack.c.b16 %v5624, %v5620
  %v5725 = vpack.c.b16 %v5629, %v5625
  %v5726 = vpack.c.b16 %v5630, %v5626
  %v5727 = vpack.c.b16 %v5631, %v5627
  %v5728 = vpack.c.b16 %v5632, %v5628
  %v5729 = vpack.c.b16 %v5637, %v5633
  %v5730 = vpack.c.b16 %v5638, %v5634
  %v5731 = vpack.c.b16 %v5639, %v5635
  %v5732 = vpack.c.b16 %v5640, %v5636
  %v5733 = vpack.c.b16 %v5645, %v5641
  %v5734 = vpack.c.b16 %v5646, %v5642
  %v5735 = vpack.c.b16 %v5647, %v5643
  %v5736 = vpack.c.b16 %v5648, %v5644
  %v5737 = vpack.c.b16 %v5653, %v5649
  %v5738 = vpack.c.b16 %v5654, %v5650
  %v5739 = vpack.c.b16 %v5655, %v5651
  %v5740 = vpack.c.b16 %v5656, %v5652
  %v5741 = vpack.c.b16 %v5661, %v5657
  %v5742 = vpack.c.b16 %v5662, %v5658
  %v5743 = vpack.c.b16 %v5663, %v5659
  %v5744 = vpack.c.b16 %v5664, %v5660
  %v5745 = vpack.c.b16 %v5669, %v5665
  %v5746 = vpack.c.b16 %v5670, %v5666
  %v5747 = vpack.c.b16 %v5671, %v5667
  %v5748 = vpack.c.b16 %v5672, %v5668
  %v5749 = vpack.c.b16 %v5677, %v5673
  %v5750 = vpack.c.b16 %v5678, %v5674
  %v5751 = vpack.c.b16 %v5679, %v5675
  %v5752 = vpack.c.b16 %v5680, %v5676
  %v5753 = vpack.c.b16 %v5685, %v5681
  %v5754 = vpack.c.b16 %v5686, %v5682
  %v5755 = vpack.c.b16 %v5687, %v5683
  %v5756 = vpack.c.b16 %v5688, %v5684
  %v5757 = vpack.c.b16 %v5693, %v5689
  %v5758 = vpack.c.b16 %v5694, %v5690
  %v5759 = vpack.c.b16 %v5695, %v5691
  %v5760 = vpack.c.b16 %v5696, %v5692
  %5825 = vmatpush.bf16.msra.mxu0 %v5725
  %5826 = vmatpush.bf16.msra.mxu0 %v5721
  %5827 = vmatpush.bf16.msra.mxu0 %v5717
  %5828 = vmatpush.bf16.msra.mxu0 %v5713
  %5829 = vmatpush.bf16.msra.mxu0 %v5709
  %5830 = vmatpush.bf16.msra.mxu0 %v5705
  %5831 = vmatpush.bf16.msra.mxu0 %v5701
  %5832 = vmatpush.bf16.msra.mxu0 %v5697
  %5833 = vmatmul.bf16.gmra.mxu0 %v5501
  %v5834 = vpop.f32.mrf.mxu0
  %v5835 = vadd.f32 0.0, %v5834
  %v5836 = vpop.f32.mrf.mxu0
  %v5837 = vadd.f32 0.0, %v5836
  %5838 = vdwg.mxu0
  %5839 = vmatpush.bf16.msra.mxu0 %v5757
  %5840 = vmatpush.bf16.msra.mxu0 %v5753
  %5841 = vmatpush.bf16.msra.mxu0 %v5749
  %5842 = vmatpush.bf16.msra.mxu0 %v5745
  %5843 = vmatpush.bf16.msra.mxu0 %v5741
  %5844 = vmatpush.bf16.msra.mxu0 %v5737
  %5845 = vmatpush.bf16.msra.mxu0 %v5733
  %5846 = vmatpush.bf16.msra.mxu0 %v5729
  %5847 = vmatmul.bf16.gmra.mxu0 %v5502
  %v5848 = vpop.f32.mrf.mxu0
  %v5849 = vadd.f32 %v5835, %v5848
  %v5850 = vpop.f32.mrf.mxu0
  %v5851 = vadd.f32 %v5837, %v5850
  %5852 = vdwg.mxu0
  %5853 = vmatpush.bf16.msra.mxu0 %v5726
  %5854 = vmatpush.bf16.msra.mxu0 %v5722
  %5855 = vmatpush.bf16.msra.mxu0 %v5718
  %5856 = vmatpush.bf16.msra.mxu0 %v5714
  %5857 = vmatpush.bf16.msra.mxu0 %v5710
  %5858 = vmatpush.bf16.msra.mxu0 %v5706
  %5859 = vmatpush.bf16.msra.mxu0 %v5702
  %5860 = vmatpush.bf16.msra.mxu0 %v5698
  %5861 = vmatmul.bf16.gmra.mxu0 %v5501
  %v5862 = vpop.f32.mrf.mxu0
  %v5863 = vadd.f32 0.0, %v5862
  %v5864 = vpop.f32.mrf.mxu0
  %v5865 = vadd.f32 0.0, %v5864
  %5866 = vdwg.mxu0
  %5867 = vmatpush.bf16.msra.mxu0 %v5758
  %5868 = vmatpush.bf16.msra.mxu0 %v5754
  %5869 = vmatpush.bf16.msra.mxu0 %v5750
  %5870 = vmatpush.bf16.msra.mxu0 %v5746
  %5871 = vmatpush.bf16.msra.mxu0 %v5742
  %5872 = vmatpush.bf16.msra.mxu0 %v5738
  %5873 = vmatpush.bf16.msra.mxu0 %v5734
  %5874 = vmatpush.bf16.msra.mxu0 %v5730
  %5875 = vmatmul.bf16.gmra.mxu0 %v5502
  %v5876 = vpop.f32.mrf.mxu0
  %v5877 = vadd.f32 %v5863, %v5876
  %v5878 = vpop.f32.mrf.mxu0
  %v5879 = vadd.f32 %v5865, %v5878
  %5880 = vdwg.mxu0
  %5881 = vmatpush.bf16.msra.mxu0 %v5727
  %5882 = vmatpush.bf16.msra.mxu0 %v5723
  %5883 = vmatpush.bf16.msra.mxu0 %v5719
  %5884 = vmatpush.bf16.msra.mxu0 %v5715
  %5885 = vmatpush.bf16.msra.mxu0 %v5711
  %5886 = vmatpush.bf16.msra.mxu0 %v5707
  %5887 = vmatpush.bf16.msra.mxu0 %v5703
  %5888 = vmatpush.bf16.msra.mxu0 %v5699
  %5889 = vmatmul.bf16.gmra.mxu0 %v5501
  %v5890 = vpop.f32.mrf.mxu0
  %v5891 = vadd.f32 0.0, %v5890
  %v5892 = vpop.f32.mrf.mxu0
  %v5893 = vadd.f32 0.0, %v5892
  %5894 = vdwg.mxu0
  %5895 = vmatpush.bf16.msra.mxu0 %v5759
  %5896 = vmatpush.bf16.msra.mxu0 %v5755
  %5897 = vmatpush.bf16.msra.mxu0 %v5751
  %5898 = vmatpush.bf16.msra.mxu0 %v5747
  %5899 = vmatpush.bf16.msra.mxu0 %v5743
  %5900 = vmatpush.bf16.msra.mxu0 %v5739
  %5901 = vmatpush.bf16.msra.mxu0 %v5735
  %5902 = vmatpush.bf16.msra.mxu0 %v5731
  %5903 = vmatmul.bf16.gmra.mxu0 %v5502
  %v5904 = vpop.f32.mrf.mxu0
  %v5905 = vadd.f32 %v5891, %v5904
  %v5906 = vpop.f32.mrf.mxu0
  %v5907 = vadd.f32 %v5893, %v5906
  %5908 = vdwg.mxu0
  %5909 = vmatpush.bf16.msra.mxu0 %v5728
  %5910 = vmatpush.bf16.msra.mxu0 %v5724
  %5911 = vmatpush.bf16.msra.mxu0 %v5720
  %5912 = vmatpush.bf16.msra.mxu0 %v5716
  %5913 = vmatpush.bf16.msra.mxu0 %v5712
  %5914 = vmatpush.bf16.msra.mxu0 %v5708
  %5915 = vmatpush.bf16.msra.mxu0 %v5704
  %5916 = vmatpush.bf16.msra.mxu0 %v5700
  %5917 = vmatmul.bf16.gmra.mxu0 %v5501
  %v5918 = vpop.f32.mrf.mxu0
  %v5919 = vadd.f32 0.0, %v5918
  %v5920 = vpop.f32.mrf.mxu0
  %v5921 = vadd.f32 0.0, %v5920
  %5922 = vdwg.mxu0
  %5923 = vmatpush.bf16.msra.mxu0 %v5760
  %5924 = vmatpush.bf16.msra.mxu0 %v5756
  %5925 = vmatpush.bf16.msra.mxu0 %v5752
  %5926 = vmatpush.bf16.msra.mxu0 %v5748
  %5927 = vmatpush.bf16.msra.mxu0 %v5744
  %5928 = vmatpush.bf16.msra.mxu0 %v5740
  %5929 = vmatpush.bf16.msra.mxu0 %v5736
  %5930 = vmatpush.bf16.msra.mxu0 %v5732
  %5931 = vmatmul.bf16.gmra.mxu0 %v5502
  %v5932 = vpop.f32.mrf.mxu0
  %v5933 = vadd.f32 %v5919, %v5932
  %v5934 = vpop.f32.mrf.mxu0
  %v5935 = vadd.f32 %v5921, %v5934
  %5936 = vdwg.mxu0
  %v5939 = vunpack.c.l.b16 %v5348
  %v5940 = vunpack.c.h.b16 %v5348
  %v5941 = vunpack.c.l.b16 %v5349
  %v5942 = vunpack.c.h.b16 %v5349
  %v5943 = vpack.c.b16 %v5941, %v5939
  %v5944 = vpack.c.b16 %v5942, %v5940
  %v6011 = vunpack.c.l.b16 %v5366
  %v6012 = vunpack.c.h.b16 %v5366
  %v6013 = vunpack.c.l.b16 %v5367
  %v6014 = vunpack.c.h.b16 %v5367
  %v6015 = vunpack.c.l.b16 %v5368
  %v6016 = vunpack.c.h.b16 %v5368
  %v6017 = vunpack.c.l.b16 %v5369
  %v6018 = vunpack.c.h.b16 %v5369
  %v6019 = vunpack.c.l.b16 %v5370
  %v6020 = vunpack.c.h.b16 %v5370
  %v6021 = vunpack.c.l.b16 %v5371
  %v6022 = vunpack.c.h.b16 %v5371
  %v6023 = vunpack.c.l.b16 %v5372
  %v6024 = vunpack.c.h.b16 %v5372
  %v6025 = vunpack.c.l.b16 %v5373
  %v6026 = vunpack.c.h.b16 %v5373
  %v6027 = vunpack.c.l.b16 %v5374
  %v6028 = vunpack.c.h.b16 %v5374
  %v6029 = vunpack.c.l.b16 %v5375
  %v6030 = vunpack.c.h.b16 %v5375
  %v6031 = vunpack.c.l.b16 %v5376
  %v6032 = vunpack.c.h.b16 %v5376
  %v6033 = vunpack.c.l.b16 %v5377
  %v6034 = vunpack.c.h.b16 %v5377
  %v6035 = vunpack.c.l.b16 %v5378
  %v6036 = vunpack.c.h.b16 %v5378
  %v6037 = vunpack.c.l.b16 %v5379
  %v6038 = vunpack.c.h.b16 %v5379
  %v6039 = vunpack.c.l.b16 %v5380
  %v6040 = vunpack.c.h.b16 %v5380
  %v6041 = vunpack.c.l.b16 %v5381
  %v6042 = vunpack.c.h.b16 %v5381
  %v6043 = vunpack.c.l.b16 %v5382
  %v6044 = vunpack.c.h.b16 %v5382
  %v6045 = vunpack.c.l.b16 %v5383
  %v6046 = vunpack.c.h.b16 %v5383
  %v6047 = vunpack.c.l.b16 %v5384
  %v6048 = vunpack.c.h.b16 %v5384
  %v6049 = vunpack.c.l.b16 %v5385
  %v6050 = vunpack.c.h.b16 %v5385
  %v6051 = vunpack.c.l.b16 %v5386
  %v6052 = vunpack.c.h.b16 %v5386
  %v6053 = vunpack.c.l.b16 %v5387
  %v6054 = vunpack.c.h.b16 %v5387
  %v6055 = vunpack.c.l.b16 %v5388
  %v6056 = vunpack.c.h.b16 %v5388
  %v6057 = vunpack.c.l.b16 %v5389
  %v6058 = vunpack.c.h.b16 %v5389
  %v6059 = vunpack.c.l.b16 %v5390
  %v6060 = vunpack.c.h.b16 %v5390
  %v6061 = vunpack.c.l.b16 %v5391
  %v6062 = vunpack.c.h.b16 %v5391
  %v6063 = vunpack.c.l.b16 %v5392
  %v6064 = vunpack.c.h.b16 %v5392
  %v6065 = vunpack.c.l.b16 %v5393
  %v6066 = vunpack.c.h.b16 %v5393
  %v6067 = vunpack.c.l.b16 %v5394
  %v6068 = vunpack.c.h.b16 %v5394
  %v6069 = vunpack.c.l.b16 %v5395
  %v6070 = vunpack.c.h.b16 %v5395
  %v6071 = vunpack.c.l.b16 %v5396
  %v6072 = vunpack.c.h.b16 %v5396
  %v6073 = vunpack.c.l.b16 %v5397
  %v6074 = vunpack.c.h.b16 %v5397
  %v6075 = vunpack.c.l.b16 %v5398
  %v6076 = vunpack.c.h.b16 %v5398
  %v6077 = vunpack.c.l.b16 %v5399
  %v6078 = vunpack.c.h.b16 %v5399
  %v6079 = vunpack.c.l.b16 %v5400
  %v6080 = vunpack.c.h.b16 %v5400
  %v6081 = vunpack.c.l.b16 %v5401
  %v6082 = vunpack.c.h.b16 %v5401
  %v6083 = vunpack.c.l.b16 %v5402
  %v6084 = vunpack.c.h.b16 %v5402
  %v6085 = vunpack.c.l.b16 %v5403
  %v6086 = vunpack.c.h.b16 %v5403
  %v6087 = vunpack.c.l.b16 %v5404
  %v6088 = vunpack.c.h.b16 %v5404
  %v6089 = vunpack.c.l.b16 %v5405
  %v6090 = vunpack.c.h.b16 %v5405
  %v6091 = vunpack.c.l.b16 %v5406
  %v6092 = vunpack.c.h.b16 %v5406
  %v6093 = vunpack.c.l.b16 %v5407
  %v6094 = vunpack.c.h.b16 %v5407
  %v6095 = vunpack.c.l.b16 %v5408
  %v6096 = vunpack.c.h.b16 %v5408
  %v6097 = vunpack.c.l.b16 %v5409
  %v6098 = vunpack.c.h.b16 %v5409
  %v6099 = vunpack.c.l.b16 %v5410
  %v6100 = vunpack.c.h.b16 %v5410
  %v6101 = vunpack.c.l.b16 %v5411
  %v6102 = vunpack.c.h.b16 %v5411
  %v6103 = vunpack.c.l.b16 %v5412
  %v6104 = vunpack.c.h.b16 %v5412
  %v6105 = vunpack.c.l.b16 %v5413
  %v6106 = vunpack.c.h.b16 %v5413
  %v6107 = vunpack.c.l.b16 %v5414
  %v6108 = vunpack.c.h.b16 %v5414
  %v6109 = vunpack.c.l.b16 %v5415
  %v6110 = vunpack.c.h.b16 %v5415
  %v6111 = vunpack.c.l.b16 %v5416
  %v6112 = vunpack.c.h.b16 %v5416
  %v6113 = vunpack.c.l.b16 %v5417
  %v6114 = vunpack.c.h.b16 %v5417
  %v6115 = vunpack.c.l.b16 %v5418
  %v6116 = vunpack.c.h.b16 %v5418
  %v6117 = vunpack.c.l.b16 %v5419
  %v6118 = vunpack.c.h.b16 %v5419
  %v6119 = vunpack.c.l.b16 %v5420
  %v6120 = vunpack.c.h.b16 %v5420
  %v6121 = vunpack.c.l.b16 %v5421
  %v6122 = vunpack.c.h.b16 %v5421
  %v6123 = vunpack.c.l.b16 %v5422
  %v6124 = vunpack.c.h.b16 %v5422
  %v6125 = vunpack.c.l.b16 %v5423
  %v6126 = vunpack.c.h.b16 %v5423
  %v6127 = vunpack.c.l.b16 %v5424
  %v6128 = vunpack.c.h.b16 %v5424
  %v6129 = vunpack.c.l.b16 %v5425
  %v6130 = vunpack.c.h.b16 %v5425
  %v6131 = vunpack.c.l.b16 %v5426
  %v6132 = vunpack.c.h.b16 %v5426
  %v6133 = vunpack.c.l.b16 %v5427
  %v6134 = vunpack.c.h.b16 %v5427
  %v6135 = vunpack.c.l.b16 %v5428
  %v6136 = vunpack.c.h.b16 %v5428
  %v6137 = vunpack.c.l.b16 %v5429
  %v6138 = vunpack.c.h.b16 %v5429
  %v6139 = vpack.c.b16 %v6015, %v6011
  %v6140 = vpack.c.b16 %v6016, %v6012
  %v6141 = vpack.c.b16 %v6017, %v6013
  %v6142 = vpack.c.b16 %v6018, %v6014
  %v6143 = vpack.c.b16 %v6023, %v6019
  %v6144 = vpack.c.b16 %v6024, %v6020
  %v6145 = vpack.c.b16 %v6025, %v6021
  %v6146 = vpack.c.b16 %v6026, %v6022
  %v6147 = vpack.c.b16 %v6031, %v6027
  %v6148 = vpack.c.b16 %v6032, %v6028
  %v6149 = vpack.c.b16 %v6033, %v6029
  %v6150 = vpack.c.b16 %v6034, %v6030
  %v6151 = vpack.c.b16 %v6039, %v6035
  %v6152 = vpack.c.b16 %v6040, %v6036
  %v6153 = vpack.c.b16 %v6041, %v6037
  %v6154 = vpack.c.b16 %v6042, %v6038
  %v6155 = vpack.c.b16 %v6047, %v6043
  %v6156 = vpack.c.b16 %v6048, %v6044
  %v6157 = vpack.c.b16 %v6049, %v6045
  %v6158 = vpack.c.b16 %v6050, %v6046
  %v6159 = vpack.c.b16 %v6055, %v6051
  %v6160 = vpack.c.b16 %v6056, %v6052
  %v6161 = vpack.c.b16 %v6057, %v6053
  %v6162 = vpack.c.b16 %v6058, %v6054
  %v6163 = vpack.c.b16 %v6063, %v6059
  %v6164 = vpack.c.b16 %v6064, %v6060
  %v6165 = vpack.c.b16 %v6065, %v6061
  %v6166 = vpack.c.b16 %v6066, %v6062
  %v6167 = vpack.c.b16 %v6071, %v6067
  %v6168 = vpack.c.b16 %v6072, %v6068
  %v6169 = vpack.c.b16 %v6073, %v6069
  %v6170 = vpack.c.b16 %v6074, %v6070
  %v6171 = vpack.c.b16 %v6079, %v6075
  %v6172 = vpack.c.b16 %v6080, %v6076
  %v6173 = vpack.c.b16 %v6081, %v6077
  %v6174 = vpack.c.b16 %v6082, %v6078
  %v6175 = vpack.c.b16 %v6087, %v6083
  %v6176 = vpack.c.b16 %v6088, %v6084
  %v6177 = vpack.c.b16 %v6089, %v6085
  %v6178 = vpack.c.b16 %v6090, %v6086
  %v6179 = vpack.c.b16 %v6095, %v6091
  %v6180 = vpack.c.b16 %v6096, %v6092
  %v6181 = vpack.c.b16 %v6097, %v6093
  %v6182 = vpack.c.b16 %v6098, %v6094
  %v6183 = vpack.c.b16 %v6103, %v6099
  %v6184 = vpack.c.b16 %v6104, %v6100
  %v6185 = vpack.c.b16 %v6105, %v6101
  %v6186 = vpack.c.b16 %v6106, %v6102
  %v6187 = vpack.c.b16 %v6111, %v6107
  %v6188 = vpack.c.b16 %v6112, %v6108
  %v6189 = vpack.c.b16 %v6113, %v6109
  %v6190 = vpack.c.b16 %v6114, %v6110
  %v6191 = vpack.c.b16 %v6119, %v6115
  %v6192 = vpack.c.b16 %v6120, %v6116
  %v6193 = vpack.c.b16 %v6121, %v6117
  %v6194 = vpack.c.b16 %v6122, %v6118
  %v6195 = vpack.c.b16 %v6127, %v6123
  %v6196 = vpack.c.b16 %v6128, %v6124
  %v6197 = vpack.c.b16 %v6129, %v6125
  %v6198 = vpack.c.b16 %v6130, %v6126
  %v6199 = vpack.c.b16 %v6135, %v6131
  %v6200 = vpack.c.b16 %v6136, %v6132
  %v6201 = vpack.c.b16 %v6137, %v6133
  %v6202 = vpack.c.b16 %v6138, %v6134
  %6267 = vmatpush.bf16.msra.mxu0 %v6167
  %6268 = vmatpush.bf16.msra.mxu0 %v6163
  %6269 = vmatpush.bf16.msra.mxu0 %v6159
  %6270 = vmatpush.bf16.msra.mxu0 %v6155
  %6271 = vmatpush.bf16.msra.mxu0 %v6151
  %6272 = vmatpush.bf16.msra.mxu0 %v6147
  %6273 = vmatpush.bf16.msra.mxu0 %v6143
  %6274 = vmatpush.bf16.msra.mxu0 %v6139
  %6275 = vmatmul.bf16.gmra.mxu0 %v5943
  %v6276 = vpop.f32.mrf.mxu0
  %v6277 = vadd.f32 %v5849, %v6276
  %v6278 = vpop.f32.mrf.mxu0
  %v6279 = vadd.f32 %v5851, %v6278
  %6280 = vdwg.mxu0
  %6281 = vmatpush.bf16.msra.mxu0 %v6199
  %6282 = vmatpush.bf16.msra.mxu0 %v6195
  %6283 = vmatpush.bf16.msra.mxu0 %v6191
  %6284 = vmatpush.bf16.msra.mxu0 %v6187
  %6285 = vmatpush.bf16.msra.mxu0 %v6183
  %6286 = vmatpush.bf16.msra.mxu0 %v6179
  %6287 = vmatpush.bf16.msra.mxu0 %v6175
  %6288 = vmatpush.bf16.msra.mxu0 %v6171
  %6289 = vmatmul.bf16.gmra.mxu0 %v5944
  %v6290 = vpop.f32.mrf.mxu0
  %v6291 = vadd.f32 %v6277, %v6290
  %v6292 = vpop.f32.mrf.mxu0
  %v6293 = vadd.f32 %v6279, %v6292
  %6294 = vdwg.mxu0
  %6295 = vmatpush.bf16.msra.mxu0 %v6168
  %6296 = vmatpush.bf16.msra.mxu0 %v6164
  %6297 = vmatpush.bf16.msra.mxu0 %v6160
  %6298 = vmatpush.bf16.msra.mxu0 %v6156
  %6299 = vmatpush.bf16.msra.mxu0 %v6152
  %6300 = vmatpush.bf16.msra.mxu0 %v6148
  %6301 = vmatpush.bf16.msra.mxu0 %v6144
  %6302 = vmatpush.bf16.msra.mxu0 %v6140
  %6303 = vmatmul.bf16.gmra.mxu0 %v5943
  %v6304 = vpop.f32.mrf.mxu0
  %v6305 = vadd.f32 %v5877, %v6304
  %v6306 = vpop.f32.mrf.mxu0
  %v6307 = vadd.f32 %v5879, %v6306
  %6308 = vdwg.mxu0
  %6309 = vmatpush.bf16.msra.mxu0 %v6200
  %6310 = vmatpush.bf16.msra.mxu0 %v6196
  %6311 = vmatpush.bf16.msra.mxu0 %v6192
  %6312 = vmatpush.bf16.msra.mxu0 %v6188
  %6313 = vmatpush.bf16.msra.mxu0 %v6184
  %6314 = vmatpush.bf16.msra.mxu0 %v6180
  %6315 = vmatpush.bf16.msra.mxu0 %v6176
  %6316 = vmatpush.bf16.msra.mxu0 %v6172
  %6317 = vmatmul.bf16.gmra.mxu0 %v5944
  %v6318 = vpop.f32.mrf.mxu0
  %v6319 = vadd.f32 %v6305, %v6318
  %v6320 = vpop.f32.mrf.mxu0
  %v6321 = vadd.f32 %v6307, %v6320
  %6322 = vdwg.mxu0
  %6323 = vmatpush.bf16.msra.mxu0 %v6169
  %6324 = vmatpush.bf16.msra.mxu0 %v6165
  %6325 = vmatpush.bf16.msra.mxu0 %v6161
  %6326 = vmatpush.bf16.msra.mxu0 %v6157
  %6327 = vmatpush.bf16.msra.mxu0 %v6153
  %6328 = vmatpush.bf16.msra.mxu0 %v6149
  %6329 = vmatpush.bf16.msra.mxu0 %v6145
  %6330 = vmatpush.bf16.msra.mxu0 %v6141
  %6331 = vmatmul.bf16.gmra.mxu0 %v5943
  %v6332 = vpop.f32.mrf.mxu0
  %v6333 = vadd.f32 %v5905, %v6332
  %v6334 = vpop.f32.mrf.mxu0
  %v6335 = vadd.f32 %v5907, %v6334
  %6336 = vdwg.mxu0
  %6337 = vmatpush.bf16.msra.mxu0 %v6201
  %6338 = vmatpush.bf16.msra.mxu0 %v6197
  %6339 = vmatpush.bf16.msra.mxu0 %v6193
  %6340 = vmatpush.bf16.msra.mxu0 %v6189
  %6341 = vmatpush.bf16.msra.mxu0 %v6185
  %6342 = vmatpush.bf16.msra.mxu0 %v6181
  %6343 = vmatpush.bf16.msra.mxu0 %v6177
  %6344 = vmatpush.bf16.msra.mxu0 %v6173
  %6345 = vmatmul.bf16.gmra.mxu0 %v5944
  %v6346 = vpop.f32.mrf.mxu0
  %v6347 = vadd.f32 %v6333, %v6346
  %v6348 = vpop.f32.mrf.mxu0
  %v6349 = vadd.f32 %v6335, %v6348
  %6350 = vdwg.mxu0
  %6351 = vmatpush.bf16.msra.mxu0 %v6170
  %6352 = vmatpush.bf16.msra.mxu0 %v6166
  %6353 = vmatpush.bf16.msra.mxu0 %v6162
  %6354 = vmatpush.bf16.msra.mxu0 %v6158
  %6355 = vmatpush.bf16.msra.mxu0 %v6154
  %6356 = vmatpush.bf16.msra.mxu0 %v6150
  %6357 = vmatpush.bf16.msra.mxu0 %v6146
  %6358 = vmatpush.bf16.msra.mxu0 %v6142
  %6359 = vmatmul.bf16.gmra.mxu0 %v5943
  %v6360 = vpop.f32.mrf.mxu0
  %v6361 = vadd.f32 %v5933, %v6360
  %v6362 = vpop.f32.mrf.mxu0
  %v6363 = vadd.f32 %v5935, %v6362
  %6364 = vdwg.mxu0
  %6365 = vmatpush.bf16.msra.mxu0 %v6202
  %6366 = vmatpush.bf16.msra.mxu0 %v6198
  %6367 = vmatpush.bf16.msra.mxu0 %v6194
  %6368 = vmatpush.bf16.msra.mxu0 %v6190
  %6369 = vmatpush.bf16.msra.mxu0 %v6186
  %6370 = vmatpush.bf16.msra.mxu0 %v6182
  %6371 = vmatpush.bf16.msra.mxu0 %v6178
  %6372 = vmatpush.bf16.msra.mxu0 %v6174
  %6373 = vmatmul.bf16.gmra.mxu0 %v5944
  %v6374 = vpop.f32.mrf.mxu0
  %v6375 = vadd.f32 %v6361, %v6374
  %v6376 = vpop.f32.mrf.mxu0
  %v6377 = vadd.f32 %v6363, %v6376
  %6378 = vdwg.mxu0
  %s6379 = scalar_lea.vmem %s9, 1024
  %v6380 = vld [vmem:[%s6379] sm:$0xff]
  %v6381 = vld [vmem:[%s6379 + $0x8] sm:$0xff]
  %v6382 = vld [vmem:[%s6379 + $0x10] sm:$0xff]
  %v6383 = vld [vmem:[%s6379 + $0x18] sm:$0xff]
  %v6384 = vld [vmem:[%s6379 + $0x20] sm:$0xff]
  %v6385 = vld [vmem:[%s6379 + $0x28] sm:$0xff]
  %v6386 = vld [vmem:[%s6379 + $0x30] sm:$0xff]
  %v6387 = vld [vmem:[%s6379 + $0x38] sm:$0xff]
  %v6388 = vld [vmem:[%s6379 + $0x40] sm:$0xff]
  %v6389 = vld [vmem:[%s6379 + $0x48] sm:$0xff]
  %v6390 = vld [vmem:[%s6379 + $0x50] sm:$0xff]
  %v6391 = vld [vmem:[%s6379 + $0x58] sm:$0xff]
  %v6392 = vld [vmem:[%s6379 + $0x60] sm:$0xff]
  %v6393 = vld [vmem:[%s6379 + $0x68] sm:$0xff]
  %v6394 = vld [vmem:[%s6379 + $0x70] sm:$0xff]
  %v6395 = vld [vmem:[%s6379 + $0x78] sm:$0xff]
  %v6396 = vld [vmem:[%s6379 + $0x80] sm:$0xff]
  %v6397 = vld [vmem:[%s6379 + $0x88] sm:$0xff]
  %v6398 = vld [vmem:[%s6379 + $0x90] sm:$0xff]
  %v6399 = vld [vmem:[%s6379 + $0x98] sm:$0xff]
  %v6400 = vld [vmem:[%s6379 + $0xa0] sm:$0xff]
  %v6401 = vld [vmem:[%s6379 + $0xa8] sm:$0xff]
  %v6402 = vld [vmem:[%s6379 + $0xb0] sm:$0xff]
  %v6403 = vld [vmem:[%s6379 + $0xb8] sm:$0xff]
  %v6404 = vld [vmem:[%s6379 + $0xc0] sm:$0xff]
  %v6405 = vld [vmem:[%s6379 + $0xc8] sm:$0xff]
  %v6406 = vld [vmem:[%s6379 + $0xd0] sm:$0xff]
  %v6407 = vld [vmem:[%s6379 + $0xd8] sm:$0xff]
  %v6408 = vld [vmem:[%s6379 + $0xe0] sm:$0xff]
  %v6409 = vld [vmem:[%s6379 + $0xe8] sm:$0xff]
  %v6410 = vld [vmem:[%s6379 + $0xf0] sm:$0xff]
  %v6411 = vld [vmem:[%s6379 + $0xf8] sm:$0xff]
  %v6412 = vld [vmem:[%s6379 + $0x100] sm:$0xff]
  %v6413 = vld [vmem:[%s6379 + $0x108] sm:$0xff]
  %v6414 = vld [vmem:[%s6379 + $0x110] sm:$0xff]
  %v6415 = vld [vmem:[%s6379 + $0x118] sm:$0xff]
  %v6416 = vld [vmem:[%s6379 + $0x120] sm:$0xff]
  %v6417 = vld [vmem:[%s6379 + $0x128] sm:$0xff]
  %v6418 = vld [vmem:[%s6379 + $0x130] sm:$0xff]
  %v6419 = vld [vmem:[%s6379 + $0x138] sm:$0xff]
  %v6420 = vld [vmem:[%s6379 + $0x140] sm:$0xff]
  %v6421 = vld [vmem:[%s6379 + $0x148] sm:$0xff]
  %v6422 = vld [vmem:[%s6379 + $0x150] sm:$0xff]
  %v6423 = vld [vmem:[%s6379 + $0x158] sm:$0xff]
  %v6424 = vld [vmem:[%s6379 + $0x160] sm:$0xff]
  %v6425 = vld [vmem:[%s6379 + $0x168] sm:$0xff]
  %v6426 = vld [vmem:[%s6379 + $0x170] sm:$0xff]
  %v6427 = vld [vmem:[%s6379 + $0x178] sm:$0xff]
  %v6428 = vld [vmem:[%s6379 + $0x180] sm:$0xff]
  %v6429 = vld [vmem:[%s6379 + $0x188] sm:$0xff]
  %v6430 = vld [vmem:[%s6379 + $0x190] sm:$0xff]
  %v6431 = vld [vmem:[%s6379 + $0x198] sm:$0xff]
  %v6432 = vld [vmem:[%s6379 + $0x1a0] sm:$0xff]
  %v6433 = vld [vmem:[%s6379 + $0x1a8] sm:$0xff]
  %v6434 = vld [vmem:[%s6379 + $0x1b0] sm:$0xff]
  %v6435 = vld [vmem:[%s6379 + $0x1b8] sm:$0xff]
  %v6436 = vld [vmem:[%s6379 + $0x1c0] sm:$0xff]
  %v6437 = vld [vmem:[%s6379 + $0x1c8] sm:$0xff]
  %v6438 = vld [vmem:[%s6379 + $0x1d0] sm:$0xff]
  %v6439 = vld [vmem:[%s6379 + $0x1d8] sm:$0xff]
  %v6440 = vld [vmem:[%s6379 + $0x1e0] sm:$0xff]
  %v6441 = vld [vmem:[%s6379 + $0x1e8] sm:$0xff]
  %v6442 = vld [vmem:[%s6379 + $0x1f0] sm:$0xff]
  %v6443 = vld [vmem:[%s6379 + $0x1f8] sm:$0xff]
  %v6446 = vunpack.c.l.b16 %v5352
  %v6447 = vunpack.c.h.b16 %v5352
  %v6448 = vunpack.c.l.b16 %v5353
  %v6449 = vunpack.c.h.b16 %v5353
  %v6450 = vpack.c.b16 %v6448, %v6446
  %v6451 = vpack.c.b16 %v6449, %v6447
  %v6518 = vunpack.c.l.b16 %v6380
  %v6519 = vunpack.c.h.b16 %v6380
  %v6520 = vunpack.c.l.b16 %v6381
  %v6521 = vunpack.c.h.b16 %v6381
  %v6522 = vunpack.c.l.b16 %v6382
  %v6523 = vunpack.c.h.b16 %v6382
  %v6524 = vunpack.c.l.b16 %v6383
  %v6525 = vunpack.c.h.b16 %v6383
  %v6526 = vunpack.c.l.b16 %v6384
  %v6527 = vunpack.c.h.b16 %v6384
  %v6528 = vunpack.c.l.b16 %v6385
  %v6529 = vunpack.c.h.b16 %v6385
  %v6530 = vunpack.c.l.b16 %v6386
  %v6531 = vunpack.c.h.b16 %v6386
  %v6532 = vunpack.c.l.b16 %v6387
  %v6533 = vunpack.c.h.b16 %v6387
  %v6534 = vunpack.c.l.b16 %v6388
  %v6535 = vunpack.c.h.b16 %v6388
  %v6536 = vunpack.c.l.b16 %v6389
  %v6537 = vunpack.c.h.b16 %v6389
  %v6538 = vunpack.c.l.b16 %v6390
  %v6539 = vunpack.c.h.b16 %v6390
  %v6540 = vunpack.c.l.b16 %v6391
  %v6541 = vunpack.c.h.b16 %v6391
  %v6542 = vunpack.c.l.b16 %v6392
  %v6543 = vunpack.c.h.b16 %v6392
  %v6544 = vunpack.c.l.b16 %v6393
  %v6545 = vunpack.c.h.b16 %v6393
  %v6546 = vunpack.c.l.b16 %v6394
  %v6547 = vunpack.c.h.b16 %v6394
  %v6548 = vunpack.c.l.b16 %v6395
  %v6549 = vunpack.c.h.b16 %v6395
  %v6550 = vunpack.c.l.b16 %v6396
  %v6551 = vunpack.c.h.b16 %v6396
  %v6552 = vunpack.c.l.b16 %v6397
  %v6553 = vunpack.c.h.b16 %v6397
  %v6554 = vunpack.c.l.b16 %v6398
  %v6555 = vunpack.c.h.b16 %v6398
  %v6556 = vunpack.c.l.b16 %v6399
  %v6557 = vunpack.c.h.b16 %v6399
  %v6558 = vunpack.c.l.b16 %v6400
  %v6559 = vunpack.c.h.b16 %v6400
  %v6560 = vunpack.c.l.b16 %v6401
  %v6561 = vunpack.c.h.b16 %v6401
  %v6562 = vunpack.c.l.b16 %v6402
  %v6563 = vunpack.c.h.b16 %v6402
  %v6564 = vunpack.c.l.b16 %v6403
  %v6565 = vunpack.c.h.b16 %v6403
  %v6566 = vunpack.c.l.b16 %v6404
  %v6567 = vunpack.c.h.b16 %v6404
  %v6568 = vunpack.c.l.b16 %v6405
  %v6569 = vunpack.c.h.b16 %v6405
  %v6570 = vunpack.c.l.b16 %v6406
  %v6571 = vunpack.c.h.b16 %v6406
  %v6572 = vunpack.c.l.b16 %v6407
  %v6573 = vunpack.c.h.b16 %v6407
  %v6574 = vunpack.c.l.b16 %v6408
  %v6575 = vunpack.c.h.b16 %v6408
  %v6576 = vunpack.c.l.b16 %v6409
  %v6577 = vunpack.c.h.b16 %v6409
  %v6578 = vunpack.c.l.b16 %v6410
  %v6579 = vunpack.c.h.b16 %v6410
  %v6580 = vunpack.c.l.b16 %v6411
  %v6581 = vunpack.c.h.b16 %v6411
  %v6582 = vunpack.c.l.b16 %v6412
  %v6583 = vunpack.c.h.b16 %v6412
  %v6584 = vunpack.c.l.b16 %v6413
  %v6585 = vunpack.c.h.b16 %v6413
  %v6586 = vunpack.c.l.b16 %v6414
  %v6587 = vunpack.c.h.b16 %v6414
  %v6588 = vunpack.c.l.b16 %v6415
  %v6589 = vunpack.c.h.b16 %v6415
  %v6590 = vunpack.c.l.b16 %v6416
  %v6591 = vunpack.c.h.b16 %v6416
  %v6592 = vunpack.c.l.b16 %v6417
  %v6593 = vunpack.c.h.b16 %v6417
  %v6594 = vunpack.c.l.b16 %v6418
  %v6595 = vunpack.c.h.b16 %v6418
  %v6596 = vunpack.c.l.b16 %v6419
  %v6597 = vunpack.c.h.b16 %v6419
  %v6598 = vunpack.c.l.b16 %v6420
  %v6599 = vunpack.c.h.b16 %v6420
  %v6600 = vunpack.c.l.b16 %v6421
  %v6601 = vunpack.c.h.b16 %v6421
  %v6602 = vunpack.c.l.b16 %v6422
  %v6603 = vunpack.c.h.b16 %v6422
  %v6604 = vunpack.c.l.b16 %v6423
  %v6605 = vunpack.c.h.b16 %v6423
  %v6606 = vunpack.c.l.b16 %v6424
  %v6607 = vunpack.c.h.b16 %v6424
  %v6608 = vunpack.c.l.b16 %v6425
  %v6609 = vunpack.c.h.b16 %v6425
  %v6610 = vunpack.c.l.b16 %v6426
  %v6611 = vunpack.c.h.b16 %v6426
  %v6612 = vunpack.c.l.b16 %v6427
  %v6613 = vunpack.c.h.b16 %v6427
  %v6614 = vunpack.c.l.b16 %v6428
  %v6615 = vunpack.c.h.b16 %v6428
  %v6616 = vunpack.c.l.b16 %v6429
  %v6617 = vunpack.c.h.b16 %v6429
  %v6618 = vunpack.c.l.b16 %v6430
  %v6619 = vunpack.c.h.b16 %v6430
  %v6620 = vunpack.c.l.b16 %v6431
  %v6621 = vunpack.c.h.b16 %v6431
  %v6622 = vunpack.c.l.b16 %v6432
  %v6623 = vunpack.c.h.b16 %v6432
  %v6624 = vunpack.c.l.b16 %v6433
  %v6625 = vunpack.c.h.b16 %v6433
  %v6626 = vunpack.c.l.b16 %v6434
  %v6627 = vunpack.c.h.b16 %v6434
  %v6628 = vunpack.c.l.b16 %v6435
  %v6629 = vunpack.c.h.b16 %v6435
  %v6630 = vunpack.c.l.b16 %v6436
  %v6631 = vunpack.c.h.b16 %v6436
  %v6632 = vunpack.c.l.b16 %v6437
  %v6633 = vunpack.c.h.b16 %v6437
  %v6634 = vunpack.c.l.b16 %v6438
  %v6635 = vunpack.c.h.b16 %v6438
  %v6636 = vunpack.c.l.b16 %v6439
  %v6637 = vunpack.c.h.b16 %v6439
  %v6638 = vunpack.c.l.b16 %v6440
  %v6639 = vunpack.c.h.b16 %v6440
  %v6640 = vunpack.c.l.b16 %v6441
  %v6641 = vunpack.c.h.b16 %v6441
  %v6642 = vunpack.c.l.b16 %v6442
  %v6643 = vunpack.c.h.b16 %v6442
  %v6644 = vunpack.c.l.b16 %v6443
  %v6645 = vunpack.c.h.b16 %v6443
  %v6646 = vpack.c.b16 %v6522, %v6518
  %v6647 = vpack.c.b16 %v6523, %v6519
  %v6648 = vpack.c.b16 %v6524, %v6520
  %v6649 = vpack.c.b16 %v6525, %v6521
  %v6650 = vpack.c.b16 %v6530, %v6526
  %v6651 = vpack.c.b16 %v6531, %v6527
  %v6652 = vpack.c.b16 %v6532, %v6528
  %v6653 = vpack.c.b16 %v6533, %v6529
  %v6654 = vpack.c.b16 %v6538, %v6534
  %v6655 = vpack.c.b16 %v6539, %v6535
  %v6656 = vpack.c.b16 %v6540, %v6536
  %v6657 = vpack.c.b16 %v6541, %v6537
  %v6658 = vpack.c.b16 %v6546, %v6542
  %v6659 = vpack.c.b16 %v6547, %v6543
  %v6660 = vpack.c.b16 %v6548, %v6544
  %v6661 = vpack.c.b16 %v6549, %v6545
  %v6662 = vpack.c.b16 %v6554, %v6550
  %v6663 = vpack.c.b16 %v6555, %v6551
  %v6664 = vpack.c.b16 %v6556, %v6552
  %v6665 = vpack.c.b16 %v6557, %v6553
  %v6666 = vpack.c.b16 %v6562, %v6558
  %v6667 = vpack.c.b16 %v6563, %v6559
  %v6668 = vpack.c.b16 %v6564, %v6560
  %v6669 = vpack.c.b16 %v6565, %v6561
  %v6670 = vpack.c.b16 %v6570, %v6566
  %v6671 = vpack.c.b16 %v6571, %v6567
  %v6672 = vpack.c.b16 %v6572, %v6568
  %v6673 = vpack.c.b16 %v6573, %v6569
  %v6674 = vpack.c.b16 %v6578, %v6574
  %v6675 = vpack.c.b16 %v6579, %v6575
  %v6676 = vpack.c.b16 %v6580, %v6576
  %v6677 = vpack.c.b16 %v6581, %v6577
  %v6678 = vpack.c.b16 %v6586, %v6582
  %v6679 = vpack.c.b16 %v6587, %v6583
  %v6680 = vpack.c.b16 %v6588, %v6584
  %v6681 = vpack.c.b16 %v6589, %v6585
  %v6682 = vpack.c.b16 %v6594, %v6590
  %v6683 = vpack.c.b16 %v6595, %v6591
  %v6684 = vpack.c.b16 %v6596, %v6592
  %v6685 = vpack.c.b16 %v6597, %v6593
  %v6686 = vpack.c.b16 %v6602, %v6598
  %v6687 = vpack.c.b16 %v6603, %v6599
  %v6688 = vpack.c.b16 %v6604, %v6600
  %v6689 = vpack.c.b16 %v6605, %v6601
  %v6690 = vpack.c.b16 %v6610, %v6606
  %v6691 = vpack.c.b16 %v6611, %v6607
  %v6692 = vpack.c.b16 %v6612, %v6608
  %v6693 = vpack.c.b16 %v6613, %v6609
  %v6694 = vpack.c.b16 %v6618, %v6614
  %v6695 = vpack.c.b16 %v6619, %v6615
  %v6696 = vpack.c.b16 %v6620, %v6616
  %v6697 = vpack.c.b16 %v6621, %v6617
  %v6698 = vpack.c.b16 %v6626, %v6622
  %v6699 = vpack.c.b16 %v6627, %v6623
  %v6700 = vpack.c.b16 %v6628, %v6624
  %v6701 = vpack.c.b16 %v6629, %v6625
  %v6702 = vpack.c.b16 %v6634, %v6630
  %v6703 = vpack.c.b16 %v6635, %v6631
  %v6704 = vpack.c.b16 %v6636, %v6632
  %v6705 = vpack.c.b16 %v6637, %v6633
  %v6706 = vpack.c.b16 %v6642, %v6638
  %v6707 = vpack.c.b16 %v6643, %v6639
  %v6708 = vpack.c.b16 %v6644, %v6640
  %v6709 = vpack.c.b16 %v6645, %v6641
  %6774 = vmatpush.bf16.msra.mxu0 %v6674
  %6775 = vmatpush.bf16.msra.mxu0 %v6670
  %6776 = vmatpush.bf16.msra.mxu0 %v6666
  %6777 = vmatpush.bf16.msra.mxu0 %v6662
  %6778 = vmatpush.bf16.msra.mxu0 %v6658
  %6779 = vmatpush.bf16.msra.mxu0 %v6654
  %6780 = vmatpush.bf16.msra.mxu0 %v6650
  %6781 = vmatpush.bf16.msra.mxu0 %v6646
  %6782 = vmatmul.bf16.gmra.mxu0 %v6450
  %v6783 = vpop.f32.mrf.mxu0
  %v6784 = vadd.f32 0.0, %v6783
  %v6785 = vpop.f32.mrf.mxu0
  %v6786 = vadd.f32 0.0, %v6785
  %6787 = vdwg.mxu0
  %6788 = vmatpush.bf16.msra.mxu0 %v6706
  %6789 = vmatpush.bf16.msra.mxu0 %v6702
  %6790 = vmatpush.bf16.msra.mxu0 %v6698
  %6791 = vmatpush.bf16.msra.mxu0 %v6694
  %6792 = vmatpush.bf16.msra.mxu0 %v6690
  %6793 = vmatpush.bf16.msra.mxu0 %v6686
  %6794 = vmatpush.bf16.msra.mxu0 %v6682
  %6795 = vmatpush.bf16.msra.mxu0 %v6678
  %6796 = vmatmul.bf16.gmra.mxu0 %v6451
  %v6797 = vpop.f32.mrf.mxu0
  %v6798 = vadd.f32 %v6784, %v6797
  %v6799 = vpop.f32.mrf.mxu0
  %v6800 = vadd.f32 %v6786, %v6799
  %6801 = vdwg.mxu0
  %6802 = vmatpush.bf16.msra.mxu0 %v6675
  %6803 = vmatpush.bf16.msra.mxu0 %v6671
  %6804 = vmatpush.bf16.msra.mxu0 %v6667
  %6805 = vmatpush.bf16.msra.mxu0 %v6663
  %6806 = vmatpush.bf16.msra.mxu0 %v6659
  %6807 = vmatpush.bf16.msra.mxu0 %v6655
  %6808 = vmatpush.bf16.msra.mxu0 %v6651
  %6809 = vmatpush.bf16.msra.mxu0 %v6647
  %6810 = vmatmul.bf16.gmra.mxu0 %v6450
  %v6811 = vpop.f32.mrf.mxu0
  %v6812 = vadd.f32 0.0, %v6811
  %v6813 = vpop.f32.mrf.mxu0
  %v6814 = vadd.f32 0.0, %v6813
  %6815 = vdwg.mxu0
  %6816 = vmatpush.bf16.msra.mxu0 %v6707
  %6817 = vmatpush.bf16.msra.mxu0 %v6703
  %6818 = vmatpush.bf16.msra.mxu0 %v6699
  %6819 = vmatpush.bf16.msra.mxu0 %v6695
  %6820 = vmatpush.bf16.msra.mxu0 %v6691
  %6821 = vmatpush.bf16.msra.mxu0 %v6687
  %6822 = vmatpush.bf16.msra.mxu0 %v6683
  %6823 = vmatpush.bf16.msra.mxu0 %v6679
  %6824 = vmatmul.bf16.gmra.mxu0 %v6451
  %v6825 = vpop.f32.mrf.mxu0
  %v6826 = vadd.f32 %v6812, %v6825
  %v6827 = vpop.f32.mrf.mxu0
  %v6828 = vadd.f32 %v6814, %v6827
  %6829 = vdwg.mxu0
  %6830 = vmatpush.bf16.msra.mxu0 %v6676
  %6831 = vmatpush.bf16.msra.mxu0 %v6672
  %6832 = vmatpush.bf16.msra.mxu0 %v6668
  %6833 = vmatpush.bf16.msra.mxu0 %v6664
  %6834 = vmatpush.bf16.msra.mxu0 %v6660
  %6835 = vmatpush.bf16.msra.mxu0 %v6656
  %6836 = vmatpush.bf16.msra.mxu0 %v6652
  %6837 = vmatpush.bf16.msra.mxu0 %v6648
  %6838 = vmatmul.bf16.gmra.mxu0 %v6450
  %v6839 = vpop.f32.mrf.mxu0
  %v6840 = vadd.f32 0.0, %v6839
  %v6841 = vpop.f32.mrf.mxu0
  %v6842 = vadd.f32 0.0, %v6841
  %6843 = vdwg.mxu0
  %6844 = vmatpush.bf16.msra.mxu0 %v6708
  %6845 = vmatpush.bf16.msra.mxu0 %v6704
  %6846 = vmatpush.bf16.msra.mxu0 %v6700
  %6847 = vmatpush.bf16.msra.mxu0 %v6696
  %6848 = vmatpush.bf16.msra.mxu0 %v6692
  %6849 = vmatpush.bf16.msra.mxu0 %v6688
  %6850 = vmatpush.bf16.msra.mxu0 %v6684
  %6851 = vmatpush.bf16.msra.mxu0 %v6680
  %6852 = vmatmul.bf16.gmra.mxu0 %v6451
  %v6853 = vpop.f32.mrf.mxu0
  %v6854 = vadd.f32 %v6840, %v6853
  %v6855 = vpop.f32.mrf.mxu0
  %v6856 = vadd.f32 %v6842, %v6855
  %6857 = vdwg.mxu0
  %6858 = vmatpush.bf16.msra.mxu0 %v6677
  %6859 = vmatpush.bf16.msra.mxu0 %v6673
  %6860 = vmatpush.bf16.msra.mxu0 %v6669
  %6861 = vmatpush.bf16.msra.mxu0 %v6665
  %6862 = vmatpush.bf16.msra.mxu0 %v6661
  %6863 = vmatpush.bf16.msra.mxu0 %v6657
  %6864 = vmatpush.bf16.msra.mxu0 %v6653
  %6865 = vmatpush.bf16.msra.mxu0 %v6649
  %6866 = vmatmul.bf16.gmra.mxu0 %v6450
  %v6867 = vpop.f32.mrf.mxu0
  %v6868 = vadd.f32 0.0, %v6867
  %v6869 = vpop.f32.mrf.mxu0
  %v6870 = vadd.f32 0.0, %v6869
  %6871 = vdwg.mxu0
  %6872 = vmatpush.bf16.msra.mxu0 %v6709
  %6873 = vmatpush.bf16.msra.mxu0 %v6705
  %6874 = vmatpush.bf16.msra.mxu0 %v6701
  %6875 = vmatpush.bf16.msra.mxu0 %v6697
  %6876 = vmatpush.bf16.msra.mxu0 %v6693
  %6877 = vmatpush.bf16.msra.mxu0 %v6689
  %6878 = vmatpush.bf16.msra.mxu0 %v6685
  %6879 = vmatpush.bf16.msra.mxu0 %v6681
  %6880 = vmatmul.bf16.gmra.mxu0 %v6451
  %v6881 = vpop.f32.mrf.mxu0
  %v6882 = vadd.f32 %v6868, %v6881
  %v6883 = vpop.f32.mrf.mxu0
  %v6884 = vadd.f32 %v6870, %v6883
  %6885 = vdwg.mxu0
  %v6886 = vadd.f32 %v6291, %v6798
  %v6887 = vadd.f32 %v6319, %v6826
  %v6888 = vadd.f32 %v6347, %v6854
  %v6889 = vadd.f32 %v6375, %v6882
  %v6890 = vadd.f32 %v6293, %v6800
  %v6891 = vadd.f32 %v6321, %v6828
  %v6892 = vadd.f32 %v6349, %v6856
  %v6893 = vadd.f32 %v6377, %v6884
  %s6894 = scalar_lea.vmem %s9, 1536
  %v6895 = vld [vmem:[%s6894] sm:$0xff]
  %v6896 = vld [vmem:[%s6894 + $0x8] sm:$0xff]
  %v6897 = vld [vmem:[%s6894 + $0x10] sm:$0xff]
  %v6898 = vld [vmem:[%s6894 + $0x18] sm:$0xff]
  %v6899 = vld [vmem:[%s6894 + $0x20] sm:$0xff]
  %v6900 = vld [vmem:[%s6894 + $0x28] sm:$0xff]
  %v6901 = vld [vmem:[%s6894 + $0x30] sm:$0xff]
  %v6902 = vld [vmem:[%s6894 + $0x38] sm:$0xff]
  %v6903 = vld [vmem:[%s6894 + $0x40] sm:$0xff]
  %v6904 = vld [vmem:[%s6894 + $0x48] sm:$0xff]
  %v6905 = vld [vmem:[%s6894 + $0x50] sm:$0xff]
  %v6906 = vld [vmem:[%s6894 + $0x58] sm:$0xff]
  %v6907 = vld [vmem:[%s6894 + $0x60] sm:$0xff]
  %v6908 = vld [vmem:[%s6894 + $0x68] sm:$0xff]
  %v6909 = vld [vmem:[%s6894 + $0x70] sm:$0xff]
  %v6910 = vld [vmem:[%s6894 + $0x78] sm:$0xff]
  %v6911 = vld [vmem:[%s6894 + $0x80] sm:$0xff]
  %v6912 = vld [vmem:[%s6894 + $0x88] sm:$0xff]
  %v6913 = vld [vmem:[%s6894 + $0x90] sm:$0xff]
  %v6914 = vld [vmem:[%s6894 + $0x98] sm:$0xff]
  %v6915 = vld [vmem:[%s6894 + $0xa0] sm:$0xff]
  %v6916 = vld [vmem:[%s6894 + $0xa8] sm:$0xff]
  %v6917 = vld [vmem:[%s6894 + $0xb0] sm:$0xff]
  %v6918 = vld [vmem:[%s6894 + $0xb8] sm:$0xff]
  %v6919 = vld [vmem:[%s6894 + $0xc0] sm:$0xff]
  %v6920 = vld [vmem:[%s6894 + $0xc8] sm:$0xff]
  %v6921 = vld [vmem:[%s6894 + $0xd0] sm:$0xff]
  %v6922 = vld [vmem:[%s6894 + $0xd8] sm:$0xff]
  %v6923 = vld [vmem:[%s6894 + $0xe0] sm:$0xff]
  %v6924 = vld [vmem:[%s6894 + $0xe8] sm:$0xff]
  %v6925 = vld [vmem:[%s6894 + $0xf0] sm:$0xff]
  %v6926 = vld [vmem:[%s6894 + $0xf8] sm:$0xff]
  %v6927 = vld [vmem:[%s6894 + $0x100] sm:$0xff]
  %v6928 = vld [vmem:[%s6894 + $0x108] sm:$0xff]
  %v6929 = vld [vmem:[%s6894 + $0x110] sm:$0xff]
  %v6930 = vld [vmem:[%s6894 + $0x118] sm:$0xff]
  %v6931 = vld [vmem:[%s6894 + $0x120] sm:$0xff]
  %v6932 = vld [vmem:[%s6894 + $0x128] sm:$0xff]
  %v6933 = vld [vmem:[%s6894 + $0x130] sm:$0xff]
  %v6934 = vld [vmem:[%s6894 + $0x138] sm:$0xff]
  %v6935 = vld [vmem:[%s6894 + $0x140] sm:$0xff]
  %v6936 = vld [vmem:[%s6894 + $0x148] sm:$0xff]
  %v6937 = vld [vmem:[%s6894 + $0x150] sm:$0xff]
  %v6938 = vld [vmem:[%s6894 + $0x158] sm:$0xff]
  %v6939 = vld [vmem:[%s6894 + $0x160] sm:$0xff]
  %v6940 = vld [vmem:[%s6894 + $0x168] sm:$0xff]
  %v6941 = vld [vmem:[%s6894 + $0x170] sm:$0xff]
  %v6942 = vld [vmem:[%s6894 + $0x178] sm:$0xff]
  %v6943 = vld [vmem:[%s6894 + $0x180] sm:$0xff]
  %v6944 = vld [vmem:[%s6894 + $0x188] sm:$0xff]
  %v6945 = vld [vmem:[%s6894 + $0x190] sm:$0xff]
  %v6946 = vld [vmem:[%s6894 + $0x198] sm:$0xff]
  %v6947 = vld [vmem:[%s6894 + $0x1a0] sm:$0xff]
  %v6948 = vld [vmem:[%s6894 + $0x1a8] sm:$0xff]
  %v6949 = vld [vmem:[%s6894 + $0x1b0] sm:$0xff]
  %v6950 = vld [vmem:[%s6894 + $0x1b8] sm:$0xff]
  %v6951 = vld [vmem:[%s6894 + $0x1c0] sm:$0xff]
  %v6952 = vld [vmem:[%s6894 + $0x1c8] sm:$0xff]
  %v6953 = vld [vmem:[%s6894 + $0x1d0] sm:$0xff]
  %v6954 = vld [vmem:[%s6894 + $0x1d8] sm:$0xff]
  %v6955 = vld [vmem:[%s6894 + $0x1e0] sm:$0xff]
  %v6956 = vld [vmem:[%s6894 + $0x1e8] sm:$0xff]
  %v6957 = vld [vmem:[%s6894 + $0x1f0] sm:$0xff]
  %v6958 = vld [vmem:[%s6894 + $0x1f8] sm:$0xff]
  %v6961 = vunpack.c.l.b16 %v5354
  %v6962 = vunpack.c.h.b16 %v5354
  %v6963 = vunpack.c.l.b16 %v5355
  %v6964 = vunpack.c.h.b16 %v5355
  %v6965 = vpack.c.b16 %v6963, %v6961
  %v6966 = vpack.c.b16 %v6964, %v6962
  %v7033 = vunpack.c.l.b16 %v6895
  %v7034 = vunpack.c.h.b16 %v6895
  %v7035 = vunpack.c.l.b16 %v6896
  %v7036 = vunpack.c.h.b16 %v6896
  %v7037 = vunpack.c.l.b16 %v6897
  %v7038 = vunpack.c.h.b16 %v6897
  %v7039 = vunpack.c.l.b16 %v6898
  %v7040 = vunpack.c.h.b16 %v6898
  %v7041 = vunpack.c.l.b16 %v6899
  %v7042 = vunpack.c.h.b16 %v6899
  %v7043 = vunpack.c.l.b16 %v6900
  %v7044 = vunpack.c.h.b16 %v6900
  %v7045 = vunpack.c.l.b16 %v6901
  %v7046 = vunpack.c.h.b16 %v6901
  %v7047 = vunpack.c.l.b16 %v6902
  %v7048 = vunpack.c.h.b16 %v6902
  %v7049 = vunpack.c.l.b16 %v6903
  %v7050 = vunpack.c.h.b16 %v6903
  %v7051 = vunpack.c.l.b16 %v6904
  %v7052 = vunpack.c.h.b16 %v6904
  %v7053 = vunpack.c.l.b16 %v6905
  %v7054 = vunpack.c.h.b16 %v6905
  %v7055 = vunpack.c.l.b16 %v6906
  %v7056 = vunpack.c.h.b16 %v6906
  %v7057 = vunpack.c.l.b16 %v6907
  %v7058 = vunpack.c.h.b16 %v6907
  %v7059 = vunpack.c.l.b16 %v6908
  %v7060 = vunpack.c.h.b16 %v6908
  %v7061 = vunpack.c.l.b16 %v6909
  %v7062 = vunpack.c.h.b16 %v6909
  %v7063 = vunpack.c.l.b16 %v6910
  %v7064 = vunpack.c.h.b16 %v6910
  %v7065 = vunpack.c.l.b16 %v6911
  %v7066 = vunpack.c.h.b16 %v6911
  %v7067 = vunpack.c.l.b16 %v6912
  %v7068 = vunpack.c.h.b16 %v6912
  %v7069 = vunpack.c.l.b16 %v6913
  %v7070 = vunpack.c.h.b16 %v6913
  %v7071 = vunpack.c.l.b16 %v6914
  %v7072 = vunpack.c.h.b16 %v6914
  %v7073 = vunpack.c.l.b16 %v6915
  %v7074 = vunpack.c.h.b16 %v6915
  %v7075 = vunpack.c.l.b16 %v6916
  %v7076 = vunpack.c.h.b16 %v6916
  %v7077 = vunpack.c.l.b16 %v6917
  %v7078 = vunpack.c.h.b16 %v6917
  %v7079 = vunpack.c.l.b16 %v6918
  %v7080 = vunpack.c.h.b16 %v6918
  %v7081 = vunpack.c.l.b16 %v6919
  %v7082 = vunpack.c.h.b16 %v6919
  %v7083 = vunpack.c.l.b16 %v6920
  %v7084 = vunpack.c.h.b16 %v6920
  %v7085 = vunpack.c.l.b16 %v6921
  %v7086 = vunpack.c.h.b16 %v6921
  %v7087 = vunpack.c.l.b16 %v6922
  %v7088 = vunpack.c.h.b16 %v6922
  %v7089 = vunpack.c.l.b16 %v6923
  %v7090 = vunpack.c.h.b16 %v6923
  %v7091 = vunpack.c.l.b16 %v6924
  %v7092 = vunpack.c.h.b16 %v6924
  %v7093 = vunpack.c.l.b16 %v6925
  %v7094 = vunpack.c.h.b16 %v6925
  %v7095 = vunpack.c.l.b16 %v6926
  %v7096 = vunpack.c.h.b16 %v6926
  %v7097 = vunpack.c.l.b16 %v6927
  %v7098 = vunpack.c.h.b16 %v6927
  %v7099 = vunpack.c.l.b16 %v6928
  %v7100 = vunpack.c.h.b16 %v6928
  %v7101 = vunpack.c.l.b16 %v6929
  %v7102 = vunpack.c.h.b16 %v6929
  %v7103 = vunpack.c.l.b16 %v6930
  %v7104 = vunpack.c.h.b16 %v6930
  %v7105 = vunpack.c.l.b16 %v6931
  %v7106 = vunpack.c.h.b16 %v6931
  %v7107 = vunpack.c.l.b16 %v6932
  %v7108 = vunpack.c.h.b16 %v6932
  %v7109 = vunpack.c.l.b16 %v6933
  %v7110 = vunpack.c.h.b16 %v6933
  %v7111 = vunpack.c.l.b16 %v6934
  %v7112 = vunpack.c.h.b16 %v6934
  %v7113 = vunpack.c.l.b16 %v6935
  %v7114 = vunpack.c.h.b16 %v6935
  %v7115 = vunpack.c.l.b16 %v6936
  %v7116 = vunpack.c.h.b16 %v6936
  %v7117 = vunpack.c.l.b16 %v6937
  %v7118 = vunpack.c.h.b16 %v6937
  %v7119 = vunpack.c.l.b16 %v6938
  %v7120 = vunpack.c.h.b16 %v6938
  %v7121 = vunpack.c.l.b16 %v6939
  %v7122 = vunpack.c.h.b16 %v6939
  %v7123 = vunpack.c.l.b16 %v6940
  %v7124 = vunpack.c.h.b16 %v6940
  %v7125 = vunpack.c.l.b16 %v6941
  %v7126 = vunpack.c.h.b16 %v6941
  %v7127 = vunpack.c.l.b16 %v6942
  %v7128 = vunpack.c.h.b16 %v6942
  %v7129 = vunpack.c.l.b16 %v6943
  %v7130 = vunpack.c.h.b16 %v6943
  %v7131 = vunpack.c.l.b16 %v6944
  %v7132 = vunpack.c.h.b16 %v6944
  %v7133 = vunpack.c.l.b16 %v6945
  %v7134 = vunpack.c.h.b16 %v6945
  %v7135 = vunpack.c.l.b16 %v6946
  %v7136 = vunpack.c.h.b16 %v6946
  %v7137 = vunpack.c.l.b16 %v6947
  %v7138 = vunpack.c.h.b16 %v6947
  %v7139 = vunpack.c.l.b16 %v6948
  %v7140 = vunpack.c.h.b16 %v6948
  %v7141 = vunpack.c.l.b16 %v6949
  %v7142 = vunpack.c.h.b16 %v6949
  %v7143 = vunpack.c.l.b16 %v6950
  %v7144 = vunpack.c.h.b16 %v6950
  %v7145 = vunpack.c.l.b16 %v6951
  %v7146 = vunpack.c.h.b16 %v6951
  %v7147 = vunpack.c.l.b16 %v6952
  %v7148 = vunpack.c.h.b16 %v6952
  %v7149 = vunpack.c.l.b16 %v6953
  %v7150 = vunpack.c.h.b16 %v6953
  %v7151 = vunpack.c.l.b16 %v6954
  %v7152 = vunpack.c.h.b16 %v6954
  %v7153 = vunpack.c.l.b16 %v6955
  %v7154 = vunpack.c.h.b16 %v6955
  %v7155 = vunpack.c.l.b16 %v6956
  %v7156 = vunpack.c.h.b16 %v6956
  %v7157 = vunpack.c.l.b16 %v6957
  %v7158 = vunpack.c.h.b16 %v6957
  %v7159 = vunpack.c.l.b16 %v6958
  %v7160 = vunpack.c.h.b16 %v6958
  %v7161 = vpack.c.b16 %v7037, %v7033
  %v7162 = vpack.c.b16 %v7038, %v7034
  %v7163 = vpack.c.b16 %v7039, %v7035
  %v7164 = vpack.c.b16 %v7040, %v7036
  %v7165 = vpack.c.b16 %v7045, %v7041
  %v7166 = vpack.c.b16 %v7046, %v7042
  %v7167 = vpack.c.b16 %v7047, %v7043
  %v7168 = vpack.c.b16 %v7048, %v7044
  %v7169 = vpack.c.b16 %v7053, %v7049
  %v7170 = vpack.c.b16 %v7054, %v7050
  %v7171 = vpack.c.b16 %v7055, %v7051
  %v7172 = vpack.c.b16 %v7056, %v7052
  %v7173 = vpack.c.b16 %v7061, %v7057
  %v7174 = vpack.c.b16 %v7062, %v7058
  %v7175 = vpack.c.b16 %v7063, %v7059
  %v7176 = vpack.c.b16 %v7064, %v7060
  %v7177 = vpack.c.b16 %v7069, %v7065
  %v7178 = vpack.c.b16 %v7070, %v7066
  %v7179 = vpack.c.b16 %v7071, %v7067
  %v7180 = vpack.c.b16 %v7072, %v7068
  %v7181 = vpack.c.b16 %v7077, %v7073
  %v7182 = vpack.c.b16 %v7078, %v7074
  %v7183 = vpack.c.b16 %v7079, %v7075
  %v7184 = vpack.c.b16 %v7080, %v7076
  %v7185 = vpack.c.b16 %v7085, %v7081
  %v7186 = vpack.c.b16 %v7086, %v7082
  %v7187 = vpack.c.b16 %v7087, %v7083
  %v7188 = vpack.c.b16 %v7088, %v7084
  %v7189 = vpack.c.b16 %v7093, %v7089
  %v7190 = vpack.c.b16 %v7094, %v7090
  %v7191 = vpack.c.b16 %v7095, %v7091
  %v7192 = vpack.c.b16 %v7096, %v7092
  %v7193 = vpack.c.b16 %v7101, %v7097
  %v7194 = vpack.c.b16 %v7102, %v7098
  %v7195 = vpack.c.b16 %v7103, %v7099
  %v7196 = vpack.c.b16 %v7104, %v7100
  %v7197 = vpack.c.b16 %v7109, %v7105
  %v7198 = vpack.c.b16 %v7110, %v7106
  %v7199 = vpack.c.b16 %v7111, %v7107
  %v7200 = vpack.c.b16 %v7112, %v7108
  %v7201 = vpack.c.b16 %v7117, %v7113
  %v7202 = vpack.c.b16 %v7118, %v7114
  %v7203 = vpack.c.b16 %v7119, %v7115
  %v7204 = vpack.c.b16 %v7120, %v7116
  %v7205 = vpack.c.b16 %v7125, %v7121
  %v7206 = vpack.c.b16 %v7126, %v7122
  %v7207 = vpack.c.b16 %v7127, %v7123
  %v7208 = vpack.c.b16 %v7128, %v7124
  %v7209 = vpack.c.b16 %v7133, %v7129
  %v7210 = vpack.c.b16 %v7134, %v7130
  %v7211 = vpack.c.b16 %v7135, %v7131
  %v7212 = vpack.c.b16 %v7136, %v7132
  %v7213 = vpack.c.b16 %v7141, %v7137
  %v7214 = vpack.c.b16 %v7142, %v7138
  %v7215 = vpack.c.b16 %v7143, %v7139
  %v7216 = vpack.c.b16 %v7144, %v7140
  %v7217 = vpack.c.b16 %v7149, %v7145
  %v7218 = vpack.c.b16 %v7150, %v7146
  %v7219 = vpack.c.b16 %v7151, %v7147
  %v7220 = vpack.c.b16 %v7152, %v7148
  %v7221 = vpack.c.b16 %v7157, %v7153
  %v7222 = vpack.c.b16 %v7158, %v7154
  %v7223 = vpack.c.b16 %v7159, %v7155
  %v7224 = vpack.c.b16 %v7160, %v7156
  %7289 = vmatpush.bf16.msra.mxu0 %v7189
  %7290 = vmatpush.bf16.msra.mxu0 %v7185
  %7291 = vmatpush.bf16.msra.mxu0 %v7181
  %7292 = vmatpush.bf16.msra.mxu0 %v7177
  %7293 = vmatpush.bf16.msra.mxu0 %v7173
  %7294 = vmatpush.bf16.msra.mxu0 %v7169
  %7295 = vmatpush.bf16.msra.mxu0 %v7165
  %7296 = vmatpush.bf16.msra.mxu0 %v7161
  %7297 = vmatmul.bf16.gmra.mxu0 %v6965
  %v7298 = vpop.f32.mrf.mxu0
  %v7299 = vadd.f32 0.0, %v7298
  %v7300 = vpop.f32.mrf.mxu0
  %v7301 = vadd.f32 0.0, %v7300
  %7302 = vdwg.mxu0
  %7303 = vmatpush.bf16.msra.mxu0 %v7221
  %7304 = vmatpush.bf16.msra.mxu0 %v7217
  %7305 = vmatpush.bf16.msra.mxu0 %v7213
  %7306 = vmatpush.bf16.msra.mxu0 %v7209
  %7307 = vmatpush.bf16.msra.mxu0 %v7205
  %7308 = vmatpush.bf16.msra.mxu0 %v7201
  %7309 = vmatpush.bf16.msra.mxu0 %v7197
  %7310 = vmatpush.bf16.msra.mxu0 %v7193
  %7311 = vmatmul.bf16.gmra.mxu0 %v6966
  %v7312 = vpop.f32.mrf.mxu0
  %v7313 = vadd.f32 %v7299, %v7312
  %v7314 = vpop.f32.mrf.mxu0
  %v7315 = vadd.f32 %v7301, %v7314
  %7316 = vdwg.mxu0
  %7317 = vmatpush.bf16.msra.mxu0 %v7190
  %7318 = vmatpush.bf16.msra.mxu0 %v7186
  %7319 = vmatpush.bf16.msra.mxu0 %v7182
  %7320 = vmatpush.bf16.msra.mxu0 %v7178
  %7321 = vmatpush.bf16.msra.mxu0 %v7174
  %7322 = vmatpush.bf16.msra.mxu0 %v7170
  %7323 = vmatpush.bf16.msra.mxu0 %v7166
  %7324 = vmatpush.bf16.msra.mxu0 %v7162
  %7325 = vmatmul.bf16.gmra.mxu0 %v6965
  %v7326 = vpop.f32.mrf.mxu0
  %v7327 = vadd.f32 0.0, %v7326
  %v7328 = vpop.f32.mrf.mxu0
  %v7329 = vadd.f32 0.0, %v7328
  %7330 = vdwg.mxu0
  %7331 = vmatpush.bf16.msra.mxu0 %v7222
  %7332 = vmatpush.bf16.msra.mxu0 %v7218
  %7333 = vmatpush.bf16.msra.mxu0 %v7214
  %7334 = vmatpush.bf16.msra.mxu0 %v7210
  %7335 = vmatpush.bf16.msra.mxu0 %v7206
  %7336 = vmatpush.bf16.msra.mxu0 %v7202
  %7337 = vmatpush.bf16.msra.mxu0 %v7198
  %7338 = vmatpush.bf16.msra.mxu0 %v7194
  %7339 = vmatmul.bf16.gmra.mxu0 %v6966
  %v7340 = vpop.f32.mrf.mxu0
  %v7341 = vadd.f32 %v7327, %v7340
  %v7342 = vpop.f32.mrf.mxu0
  %v7343 = vadd.f32 %v7329, %v7342
  %7344 = vdwg.mxu0
  %7345 = vmatpush.bf16.msra.mxu0 %v7191
  %7346 = vmatpush.bf16.msra.mxu0 %v7187
  %7347 = vmatpush.bf16.msra.mxu0 %v7183
  %7348 = vmatpush.bf16.msra.mxu0 %v7179
  %7349 = vmatpush.bf16.msra.mxu0 %v7175
  %7350 = vmatpush.bf16.msra.mxu0 %v7171
  %7351 = vmatpush.bf16.msra.mxu0 %v7167
  %7352 = vmatpush.bf16.msra.mxu0 %v7163
  %7353 = vmatmul.bf16.gmra.mxu0 %v6965
  %v7354 = vpop.f32.mrf.mxu0
  %v7355 = vadd.f32 0.0, %v7354
  %v7356 = vpop.f32.mrf.mxu0
  %v7357 = vadd.f32 0.0, %v7356
  %7358 = vdwg.mxu0
  %7359 = vmatpush.bf16.msra.mxu0 %v7223
  %7360 = vmatpush.bf16.msra.mxu0 %v7219
  %7361 = vmatpush.bf16.msra.mxu0 %v7215
  %7362 = vmatpush.bf16.msra.mxu0 %v7211
  %7363 = vmatpush.bf16.msra.mxu0 %v7207
  %7364 = vmatpush.bf16.msra.mxu0 %v7203
  %7365 = vmatpush.bf16.msra.mxu0 %v7199
  %7366 = vmatpush.bf16.msra.mxu0 %v7195
  %7367 = vmatmul.bf16.gmra.mxu0 %v6966
  %v7368 = vpop.f32.mrf.mxu0
  %v7369 = vadd.f32 %v7355, %v7368
  %v7370 = vpop.f32.mrf.mxu0
  %v7371 = vadd.f32 %v7357, %v7370
  %7372 = vdwg.mxu0
  %7373 = vmatpush.bf16.msra.mxu0 %v7192
  %7374 = vmatpush.bf16.msra.mxu0 %v7188
  %7375 = vmatpush.bf16.msra.mxu0 %v7184
  %7376 = vmatpush.bf16.msra.mxu0 %v7180
  %7377 = vmatpush.bf16.msra.mxu0 %v7176
  %7378 = vmatpush.bf16.msra.mxu0 %v7172
  %7379 = vmatpush.bf16.msra.mxu0 %v7168
  %7380 = vmatpush.bf16.msra.mxu0 %v7164
  %7381 = vmatmul.bf16.gmra.mxu0 %v6965
  %v7382 = vpop.f32.mrf.mxu0
  %v7383 = vadd.f32 0.0, %v7382
  %v7384 = vpop.f32.mrf.mxu0
  %v7385 = vadd.f32 0.0, %v7384
  %7386 = vdwg.mxu0
  %7387 = vmatpush.bf16.msra.mxu0 %v7224
  %7388 = vmatpush.bf16.msra.mxu0 %v7220
  %7389 = vmatpush.bf16.msra.mxu0 %v7216
  %7390 = vmatpush.bf16.msra.mxu0 %v7212
  %7391 = vmatpush.bf16.msra.mxu0 %v7208
  %7392 = vmatpush.bf16.msra.mxu0 %v7204
  %7393 = vmatpush.bf16.msra.mxu0 %v7200
  %7394 = vmatpush.bf16.msra.mxu0 %v7196
  %7395 = vmatmul.bf16.gmra.mxu0 %v6966
  %v7396 = vpop.f32.mrf.mxu0
  %v7397 = vadd.f32 %v7383, %v7396
  %v7398 = vpop.f32.mrf.mxu0
  %v7399 = vadd.f32 %v7385, %v7398
  %7400 = vdwg.mxu0
  %v7401 = vadd.f32 %v6886, %v7313
  %v7402 = vadd.f32 %v6887, %v7341
  %v7403 = vadd.f32 %v6888, %v7369
  %v7404 = vadd.f32 %v6889, %v7397
  %v7405 = vadd.f32 %v6890, %v7315
  %v7406 = vadd.f32 %v6891, %v7343
  %v7407 = vadd.f32 %v6892, %v7371
  %v7408 = vadd.f32 %v6893, %v7399
  %s7409 = scalar_lea.vmem %s9, 2048
  %v7410 = vld [vmem:[%s7409] sm:$0xff]
  %v7411 = vld [vmem:[%s7409 + $0x8] sm:$0xff]
  %v7412 = vld [vmem:[%s7409 + $0x10] sm:$0xff]
  %v7413 = vld [vmem:[%s7409 + $0x18] sm:$0xff]
  %v7414 = vld [vmem:[%s7409 + $0x20] sm:$0xff]
  %v7415 = vld [vmem:[%s7409 + $0x28] sm:$0xff]
  %v7416 = vld [vmem:[%s7409 + $0x30] sm:$0xff]
  %v7417 = vld [vmem:[%s7409 + $0x38] sm:$0xff]
  %v7418 = vld [vmem:[%s7409 + $0x40] sm:$0xff]
  %v7419 = vld [vmem:[%s7409 + $0x48] sm:$0xff]
  %v7420 = vld [vmem:[%s7409 + $0x50] sm:$0xff]
  %v7421 = vld [vmem:[%s7409 + $0x58] sm:$0xff]
  %v7422 = vld [vmem:[%s7409 + $0x60] sm:$0xff]
  %v7423 = vld [vmem:[%s7409 + $0x68] sm:$0xff]
  %v7424 = vld [vmem:[%s7409 + $0x70] sm:$0xff]
  %v7425 = vld [vmem:[%s7409 + $0x78] sm:$0xff]
  %v7426 = vld [vmem:[%s7409 + $0x80] sm:$0xff]
  %v7427 = vld [vmem:[%s7409 + $0x88] sm:$0xff]
  %v7428 = vld [vmem:[%s7409 + $0x90] sm:$0xff]
  %v7429 = vld [vmem:[%s7409 + $0x98] sm:$0xff]
  %v7430 = vld [vmem:[%s7409 + $0xa0] sm:$0xff]
  %v7431 = vld [vmem:[%s7409 + $0xa8] sm:$0xff]
  %v7432 = vld [vmem:[%s7409 + $0xb0] sm:$0xff]
  %v7433 = vld [vmem:[%s7409 + $0xb8] sm:$0xff]
  %v7434 = vld [vmem:[%s7409 + $0xc0] sm:$0xff]
  %v7435 = vld [vmem:[%s7409 + $0xc8] sm:$0xff]
  %v7436 = vld [vmem:[%s7409 + $0xd0] sm:$0xff]
  %v7437 = vld [vmem:[%s7409 + $0xd8] sm:$0xff]
  %v7438 = vld [vmem:[%s7409 + $0xe0] sm:$0xff]
  %v7439 = vld [vmem:[%s7409 + $0xe8] sm:$0xff]
  %v7440 = vld [vmem:[%s7409 + $0xf0] sm:$0xff]
  %v7441 = vld [vmem:[%s7409 + $0xf8] sm:$0xff]
  %v7442 = vld [vmem:[%s7409 + $0x100] sm:$0xff]
  %v7443 = vld [vmem:[%s7409 + $0x108] sm:$0xff]
  %v7444 = vld [vmem:[%s7409 + $0x110] sm:$0xff]
  %v7445 = vld [vmem:[%s7409 + $0x118] sm:$0xff]
  %v7446 = vld [vmem:[%s7409 + $0x120] sm:$0xff]
  %v7447 = vld [vmem:[%s7409 + $0x128] sm:$0xff]
  %v7448 = vld [vmem:[%s7409 + $0x130] sm:$0xff]
  %v7449 = vld [vmem:[%s7409 + $0x138] sm:$0xff]
  %v7450 = vld [vmem:[%s7409 + $0x140] sm:$0xff]
  %v7451 = vld [vmem:[%s7409 + $0x148] sm:$0xff]
  %v7452 = vld [vmem:[%s7409 + $0x150] sm:$0xff]
  %v7453 = vld [vmem:[%s7409 + $0x158] sm:$0xff]
  %v7454 = vld [vmem:[%s7409 + $0x160] sm:$0xff]
  %v7455 = vld [vmem:[%s7409 + $0x168] sm:$0xff]
  %v7456 = vld [vmem:[%s7409 + $0x170] sm:$0xff]
  %v7457 = vld [vmem:[%s7409 + $0x178] sm:$0xff]
  %v7458 = vld [vmem:[%s7409 + $0x180] sm:$0xff]
  %v7459 = vld [vmem:[%s7409 + $0x188] sm:$0xff]
  %v7460 = vld [vmem:[%s7409 + $0x190] sm:$0xff]
  %v7461 = vld [vmem:[%s7409 + $0x198] sm:$0xff]
  %v7462 = vld [vmem:[%s7409 + $0x1a0] sm:$0xff]
  %v7463 = vld [vmem:[%s7409 + $0x1a8] sm:$0xff]
  %v7464 = vld [vmem:[%s7409 + $0x1b0] sm:$0xff]
  %v7465 = vld [vmem:[%s7409 + $0x1b8] sm:$0xff]
  %v7466 = vld [vmem:[%s7409 + $0x1c0] sm:$0xff]
  %v7467 = vld [vmem:[%s7409 + $0x1c8] sm:$0xff]
  %v7468 = vld [vmem:[%s7409 + $0x1d0] sm:$0xff]
  %v7469 = vld [vmem:[%s7409 + $0x1d8] sm:$0xff]
  %v7470 = vld [vmem:[%s7409 + $0x1e0] sm:$0xff]
  %v7471 = vld [vmem:[%s7409 + $0x1e8] sm:$0xff]
  %v7472 = vld [vmem:[%s7409 + $0x1f0] sm:$0xff]
  %v7473 = vld [vmem:[%s7409 + $0x1f8] sm:$0xff]
  %v7476 = vunpack.c.l.b16 %v5356
  %v7477 = vunpack.c.h.b16 %v5356
  %v7478 = vunpack.c.l.b16 %v5357
  %v7479 = vunpack.c.h.b16 %v5357
  %v7480 = vpack.c.b16 %v7478, %v7476
  %v7481 = vpack.c.b16 %v7479, %v7477
  %v7548 = vunpack.c.l.b16 %v7410
  %v7549 = vunpack.c.h.b16 %v7410
  %v7550 = vunpack.c.l.b16 %v7411
  %v7551 = vunpack.c.h.b16 %v7411
  %v7552 = vunpack.c.l.b16 %v7412
  %v7553 = vunpack.c.h.b16 %v7412
  %v7554 = vunpack.c.l.b16 %v7413
  %v7555 = vunpack.c.h.b16 %v7413
  %v7556 = vunpack.c.l.b16 %v7414
  %v7557 = vunpack.c.h.b16 %v7414
  %v7558 = vunpack.c.l.b16 %v7415
  %v7559 = vunpack.c.h.b16 %v7415
  %v7560 = vunpack.c.l.b16 %v7416
  %v7561 = vunpack.c.h.b16 %v7416
  %v7562 = vunpack.c.l.b16 %v7417
  %v7563 = vunpack.c.h.b16 %v7417
  %v7564 = vunpack.c.l.b16 %v7418
  %v7565 = vunpack.c.h.b16 %v7418
  %v7566 = vunpack.c.l.b16 %v7419
  %v7567 = vunpack.c.h.b16 %v7419
  %v7568 = vunpack.c.l.b16 %v7420
  %v7569 = vunpack.c.h.b16 %v7420
  %v7570 = vunpack.c.l.b16 %v7421
  %v7571 = vunpack.c.h.b16 %v7421
  %v7572 = vunpack.c.l.b16 %v7422
  %v7573 = vunpack.c.h.b16 %v7422
  %v7574 = vunpack.c.l.b16 %v7423
  %v7575 = vunpack.c.h.b16 %v7423
  %v7576 = vunpack.c.l.b16 %v7424
  %v7577 = vunpack.c.h.b16 %v7424
  %v7578 = vunpack.c.l.b16 %v7425
  %v7579 = vunpack.c.h.b16 %v7425
  %v7580 = vunpack.c.l.b16 %v7426
  %v7581 = vunpack.c.h.b16 %v7426
  %v7582 = vunpack.c.l.b16 %v7427
  %v7583 = vunpack.c.h.b16 %v7427
  %v7584 = vunpack.c.l.b16 %v7428
  %v7585 = vunpack.c.h.b16 %v7428
  %v7586 = vunpack.c.l.b16 %v7429
  %v7587 = vunpack.c.h.b16 %v7429
  %v7588 = vunpack.c.l.b16 %v7430
  %v7589 = vunpack.c.h.b16 %v7430
  %v7590 = vunpack.c.l.b16 %v7431
  %v7591 = vunpack.c.h.b16 %v7431
  %v7592 = vunpack.c.l.b16 %v7432
  %v7593 = vunpack.c.h.b16 %v7432
  %v7594 = vunpack.c.l.b16 %v7433
  %v7595 = vunpack.c.h.b16 %v7433
  %v7596 = vunpack.c.l.b16 %v7434
  %v7597 = vunpack.c.h.b16 %v7434
  %v7598 = vunpack.c.l.b16 %v7435
  %v7599 = vunpack.c.h.b16 %v7435
  %v7600 = vunpack.c.l.b16 %v7436
  %v7601 = vunpack.c.h.b16 %v7436
  %v7602 = vunpack.c.l.b16 %v7437
  %v7603 = vunpack.c.h.b16 %v7437
  %v7604 = vunpack.c.l.b16 %v7438
  %v7605 = vunpack.c.h.b16 %v7438
  %v7606 = vunpack.c.l.b16 %v7439
  %v7607 = vunpack.c.h.b16 %v7439
  %v7608 = vunpack.c.l.b16 %v7440
  %v7609 = vunpack.c.h.b16 %v7440
  %v7610 = vunpack.c.l.b16 %v7441
  %v7611 = vunpack.c.h.b16 %v7441
  %v7612 = vunpack.c.l.b16 %v7442
  %v7613 = vunpack.c.h.b16 %v7442
  %v7614 = vunpack.c.l.b16 %v7443
  %v7615 = vunpack.c.h.b16 %v7443
  %v7616 = vunpack.c.l.b16 %v7444
  %v7617 = vunpack.c.h.b16 %v7444
  %v7618 = vunpack.c.l.b16 %v7445
  %v7619 = vunpack.c.h.b16 %v7445
  %v7620 = vunpack.c.l.b16 %v7446
  %v7621 = vunpack.c.h.b16 %v7446
  %v7622 = vunpack.c.l.b16 %v7447
  %v7623 = vunpack.c.h.b16 %v7447
  %v7624 = vunpack.c.l.b16 %v7448
  %v7625 = vunpack.c.h.b16 %v7448
  %v7626 = vunpack.c.l.b16 %v7449
  %v7627 = vunpack.c.h.b16 %v7449
  %v7628 = vunpack.c.l.b16 %v7450
  %v7629 = vunpack.c.h.b16 %v7450
  %v7630 = vunpack.c.l.b16 %v7451
  %v7631 = vunpack.c.h.b16 %v7451
  %v7632 = vunpack.c.l.b16 %v7452
  %v7633 = vunpack.c.h.b16 %v7452
  %v7634 = vunpack.c.l.b16 %v7453
  %v7635 = vunpack.c.h.b16 %v7453
  %v7636 = vunpack.c.l.b16 %v7454
  %v7637 = vunpack.c.h.b16 %v7454
  %v7638 = vunpack.c.l.b16 %v7455
  %v7639 = vunpack.c.h.b16 %v7455
  %v7640 = vunpack.c.l.b16 %v7456
  %v7641 = vunpack.c.h.b16 %v7456
  %v7642 = vunpack.c.l.b16 %v7457
  %v7643 = vunpack.c.h.b16 %v7457
  %v7644 = vunpack.c.l.b16 %v7458
  %v7645 = vunpack.c.h.b16 %v7458
  %v7646 = vunpack.c.l.b16 %v7459
  %v7647 = vunpack.c.h.b16 %v7459
  %v7648 = vunpack.c.l.b16 %v7460
  %v7649 = vunpack.c.h.b16 %v7460
  %v7650 = vunpack.c.l.b16 %v7461
  %v7651 = vunpack.c.h.b16 %v7461
  %v7652 = vunpack.c.l.b16 %v7462
  %v7653 = vunpack.c.h.b16 %v7462
  %v7654 = vunpack.c.l.b16 %v7463
  %v7655 = vunpack.c.h.b16 %v7463
  %v7656 = vunpack.c.l.b16 %v7464
  %v7657 = vunpack.c.h.b16 %v7464
  %v7658 = vunpack.c.l.b16 %v7465
  %v7659 = vunpack.c.h.b16 %v7465
  %v7660 = vunpack.c.l.b16 %v7466
  %v7661 = vunpack.c.h.b16 %v7466
  %v7662 = vunpack.c.l.b16 %v7467
  %v7663 = vunpack.c.h.b16 %v7467
  %v7664 = vunpack.c.l.b16 %v7468
  %v7665 = vunpack.c.h.b16 %v7468
  %v7666 = vunpack.c.l.b16 %v7469
  %v7667 = vunpack.c.h.b16 %v7469
  %v7668 = vunpack.c.l.b16 %v7470
  %v7669 = vunpack.c.h.b16 %v7470
  %v7670 = vunpack.c.l.b16 %v7471
  %v7671 = vunpack.c.h.b16 %v7471
  %v7672 = vunpack.c.l.b16 %v7472
  %v7673 = vunpack.c.h.b16 %v7472
  %v7674 = vunpack.c.l.b16 %v7473
  %v7675 = vunpack.c.h.b16 %v7473
  %v7676 = vpack.c.b16 %v7552, %v7548
  %v7677 = vpack.c.b16 %v7553, %v7549
  %v7678 = vpack.c.b16 %v7554, %v7550
  %v7679 = vpack.c.b16 %v7555, %v7551
  %v7680 = vpack.c.b16 %v7560, %v7556
  %v7681 = vpack.c.b16 %v7561, %v7557
  %v7682 = vpack.c.b16 %v7562, %v7558
  %v7683 = vpack.c.b16 %v7563, %v7559
  %v7684 = vpack.c.b16 %v7568, %v7564
  %v7685 = vpack.c.b16 %v7569, %v7565
  %v7686 = vpack.c.b16 %v7570, %v7566
  %v7687 = vpack.c.b16 %v7571, %v7567
  %v7688 = vpack.c.b16 %v7576, %v7572
  %v7689 = vpack.c.b16 %v7577, %v7573
  %v7690 = vpack.c.b16 %v7578, %v7574
  %v7691 = vpack.c.b16 %v7579, %v7575
  %v7692 = vpack.c.b16 %v7584, %v7580
  %v7693 = vpack.c.b16 %v7585, %v7581
  %v7694 = vpack.c.b16 %v7586, %v7582
  %v7695 = vpack.c.b16 %v7587, %v7583
  %v7696 = vpack.c.b16 %v7592, %v7588
  %v7697 = vpack.c.b16 %v7593, %v7589
  %v7698 = vpack.c.b16 %v7594, %v7590
  %v7699 = vpack.c.b16 %v7595, %v7591
  %v7700 = vpack.c.b16 %v7600, %v7596
  %v7701 = vpack.c.b16 %v7601, %v7597
  %v7702 = vpack.c.b16 %v7602, %v7598
  %v7703 = vpack.c.b16 %v7603, %v7599
  %v7704 = vpack.c.b16 %v7608, %v7604
  %v7705 = vpack.c.b16 %v7609, %v7605
  %v7706 = vpack.c.b16 %v7610, %v7606
  %v7707 = vpack.c.b16 %v7611, %v7607
  %v7708 = vpack.c.b16 %v7616, %v7612
  %v7709 = vpack.c.b16 %v7617, %v7613
  %v7710 = vpack.c.b16 %v7618, %v7614
  %v7711 = vpack.c.b16 %v7619, %v7615
  %v7712 = vpack.c.b16 %v7624, %v7620
  %v7713 = vpack.c.b16 %v7625, %v7621
  %v7714 = vpack.c.b16 %v7626, %v7622
  %v7715 = vpack.c.b16 %v7627, %v7623
  %v7716 = vpack.c.b16 %v7632, %v7628
  %v7717 = vpack.c.b16 %v7633, %v7629
  %v7718 = vpack.c.b16 %v7634, %v7630
  %v7719 = vpack.c.b16 %v7635, %v7631
  %v7720 = vpack.c.b16 %v7640, %v7636
  %v7721 = vpack.c.b16 %v7641, %v7637
  %v7722 = vpack.c.b16 %v7642, %v7638
  %v7723 = vpack.c.b16 %v7643, %v7639
  %v7724 = vpack.c.b16 %v7648, %v7644
  %v7725 = vpack.c.b16 %v7649, %v7645
  %v7726 = vpack.c.b16 %v7650, %v7646
  %v7727 = vpack.c.b16 %v7651, %v7647
  %v7728 = vpack.c.b16 %v7656, %v7652
  %v7729 = vpack.c.b16 %v7657, %v7653
  %v7730 = vpack.c.b16 %v7658, %v7654
  %v7731 = vpack.c.b16 %v7659, %v7655
  %v7732 = vpack.c.b16 %v7664, %v7660
  %v7733 = vpack.c.b16 %v7665, %v7661
  %v7734 = vpack.c.b16 %v7666, %v7662
  %v7735 = vpack.c.b16 %v7667, %v7663
  %v7736 = vpack.c.b16 %v7672, %v7668
  %v7737 = vpack.c.b16 %v7673, %v7669
  %v7738 = vpack.c.b16 %v7674, %v7670
  %v7739 = vpack.c.b16 %v7675, %v7671
  %7804 = vmatpush.bf16.msra.mxu0 %v7704
  %7805 = vmatpush.bf16.msra.mxu0 %v7700
  %7806 = vmatpush.bf16.msra.mxu0 %v7696
  %7807 = vmatpush.bf16.msra.mxu0 %v7692
  %7808 = vmatpush.bf16.msra.mxu0 %v7688
  %7809 = vmatpush.bf16.msra.mxu0 %v7684
  %7810 = vmatpush.bf16.msra.mxu0 %v7680
  %7811 = vmatpush.bf16.msra.mxu0 %v7676
  %7812 = vmatmul.bf16.gmra.mxu0 %v7480
  %v7813 = vpop.f32.mrf.mxu0
  %v7814 = vadd.f32 0.0, %v7813
  %v7815 = vpop.f32.mrf.mxu0
  %v7816 = vadd.f32 0.0, %v7815
  %7817 = vdwg.mxu0
  %7818 = vmatpush.bf16.msra.mxu0 %v7736
  %7819 = vmatpush.bf16.msra.mxu0 %v7732
  %7820 = vmatpush.bf16.msra.mxu0 %v7728
  %7821 = vmatpush.bf16.msra.mxu0 %v7724
  %7822 = vmatpush.bf16.msra.mxu0 %v7720
  %7823 = vmatpush.bf16.msra.mxu0 %v7716
  %7824 = vmatpush.bf16.msra.mxu0 %v7712
  %7825 = vmatpush.bf16.msra.mxu0 %v7708
  %7826 = vmatmul.bf16.gmra.mxu0 %v7481
  %v7827 = vpop.f32.mrf.mxu0
  %v7828 = vadd.f32 %v7814, %v7827
  %v7829 = vpop.f32.mrf.mxu0
  %v7830 = vadd.f32 %v7816, %v7829
  %7831 = vdwg.mxu0
  %7832 = vmatpush.bf16.msra.mxu0 %v7705
  %7833 = vmatpush.bf16.msra.mxu0 %v7701
  %7834 = vmatpush.bf16.msra.mxu0 %v7697
  %7835 = vmatpush.bf16.msra.mxu0 %v7693
  %7836 = vmatpush.bf16.msra.mxu0 %v7689
  %7837 = vmatpush.bf16.msra.mxu0 %v7685
  %7838 = vmatpush.bf16.msra.mxu0 %v7681
  %7839 = vmatpush.bf16.msra.mxu0 %v7677
  %7840 = vmatmul.bf16.gmra.mxu0 %v7480
  %v7841 = vpop.f32.mrf.mxu0
  %v7842 = vadd.f32 0.0, %v7841
  %v7843 = vpop.f32.mrf.mxu0
  %v7844 = vadd.f32 0.0, %v7843
  %7845 = vdwg.mxu0
  %7846 = vmatpush.bf16.msra.mxu0 %v7737
  %7847 = vmatpush.bf16.msra.mxu0 %v7733
  %7848 = vmatpush.bf16.msra.mxu0 %v7729
  %7849 = vmatpush.bf16.msra.mxu0 %v7725
  %7850 = vmatpush.bf16.msra.mxu0 %v7721
  %7851 = vmatpush.bf16.msra.mxu0 %v7717
  %7852 = vmatpush.bf16.msra.mxu0 %v7713
  %7853 = vmatpush.bf16.msra.mxu0 %v7709
  %7854 = vmatmul.bf16.gmra.mxu0 %v7481
  %v7855 = vpop.f32.mrf.mxu0
  %v7856 = vadd.f32 %v7842, %v7855
  %v7857 = vpop.f32.mrf.mxu0
  %v7858 = vadd.f32 %v7844, %v7857
  %7859 = vdwg.mxu0
  %7860 = vmatpush.bf16.msra.mxu0 %v7706
  %7861 = vmatpush.bf16.msra.mxu0 %v7702
  %7862 = vmatpush.bf16.msra.mxu0 %v7698
  %7863 = vmatpush.bf16.msra.mxu0 %v7694
  %7864 = vmatpush.bf16.msra.mxu0 %v7690
  %7865 = vmatpush.bf16.msra.mxu0 %v7686
  %7866 = vmatpush.bf16.msra.mxu0 %v7682
  %7867 = vmatpush.bf16.msra.mxu0 %v7678
  %7868 = vmatmul.bf16.gmra.mxu0 %v7480
  %v7869 = vpop.f32.mrf.mxu0
  %v7870 = vadd.f32 0.0, %v7869
  %v7871 = vpop.f32.mrf.mxu0
  %v7872 = vadd.f32 0.0, %v7871
  %7873 = vdwg.mxu0
  %7874 = vmatpush.bf16.msra.mxu0 %v7738
  %7875 = vmatpush.bf16.msra.mxu0 %v7734
  %7876 = vmatpush.bf16.msra.mxu0 %v7730
  %7877 = vmatpush.bf16.msra.mxu0 %v7726
  %7878 = vmatpush.bf16.msra.mxu0 %v7722
  %7879 = vmatpush.bf16.msra.mxu0 %v7718
  %7880 = vmatpush.bf16.msra.mxu0 %v7714
  %7881 = vmatpush.bf16.msra.mxu0 %v7710
  %7882 = vmatmul.bf16.gmra.mxu0 %v7481
  %v7883 = vpop.f32.mrf.mxu0
  %v7884 = vadd.f32 %v7870, %v7883
  %v7885 = vpop.f32.mrf.mxu0
  %v7886 = vadd.f32 %v7872, %v7885
  %7887 = vdwg.mxu0
  %7888 = vmatpush.bf16.msra.mxu0 %v7707
  %7889 = vmatpush.bf16.msra.mxu0 %v7703
  %7890 = vmatpush.bf16.msra.mxu0 %v7699
  %7891 = vmatpush.bf16.msra.mxu0 %v7695
  %7892 = vmatpush.bf16.msra.mxu0 %v7691
  %7893 = vmatpush.bf16.msra.mxu0 %v7687
  %7894 = vmatpush.bf16.msra.mxu0 %v7683
  %7895 = vmatpush.bf16.msra.mxu0 %v7679
  %7896 = vmatmul.bf16.gmra.mxu0 %v7480
  %v7897 = vpop.f32.mrf.mxu0
  %v7898 = vadd.f32 0.0, %v7897
  %v7899 = vpop.f32.mrf.mxu0
  %v7900 = vadd.f32 0.0, %v7899
  %7901 = vdwg.mxu0
  %7902 = vmatpush.bf16.msra.mxu0 %v7739
  %7903 = vmatpush.bf16.msra.mxu0 %v7735
  %7904 = vmatpush.bf16.msra.mxu0 %v7731
  %7905 = vmatpush.bf16.msra.mxu0 %v7727
  %7906 = vmatpush.bf16.msra.mxu0 %v7723
  %7907 = vmatpush.bf16.msra.mxu0 %v7719
  %7908 = vmatpush.bf16.msra.mxu0 %v7715
  %7909 = vmatpush.bf16.msra.mxu0 %v7711
  %7910 = vmatmul.bf16.gmra.mxu0 %v7481
  %v7911 = vpop.f32.mrf.mxu0
  %v7912 = vadd.f32 %v7898, %v7911
  %v7913 = vpop.f32.mrf.mxu0
  %v7914 = vadd.f32 %v7900, %v7913
  %7915 = vdwg.mxu0
  %v7916 = vadd.f32 %v7401, %v7828
  %v7917 = vadd.f32 %v7402, %v7856
  %v7918 = vadd.f32 %v7403, %v7884
  %v7919 = vadd.f32 %v7404, %v7912
  %v7920 = vadd.f32 %v7405, %v7830
  %v7921 = vadd.f32 %v7406, %v7858
  %v7922 = vadd.f32 %v7407, %v7886
  %v7923 = vadd.f32 %v7408, %v7914
  %s7924 = scalar_lea.vmem %s9, 2560
  %v7925 = vld [vmem:[%s7924] sm:$0xff]
  %v7926 = vld [vmem:[%s7924 + $0x8] sm:$0xff]
  %v7927 = vld [vmem:[%s7924 + $0x10] sm:$0xff]
  %v7928 = vld [vmem:[%s7924 + $0x18] sm:$0xff]
  %v7929 = vld [vmem:[%s7924 + $0x20] sm:$0xff]
  %v7930 = vld [vmem:[%s7924 + $0x28] sm:$0xff]
  %v7931 = vld [vmem:[%s7924 + $0x30] sm:$0xff]
  %v7932 = vld [vmem:[%s7924 + $0x38] sm:$0xff]
  %v7933 = vld [vmem:[%s7924 + $0x40] sm:$0xff]
  %v7934 = vld [vmem:[%s7924 + $0x48] sm:$0xff]
  %v7935 = vld [vmem:[%s7924 + $0x50] sm:$0xff]
  %v7936 = vld [vmem:[%s7924 + $0x58] sm:$0xff]
  %v7937 = vld [vmem:[%s7924 + $0x60] sm:$0xff]
  %v7938 = vld [vmem:[%s7924 + $0x68] sm:$0xff]
  %v7939 = vld [vmem:[%s7924 + $0x70] sm:$0xff]
  %v7940 = vld [vmem:[%s7924 + $0x78] sm:$0xff]
  %v7941 = vld [vmem:[%s7924 + $0x80] sm:$0xff]
  %v7942 = vld [vmem:[%s7924 + $0x88] sm:$0xff]
  %v7943 = vld [vmem:[%s7924 + $0x90] sm:$0xff]
  %v7944 = vld [vmem:[%s7924 + $0x98] sm:$0xff]
  %v7945 = vld [vmem:[%s7924 + $0xa0] sm:$0xff]
  %v7946 = vld [vmem:[%s7924 + $0xa8] sm:$0xff]
  %v7947 = vld [vmem:[%s7924 + $0xb0] sm:$0xff]
  %v7948 = vld [vmem:[%s7924 + $0xb8] sm:$0xff]
  %v7949 = vld [vmem:[%s7924 + $0xc0] sm:$0xff]
  %v7950 = vld [vmem:[%s7924 + $0xc8] sm:$0xff]
  %v7951 = vld [vmem:[%s7924 + $0xd0] sm:$0xff]
  %v7952 = vld [vmem:[%s7924 + $0xd8] sm:$0xff]
  %v7953 = vld [vmem:[%s7924 + $0xe0] sm:$0xff]
  %v7954 = vld [vmem:[%s7924 + $0xe8] sm:$0xff]
  %v7955 = vld [vmem:[%s7924 + $0xf0] sm:$0xff]
  %v7956 = vld [vmem:[%s7924 + $0xf8] sm:$0xff]
  %v7957 = vld [vmem:[%s7924 + $0x100] sm:$0xff]
  %v7958 = vld [vmem:[%s7924 + $0x108] sm:$0xff]
  %v7959 = vld [vmem:[%s7924 + $0x110] sm:$0xff]
  %v7960 = vld [vmem:[%s7924 + $0x118] sm:$0xff]
  %v7961 = vld [vmem:[%s7924 + $0x120] sm:$0xff]
  %v7962 = vld [vmem:[%s7924 + $0x128] sm:$0xff]
  %v7963 = vld [vmem:[%s7924 + $0x130] sm:$0xff]
  %v7964 = vld [vmem:[%s7924 + $0x138] sm:$0xff]
  %v7965 = vld [vmem:[%s7924 + $0x140] sm:$0xff]
  %v7966 = vld [vmem:[%s7924 + $0x148] sm:$0xff]
  %v7967 = vld [vmem:[%s7924 + $0x150] sm:$0xff]
  %v7968 = vld [vmem:[%s7924 + $0x158] sm:$0xff]
  %v7969 = vld [vmem:[%s7924 + $0x160] sm:$0xff]
  %v7970 = vld [vmem:[%s7924 + $0x168] sm:$0xff]
  %v7971 = vld [vmem:[%s7924 + $0x170] sm:$0xff]
  %v7972 = vld [vmem:[%s7924 + $0x178] sm:$0xff]
  %v7973 = vld [vmem:[%s7924 + $0x180] sm:$0xff]
  %v7974 = vld [vmem:[%s7924 + $0x188] sm:$0xff]
  %v7975 = vld [vmem:[%s7924 + $0x190] sm:$0xff]
  %v7976 = vld [vmem:[%s7924 + $0x198] sm:$0xff]
  %v7977 = vld [vmem:[%s7924 + $0x1a0] sm:$0xff]
  %v7978 = vld [vmem:[%s7924 + $0x1a8] sm:$0xff]
  %v7979 = vld [vmem:[%s7924 + $0x1b0] sm:$0xff]
  %v7980 = vld [vmem:[%s7924 + $0x1b8] sm:$0xff]
  %v7981 = vld [vmem:[%s7924 + $0x1c0] sm:$0xff]
  %v7982 = vld [vmem:[%s7924 + $0x1c8] sm:$0xff]
  %v7983 = vld [vmem:[%s7924 + $0x1d0] sm:$0xff]
  %v7984 = vld [vmem:[%s7924 + $0x1d8] sm:$0xff]
  %v7985 = vld [vmem:[%s7924 + $0x1e0] sm:$0xff]
  %v7986 = vld [vmem:[%s7924 + $0x1e8] sm:$0xff]
  %v7987 = vld [vmem:[%s7924 + $0x1f0] sm:$0xff]
  %v7988 = vld [vmem:[%s7924 + $0x1f8] sm:$0xff]
  %v7991 = vunpack.c.l.b16 %v5358
  %v7992 = vunpack.c.h.b16 %v5358
  %v7993 = vunpack.c.l.b16 %v5359
  %v7994 = vunpack.c.h.b16 %v5359
  %v7995 = vpack.c.b16 %v7993, %v7991
  %v7996 = vpack.c.b16 %v7994, %v7992
  %v8063 = vunpack.c.l.b16 %v7925
  %v8064 = vunpack.c.h.b16 %v7925
  %v8065 = vunpack.c.l.b16 %v7926
  %v8066 = vunpack.c.h.b16 %v7926
  %v8067 = vunpack.c.l.b16 %v7927
  %v8068 = vunpack.c.h.b16 %v7927
  %v8069 = vunpack.c.l.b16 %v7928
  %v8070 = vunpack.c.h.b16 %v7928
  %v8071 = vunpack.c.l.b16 %v7929
  %v8072 = vunpack.c.h.b16 %v7929
  %v8073 = vunpack.c.l.b16 %v7930
  %v8074 = vunpack.c.h.b16 %v7930
  %v8075 = vunpack.c.l.b16 %v7931
  %v8076 = vunpack.c.h.b16 %v7931
  %v8077 = vunpack.c.l.b16 %v7932
  %v8078 = vunpack.c.h.b16 %v7932
  %v8079 = vunpack.c.l.b16 %v7933
  %v8080 = vunpack.c.h.b16 %v7933
  %v8081 = vunpack.c.l.b16 %v7934
  %v8082 = vunpack.c.h.b16 %v7934
  %v8083 = vunpack.c.l.b16 %v7935
  %v8084 = vunpack.c.h.b16 %v7935
  %v8085 = vunpack.c.l.b16 %v7936
  %v8086 = vunpack.c.h.b16 %v7936
  %v8087 = vunpack.c.l.b16 %v7937
  %v8088 = vunpack.c.h.b16 %v7937
  %v8089 = vunpack.c.l.b16 %v7938
  %v8090 = vunpack.c.h.b16 %v7938
  %v8091 = vunpack.c.l.b16 %v7939
  %v8092 = vunpack.c.h.b16 %v7939
  %v8093 = vunpack.c.l.b16 %v7940
  %v8094 = vunpack.c.h.b16 %v7940
  %v8095 = vunpack.c.l.b16 %v7941
  %v8096 = vunpack.c.h.b16 %v7941
  %v8097 = vunpack.c.l.b16 %v7942
  %v8098 = vunpack.c.h.b16 %v7942
  %v8099 = vunpack.c.l.b16 %v7943
  %v8100 = vunpack.c.h.b16 %v7943
  %v8101 = vunpack.c.l.b16 %v7944
  %v8102 = vunpack.c.h.b16 %v7944
  %v8103 = vunpack.c.l.b16 %v7945
  %v8104 = vunpack.c.h.b16 %v7945
  %v8105 = vunpack.c.l.b16 %v7946
  %v8106 = vunpack.c.h.b16 %v7946
  %v8107 = vunpack.c.l.b16 %v7947
  %v8108 = vunpack.c.h.b16 %v7947
  %v8109 = vunpack.c.l.b16 %v7948
  %v8110 = vunpack.c.h.b16 %v7948
  %v8111 = vunpack.c.l.b16 %v7949
  %v8112 = vunpack.c.h.b16 %v7949
  %v8113 = vunpack.c.l.b16 %v7950
  %v8114 = vunpack.c.h.b16 %v7950
  %v8115 = vunpack.c.l.b16 %v7951
  %v8116 = vunpack.c.h.b16 %v7951
  %v8117 = vunpack.c.l.b16 %v7952
  %v8118 = vunpack.c.h.b16 %v7952
  %v8119 = vunpack.c.l.b16 %v7953
  %v8120 = vunpack.c.h.b16 %v7953
  %v8121 = vunpack.c.l.b16 %v7954
  %v8122 = vunpack.c.h.b16 %v7954
  %v8123 = vunpack.c.l.b16 %v7955
  %v8124 = vunpack.c.h.b16 %v7955
  %v8125 = vunpack.c.l.b16 %v7956
  %v8126 = vunpack.c.h.b16 %v7956
  %v8127 = vunpack.c.l.b16 %v7957
  %v8128 = vunpack.c.h.b16 %v7957
  %v8129 = vunpack.c.l.b16 %v7958
  %v8130 = vunpack.c.h.b16 %v7958
  %v8131 = vunpack.c.l.b16 %v7959
  %v8132 = vunpack.c.h.b16 %v7959
  %v8133 = vunpack.c.l.b16 %v7960
  %v8134 = vunpack.c.h.b16 %v7960
  %v8135 = vunpack.c.l.b16 %v7961
  %v8136 = vunpack.c.h.b16 %v7961
  %v8137 = vunpack.c.l.b16 %v7962
  %v8138 = vunpack.c.h.b16 %v7962
  %v8139 = vunpack.c.l.b16 %v7963
  %v8140 = vunpack.c.h.b16 %v7963
  %v8141 = vunpack.c.l.b16 %v7964
  %v8142 = vunpack.c.h.b16 %v7964
  %v8143 = vunpack.c.l.b16 %v7965
  %v8144 = vunpack.c.h.b16 %v7965
  %v8145 = vunpack.c.l.b16 %v7966
  %v8146 = vunpack.c.h.b16 %v7966
  %v8147 = vunpack.c.l.b16 %v7967
  %v8148 = vunpack.c.h.b16 %v7967
  %v8149 = vunpack.c.l.b16 %v7968
  %v8150 = vunpack.c.h.b16 %v7968
  %v8151 = vunpack.c.l.b16 %v7969
  %v8152 = vunpack.c.h.b16 %v7969
  %v8153 = vunpack.c.l.b16 %v7970
  %v8154 = vunpack.c.h.b16 %v7970
  %v8155 = vunpack.c.l.b16 %v7971
  %v8156 = vunpack.c.h.b16 %v7971
  %v8157 = vunpack.c.l.b16 %v7972
  %v8158 = vunpack.c.h.b16 %v7972
  %v8159 = vunpack.c.l.b16 %v7973
  %v8160 = vunpack.c.h.b16 %v7973
  %v8161 = vunpack.c.l.b16 %v7974
  %v8162 = vunpack.c.h.b16 %v7974
  %v8163 = vunpack.c.l.b16 %v7975
  %v8164 = vunpack.c.h.b16 %v7975
  %v8165 = vunpack.c.l.b16 %v7976
  %v8166 = vunpack.c.h.b16 %v7976
  %v8167 = vunpack.c.l.b16 %v7977
  %v8168 = vunpack.c.h.b16 %v7977
  %v8169 = vunpack.c.l.b16 %v7978
  %v8170 = vunpack.c.h.b16 %v7978
  %v8171 = vunpack.c.l.b16 %v7979
  %v8172 = vunpack.c.h.b16 %v7979
  %v8173 = vunpack.c.l.b16 %v7980
  %v8174 = vunpack.c.h.b16 %v7980
  %v8175 = vunpack.c.l.b16 %v7981
  %v8176 = vunpack.c.h.b16 %v7981
  %v8177 = vunpack.c.l.b16 %v7982
  %v8178 = vunpack.c.h.b16 %v7982
  %v8179 = vunpack.c.l.b16 %v7983
  %v8180 = vunpack.c.h.b16 %v7983
  %v8181 = vunpack.c.l.b16 %v7984
  %v8182 = vunpack.c.h.b16 %v7984
  %v8183 = vunpack.c.l.b16 %v7985
  %v8184 = vunpack.c.h.b16 %v7985
  %v8185 = vunpack.c.l.b16 %v7986
  %v8186 = vunpack.c.h.b16 %v7986
  %v8187 = vunpack.c.l.b16 %v7987
  %v8188 = vunpack.c.h.b16 %v7987
  %v8189 = vunpack.c.l.b16 %v7988
  %v8190 = vunpack.c.h.b16 %v7988
  %v8191 = vpack.c.b16 %v8067, %v8063
  %v8192 = vpack.c.b16 %v8068, %v8064
  %v8193 = vpack.c.b16 %v8069, %v8065
  %v8194 = vpack.c.b16 %v8070, %v8066
  %v8195 = vpack.c.b16 %v8075, %v8071
  %v8196 = vpack.c.b16 %v8076, %v8072
  %v8197 = vpack.c.b16 %v8077, %v8073
  %v8198 = vpack.c.b16 %v8078, %v8074
  %v8199 = vpack.c.b16 %v8083, %v8079
  %v8200 = vpack.c.b16 %v8084, %v8080
  %v8201 = vpack.c.b16 %v8085, %v8081
  %v8202 = vpack.c.b16 %v8086, %v8082
  %v8203 = vpack.c.b16 %v8091, %v8087
  %v8204 = vpack.c.b16 %v8092, %v8088
  %v8205 = vpack.c.b16 %v8093, %v8089
  %v8206 = vpack.c.b16 %v8094, %v8090
  %v8207 = vpack.c.b16 %v8099, %v8095
  %v8208 = vpack.c.b16 %v8100, %v8096
  %v8209 = vpack.c.b16 %v8101, %v8097
  %v8210 = vpack.c.b16 %v8102, %v8098
  %v8211 = vpack.c.b16 %v8107, %v8103
  %v8212 = vpack.c.b16 %v8108, %v8104
  %v8213 = vpack.c.b16 %v8109, %v8105
  %v8214 = vpack.c.b16 %v8110, %v8106
  %v8215 = vpack.c.b16 %v8115, %v8111
  %v8216 = vpack.c.b16 %v8116, %v8112
  %v8217 = vpack.c.b16 %v8117, %v8113
  %v8218 = vpack.c.b16 %v8118, %v8114
  %v8219 = vpack.c.b16 %v8123, %v8119
  %v8220 = vpack.c.b16 %v8124, %v8120
  %v8221 = vpack.c.b16 %v8125, %v8121
  %v8222 = vpack.c.b16 %v8126, %v8122
  %v8223 = vpack.c.b16 %v8131, %v8127
  %v8224 = vpack.c.b16 %v8132, %v8128
  %v8225 = vpack.c.b16 %v8133, %v8129
  %v8226 = vpack.c.b16 %v8134, %v8130
  %v8227 = vpack.c.b16 %v8139, %v8135
  %v8228 = vpack.c.b16 %v8140, %v8136
  %v8229 = vpack.c.b16 %v8141, %v8137
  %v8230 = vpack.c.b16 %v8142, %v8138
  %v8231 = vpack.c.b16 %v8147, %v8143
  %v8232 = vpack.c.b16 %v8148, %v8144
  %v8233 = vpack.c.b16 %v8149, %v8145
  %v8234 = vpack.c.b16 %v8150, %v8146
  %v8235 = vpack.c.b16 %v8155, %v8151
  %v8236 = vpack.c.b16 %v8156, %v8152
  %v8237 = vpack.c.b16 %v8157, %v8153
  %v8238 = vpack.c.b16 %v8158, %v8154
  %v8239 = vpack.c.b16 %v8163, %v8159
  %v8240 = vpack.c.b16 %v8164, %v8160
  %v8241 = vpack.c.b16 %v8165, %v8161
  %v8242 = vpack.c.b16 %v8166, %v8162
  %v8243 = vpack.c.b16 %v8171, %v8167
  %v8244 = vpack.c.b16 %v8172, %v8168
  %v8245 = vpack.c.b16 %v8173, %v8169
  %v8246 = vpack.c.b16 %v8174, %v8170
  %v8247 = vpack.c.b16 %v8179, %v8175
  %v8248 = vpack.c.b16 %v8180, %v8176
  %v8249 = vpack.c.b16 %v8181, %v8177
  %v8250 = vpack.c.b16 %v8182, %v8178
  %v8251 = vpack.c.b16 %v8187, %v8183
  %v8252 = vpack.c.b16 %v8188, %v8184
  %v8253 = vpack.c.b16 %v8189, %v8185
  %v8254 = vpack.c.b16 %v8190, %v8186
  %8319 = vmatpush.bf16.msra.mxu0 %v8219
  %8320 = vmatpush.bf16.msra.mxu0 %v8215
  %8321 = vmatpush.bf16.msra.mxu0 %v8211
  %8322 = vmatpush.bf16.msra.mxu0 %v8207
  %8323 = vmatpush.bf16.msra.mxu0 %v8203
  %8324 = vmatpush.bf16.msra.mxu0 %v8199
  %8325 = vmatpush.bf16.msra.mxu0 %v8195
  %8326 = vmatpush.bf16.msra.mxu0 %v8191
  %8327 = vmatmul.bf16.gmra.mxu0 %v7995
  %v8328 = vpop.f32.mrf.mxu0
  %v8329 = vadd.f32 0.0, %v8328
  %v8330 = vpop.f32.mrf.mxu0
  %v8331 = vadd.f32 0.0, %v8330
  %8332 = vdwg.mxu0
  %8333 = vmatpush.bf16.msra.mxu0 %v8251
  %8334 = vmatpush.bf16.msra.mxu0 %v8247
  %8335 = vmatpush.bf16.msra.mxu0 %v8243
  %8336 = vmatpush.bf16.msra.mxu0 %v8239
  %8337 = vmatpush.bf16.msra.mxu0 %v8235
  %8338 = vmatpush.bf16.msra.mxu0 %v8231
  %8339 = vmatpush.bf16.msra.mxu0 %v8227
  %8340 = vmatpush.bf16.msra.mxu0 %v8223
  %8341 = vmatmul.bf16.gmra.mxu0 %v7996
  %v8342 = vpop.f32.mrf.mxu0
  %v8343 = vadd.f32 %v8329, %v8342
  %v8344 = vpop.f32.mrf.mxu0
  %v8345 = vadd.f32 %v8331, %v8344
  %8346 = vdwg.mxu0
  %8347 = vmatpush.bf16.msra.mxu0 %v8220
  %8348 = vmatpush.bf16.msra.mxu0 %v8216
  %8349 = vmatpush.bf16.msra.mxu0 %v8212
  %8350 = vmatpush.bf16.msra.mxu0 %v8208
  %8351 = vmatpush.bf16.msra.mxu0 %v8204
  %8352 = vmatpush.bf16.msra.mxu0 %v8200
  %8353 = vmatpush.bf16.msra.mxu0 %v8196
  %8354 = vmatpush.bf16.msra.mxu0 %v8192
  %8355 = vmatmul.bf16.gmra.mxu0 %v7995
  %v8356 = vpop.f32.mrf.mxu0
  %v8357 = vadd.f32 0.0, %v8356
  %v8358 = vpop.f32.mrf.mxu0
  %v8359 = vadd.f32 0.0, %v8358
  %8360 = vdwg.mxu0
  %8361 = vmatpush.bf16.msra.mxu0 %v8252
  %8362 = vmatpush.bf16.msra.mxu0 %v8248
  %8363 = vmatpush.bf16.msra.mxu0 %v8244
  %8364 = vmatpush.bf16.msra.mxu0 %v8240
  %8365 = vmatpush.bf16.msra.mxu0 %v8236
  %8366 = vmatpush.bf16.msra.mxu0 %v8232
  %8367 = vmatpush.bf16.msra.mxu0 %v8228
  %8368 = vmatpush.bf16.msra.mxu0 %v8224
  %8369 = vmatmul.bf16.gmra.mxu0 %v7996
  %v8370 = vpop.f32.mrf.mxu0
  %v8371 = vadd.f32 %v8357, %v8370
  %v8372 = vpop.f32.mrf.mxu0
  %v8373 = vadd.f32 %v8359, %v8372
  %8374 = vdwg.mxu0
  %8375 = vmatpush.bf16.msra.mxu0 %v8221
  %8376 = vmatpush.bf16.msra.mxu0 %v8217
  %8377 = vmatpush.bf16.msra.mxu0 %v8213
  %8378 = vmatpush.bf16.msra.mxu0 %v8209
  %8379 = vmatpush.bf16.msra.mxu0 %v8205
  %8380 = vmatpush.bf16.msra.mxu0 %v8201
  %8381 = vmatpush.bf16.msra.mxu0 %v8197
  %8382 = vmatpush.bf16.msra.mxu0 %v8193
  %8383 = vmatmul.bf16.gmra.mxu0 %v7995
  %v8384 = vpop.f32.mrf.mxu0
  %v8385 = vadd.f32 0.0, %v8384
  %v8386 = vpop.f32.mrf.mxu0
  %v8387 = vadd.f32 0.0, %v8386
  %8388 = vdwg.mxu0
  %8389 = vmatpush.bf16.msra.mxu0 %v8253
  %8390 = vmatpush.bf16.msra.mxu0 %v8249
  %8391 = vmatpush.bf16.msra.mxu0 %v8245
  %8392 = vmatpush.bf16.msra.mxu0 %v8241
  %8393 = vmatpush.bf16.msra.mxu0 %v8237
  %8394 = vmatpush.bf16.msra.mxu0 %v8233
  %8395 = vmatpush.bf16.msra.mxu0 %v8229
  %8396 = vmatpush.bf16.msra.mxu0 %v8225
  %8397 = vmatmul.bf16.gmra.mxu0 %v7996
  %v8398 = vpop.f32.mrf.mxu0
  %v8399 = vadd.f32 %v8385, %v8398
  %v8400 = vpop.f32.mrf.mxu0
  %v8401 = vadd.f32 %v8387, %v8400
  %8402 = vdwg.mxu0
  %8403 = vmatpush.bf16.msra.mxu0 %v8222
  %8404 = vmatpush.bf16.msra.mxu0 %v8218
  %8405 = vmatpush.bf16.msra.mxu0 %v8214
  %8406 = vmatpush.bf16.msra.mxu0 %v8210
  %8407 = vmatpush.bf16.msra.mxu0 %v8206
  %8408 = vmatpush.bf16.msra.mxu0 %v8202
  %8409 = vmatpush.bf16.msra.mxu0 %v8198
  %8410 = vmatpush.bf16.msra.mxu0 %v8194
  %8411 = vmatmul.bf16.gmra.mxu0 %v7995
  %v8412 = vpop.f32.mrf.mxu0
  %v8413 = vadd.f32 0.0, %v8412
  %v8414 = vpop.f32.mrf.mxu0
  %v8415 = vadd.f32 0.0, %v8414
  %8416 = vdwg.mxu0
  %8417 = vmatpush.bf16.msra.mxu0 %v8254
  %8418 = vmatpush.bf16.msra.mxu0 %v8250
  %8419 = vmatpush.bf16.msra.mxu0 %v8246
  %8420 = vmatpush.bf16.msra.mxu0 %v8242
  %8421 = vmatpush.bf16.msra.mxu0 %v8238
  %8422 = vmatpush.bf16.msra.mxu0 %v8234
  %8423 = vmatpush.bf16.msra.mxu0 %v8230
  %8424 = vmatpush.bf16.msra.mxu0 %v8226
  %8425 = vmatmul.bf16.gmra.mxu0 %v7996
  %v8426 = vpop.f32.mrf.mxu0
  %v8427 = vadd.f32 %v8413, %v8426
  %v8428 = vpop.f32.mrf.mxu0
  %v8429 = vadd.f32 %v8415, %v8428
  %8430 = vdwg.mxu0
  %v8431 = vadd.f32 %v7916, %v8343
  %v8432 = vadd.f32 %v7917, %v8371
  %v8433 = vadd.f32 %v7918, %v8399
  %v8434 = vadd.f32 %v7919, %v8427
  %v8435 = vadd.f32 %v7920, %v8345
  %v8436 = vadd.f32 %v7921, %v8373
  %v8437 = vadd.f32 %v7922, %v8401
  %v8438 = vadd.f32 %v7923, %v8429
  %s8439 = scalar_lea.vmem %s9, 3072
  %v8440 = vld [vmem:[%s8439] sm:$0xff]
  %v8441 = vld [vmem:[%s8439 + $0x8] sm:$0xff]
  %v8442 = vld [vmem:[%s8439 + $0x10] sm:$0xff]
  %v8443 = vld [vmem:[%s8439 + $0x18] sm:$0xff]
  %v8444 = vld [vmem:[%s8439 + $0x20] sm:$0xff]
  %v8445 = vld [vmem:[%s8439 + $0x28] sm:$0xff]
  %v8446 = vld [vmem:[%s8439 + $0x30] sm:$0xff]
  %v8447 = vld [vmem:[%s8439 + $0x38] sm:$0xff]
  %v8448 = vld [vmem:[%s8439 + $0x40] sm:$0xff]
  %v8449 = vld [vmem:[%s8439 + $0x48] sm:$0xff]
  %v8450 = vld [vmem:[%s8439 + $0x50] sm:$0xff]
  %v8451 = vld [vmem:[%s8439 + $0x58] sm:$0xff]
  %v8452 = vld [vmem:[%s8439 + $0x60] sm:$0xff]
  %v8453 = vld [vmem:[%s8439 + $0x68] sm:$0xff]
  %v8454 = vld [vmem:[%s8439 + $0x70] sm:$0xff]
  %v8455 = vld [vmem:[%s8439 + $0x78] sm:$0xff]
  %v8456 = vld [vmem:[%s8439 + $0x80] sm:$0xff]
  %v8457 = vld [vmem:[%s8439 + $0x88] sm:$0xff]
  %v8458 = vld [vmem:[%s8439 + $0x90] sm:$0xff]
  %v8459 = vld [vmem:[%s8439 + $0x98] sm:$0xff]
  %v8460 = vld [vmem:[%s8439 + $0xa0] sm:$0xff]
  %v8461 = vld [vmem:[%s8439 + $0xa8] sm:$0xff]
  %v8462 = vld [vmem:[%s8439 + $0xb0] sm:$0xff]
  %v8463 = vld [vmem:[%s8439 + $0xb8] sm:$0xff]
  %v8464 = vld [vmem:[%s8439 + $0xc0] sm:$0xff]
  %v8465 = vld [vmem:[%s8439 + $0xc8] sm:$0xff]
  %v8466 = vld [vmem:[%s8439 + $0xd0] sm:$0xff]
  %v8467 = vld [vmem:[%s8439 + $0xd8] sm:$0xff]
  %v8468 = vld [vmem:[%s8439 + $0xe0] sm:$0xff]
  %v8469 = vld [vmem:[%s8439 + $0xe8] sm:$0xff]
  %v8470 = vld [vmem:[%s8439 + $0xf0] sm:$0xff]
  %v8471 = vld [vmem:[%s8439 + $0xf8] sm:$0xff]
  %v8472 = vld [vmem:[%s8439 + $0x100] sm:$0xff]
  %v8473 = vld [vmem:[%s8439 + $0x108] sm:$0xff]
  %v8474 = vld [vmem:[%s8439 + $0x110] sm:$0xff]
  %v8475 = vld [vmem:[%s8439 + $0x118] sm:$0xff]
  %v8476 = vld [vmem:[%s8439 + $0x120] sm:$0xff]
  %v8477 = vld [vmem:[%s8439 + $0x128] sm:$0xff]
  %v8478 = vld [vmem:[%s8439 + $0x130] sm:$0xff]
  %v8479 = vld [vmem:[%s8439 + $0x138] sm:$0xff]
  %v8480 = vld [vmem:[%s8439 + $0x140] sm:$0xff]
  %v8481 = vld [vmem:[%s8439 + $0x148] sm:$0xff]
  %v8482 = vld [vmem:[%s8439 + $0x150] sm:$0xff]
  %v8483 = vld [vmem:[%s8439 + $0x158] sm:$0xff]
  %v8484 = vld [vmem:[%s8439 + $0x160] sm:$0xff]
  %v8485 = vld [vmem:[%s8439 + $0x168] sm:$0xff]
  %v8486 = vld [vmem:[%s8439 + $0x170] sm:$0xff]
  %v8487 = vld [vmem:[%s8439 + $0x178] sm:$0xff]
  %v8488 = vld [vmem:[%s8439 + $0x180] sm:$0xff]
  %v8489 = vld [vmem:[%s8439 + $0x188] sm:$0xff]
  %v8490 = vld [vmem:[%s8439 + $0x190] sm:$0xff]
  %v8491 = vld [vmem:[%s8439 + $0x198] sm:$0xff]
  %v8492 = vld [vmem:[%s8439 + $0x1a0] sm:$0xff]
  %v8493 = vld [vmem:[%s8439 + $0x1a8] sm:$0xff]
  %v8494 = vld [vmem:[%s8439 + $0x1b0] sm:$0xff]
  %v8495 = vld [vmem:[%s8439 + $0x1b8] sm:$0xff]
  %v8496 = vld [vmem:[%s8439 + $0x1c0] sm:$0xff]
  %v8497 = vld [vmem:[%s8439 + $0x1c8] sm:$0xff]
  %v8498 = vld [vmem:[%s8439 + $0x1d0] sm:$0xff]
  %v8499 = vld [vmem:[%s8439 + $0x1d8] sm:$0xff]
  %v8500 = vld [vmem:[%s8439 + $0x1e0] sm:$0xff]
  %v8501 = vld [vmem:[%s8439 + $0x1e8] sm:$0xff]
  %v8502 = vld [vmem:[%s8439 + $0x1f0] sm:$0xff]
  %v8503 = vld [vmem:[%s8439 + $0x1f8] sm:$0xff]
  %v8506 = vunpack.c.l.b16 %v5360
  %v8507 = vunpack.c.h.b16 %v5360
  %v8508 = vunpack.c.l.b16 %v5361
  %v8509 = vunpack.c.h.b16 %v5361
  %v8510 = vpack.c.b16 %v8508, %v8506
  %v8511 = vpack.c.b16 %v8509, %v8507
  %v8578 = vunpack.c.l.b16 %v8440
  %v8579 = vunpack.c.h.b16 %v8440
  %v8580 = vunpack.c.l.b16 %v8441
  %v8581 = vunpack.c.h.b16 %v8441
  %v8582 = vunpack.c.l.b16 %v8442
  %v8583 = vunpack.c.h.b16 %v8442
  %v8584 = vunpack.c.l.b16 %v8443
  %v8585 = vunpack.c.h.b16 %v8443
  %v8586 = vunpack.c.l.b16 %v8444
  %v8587 = vunpack.c.h.b16 %v8444
  %v8588 = vunpack.c.l.b16 %v8445
  %v8589 = vunpack.c.h.b16 %v8445
  %v8590 = vunpack.c.l.b16 %v8446
  %v8591 = vunpack.c.h.b16 %v8446
  %v8592 = vunpack.c.l.b16 %v8447
  %v8593 = vunpack.c.h.b16 %v8447
  %v8594 = vunpack.c.l.b16 %v8448
  %v8595 = vunpack.c.h.b16 %v8448
  %v8596 = vunpack.c.l.b16 %v8449
  %v8597 = vunpack.c.h.b16 %v8449
  %v8598 = vunpack.c.l.b16 %v8450
  %v8599 = vunpack.c.h.b16 %v8450
  %v8600 = vunpack.c.l.b16 %v8451
  %v8601 = vunpack.c.h.b16 %v8451
  %v8602 = vunpack.c.l.b16 %v8452
  %v8603 = vunpack.c.h.b16 %v8452
  %v8604 = vunpack.c.l.b16 %v8453
  %v8605 = vunpack.c.h.b16 %v8453
  %v8606 = vunpack.c.l.b16 %v8454
  %v8607 = vunpack.c.h.b16 %v8454
  %v8608 = vunpack.c.l.b16 %v8455
  %v8609 = vunpack.c.h.b16 %v8455
  %v8610 = vunpack.c.l.b16 %v8456
  %v8611 = vunpack.c.h.b16 %v8456
  %v8612 = vunpack.c.l.b16 %v8457
  %v8613 = vunpack.c.h.b16 %v8457
  %v8614 = vunpack.c.l.b16 %v8458
  %v8615 = vunpack.c.h.b16 %v8458
  %v8616 = vunpack.c.l.b16 %v8459
  %v8617 = vunpack.c.h.b16 %v8459
  %v8618 = vunpack.c.l.b16 %v8460
  %v8619 = vunpack.c.h.b16 %v8460
  %v8620 = vunpack.c.l.b16 %v8461
  %v8621 = vunpack.c.h.b16 %v8461
  %v8622 = vunpack.c.l.b16 %v8462
  %v8623 = vunpack.c.h.b16 %v8462
  %v8624 = vunpack.c.l.b16 %v8463
  %v8625 = vunpack.c.h.b16 %v8463
  %v8626 = vunpack.c.l.b16 %v8464
  %v8627 = vunpack.c.h.b16 %v8464
  %v8628 = vunpack.c.l.b16 %v8465
  %v8629 = vunpack.c.h.b16 %v8465
  %v8630 = vunpack.c.l.b16 %v8466
  %v8631 = vunpack.c.h.b16 %v8466
  %v8632 = vunpack.c.l.b16 %v8467
  %v8633 = vunpack.c.h.b16 %v8467
  %v8634 = vunpack.c.l.b16 %v8468
  %v8635 = vunpack.c.h.b16 %v8468
  %v8636 = vunpack.c.l.b16 %v8469
  %v8637 = vunpack.c.h.b16 %v8469
  %v8638 = vunpack.c.l.b16 %v8470
  %v8639 = vunpack.c.h.b16 %v8470
  %v8640 = vunpack.c.l.b16 %v8471
  %v8641 = vunpack.c.h.b16 %v8471
  %v8642 = vunpack.c.l.b16 %v8472
  %v8643 = vunpack.c.h.b16 %v8472
  %v8644 = vunpack.c.l.b16 %v8473
  %v8645 = vunpack.c.h.b16 %v8473
  %v8646 = vunpack.c.l.b16 %v8474
  %v8647 = vunpack.c.h.b16 %v8474
  %v8648 = vunpack.c.l.b16 %v8475
  %v8649 = vunpack.c.h.b16 %v8475
  %v8650 = vunpack.c.l.b16 %v8476
  %v8651 = vunpack.c.h.b16 %v8476
  %v8652 = vunpack.c.l.b16 %v8477
  %v8653 = vunpack.c.h.b16 %v8477
  %v8654 = vunpack.c.l.b16 %v8478
  %v8655 = vunpack.c.h.b16 %v8478
  %v8656 = vunpack.c.l.b16 %v8479
  %v8657 = vunpack.c.h.b16 %v8479
  %v8658 = vunpack.c.l.b16 %v8480
  %v8659 = vunpack.c.h.b16 %v8480
  %v8660 = vunpack.c.l.b16 %v8481
  %v8661 = vunpack.c.h.b16 %v8481
  %v8662 = vunpack.c.l.b16 %v8482
  %v8663 = vunpack.c.h.b16 %v8482
  %v8664 = vunpack.c.l.b16 %v8483
  %v8665 = vunpack.c.h.b16 %v8483
  %v8666 = vunpack.c.l.b16 %v8484
  %v8667 = vunpack.c.h.b16 %v8484
  %v8668 = vunpack.c.l.b16 %v8485
  %v8669 = vunpack.c.h.b16 %v8485
  %v8670 = vunpack.c.l.b16 %v8486
  %v8671 = vunpack.c.h.b16 %v8486
  %v8672 = vunpack.c.l.b16 %v8487
  %v8673 = vunpack.c.h.b16 %v8487
  %v8674 = vunpack.c.l.b16 %v8488
  %v8675 = vunpack.c.h.b16 %v8488
  %v8676 = vunpack.c.l.b16 %v8489
  %v8677 = vunpack.c.h.b16 %v8489
  %v8678 = vunpack.c.l.b16 %v8490
  %v8679 = vunpack.c.h.b16 %v8490
  %v8680 = vunpack.c.l.b16 %v8491
  %v8681 = vunpack.c.h.b16 %v8491
  %v8682 = vunpack.c.l.b16 %v8492
  %v8683 = vunpack.c.h.b16 %v8492
  %v8684 = vunpack.c.l.b16 %v8493
  %v8685 = vunpack.c.h.b16 %v8493
  %v8686 = vunpack.c.l.b16 %v8494
  %v8687 = vunpack.c.h.b16 %v8494
  %v8688 = vunpack.c.l.b16 %v8495
  %v8689 = vunpack.c.h.b16 %v8495
  %v8690 = vunpack.c.l.b16 %v8496
  %v8691 = vunpack.c.h.b16 %v8496
  %v8692 = vunpack.c.l.b16 %v8497
  %v8693 = vunpack.c.h.b16 %v8497
  %v8694 = vunpack.c.l.b16 %v8498
  %v8695 = vunpack.c.h.b16 %v8498
  %v8696 = vunpack.c.l.b16 %v8499
  %v8697 = vunpack.c.h.b16 %v8499
  %v8698 = vunpack.c.l.b16 %v8500
  %v8699 = vunpack.c.h.b16 %v8500
  %v8700 = vunpack.c.l.b16 %v8501
  %v8701 = vunpack.c.h.b16 %v8501
  %v8702 = vunpack.c.l.b16 %v8502
  %v8703 = vunpack.c.h.b16 %v8502
  %v8704 = vunpack.c.l.b16 %v8503
  %v8705 = vunpack.c.h.b16 %v8503
  %v8706 = vpack.c.b16 %v8582, %v8578
  %v8707 = vpack.c.b16 %v8583, %v8579
  %v8708 = vpack.c.b16 %v8584, %v8580
  %v8709 = vpack.c.b16 %v8585, %v8581
  %v8710 = vpack.c.b16 %v8590, %v8586
  %v8711 = vpack.c.b16 %v8591, %v8587
  %v8712 = vpack.c.b16 %v8592, %v8588
  %v8713 = vpack.c.b16 %v8593, %v8589
  %v8714 = vpack.c.b16 %v8598, %v8594
  %v8715 = vpack.c.b16 %v8599, %v8595
  %v8716 = vpack.c.b16 %v8600, %v8596
  %v8717 = vpack.c.b16 %v8601, %v8597
  %v8718 = vpack.c.b16 %v8606, %v8602
  %v8719 = vpack.c.b16 %v8607, %v8603
  %v8720 = vpack.c.b16 %v8608, %v8604
  %v8721 = vpack.c.b16 %v8609, %v8605
  %v8722 = vpack.c.b16 %v8614, %v8610
  %v8723 = vpack.c.b16 %v8615, %v8611
  %v8724 = vpack.c.b16 %v8616, %v8612
  %v8725 = vpack.c.b16 %v8617, %v8613
  %v8726 = vpack.c.b16 %v8622, %v8618
  %v8727 = vpack.c.b16 %v8623, %v8619
  %v8728 = vpack.c.b16 %v8624, %v8620
  %v8729 = vpack.c.b16 %v8625, %v8621
  %v8730 = vpack.c.b16 %v8630, %v8626
  %v8731 = vpack.c.b16 %v8631, %v8627
  %v8732 = vpack.c.b16 %v8632, %v8628
  %v8733 = vpack.c.b16 %v8633, %v8629
  %v8734 = vpack.c.b16 %v8638, %v8634
  %v8735 = vpack.c.b16 %v8639, %v8635
  %v8736 = vpack.c.b16 %v8640, %v8636
  %v8737 = vpack.c.b16 %v8641, %v8637
  %v8738 = vpack.c.b16 %v8646, %v8642
  %v8739 = vpack.c.b16 %v8647, %v8643
  %v8740 = vpack.c.b16 %v8648, %v8644
  %v8741 = vpack.c.b16 %v8649, %v8645
  %v8742 = vpack.c.b16 %v8654, %v8650
  %v8743 = vpack.c.b16 %v8655, %v8651
  %v8744 = vpack.c.b16 %v8656, %v8652
  %v8745 = vpack.c.b16 %v8657, %v8653
  %v8746 = vpack.c.b16 %v8662, %v8658
  %v8747 = vpack.c.b16 %v8663, %v8659
  %v8748 = vpack.c.b16 %v8664, %v8660
  %v8749 = vpack.c.b16 %v8665, %v8661
  %v8750 = vpack.c.b16 %v8670, %v8666
  %v8751 = vpack.c.b16 %v8671, %v8667
  %v8752 = vpack.c.b16 %v8672, %v8668
  %v8753 = vpack.c.b16 %v8673, %v8669
  %v8754 = vpack.c.b16 %v8678, %v8674
  %v8755 = vpack.c.b16 %v8679, %v8675
  %v8756 = vpack.c.b16 %v8680, %v8676
  %v8757 = vpack.c.b16 %v8681, %v8677
  %v8758 = vpack.c.b16 %v8686, %v8682
  %v8759 = vpack.c.b16 %v8687, %v8683
  %v8760 = vpack.c.b16 %v8688, %v8684
  %v8761 = vpack.c.b16 %v8689, %v8685
  %v8762 = vpack.c.b16 %v8694, %v8690
  %v8763 = vpack.c.b16 %v8695, %v8691
  %v8764 = vpack.c.b16 %v8696, %v8692
  %v8765 = vpack.c.b16 %v8697, %v8693
  %v8766 = vpack.c.b16 %v8702, %v8698
  %v8767 = vpack.c.b16 %v8703, %v8699
  %v8768 = vpack.c.b16 %v8704, %v8700
  %v8769 = vpack.c.b16 %v8705, %v8701
  %8834 = vmatpush.bf16.msra.mxu0 %v8734
  %8835 = vmatpush.bf16.msra.mxu0 %v8730
  %8836 = vmatpush.bf16.msra.mxu0 %v8726
  %8837 = vmatpush.bf16.msra.mxu0 %v8722
  %8838 = vmatpush.bf16.msra.mxu0 %v8718
  %8839 = vmatpush.bf16.msra.mxu0 %v8714
  %8840 = vmatpush.bf16.msra.mxu0 %v8710
  %8841 = vmatpush.bf16.msra.mxu0 %v8706
  %8842 = vmatmul.bf16.gmra.mxu0 %v8510
  %v8843 = vpop.f32.mrf.mxu0
  %v8844 = vadd.f32 0.0, %v8843
  %v8845 = vpop.f32.mrf.mxu0
  %v8846 = vadd.f32 0.0, %v8845
  %8847 = vdwg.mxu0
  %8848 = vmatpush.bf16.msra.mxu0 %v8766
  %8849 = vmatpush.bf16.msra.mxu0 %v8762
  %8850 = vmatpush.bf16.msra.mxu0 %v8758
  %8851 = vmatpush.bf16.msra.mxu0 %v8754
  %8852 = vmatpush.bf16.msra.mxu0 %v8750
  %8853 = vmatpush.bf16.msra.mxu0 %v8746
  %8854 = vmatpush.bf16.msra.mxu0 %v8742
  %8855 = vmatpush.bf16.msra.mxu0 %v8738
  %8856 = vmatmul.bf16.gmra.mxu0 %v8511
  %v8857 = vpop.f32.mrf.mxu0
  %v8858 = vadd.f32 %v8844, %v8857
  %v8859 = vpop.f32.mrf.mxu0
  %v8860 = vadd.f32 %v8846, %v8859
  %8861 = vdwg.mxu0
  %8862 = vmatpush.bf16.msra.mxu0 %v8735
  %8863 = vmatpush.bf16.msra.mxu0 %v8731
  %8864 = vmatpush.bf16.msra.mxu0 %v8727
  %8865 = vmatpush.bf16.msra.mxu0 %v8723
  %8866 = vmatpush.bf16.msra.mxu0 %v8719
  %8867 = vmatpush.bf16.msra.mxu0 %v8715
  %8868 = vmatpush.bf16.msra.mxu0 %v8711
  %8869 = vmatpush.bf16.msra.mxu0 %v8707
  %8870 = vmatmul.bf16.gmra.mxu0 %v8510
  %v8871 = vpop.f32.mrf.mxu0
  %v8872 = vadd.f32 0.0, %v8871
  %v8873 = vpop.f32.mrf.mxu0
  %v8874 = vadd.f32 0.0, %v8873
  %8875 = vdwg.mxu0
  %8876 = vmatpush.bf16.msra.mxu0 %v8767
  %8877 = vmatpush.bf16.msra.mxu0 %v8763
  %8878 = vmatpush.bf16.msra.mxu0 %v8759
  %8879 = vmatpush.bf16.msra.mxu0 %v8755
  %8880 = vmatpush.bf16.msra.mxu0 %v8751
  %8881 = vmatpush.bf16.msra.mxu0 %v8747
  %8882 = vmatpush.bf16.msra.mxu0 %v8743
  %8883 = vmatpush.bf16.msra.mxu0 %v8739
  %8884 = vmatmul.bf16.gmra.mxu0 %v8511
  %v8885 = vpop.f32.mrf.mxu0
  %v8886 = vadd.f32 %v8872, %v8885
  %v8887 = vpop.f32.mrf.mxu0
  %v8888 = vadd.f32 %v8874, %v8887
  %8889 = vdwg.mxu0
  %8890 = vmatpush.bf16.msra.mxu0 %v8736
  %8891 = vmatpush.bf16.msra.mxu0 %v8732
  %8892 = vmatpush.bf16.msra.mxu0 %v8728
  %8893 = vmatpush.bf16.msra.mxu0 %v8724
  %8894 = vmatpush.bf16.msra.mxu0 %v8720
  %8895 = vmatpush.bf16.msra.mxu0 %v8716
  %8896 = vmatpush.bf16.msra.mxu0 %v8712
  %8897 = vmatpush.bf16.msra.mxu0 %v8708
  %8898 = vmatmul.bf16.gmra.mxu0 %v8510
  %v8899 = vpop.f32.mrf.mxu0
  %v8900 = vadd.f32 0.0, %v8899
  %v8901 = vpop.f32.mrf.mxu0
  %v8902 = vadd.f32 0.0, %v8901
  %8903 = vdwg.mxu0
  %8904 = vmatpush.bf16.msra.mxu0 %v8768
  %8905 = vmatpush.bf16.msra.mxu0 %v8764
  %8906 = vmatpush.bf16.msra.mxu0 %v8760
  %8907 = vmatpush.bf16.msra.mxu0 %v8756
  %8908 = vmatpush.bf16.msra.mxu0 %v8752
  %8909 = vmatpush.bf16.msra.mxu0 %v8748
  %8910 = vmatpush.bf16.msra.mxu0 %v8744
  %8911 = vmatpush.bf16.msra.mxu0 %v8740
  %8912 = vmatmul.bf16.gmra.mxu0 %v8511
  %v8913 = vpop.f32.mrf.mxu0
  %v8914 = vadd.f32 %v8900, %v8913
  %v8915 = vpop.f32.mrf.mxu0
  %v8916 = vadd.f32 %v8902, %v8915
  %8917 = vdwg.mxu0
  %8918 = vmatpush.bf16.msra.mxu0 %v8737
  %8919 = vmatpush.bf16.msra.mxu0 %v8733
  %8920 = vmatpush.bf16.msra.mxu0 %v8729
  %8921 = vmatpush.bf16.msra.mxu0 %v8725
  %8922 = vmatpush.bf16.msra.mxu0 %v8721
  %8923 = vmatpush.bf16.msra.mxu0 %v8717
  %8924 = vmatpush.bf16.msra.mxu0 %v8713
  %8925 = vmatpush.bf16.msra.mxu0 %v8709
  %8926 = vmatmul.bf16.gmra.mxu0 %v8510
  %v8927 = vpop.f32.mrf.mxu0
  %v8928 = vadd.f32 0.0, %v8927
  %v8929 = vpop.f32.mrf.mxu0
  %v8930 = vadd.f32 0.0, %v8929
  %8931 = vdwg.mxu0
  %8932 = vmatpush.bf16.msra.mxu0 %v8769
  %8933 = vmatpush.bf16.msra.mxu0 %v8765
  %8934 = vmatpush.bf16.msra.mxu0 %v8761
  %8935 = vmatpush.bf16.msra.mxu0 %v8757
  %8936 = vmatpush.bf16.msra.mxu0 %v8753
  %8937 = vmatpush.bf16.msra.mxu0 %v8749
  %8938 = vmatpush.bf16.msra.mxu0 %v8745
  %8939 = vmatpush.bf16.msra.mxu0 %v8741
  %8940 = vmatmul.bf16.gmra.mxu0 %v8511
  %v8941 = vpop.f32.mrf.mxu0
  %v8942 = vadd.f32 %v8928, %v8941
  %v8943 = vpop.f32.mrf.mxu0
  %v8944 = vadd.f32 %v8930, %v8943
  %8945 = vdwg.mxu0
  %v8946 = vadd.f32 %v8431, %v8858
  %v8947 = vadd.f32 %v8432, %v8886
  %v8948 = vadd.f32 %v8433, %v8914
  %v8949 = vadd.f32 %v8434, %v8942
  %v8950 = vadd.f32 %v8435, %v8860
  %v8951 = vadd.f32 %v8436, %v8888
  %v8952 = vadd.f32 %v8437, %v8916
  %v8953 = vadd.f32 %v8438, %v8944
  %s8954 = scalar_lea.vmem %s9, 3584
  %v8955 = vld [vmem:[%s8954] sm:$0xff]
  %v8956 = vld [vmem:[%s8954 + $0x8] sm:$0xff]
  %v8957 = vld [vmem:[%s8954 + $0x10] sm:$0xff]
  %v8958 = vld [vmem:[%s8954 + $0x18] sm:$0xff]
  %v8959 = vld [vmem:[%s8954 + $0x20] sm:$0xff]
  %v8960 = vld [vmem:[%s8954 + $0x28] sm:$0xff]
  %v8961 = vld [vmem:[%s8954 + $0x30] sm:$0xff]
  %v8962 = vld [vmem:[%s8954 + $0x38] sm:$0xff]
  %v8963 = vld [vmem:[%s8954 + $0x40] sm:$0xff]
  %v8964 = vld [vmem:[%s8954 + $0x48] sm:$0xff]
  %v8965 = vld [vmem:[%s8954 + $0x50] sm:$0xff]
  %v8966 = vld [vmem:[%s8954 + $0x58] sm:$0xff]
  %v8967 = vld [vmem:[%s8954 + $0x60] sm:$0xff]
  %v8968 = vld [vmem:[%s8954 + $0x68] sm:$0xff]
  %v8969 = vld [vmem:[%s8954 + $0x70] sm:$0xff]
  %v8970 = vld [vmem:[%s8954 + $0x78] sm:$0xff]
  %v8971 = vld [vmem:[%s8954 + $0x80] sm:$0xff]
  %v8972 = vld [vmem:[%s8954 + $0x88] sm:$0xff]
  %v8973 = vld [vmem:[%s8954 + $0x90] sm:$0xff]
  %v8974 = vld [vmem:[%s8954 + $0x98] sm:$0xff]
  %v8975 = vld [vmem:[%s8954 + $0xa0] sm:$0xff]
  %v8976 = vld [vmem:[%s8954 + $0xa8] sm:$0xff]
  %v8977 = vld [vmem:[%s8954 + $0xb0] sm:$0xff]
  %v8978 = vld [vmem:[%s8954 + $0xb8] sm:$0xff]
  %v8979 = vld [vmem:[%s8954 + $0xc0] sm:$0xff]
  %v8980 = vld [vmem:[%s8954 + $0xc8] sm:$0xff]
  %v8981 = vld [vmem:[%s8954 + $0xd0] sm:$0xff]
  %v8982 = vld [vmem:[%s8954 + $0xd8] sm:$0xff]
  %v8983 = vld [vmem:[%s8954 + $0xe0] sm:$0xff]
  %v8984 = vld [vmem:[%s8954 + $0xe8] sm:$0xff]
  %v8985 = vld [vmem:[%s8954 + $0xf0] sm:$0xff]
  %v8986 = vld [vmem:[%s8954 + $0xf8] sm:$0xff]
  %v8987 = vld [vmem:[%s8954 + $0x100] sm:$0xff]
  %v8988 = vld [vmem:[%s8954 + $0x108] sm:$0xff]
  %v8989 = vld [vmem:[%s8954 + $0x110] sm:$0xff]
  %v8990 = vld [vmem:[%s8954 + $0x118] sm:$0xff]
  %v8991 = vld [vmem:[%s8954 + $0x120] sm:$0xff]
  %v8992 = vld [vmem:[%s8954 + $0x128] sm:$0xff]
  %v8993 = vld [vmem:[%s8954 + $0x130] sm:$0xff]
  %v8994 = vld [vmem:[%s8954 + $0x138] sm:$0xff]
  %v8995 = vld [vmem:[%s8954 + $0x140] sm:$0xff]
  %v8996 = vld [vmem:[%s8954 + $0x148] sm:$0xff]
  %v8997 = vld [vmem:[%s8954 + $0x150] sm:$0xff]
  %v8998 = vld [vmem:[%s8954 + $0x158] sm:$0xff]
  %v8999 = vld [vmem:[%s8954 + $0x160] sm:$0xff]
  %v9000 = vld [vmem:[%s8954 + $0x168] sm:$0xff]
  %v9001 = vld [vmem:[%s8954 + $0x170] sm:$0xff]
  %v9002 = vld [vmem:[%s8954 + $0x178] sm:$0xff]
  %v9003 = vld [vmem:[%s8954 + $0x180] sm:$0xff]
  %v9004 = vld [vmem:[%s8954 + $0x188] sm:$0xff]
  %v9005 = vld [vmem:[%s8954 + $0x190] sm:$0xff]
  %v9006 = vld [vmem:[%s8954 + $0x198] sm:$0xff]
  %v9007 = vld [vmem:[%s8954 + $0x1a0] sm:$0xff]
  %v9008 = vld [vmem:[%s8954 + $0x1a8] sm:$0xff]
  %v9009 = vld [vmem:[%s8954 + $0x1b0] sm:$0xff]
  %v9010 = vld [vmem:[%s8954 + $0x1b8] sm:$0xff]
  %v9011 = vld [vmem:[%s8954 + $0x1c0] sm:$0xff]
  %v9012 = vld [vmem:[%s8954 + $0x1c8] sm:$0xff]
  %v9013 = vld [vmem:[%s8954 + $0x1d0] sm:$0xff]
  %v9014 = vld [vmem:[%s8954 + $0x1d8] sm:$0xff]
  %v9015 = vld [vmem:[%s8954 + $0x1e0] sm:$0xff]
  %v9016 = vld [vmem:[%s8954 + $0x1e8] sm:$0xff]
  %v9017 = vld [vmem:[%s8954 + $0x1f0] sm:$0xff]
  %v9018 = vld [vmem:[%s8954 + $0x1f8] sm:$0xff]
  %v9021 = vunpack.c.l.b16 %v5362
  %v9022 = vunpack.c.h.b16 %v5362
  %v9023 = vunpack.c.l.b16 %v5363
  %v9024 = vunpack.c.h.b16 %v5363
  %v9025 = vpack.c.b16 %v9023, %v9021
  %v9026 = vpack.c.b16 %v9024, %v9022
  %v9093 = vunpack.c.l.b16 %v8955
  %v9094 = vunpack.c.h.b16 %v8955
  %v9095 = vunpack.c.l.b16 %v8956
  %v9096 = vunpack.c.h.b16 %v8956
  %v9097 = vunpack.c.l.b16 %v8957
  %v9098 = vunpack.c.h.b16 %v8957
  %v9099 = vunpack.c.l.b16 %v8958
  %v9100 = vunpack.c.h.b16 %v8958
  %v9101 = vunpack.c.l.b16 %v8959
  %v9102 = vunpack.c.h.b16 %v8959
  %v9103 = vunpack.c.l.b16 %v8960
  %v9104 = vunpack.c.h.b16 %v8960
  %v9105 = vunpack.c.l.b16 %v8961
  %v9106 = vunpack.c.h.b16 %v8961
  %v9107 = vunpack.c.l.b16 %v8962
  %v9108 = vunpack.c.h.b16 %v8962
  %v9109 = vunpack.c.l.b16 %v8963
  %v9110 = vunpack.c.h.b16 %v8963
  %v9111 = vunpack.c.l.b16 %v8964
  %v9112 = vunpack.c.h.b16 %v8964
  %v9113 = vunpack.c.l.b16 %v8965
  %v9114 = vunpack.c.h.b16 %v8965
  %v9115 = vunpack.c.l.b16 %v8966
  %v9116 = vunpack.c.h.b16 %v8966
  %v9117 = vunpack.c.l.b16 %v8967
  %v9118 = vunpack.c.h.b16 %v8967
  %v9119 = vunpack.c.l.b16 %v8968
  %v9120 = vunpack.c.h.b16 %v8968
  %v9121 = vunpack.c.l.b16 %v8969
  %v9122 = vunpack.c.h.b16 %v8969
  %v9123 = vunpack.c.l.b16 %v8970
  %v9124 = vunpack.c.h.b16 %v8970
  %v9125 = vunpack.c.l.b16 %v8971
  %v9126 = vunpack.c.h.b16 %v8971
  %v9127 = vunpack.c.l.b16 %v8972
  %v9128 = vunpack.c.h.b16 %v8972
  %v9129 = vunpack.c.l.b16 %v8973
  %v9130 = vunpack.c.h.b16 %v8973
  %v9131 = vunpack.c.l.b16 %v8974
  %v9132 = vunpack.c.h.b16 %v8974
  %v9133 = vunpack.c.l.b16 %v8975
  %v9134 = vunpack.c.h.b16 %v8975
  %v9135 = vunpack.c.l.b16 %v8976
  %v9136 = vunpack.c.h.b16 %v8976
  %v9137 = vunpack.c.l.b16 %v8977
  %v9138 = vunpack.c.h.b16 %v8977
  %v9139 = vunpack.c.l.b16 %v8978
  %v9140 = vunpack.c.h.b16 %v8978
  %v9141 = vunpack.c.l.b16 %v8979
  %v9142 = vunpack.c.h.b16 %v8979
  %v9143 = vunpack.c.l.b16 %v8980
  %v9144 = vunpack.c.h.b16 %v8980
  %v9145 = vunpack.c.l.b16 %v8981
  %v9146 = vunpack.c.h.b16 %v8981
  %v9147 = vunpack.c.l.b16 %v8982
  %v9148 = vunpack.c.h.b16 %v8982
  %v9149 = vunpack.c.l.b16 %v8983
  %v9150 = vunpack.c.h.b16 %v8983
  %v9151 = vunpack.c.l.b16 %v8984
  %v9152 = vunpack.c.h.b16 %v8984
  %v9153 = vunpack.c.l.b16 %v8985
  %v9154 = vunpack.c.h.b16 %v8985
  %v9155 = vunpack.c.l.b16 %v8986
  %v9156 = vunpack.c.h.b16 %v8986
  %v9157 = vunpack.c.l.b16 %v8987
  %v9158 = vunpack.c.h.b16 %v8987
  %v9159 = vunpack.c.l.b16 %v8988
  %v9160 = vunpack.c.h.b16 %v8988
  %v9161 = vunpack.c.l.b16 %v8989
  %v9162 = vunpack.c.h.b16 %v8989
  %v9163 = vunpack.c.l.b16 %v8990
  %v9164 = vunpack.c.h.b16 %v8990
  %v9165 = vunpack.c.l.b16 %v8991
  %v9166 = vunpack.c.h.b16 %v8991
  %v9167 = vunpack.c.l.b16 %v8992
  %v9168 = vunpack.c.h.b16 %v8992
  %v9169 = vunpack.c.l.b16 %v8993
  %v9170 = vunpack.c.h.b16 %v8993
  %v9171 = vunpack.c.l.b16 %v8994
  %v9172 = vunpack.c.h.b16 %v8994
  %v9173 = vunpack.c.l.b16 %v8995
  %v9174 = vunpack.c.h.b16 %v8995
  %v9175 = vunpack.c.l.b16 %v8996
  %v9176 = vunpack.c.h.b16 %v8996
  %v9177 = vunpack.c.l.b16 %v8997
  %v9178 = vunpack.c.h.b16 %v8997
  %v9179 = vunpack.c.l.b16 %v8998
  %v9180 = vunpack.c.h.b16 %v8998
  %v9181 = vunpack.c.l.b16 %v8999
  %v9182 = vunpack.c.h.b16 %v8999
  %v9183 = vunpack.c.l.b16 %v9000
  %v9184 = vunpack.c.h.b16 %v9000
  %v9185 = vunpack.c.l.b16 %v9001
  %v9186 = vunpack.c.h.b16 %v9001
  %v9187 = vunpack.c.l.b16 %v9002
  %v9188 = vunpack.c.h.b16 %v9002
  %v9189 = vunpack.c.l.b16 %v9003
  %v9190 = vunpack.c.h.b16 %v9003
  %v9191 = vunpack.c.l.b16 %v9004
  %v9192 = vunpack.c.h.b16 %v9004
  %v9193 = vunpack.c.l.b16 %v9005
  %v9194 = vunpack.c.h.b16 %v9005
  %v9195 = vunpack.c.l.b16 %v9006
  %v9196 = vunpack.c.h.b16 %v9006
  %v9197 = vunpack.c.l.b16 %v9007
  %v9198 = vunpack.c.h.b16 %v9007
  %v9199 = vunpack.c.l.b16 %v9008
  %v9200 = vunpack.c.h.b16 %v9008
  %v9201 = vunpack.c.l.b16 %v9009
  %v9202 = vunpack.c.h.b16 %v9009
  %v9203 = vunpack.c.l.b16 %v9010
  %v9204 = vunpack.c.h.b16 %v9010
  %v9205 = vunpack.c.l.b16 %v9011
  %v9206 = vunpack.c.h.b16 %v9011
  %v9207 = vunpack.c.l.b16 %v9012
  %v9208 = vunpack.c.h.b16 %v9012
  %v9209 = vunpack.c.l.b16 %v9013
  %v9210 = vunpack.c.h.b16 %v9013
  %v9211 = vunpack.c.l.b16 %v9014
  %v9212 = vunpack.c.h.b16 %v9014
  %v9213 = vunpack.c.l.b16 %v9015
  %v9214 = vunpack.c.h.b16 %v9015
  %v9215 = vunpack.c.l.b16 %v9016
  %v9216 = vunpack.c.h.b16 %v9016
  %v9217 = vunpack.c.l.b16 %v9017
  %v9218 = vunpack.c.h.b16 %v9017
  %v9219 = vunpack.c.l.b16 %v9018
  %v9220 = vunpack.c.h.b16 %v9018
  %v9221 = vpack.c.b16 %v9097, %v9093
  %v9222 = vpack.c.b16 %v9098, %v9094
  %v9223 = vpack.c.b16 %v9099, %v9095
  %v9224 = vpack.c.b16 %v9100, %v9096
  %v9225 = vpack.c.b16 %v9105, %v9101
  %v9226 = vpack.c.b16 %v9106, %v9102
  %v9227 = vpack.c.b16 %v9107, %v9103
  %v9228 = vpack.c.b16 %v9108, %v9104
  %v9229 = vpack.c.b16 %v9113, %v9109
  %v9230 = vpack.c.b16 %v9114, %v9110
  %v9231 = vpack.c.b16 %v9115, %v9111
  %v9232 = vpack.c.b16 %v9116, %v9112
  %v9233 = vpack.c.b16 %v9121, %v9117
  %v9234 = vpack.c.b16 %v9122, %v9118
  %v9235 = vpack.c.b16 %v9123, %v9119
  %v9236 = vpack.c.b16 %v9124, %v9120
  %v9237 = vpack.c.b16 %v9129, %v9125
  %v9238 = vpack.c.b16 %v9130, %v9126
  %v9239 = vpack.c.b16 %v9131, %v9127
  %v9240 = vpack.c.b16 %v9132, %v9128
  %v9241 = vpack.c.b16 %v9137, %v9133
  %v9242 = vpack.c.b16 %v9138, %v9134
  %v9243 = vpack.c.b16 %v9139, %v9135
  %v9244 = vpack.c.b16 %v9140, %v9136
  %v9245 = vpack.c.b16 %v9145, %v9141
  %v9246 = vpack.c.b16 %v9146, %v9142
  %v9247 = vpack.c.b16 %v9147, %v9143
  %v9248 = vpack.c.b16 %v9148, %v9144
  %v9249 = vpack.c.b16 %v9153, %v9149
  %v9250 = vpack.c.b16 %v9154, %v9150
  %v9251 = vpack.c.b16 %v9155, %v9151
  %v9252 = vpack.c.b16 %v9156, %v9152
  %v9253 = vpack.c.b16 %v9161, %v9157
  %v9254 = vpack.c.b16 %v9162, %v9158
  %v9255 = vpack.c.b16 %v9163, %v9159
  %v9256 = vpack.c.b16 %v9164, %v9160
  %v9257 = vpack.c.b16 %v9169, %v9165
  %v9258 = vpack.c.b16 %v9170, %v9166
  %v9259 = vpack.c.b16 %v9171, %v9167
  %v9260 = vpack.c.b16 %v9172, %v9168
  %v9261 = vpack.c.b16 %v9177, %v9173
  %v9262 = vpack.c.b16 %v9178, %v9174
  %v9263 = vpack.c.b16 %v9179, %v9175
  %v9264 = vpack.c.b16 %v9180, %v9176
  %v9265 = vpack.c.b16 %v9185, %v9181
  %v9266 = vpack.c.b16 %v9186, %v9182
  %v9267 = vpack.c.b16 %v9187, %v9183
  %v9268 = vpack.c.b16 %v9188, %v9184
  %v9269 = vpack.c.b16 %v9193, %v9189
  %v9270 = vpack.c.b16 %v9194, %v9190
  %v9271 = vpack.c.b16 %v9195, %v9191
  %v9272 = vpack.c.b16 %v9196, %v9192
  %v9273 = vpack.c.b16 %v9201, %v9197
  %v9274 = vpack.c.b16 %v9202, %v9198
  %v9275 = vpack.c.b16 %v9203, %v9199
  %v9276 = vpack.c.b16 %v9204, %v9200
  %v9277 = vpack.c.b16 %v9209, %v9205
  %v9278 = vpack.c.b16 %v9210, %v9206
  %v9279 = vpack.c.b16 %v9211, %v9207
  %v9280 = vpack.c.b16 %v9212, %v9208
  %v9281 = vpack.c.b16 %v9217, %v9213
  %v9282 = vpack.c.b16 %v9218, %v9214
  %v9283 = vpack.c.b16 %v9219, %v9215
  %v9284 = vpack.c.b16 %v9220, %v9216
  %9349 = vmatpush.bf16.msra.mxu0 %v9249
  %9350 = vmatpush.bf16.msra.mxu0 %v9245
  %9351 = vmatpush.bf16.msra.mxu0 %v9241
  %9352 = vmatpush.bf16.msra.mxu0 %v9237
  %9353 = vmatpush.bf16.msra.mxu0 %v9233
  %9354 = vmatpush.bf16.msra.mxu0 %v9229
  %9355 = vmatpush.bf16.msra.mxu0 %v9225
  %9356 = vmatpush.bf16.msra.mxu0 %v9221
  %9357 = vmatmul.bf16.gmra.mxu0 %v9025
  %v9358 = vpop.f32.mrf.mxu0
  %v9359 = vadd.f32 0.0, %v9358
  %v9360 = vpop.f32.mrf.mxu0
  %v9361 = vadd.f32 0.0, %v9360
  %9362 = vdwg.mxu0
  %9363 = vmatpush.bf16.msra.mxu0 %v9281
  %9364 = vmatpush.bf16.msra.mxu0 %v9277
  %9365 = vmatpush.bf16.msra.mxu0 %v9273
  %9366 = vmatpush.bf16.msra.mxu0 %v9269
  %9367 = vmatpush.bf16.msra.mxu0 %v9265
  %9368 = vmatpush.bf16.msra.mxu0 %v9261
  %9369 = vmatpush.bf16.msra.mxu0 %v9257
  %9370 = vmatpush.bf16.msra.mxu0 %v9253
  %9371 = vmatmul.bf16.gmra.mxu0 %v9026
  %v9372 = vpop.f32.mrf.mxu0
  %v9373 = vadd.f32 %v9359, %v9372
  %v9374 = vpop.f32.mrf.mxu0
  %v9375 = vadd.f32 %v9361, %v9374
  %9376 = vdwg.mxu0
  %9377 = vmatpush.bf16.msra.mxu0 %v9250
  %9378 = vmatpush.bf16.msra.mxu0 %v9246
  %9379 = vmatpush.bf16.msra.mxu0 %v9242
  %9380 = vmatpush.bf16.msra.mxu0 %v9238
  %9381 = vmatpush.bf16.msra.mxu0 %v9234
  %9382 = vmatpush.bf16.msra.mxu0 %v9230
  %9383 = vmatpush.bf16.msra.mxu0 %v9226
  %9384 = vmatpush.bf16.msra.mxu0 %v9222
  %9385 = vmatmul.bf16.gmra.mxu0 %v9025
  %v9386 = vpop.f32.mrf.mxu0
  %v9387 = vadd.f32 0.0, %v9386
  %v9388 = vpop.f32.mrf.mxu0
  %v9389 = vadd.f32 0.0, %v9388
  %9390 = vdwg.mxu0
  %9391 = vmatpush.bf16.msra.mxu0 %v9282
  %9392 = vmatpush.bf16.msra.mxu0 %v9278
  %9393 = vmatpush.bf16.msra.mxu0 %v9274
  %9394 = vmatpush.bf16.msra.mxu0 %v9270
  %9395 = vmatpush.bf16.msra.mxu0 %v9266
  %9396 = vmatpush.bf16.msra.mxu0 %v9262
  %9397 = vmatpush.bf16.msra.mxu0 %v9258
  %9398 = vmatpush.bf16.msra.mxu0 %v9254
  %9399 = vmatmul.bf16.gmra.mxu0 %v9026
  %v9400 = vpop.f32.mrf.mxu0
  %v9401 = vadd.f32 %v9387, %v9400
  %v9402 = vpop.f32.mrf.mxu0
  %v9403 = vadd.f32 %v9389, %v9402
  %9404 = vdwg.mxu0
  %9405 = vmatpush.bf16.msra.mxu0 %v9251
  %9406 = vmatpush.bf16.msra.mxu0 %v9247
  %9407 = vmatpush.bf16.msra.mxu0 %v9243
  %9408 = vmatpush.bf16.msra.mxu0 %v9239
  %9409 = vmatpush.bf16.msra.mxu0 %v9235
  %9410 = vmatpush.bf16.msra.mxu0 %v9231
  %9411 = vmatpush.bf16.msra.mxu0 %v9227
  %9412 = vmatpush.bf16.msra.mxu0 %v9223
  %9413 = vmatmul.bf16.gmra.mxu0 %v9025
  %v9414 = vpop.f32.mrf.mxu0
  %v9415 = vadd.f32 0.0, %v9414
  %v9416 = vpop.f32.mrf.mxu0
  %v9417 = vadd.f32 0.0, %v9416
  %9418 = vdwg.mxu0
  %9419 = vmatpush.bf16.msra.mxu0 %v9283
  %9420 = vmatpush.bf16.msra.mxu0 %v9279
  %9421 = vmatpush.bf16.msra.mxu0 %v9275
  %9422 = vmatpush.bf16.msra.mxu0 %v9271
  %9423 = vmatpush.bf16.msra.mxu0 %v9267
  %9424 = vmatpush.bf16.msra.mxu0 %v9263
  %9425 = vmatpush.bf16.msra.mxu0 %v9259
  %9426 = vmatpush.bf16.msra.mxu0 %v9255
  %9427 = vmatmul.bf16.gmra.mxu0 %v9026
  %v9428 = vpop.f32.mrf.mxu0
  %v9429 = vadd.f32 %v9415, %v9428
  %v9430 = vpop.f32.mrf.mxu0
  %v9431 = vadd.f32 %v9417, %v9430
  %9432 = vdwg.mxu0
  %9433 = vmatpush.bf16.msra.mxu0 %v9252
  %9434 = vmatpush.bf16.msra.mxu0 %v9248
  %9435 = vmatpush.bf16.msra.mxu0 %v9244
  %9436 = vmatpush.bf16.msra.mxu0 %v9240
  %9437 = vmatpush.bf16.msra.mxu0 %v9236
  %9438 = vmatpush.bf16.msra.mxu0 %v9232
  %9439 = vmatpush.bf16.msra.mxu0 %v9228
  %9440 = vmatpush.bf16.msra.mxu0 %v9224
  %9441 = vmatmul.bf16.gmra.mxu0 %v9025
  %v9442 = vpop.f32.mrf.mxu0
  %v9443 = vadd.f32 0.0, %v9442
  %v9444 = vpop.f32.mrf.mxu0
  %v9445 = vadd.f32 0.0, %v9444
  %9446 = vdwg.mxu0
  %9447 = vmatpush.bf16.msra.mxu0 %v9284
  %9448 = vmatpush.bf16.msra.mxu0 %v9280
  %9449 = vmatpush.bf16.msra.mxu0 %v9276
  %9450 = vmatpush.bf16.msra.mxu0 %v9272
  %9451 = vmatpush.bf16.msra.mxu0 %v9268
  %9452 = vmatpush.bf16.msra.mxu0 %v9264
  %9453 = vmatpush.bf16.msra.mxu0 %v9260
  %9454 = vmatpush.bf16.msra.mxu0 %v9256
  %9455 = vmatmul.bf16.gmra.mxu0 %v9026
  %v9456 = vpop.f32.mrf.mxu0
  %v9457 = vadd.f32 %v9443, %v9456
  %v9458 = vpop.f32.mrf.mxu0
  %v9459 = vadd.f32 %v9445, %v9458
  %9460 = vdwg.mxu0
  %v9461 = vadd.f32 %v8946, %v9373
  %v9462 = vadd.f32 %v8947, %v9401
  %v9463 = vadd.f32 %v8948, %v9429
  %v9464 = vadd.f32 %v8949, %v9457
  %v9465 = vadd.f32 %v8950, %v9375
  %v9466 = vadd.f32 %v8951, %v9403
  %v9467 = vadd.f32 %v8952, %v9431
  %v9468 = vadd.f32 %v8953, %v9459
  %s9469 = scalar_lea.vmem %s9, 4096
  %v9470 = vld [vmem:[%s9469] sm:$0xff]
  %v9471 = vld [vmem:[%s9469 + $0x8] sm:$0xff]
  %v9472 = vld [vmem:[%s9469 + $0x10] sm:$0xff]
  %v9473 = vld [vmem:[%s9469 + $0x18] sm:$0xff]
  %v9474 = vld [vmem:[%s9469 + $0x20] sm:$0xff]
  %v9475 = vld [vmem:[%s9469 + $0x28] sm:$0xff]
  %v9476 = vld [vmem:[%s9469 + $0x30] sm:$0xff]
  %v9477 = vld [vmem:[%s9469 + $0x38] sm:$0xff]
  %v9478 = vld [vmem:[%s9469 + $0x40] sm:$0xff]
  %v9479 = vld [vmem:[%s9469 + $0x48] sm:$0xff]
  %v9480 = vld [vmem:[%s9469 + $0x50] sm:$0xff]
  %v9481 = vld [vmem:[%s9469 + $0x58] sm:$0xff]
  %v9482 = vld [vmem:[%s9469 + $0x60] sm:$0xff]
  %v9483 = vld [vmem:[%s9469 + $0x68] sm:$0xff]
  %v9484 = vld [vmem:[%s9469 + $0x70] sm:$0xff]
  %v9485 = vld [vmem:[%s9469 + $0x78] sm:$0xff]
  %v9486 = vld [vmem:[%s9469 + $0x80] sm:$0xff]
  %v9487 = vld [vmem:[%s9469 + $0x88] sm:$0xff]
  %v9488 = vld [vmem:[%s9469 + $0x90] sm:$0xff]
  %v9489 = vld [vmem:[%s9469 + $0x98] sm:$0xff]
  %v9490 = vld [vmem:[%s9469 + $0xa0] sm:$0xff]
  %v9491 = vld [vmem:[%s9469 + $0xa8] sm:$0xff]
  %v9492 = vld [vmem:[%s9469 + $0xb0] sm:$0xff]
  %v9493 = vld [vmem:[%s9469 + $0xb8] sm:$0xff]
  %v9494 = vld [vmem:[%s9469 + $0xc0] sm:$0xff]
  %v9495 = vld [vmem:[%s9469 + $0xc8] sm:$0xff]
  %v9496 = vld [vmem:[%s9469 + $0xd0] sm:$0xff]
  %v9497 = vld [vmem:[%s9469 + $0xd8] sm:$0xff]
  %v9498 = vld [vmem:[%s9469 + $0xe0] sm:$0xff]
  %v9499 = vld [vmem:[%s9469 + $0xe8] sm:$0xff]
  %v9500 = vld [vmem:[%s9469 + $0xf0] sm:$0xff]
  %v9501 = vld [vmem:[%s9469 + $0xf8] sm:$0xff]
  %v9502 = vld [vmem:[%s9469 + $0x100] sm:$0xff]
  %v9503 = vld [vmem:[%s9469 + $0x108] sm:$0xff]
  %v9504 = vld [vmem:[%s9469 + $0x110] sm:$0xff]
  %v9505 = vld [vmem:[%s9469 + $0x118] sm:$0xff]
  %v9506 = vld [vmem:[%s9469 + $0x120] sm:$0xff]
  %v9507 = vld [vmem:[%s9469 + $0x128] sm:$0xff]
  %v9508 = vld [vmem:[%s9469 + $0x130] sm:$0xff]
  %v9509 = vld [vmem:[%s9469 + $0x138] sm:$0xff]
  %v9510 = vld [vmem:[%s9469 + $0x140] sm:$0xff]
  %v9511 = vld [vmem:[%s9469 + $0x148] sm:$0xff]
  %v9512 = vld [vmem:[%s9469 + $0x150] sm:$0xff]
  %v9513 = vld [vmem:[%s9469 + $0x158] sm:$0xff]
  %v9514 = vld [vmem:[%s9469 + $0x160] sm:$0xff]
  %v9515 = vld [vmem:[%s9469 + $0x168] sm:$0xff]
  %v9516 = vld [vmem:[%s9469 + $0x170] sm:$0xff]
  %v9517 = vld [vmem:[%s9469 + $0x178] sm:$0xff]
  %v9518 = vld [vmem:[%s9469 + $0x180] sm:$0xff]
  %v9519 = vld [vmem:[%s9469 + $0x188] sm:$0xff]
  %v9520 = vld [vmem:[%s9469 + $0x190] sm:$0xff]
  %v9521 = vld [vmem:[%s9469 + $0x198] sm:$0xff]
  %v9522 = vld [vmem:[%s9469 + $0x1a0] sm:$0xff]
  %v9523 = vld [vmem:[%s9469 + $0x1a8] sm:$0xff]
  %v9524 = vld [vmem:[%s9469 + $0x1b0] sm:$0xff]
  %v9525 = vld [vmem:[%s9469 + $0x1b8] sm:$0xff]
  %v9526 = vld [vmem:[%s9469 + $0x1c0] sm:$0xff]
  %v9527 = vld [vmem:[%s9469 + $0x1c8] sm:$0xff]
  %v9528 = vld [vmem:[%s9469 + $0x1d0] sm:$0xff]
  %v9529 = vld [vmem:[%s9469 + $0x1d8] sm:$0xff]
  %v9530 = vld [vmem:[%s9469 + $0x1e0] sm:$0xff]
  %v9531 = vld [vmem:[%s9469 + $0x1e8] sm:$0xff]
  %v9532 = vld [vmem:[%s9469 + $0x1f0] sm:$0xff]
  %v9533 = vld [vmem:[%s9469 + $0x1f8] sm:$0xff]
  %v9536 = vunpack.c.l.b16 %v5364
  %v9537 = vunpack.c.h.b16 %v5364
  %v9538 = vunpack.c.l.b16 %v5365
  %v9539 = vunpack.c.h.b16 %v5365
  %v9540 = vpack.c.b16 %v9538, %v9536
  %v9541 = vpack.c.b16 %v9539, %v9537
  %v9608 = vunpack.c.l.b16 %v9470
  %v9609 = vunpack.c.h.b16 %v9470
  %v9610 = vunpack.c.l.b16 %v9471
  %v9611 = vunpack.c.h.b16 %v9471
  %v9612 = vunpack.c.l.b16 %v9472
  %v9613 = vunpack.c.h.b16 %v9472
  %v9614 = vunpack.c.l.b16 %v9473
  %v9615 = vunpack.c.h.b16 %v9473
  %v9616 = vunpack.c.l.b16 %v9474
  %v9617 = vunpack.c.h.b16 %v9474
  %v9618 = vunpack.c.l.b16 %v9475
  %v9619 = vunpack.c.h.b16 %v9475
  %v9620 = vunpack.c.l.b16 %v9476
  %v9621 = vunpack.c.h.b16 %v9476
  %v9622 = vunpack.c.l.b16 %v9477
  %v9623 = vunpack.c.h.b16 %v9477
  %v9624 = vunpack.c.l.b16 %v9478
  %v9625 = vunpack.c.h.b16 %v9478
  %v9626 = vunpack.c.l.b16 %v9479
  %v9627 = vunpack.c.h.b16 %v9479
  %v9628 = vunpack.c.l.b16 %v9480
  %v9629 = vunpack.c.h.b16 %v9480
  %v9630 = vunpack.c.l.b16 %v9481
  %v9631 = vunpack.c.h.b16 %v9481
  %v9632 = vunpack.c.l.b16 %v9482
  %v9633 = vunpack.c.h.b16 %v9482
  %v9634 = vunpack.c.l.b16 %v9483
  %v9635 = vunpack.c.h.b16 %v9483
  %v9636 = vunpack.c.l.b16 %v9484
  %v9637 = vunpack.c.h.b16 %v9484
  %v9638 = vunpack.c.l.b16 %v9485
  %v9639 = vunpack.c.h.b16 %v9485
  %v9640 = vunpack.c.l.b16 %v9486
  %v9641 = vunpack.c.h.b16 %v9486
  %v9642 = vunpack.c.l.b16 %v9487
  %v9643 = vunpack.c.h.b16 %v9487
  %v9644 = vunpack.c.l.b16 %v9488
  %v9645 = vunpack.c.h.b16 %v9488
  %v9646 = vunpack.c.l.b16 %v9489
  %v9647 = vunpack.c.h.b16 %v9489
  %v9648 = vunpack.c.l.b16 %v9490
  %v9649 = vunpack.c.h.b16 %v9490
  %v9650 = vunpack.c.l.b16 %v9491
  %v9651 = vunpack.c.h.b16 %v9491
  %v9652 = vunpack.c.l.b16 %v9492
  %v9653 = vunpack.c.h.b16 %v9492
  %v9654 = vunpack.c.l.b16 %v9493
  %v9655 = vunpack.c.h.b16 %v9493
  %v9656 = vunpack.c.l.b16 %v9494
  %v9657 = vunpack.c.h.b16 %v9494
  %v9658 = vunpack.c.l.b16 %v9495
  %v9659 = vunpack.c.h.b16 %v9495
  %v9660 = vunpack.c.l.b16 %v9496
  %v9661 = vunpack.c.h.b16 %v9496
  %v9662 = vunpack.c.l.b16 %v9497
  %v9663 = vunpack.c.h.b16 %v9497
  %v9664 = vunpack.c.l.b16 %v9498
  %v9665 = vunpack.c.h.b16 %v9498
  %v9666 = vunpack.c.l.b16 %v9499
  %v9667 = vunpack.c.h.b16 %v9499
  %v9668 = vunpack.c.l.b16 %v9500
  %v9669 = vunpack.c.h.b16 %v9500
  %v9670 = vunpack.c.l.b16 %v9501
  %v9671 = vunpack.c.h.b16 %v9501
  %v9672 = vunpack.c.l.b16 %v9502
  %v9673 = vunpack.c.h.b16 %v9502
  %v9674 = vunpack.c.l.b16 %v9503
  %v9675 = vunpack.c.h.b16 %v9503
  %v9676 = vunpack.c.l.b16 %v9504
  %v9677 = vunpack.c.h.b16 %v9504
  %v9678 = vunpack.c.l.b16 %v9505
  %v9679 = vunpack.c.h.b16 %v9505
  %v9680 = vunpack.c.l.b16 %v9506
  %v9681 = vunpack.c.h.b16 %v9506
  %v9682 = vunpack.c.l.b16 %v9507
  %v9683 = vunpack.c.h.b16 %v9507
  %v9684 = vunpack.c.l.b16 %v9508
  %v9685 = vunpack.c.h.b16 %v9508
  %v9686 = vunpack.c.l.b16 %v9509
  %v9687 = vunpack.c.h.b16 %v9509
  %v9688 = vunpack.c.l.b16 %v9510
  %v9689 = vunpack.c.h.b16 %v9510
  %v9690 = vunpack.c.l.b16 %v9511
  %v9691 = vunpack.c.h.b16 %v9511
  %v9692 = vunpack.c.l.b16 %v9512
  %v9693 = vunpack.c.h.b16 %v9512
  %v9694 = vunpack.c.l.b16 %v9513
  %v9695 = vunpack.c.h.b16 %v9513
  %v9696 = vunpack.c.l.b16 %v9514
  %v9697 = vunpack.c.h.b16 %v9514
  %v9698 = vunpack.c.l.b16 %v9515
  %v9699 = vunpack.c.h.b16 %v9515
  %v9700 = vunpack.c.l.b16 %v9516
  %v9701 = vunpack.c.h.b16 %v9516
  %v9702 = vunpack.c.l.b16 %v9517
  %v9703 = vunpack.c.h.b16 %v9517
  %v9704 = vunpack.c.l.b16 %v9518
  %v9705 = vunpack.c.h.b16 %v9518
  %v9706 = vunpack.c.l.b16 %v9519
  %v9707 = vunpack.c.h.b16 %v9519
  %v9708 = vunpack.c.l.b16 %v9520
  %v9709 = vunpack.c.h.b16 %v9520
  %v9710 = vunpack.c.l.b16 %v9521
  %v9711 = vunpack.c.h.b16 %v9521
  %v9712 = vunpack.c.l.b16 %v9522
  %v9713 = vunpack.c.h.b16 %v9522
  %v9714 = vunpack.c.l.b16 %v9523
  %v9715 = vunpack.c.h.b16 %v9523
  %v9716 = vunpack.c.l.b16 %v9524
  %v9717 = vunpack.c.h.b16 %v9524
  %v9718 = vunpack.c.l.b16 %v9525
  %v9719 = vunpack.c.h.b16 %v9525
  %v9720 = vunpack.c.l.b16 %v9526
  %v9721 = vunpack.c.h.b16 %v9526
  %v9722 = vunpack.c.l.b16 %v9527
  %v9723 = vunpack.c.h.b16 %v9527
  %v9724 = vunpack.c.l.b16 %v9528
  %v9725 = vunpack.c.h.b16 %v9528
  %v9726 = vunpack.c.l.b16 %v9529
  %v9727 = vunpack.c.h.b16 %v9529
  %v9728 = vunpack.c.l.b16 %v9530
  %v9729 = vunpack.c.h.b16 %v9530
  %v9730 = vunpack.c.l.b16 %v9531
  %v9731 = vunpack.c.h.b16 %v9531
  %v9732 = vunpack.c.l.b16 %v9532
  %v9733 = vunpack.c.h.b16 %v9532
  %v9734 = vunpack.c.l.b16 %v9533
  %v9735 = vunpack.c.h.b16 %v9533
  %v9736 = vpack.c.b16 %v9612, %v9608
  %v9737 = vpack.c.b16 %v9613, %v9609
  %v9738 = vpack.c.b16 %v9614, %v9610
  %v9739 = vpack.c.b16 %v9615, %v9611
  %v9740 = vpack.c.b16 %v9620, %v9616
  %v9741 = vpack.c.b16 %v9621, %v9617
  %v9742 = vpack.c.b16 %v9622, %v9618
  %v9743 = vpack.c.b16 %v9623, %v9619
  %v9744 = vpack.c.b16 %v9628, %v9624
  %v9745 = vpack.c.b16 %v9629, %v9625
  %v9746 = vpack.c.b16 %v9630, %v9626
  %v9747 = vpack.c.b16 %v9631, %v9627
  %v9748 = vpack.c.b16 %v9636, %v9632
  %v9749 = vpack.c.b16 %v9637, %v9633
  %v9750 = vpack.c.b16 %v9638, %v9634
  %v9751 = vpack.c.b16 %v9639, %v9635
  %v9752 = vpack.c.b16 %v9644, %v9640
  %v9753 = vpack.c.b16 %v9645, %v9641
  %v9754 = vpack.c.b16 %v9646, %v9642
  %v9755 = vpack.c.b16 %v9647, %v9643
  %v9756 = vpack.c.b16 %v9652, %v9648
  %v9757 = vpack.c.b16 %v9653, %v9649
  %v9758 = vpack.c.b16 %v9654, %v9650
  %v9759 = vpack.c.b16 %v9655, %v9651
  %v9760 = vpack.c.b16 %v9660, %v9656
  %v9761 = vpack.c.b16 %v9661, %v9657
  %v9762 = vpack.c.b16 %v9662, %v9658
  %v9763 = vpack.c.b16 %v9663, %v9659
  %v9764 = vpack.c.b16 %v9668, %v9664
  %v9765 = vpack.c.b16 %v9669, %v9665
  %v9766 = vpack.c.b16 %v9670, %v9666
  %v9767 = vpack.c.b16 %v9671, %v9667
  %v9768 = vpack.c.b16 %v9676, %v9672
  %v9769 = vpack.c.b16 %v9677, %v9673
  %v9770 = vpack.c.b16 %v9678, %v9674
  %v9771 = vpack.c.b16 %v9679, %v9675
  %v9772 = vpack.c.b16 %v9684, %v9680
  %v9773 = vpack.c.b16 %v9685, %v9681
  %v9774 = vpack.c.b16 %v9686, %v9682
  %v9775 = vpack.c.b16 %v9687, %v9683
  %v9776 = vpack.c.b16 %v9692, %v9688
  %v9777 = vpack.c.b16 %v9693, %v9689
  %v9778 = vpack.c.b16 %v9694, %v9690
  %v9779 = vpack.c.b16 %v9695, %v9691
  %v9780 = vpack.c.b16 %v9700, %v9696
  %v9781 = vpack.c.b16 %v9701, %v9697
  %v9782 = vpack.c.b16 %v9702, %v9698
  %v9783 = vpack.c.b16 %v9703, %v9699
  %v9784 = vpack.c.b16 %v9708, %v9704
  %v9785 = vpack.c.b16 %v9709, %v9705
  %v9786 = vpack.c.b16 %v9710, %v9706
  %v9787 = vpack.c.b16 %v9711, %v9707
  %v9788 = vpack.c.b16 %v9716, %v9712
  %v9789 = vpack.c.b16 %v9717, %v9713
  %v9790 = vpack.c.b16 %v9718, %v9714
  %v9791 = vpack.c.b16 %v9719, %v9715
  %v9792 = vpack.c.b16 %v9724, %v9720
  %v9793 = vpack.c.b16 %v9725, %v9721
  %v9794 = vpack.c.b16 %v9726, %v9722
  %v9795 = vpack.c.b16 %v9727, %v9723
  %v9796 = vpack.c.b16 %v9732, %v9728
  %v9797 = vpack.c.b16 %v9733, %v9729
  %v9798 = vpack.c.b16 %v9734, %v9730
  %v9799 = vpack.c.b16 %v9735, %v9731
  %9864 = vmatpush.bf16.msra.mxu0 %v9764
  %9865 = vmatpush.bf16.msra.mxu0 %v9760
  %9866 = vmatpush.bf16.msra.mxu0 %v9756
  %9867 = vmatpush.bf16.msra.mxu0 %v9752
  %9868 = vmatpush.bf16.msra.mxu0 %v9748
  %9869 = vmatpush.bf16.msra.mxu0 %v9744
  %9870 = vmatpush.bf16.msra.mxu0 %v9740
  %9871 = vmatpush.bf16.msra.mxu0 %v9736
  %9872 = vmatmul.bf16.gmra.mxu0 %v9540
  %v9873 = vpop.f32.mrf.mxu0
  %v9874 = vadd.f32 0.0, %v9873
  %v9875 = vpop.f32.mrf.mxu0
  %v9876 = vadd.f32 0.0, %v9875
  %9877 = vdwg.mxu0
  %9878 = vmatpush.bf16.msra.mxu0 %v9796
  %9879 = vmatpush.bf16.msra.mxu0 %v9792
  %9880 = vmatpush.bf16.msra.mxu0 %v9788
  %9881 = vmatpush.bf16.msra.mxu0 %v9784
  %9882 = vmatpush.bf16.msra.mxu0 %v9780
  %9883 = vmatpush.bf16.msra.mxu0 %v9776
  %9884 = vmatpush.bf16.msra.mxu0 %v9772
  %9885 = vmatpush.bf16.msra.mxu0 %v9768
  %9886 = vmatmul.bf16.gmra.mxu0 %v9541
  %v9887 = vpop.f32.mrf.mxu0
  %v9888 = vadd.f32 %v9874, %v9887
  %v9889 = vpop.f32.mrf.mxu0
  %v9890 = vadd.f32 %v9876, %v9889
  %9891 = vdwg.mxu0
  %9892 = vmatpush.bf16.msra.mxu0 %v9765
  %9893 = vmatpush.bf16.msra.mxu0 %v9761
  %9894 = vmatpush.bf16.msra.mxu0 %v9757
  %9895 = vmatpush.bf16.msra.mxu0 %v9753
  %9896 = vmatpush.bf16.msra.mxu0 %v9749
  %9897 = vmatpush.bf16.msra.mxu0 %v9745
  %9898 = vmatpush.bf16.msra.mxu0 %v9741
  %9899 = vmatpush.bf16.msra.mxu0 %v9737
  %9900 = vmatmul.bf16.gmra.mxu0 %v9540
  %v9901 = vpop.f32.mrf.mxu0
  %v9902 = vadd.f32 0.0, %v9901
  %v9903 = vpop.f32.mrf.mxu0
  %v9904 = vadd.f32 0.0, %v9903
  %9905 = vdwg.mxu0
  %9906 = vmatpush.bf16.msra.mxu0 %v9797
  %9907 = vmatpush.bf16.msra.mxu0 %v9793
  %9908 = vmatpush.bf16.msra.mxu0 %v9789
  %9909 = vmatpush.bf16.msra.mxu0 %v9785
  %9910 = vmatpush.bf16.msra.mxu0 %v9781
  %9911 = vmatpush.bf16.msra.mxu0 %v9777
  %9912 = vmatpush.bf16.msra.mxu0 %v9773
  %9913 = vmatpush.bf16.msra.mxu0 %v9769
  %9914 = vmatmul.bf16.gmra.mxu0 %v9541
  %v9915 = vpop.f32.mrf.mxu0
  %v9916 = vadd.f32 %v9902, %v9915
  %v9917 = vpop.f32.mrf.mxu0
  %v9918 = vadd.f32 %v9904, %v9917
  %9919 = vdwg.mxu0
  %9920 = vmatpush.bf16.msra.mxu0 %v9766
  %9921 = vmatpush.bf16.msra.mxu0 %v9762
  %9922 = vmatpush.bf16.msra.mxu0 %v9758
  %9923 = vmatpush.bf16.msra.mxu0 %v9754
  %9924 = vmatpush.bf16.msra.mxu0 %v9750
  %9925 = vmatpush.bf16.msra.mxu0 %v9746
  %9926 = vmatpush.bf16.msra.mxu0 %v9742
  %9927 = vmatpush.bf16.msra.mxu0 %v9738
  %9928 = vmatmul.bf16.gmra.mxu0 %v9540
  %v9929 = vpop.f32.mrf.mxu0
  %v9930 = vadd.f32 0.0, %v9929
  %v9931 = vpop.f32.mrf.mxu0
  %v9932 = vadd.f32 0.0, %v9931
  %9933 = vdwg.mxu0
  %9934 = vmatpush.bf16.msra.mxu0 %v9798
  %9935 = vmatpush.bf16.msra.mxu0 %v9794
  %9936 = vmatpush.bf16.msra.mxu0 %v9790
  %9937 = vmatpush.bf16.msra.mxu0 %v9786
  %9938 = vmatpush.bf16.msra.mxu0 %v9782
  %9939 = vmatpush.bf16.msra.mxu0 %v9778
  %9940 = vmatpush.bf16.msra.mxu0 %v9774
  %9941 = vmatpush.bf16.msra.mxu0 %v9770
  %9942 = vmatmul.bf16.gmra.mxu0 %v9541
  %v9943 = vpop.f32.mrf.mxu0
  %v9944 = vadd.f32 %v9930, %v9943
  %v9945 = vpop.f32.mrf.mxu0
  %v9946 = vadd.f32 %v9932, %v9945
  %9947 = vdwg.mxu0
  %9948 = vmatpush.bf16.msra.mxu0 %v9767
  %9949 = vmatpush.bf16.msra.mxu0 %v9763
  %9950 = vmatpush.bf16.msra.mxu0 %v9759
  %9951 = vmatpush.bf16.msra.mxu0 %v9755
  %9952 = vmatpush.bf16.msra.mxu0 %v9751
  %9953 = vmatpush.bf16.msra.mxu0 %v9747
  %9954 = vmatpush.bf16.msra.mxu0 %v9743
  %9955 = vmatpush.bf16.msra.mxu0 %v9739
  %9956 = vmatmul.bf16.gmra.mxu0 %v9540
  %v9957 = vpop.f32.mrf.mxu0
  %v9958 = vadd.f32 0.0, %v9957
  %v9959 = vpop.f32.mrf.mxu0
  %v9960 = vadd.f32 0.0, %v9959
  %9961 = vdwg.mxu0
  %9962 = vmatpush.bf16.msra.mxu0 %v9799
  %9963 = vmatpush.bf16.msra.mxu0 %v9795
  %9964 = vmatpush.bf16.msra.mxu0 %v9791
  %9965 = vmatpush.bf16.msra.mxu0 %v9787
  %9966 = vmatpush.bf16.msra.mxu0 %v9783
  %9967 = vmatpush.bf16.msra.mxu0 %v9779
  %9968 = vmatpush.bf16.msra.mxu0 %v9775
  %9969 = vmatpush.bf16.msra.mxu0 %v9771
  %9970 = vmatmul.bf16.gmra.mxu0 %v9541
  %v9971 = vpop.f32.mrf.mxu0
  %v9972 = vadd.f32 %v9958, %v9971
  %v9973 = vpop.f32.mrf.mxu0
  %v9974 = vadd.f32 %v9960, %v9973
  %9975 = vdwg.mxu0
  %v9976 = vadd.f32 %v9461, %v9888
  %v9977 = vadd.f32 %v9462, %v9916
  %v9978 = vadd.f32 %v9463, %v9944
  %v9979 = vadd.f32 %v9464, %v9972
  %v9980 = vadd.f32 %v9465, %v9890
  %v9981 = vadd.f32 %v9466, %v9918
  %v9982 = vadd.f32 %v9467, %v9946
  %v9983 = vadd.f32 %v9468, %v9974
  %v9984 = vld [vmem:[%s10] sm:$0xf]
  %v9986 = vperm.slane %v9984, 0
  %v9987 = vperm.slane %v9984, 1
  %v9988 = vperm.slane %v9984, 2
  %v9989 = vperm.slane %v9984, 3
  %v9994 = vadd.f32 %v9976, %v9986
  %v9995 = vadd.f32 %v9977, %v9987
  %v9996 = vadd.f32 %v9978, %v9988
  %v9997 = vadd.f32 %v9979, %v9989
  %v9998 = vadd.f32 %v9980, %v9986
  %v9999 = vadd.f32 %v9981, %v9987
  %v10000 = vadd.f32 %v9982, %v9988
  %v10001 = vadd.f32 %v9983, %v9989
  %vm10002 = vcmp.ge.f32.partialorder %v9994, 0.0
  %vm10003 = vcmp.ge.f32.partialorder %v9995, 0.0
  %vm10004 = vcmp.ge.f32.partialorder %v9996, 0.0
  %vm10005 = vcmp.ge.f32.partialorder %v9997, 0.0
  %vm10006 = vcmp.ge.f32.partialorder %v9998, 0.0
  %vm10007 = vcmp.ge.f32.partialorder %v9999, 0.0
  %vm10008 = vcmp.ge.f32.partialorder %v10000, 0.0
  %vm10009 = vcmp.ge.f32.partialorder %v10001, 0.0
  %v10010 = vmul.f32 %v9994, 0.2
  %v10011 = vmul.f32 %v9995, 0.2
  %v10012 = vmul.f32 %v9996, 0.2
  %v10013 = vmul.f32 %v9997, 0.2
  %v10014 = vmul.f32 %v9998, 0.2
  %v10015 = vmul.f32 %v9999, 0.2
  %v10016 = vmul.f32 %v10000, 0.2
  %v10017 = vmul.f32 %v10001, 0.2
  %v10018 = vsel %vm10002, %v9994, %v10010
  %v10019 = vsel %vm10003, %v9995, %v10011
  %v10020 = vsel %vm10004, %v9996, %v10012
  %v10021 = vsel %vm10005, %v9997, %v10013
  %v10022 = vsel %vm10006, %v9998, %v10014
  %v10023 = vsel %vm10007, %v9999, %v10015
  %v10024 = vsel %vm10008, %v10000, %v10016
  %v10025 = vsel %vm10009, %v10001, %v10017
  %v10026 = vld [vmem:[%s11] sm:$0xf]
  %v10028 = vperm.slane %v10026, 0
  %v10029 = vperm.slane %v10026, 1
  %v10030 = vperm.slane %v10026, 2
  %v10031 = vperm.slane %v10026, 3
  %v10036 = vmul.f32 %v10018, %v10028
  %v10037 = vmul.f32 %v10019, %v10029
  %v10038 = vmul.f32 %v10020, %v10030
  %v10039 = vmul.f32 %v10021, %v10031
  %v10040 = vmul.f32 %v10022, %v10028
  %v10041 = vmul.f32 %v10023, %v10029
  %v10042 = vmul.f32 %v10024, %v10030
  %v10043 = vmul.f32 %v10025, %v10031
  %v10044 = vld [vmem:[%s12] sm:$0xf]
  %v10046 = vperm.slane %v10044, 0
  %v10047 = vperm.slane %v10044, 1
  %v10048 = vperm.slane %v10044, 2
  %v10049 = vperm.slane %v10044, 3
  %v10054 = vadd.f32 %v10036, %v10046
  %v10055 = vadd.f32 %v10037, %v10047
  %v10056 = vadd.f32 %v10038, %v10048
  %v10057 = vadd.f32 %v10039, %v10049
  %v10058 = vadd.f32 %v10040, %v10046
  %v10059 = vadd.f32 %v10041, %v10047
  %v10060 = vadd.f32 %v10042, %v10048
  %v10061 = vadd.f32 %v10043, %v10049
  %v10062 = vld [vmem:[%s13] sm:$0xff]
  %v10063 = vld [vmem:[%s13 + $0x8] sm:$0xff]
  %v10064 = vld [vmem:[%s13 + $0x10] sm:$0xff]
  %v10065 = vld [vmem:[%s13 + $0x18] sm:$0xff]
  %v10066 = vld [vmem:[%s13 + $0x20] sm:$0xff]
  %v10067 = vld [vmem:[%s13 + $0x28] sm:$0xff]
  %v10068 = vld [vmem:[%s13 + $0x30] sm:$0xff]
  %v10069 = vld [vmem:[%s13 + $0x38] sm:$0xff]
  %v10070 = vmul.f32 %v10054, %v10062
  %v10071 = vmul.f32 %v10055, %v10063
  %v10072 = vmul.f32 %v10056, %v10064
  %v10073 = vmul.f32 %v10057, %v10065
  %v10074 = vmul.f32 %v10058, %v10066
  %v10075 = vmul.f32 %v10059, %v10067
  %v10076 = vmul.f32 %v10060, %v10068
  %v10077 = vmul.f32 %v10061, %v10069
  %10078 = vadd.xlane.f32.xlu0 %v10070
  %v10079 = vpop.xlane.xlu0 %10078
  %10080 = vadd.xlane.f32.xlu0 %v10074
  %v10081 = vpop.xlane.xlu0 %10080
  %v10082 = vadd.f32 %v10079, %v10081
  %v10083 = vrot.slane %v10082, 4
  %v10084 = vadd.f32 %v10082, %v10083
  %v10085 = vrot.slane %v10084, 2
  %v10086 = vadd.f32 %v10084, %v10085
  %v10087 = vrot.slane %v10086, 1
  %v10088 = vadd.f32 %v10086, %v10087
  %v10089 = vld [vmem:[#allocation2] sm:$0x1]
  %v10090 = vadd.f32 %v10088, %v10089
  %v10091 = vsub.f32 0.0, %v10090
  %v10092 = vmul.f32 %v10091, 1.442695
  %v10093 = vpow.pop %v10092
  %v10094 = vadd.f32 %v10093, 1.0
  %v10095 = vrcp.pop %v10094
  %v10096 = vmul.f32 %v10094, %v10095
  %v10097 = vsub.f32 1.0, %v10096
  %v10098 = vmul.f32 %v10095, %v10097
  %v10099 = vadd.f32 %v10095, %v10098
  %vm10100 = vweird.f32 %v10094
  %vm10101 = vweird.f32 %v10095
  %vm10102 = vmor %vm10100, %vm10101
  %v10103 = vsel %vm10102, %v10095, %v10099
  %v10104 = vand.u32 2147483647, %v10094
  %vm10105 = vcmp.eq.f32.partialorder %v10104, 8.507059e+37
  %v10106 = vand.u32 %v10094, 2147483648
  %v10107 = vor.u32 1.1754944e-38, %v10106
  %v10108 = vsel %vm10105, %v10107, %v10103
  %v10109 = vmul.f32 1.0, %v10108
  %10111 = vset.pattern.permute.xlu0 0
  %10112 = vperm.xlu0 %10111, %v10109
  %v10113 = vpop.permute.xlu0 %10112
  %v10115 = vperm.slane %v10113, 0
  %10116 = vadd.xlane.f32.xlu0 %v10071
  %v10117 = vpop.xlane.xlu0 %10116
  %10118 = vadd.xlane.f32.xlu0 %v10075
  %v10119 = vpop.xlane.xlu0 %10118
  %v10120 = vadd.f32 %v10117, %v10119
  %v10121 = vrot.slane %v10120, 4
  %v10122 = vadd.f32 %v10120, %v10121
  %v10123 = vrot.slane %v10122, 2
  %v10124 = vadd.f32 %v10122, %v10123
  %v10125 = vrot.slane %v10124, 1
  %v10126 = vadd.f32 %v10124, %v10125
  %v10127 = vadd.f32 %v10126, %v10089
  %v10128 = vsub.f32 0.0, %v10127
  %v10129 = vmul.f32 %v10128, 1.442695
  %v10130 = vpow.pop %v10129
  %v10131 = vadd.f32 %v10130, 1.0
  %v10132 = vrcp.pop %v10131
  %v10133 = vmul.f32 %v10131, %v10132
  %v10134 = vsub.f32 1.0, %v10133
  %v10135 = vmul.f32 %v10132, %v10134
  %v10136 = vadd.f32 %v10132, %v10135
  %vm10137 = vweird.f32 %v10131
  %vm10138 = vweird.f32 %v10132
  %vm10139 = vmor %vm10137, %vm10138
  %v10140 = vsel %vm10139, %v10132, %v10136
  %v10141 = vand.u32 2147483647, %v10131
  %vm10142 = vcmp.eq.f32.partialorder %v10141, 8.507059e+37
  %v10143 = vand.u32 %v10131, 2147483648
  %v10144 = vor.u32 1.1754944e-38, %v10143
  %v10145 = vsel %vm10142, %v10144, %v10140
  %v10146 = vmul.f32 1.0, %v10145
  %10148 = vset.pattern.permute.xlu0 0
  %10149 = vperm.xlu0 %10148, %v10146
  %v10150 = vpop.permute.xlu0 %10149
  %v10152 = vperm.slane %v10150, 0
  %10153 = vadd.xlane.f32.xlu0 %v10072
  %v10154 = vpop.xlane.xlu0 %10153
  %10155 = vadd.xlane.f32.xlu0 %v10076
  %v10156 = vpop.xlane.xlu0 %10155
  %v10157 = vadd.f32 %v10154, %v10156
  %v10158 = vrot.slane %v10157, 4
  %v10159 = vadd.f32 %v10157, %v10158
  %v10160 = vrot.slane %v10159, 2
  %v10161 = vadd.f32 %v10159, %v10160
  %v10162 = vrot.slane %v10161, 1
  %v10163 = vadd.f32 %v10161, %v10162
  %v10164 = vadd.f32 %v10163, %v10089
  %v10165 = vsub.f32 0.0, %v10164
  %v10166 = vmul.f32 %v10165, 1.442695
  %v10167 = vpow.pop %v10166
  %v10168 = vadd.f32 %v10167, 1.0
  %v10169 = vrcp.pop %v10168
  %v10170 = vmul.f32 %v10168, %v10169
  %v10171 = vsub.f32 1.0, %v10170
  %v10172 = vmul.f32 %v10169, %v10171
  %v10173 = vadd.f32 %v10169, %v10172
  %vm10174 = vweird.f32 %v10168
  %vm10175 = vweird.f32 %v10169
  %vm10176 = vmor %vm10174, %vm10175
  %v10177 = vsel %vm10176, %v10169, %v10173
  %v10178 = vand.u32 2147483647, %v10168
  %vm10179 = vcmp.eq.f32.partialorder %v10178, 8.507059e+37
  %v10180 = vand.u32 %v10168, 2147483648
  %v10181 = vor.u32 1.1754944e-38, %v10180
  %v10182 = vsel %vm10179, %v10181, %v10177
  %v10183 = vmul.f32 1.0, %v10182
  %10185 = vset.pattern.permute.xlu0 0
  %10186 = vperm.xlu0 %10185, %v10183
  %v10187 = vpop.permute.xlu0 %10186
  %v10189 = vperm.slane %v10187, 0
  %10190 = vadd.xlane.f32.xlu0 %v10073
  %v10191 = vpop.xlane.xlu0 %10190
  %10192 = vadd.xlane.f32.xlu0 %v10077
  %v10193 = vpop.xlane.xlu0 %10192
  %v10194 = vadd.f32 %v10191, %v10193
  %v10195 = vrot.slane %v10194, 4
  %v10196 = vadd.f32 %v10194, %v10195
  %v10197 = vrot.slane %v10196, 2
  %v10198 = vadd.f32 %v10196, %v10197
  %v10199 = vrot.slane %v10198, 1
  %v10200 = vadd.f32 %v10198, %v10199
  %v10201 = vadd.f32 %v10200, %v10089
  %v10202 = vsub.f32 0.0, %v10201
  %v10203 = vmul.f32 %v10202, 1.442695
  %v10204 = vpow.pop %v10203
  %v10205 = vadd.f32 %v10204, 1.0
  %v10206 = vrcp.pop %v10205
  %v10207 = vmul.f32 %v10205, %v10206
  %v10208 = vsub.f32 1.0, %v10207
  %v10209 = vmul.f32 %v10206, %v10208
  %v10210 = vadd.f32 %v10206, %v10209
  %vm10211 = vweird.f32 %v10205
  %vm10212 = vweird.f32 %v10206
  %vm10213 = vmor %vm10211, %vm10212
  %v10214 = vsel %vm10213, %v10206, %v10210
  %v10215 = vand.u32 2147483647, %v10205
  %vm10216 = vcmp.eq.f32.partialorder %v10215, 8.507059e+37
  %v10217 = vand.u32 %v10205, 2147483648
  %v10218 = vor.u32 1.1754944e-38, %v10217
  %v10219 = vsel %vm10216, %v10218, %v10214
  %v10220 = vmul.f32 1.0, %v10219
  %10222 = vset.pattern.permute.xlu0 0
  %10223 = vperm.xlu0 %10222, %v10220
  %v10224 = vpop.permute.xlu0 %10223
  %v10226 = vperm.slane %v10224, 0
  %vm10227 = vcmask 1040384
  %v10228 = vsel %vm10227, %v10115, %v10152
  %vm10229 = vcmask 1041408
  %v10230 = vsel %vm10229, %v10228, %v10189
  %vm10231 = vcmask 1042432
  %v10232 = vsel %vm10231, %v10230, %v10226
  %10233 = vst [vmem:[%s15] sm:$0xf] %v10232
  // Predicated region
  $region62: #{discriminator_forward.1} parent=0 // pred_check
    _
  $region63: #{discriminator_forward.1} parent=0 // pred_check_branch
    %10235 = sbr.rel (0) target = $region65
  $region64: #{discriminator_forward.1} parent=0 // pred_region
    _
  $region65: #{discriminator_forward.1} parent=0 // pred_fallthru
    _
  // Predicated region
  $region66: #{discriminator_forward.1} parent=0 // pred_check
    _
  $region67: #{discriminator_forward.1} parent=0 // pred_check_branch
    %10237 = sbr.rel (0) target = $region69
  $region68: #{discriminator_forward.1} parent=0 // pred_region
    _
  $region69: #{discriminator_forward.1} parent=0 // pred_fallthru
    _

</llo_original>
